<compile_context>
chip_gen: v5e
topology: v5e:2x2
jax: 0.10.0
libtpu: 0.0.40
codegen_flags: <defaults>
</compile_context>

<pallas_src>
import functools

import jax
import jax.numpy as jnp
from jax.experimental import pallas as pl
from jax.experimental.pallas import tpu as pltpu


def _round_up(x, m):
    return (x + m - 1) // m * m


def _lstm_chunk_kernel(xproj_ref, whh_ref, h0_ref, c0_ref,
                       allout_ref, hn_ref, cn_ref,
                       *, t_chunk, seq_len, seq_len_pad):
    """One grid step == one chunk of `t_chunk` LSTM time steps for one batch shard.

    xproj_ref : (BB, t_chunk, 4*Hp) f32   precomputed x@W_ih^T + bias (gate-grouped)
    whh_ref   : (Hp, 4*Hp)         bf16   W_hh^T, gate-grouped, zero padded
    h0/c0_ref : (BB, Hp)           f32    initial state for this batch shard
    allout_ref: (BB, t_chunk, Hp)  f32    hidden states for this chunk
    hn/cn_ref : (BB, Hp)           f32    recurrent carry (resident across chunks)
    """
    chunk = pl.program_id(1)
    n_chunks = pl.num_programs(1)

    @pl.when(chunk == 0)
    def _():
        hn_ref[...] = h0_ref[...]
        cn_ref[...] = c0_ref[...]

    h = hn_ref[...]                       # (BB, Hp) f32
    c = cn_ref[...]
    hp = h.shape[-1]                      # Hp (multiple of 128)
    need_mask = seq_len_pad != seq_len    # static python bool
    base_t = chunk * t_chunk

    # Capped static unroll: matmul of step t+1 overlaps VPU/EUP math of step t.
    for lt in range(t_chunk):
        x_t = xproj_ref[:, lt, :]                                 # (BB, 4*Hp)
        # bf16 x bf16 MXU matmul with f32 accumulation (critical-path latency).
        gates = x_t + jnp.dot(h.astype(whh_ref.dtype), whh_ref[...],
                              preferred_element_type=jnp.float32)
        # PyTorch gate order (i, f, g, o); each slice is a full lane-tile group.
        i_g = jax.nn.sigmoid(gates[:, 0 * hp:1 * hp])
        f_g = jax.nn.sigmoid(gates[:, 1 * hp:2 * hp])
        g_g = jnp.tanh(gates[:, 2 * hp:3 * hp])
        o_g = jax.nn.sigmoid(gates[:, 3 * hp:4 * hp])

        c = f_g * c + i_g * g_g
        h = o_g * jnp.tanh(c)

        allout_ref[:, lt, :] = h          # batch-major store (no wrapper transpose)

        if need_mask:
            # Capture hn/cn exactly at the true last time step; padded tail
            # steps of the final chunk are computed but never carried.
            @pl.when(base_t + lt == seq_len - 1)
            def _(h=h, c=c):
                hn_ref[...] = h
                cn_ref[...] = c

    if need_mask:
        # Intermediate chunks still carry state forward; the final (partially
        # padded) chunk already wrote hn/cn at step seq_len-1 above.
        @pl.when(chunk < n_chunks - 1)
        def _():
            hn_ref[...] = h
            cn_ref[...] = c
    else:
        hn_ref[...] = h
        cn_ref[...] = c


@jax.jit
def decoder_forward(x_ids, h0, c0, embedding, weight_ih, weight_hh,
                    bias_ih, bias_hh):
    """Mirrors Decoder.forward(x, start).

    x_ids : (B, T) int32 token ids
    h0, c0: (1, B, H) float32
    Returns (allOut (B, T, H), (h_n (1, B, H), c_n (1, B, H))).
    """
    B, T = x_ids.shape
    H = h0.shape[-1]
    f32 = jnp.float32
    bf16 = jnp.bfloat16

    Hp = _round_up(H, 128)                   # lane-aligned hidden width

    # ---- batch sharding: fill the MXU, but keep >=2 shards when possible ----
    Bp8 = _round_up(B, 8)
    if Bp8 <= 8:
        BB = 8
    else:
        BB = min(128, _round_up(-(-Bp8 // 2), 8))   # ~Bp/2, up to 128 rows
    Bp = _round_up(Bp8, BB)

    # ---- time chunking: prefer a chunk that divides T (no tail mask) ----
    if T <= 32:
        TC = T
    else:
        TC = next((c for c in (32, 16, 8) if T % c == 0), 32)

    # ---- VMEM budget (v7x: 64 MiB per TensorCore) ----
    def vmem_est(bb, tc, hp):
        return (2 * bb * tc * 4 * hp * 4      # xproj (double-buffered, f32)
                + 2 * bb * tc * hp * 4        # allout (double-buffered, f32)
                + 2 * hp * 4 * hp * 2         # W_hh^T (bf16)
                + 4 * 2 * bb * hp * 4)        # h0, c0, hn, cn

    BUDGET = 40 * 1024 * 1024
    while vmem_est(BB, TC, Hp) > BUDGET and TC > 8:
        TC = max(8, (TC // 2) // 8 * 8)
    while vmem_est(BB, TC, Hp) > BUDGET and BB > 8:
        BB = max(8, (BB // 2) // 8 * 8)
    Bp = _round_up(Bp8, BB)
    Tp = _round_up(T, TC)

    n_b = Bp // BB
    n_t = Tp // TC

    # ---- Hoisted non-recurrent work: one big GEMM, already batch-major ------
    emb = jnp.take(embedding.astype(f32), x_ids, axis=0)              # (B, T, E)
    bias = (bias_ih + bias_hh).astype(f32)                            # (4H,)
    xproj = jnp.einsum('bte,ge->btg', emb,
                       weight_ih.astype(f32)) + bias                  # (B, T, 4H)
    # Gate-grouped, lane/sublane padded; NO transpose needed.
    xproj = xproj.reshape(B, T, 4, H)
    xproj = jnp.pad(xproj, ((0, Bp - B), (0, Tp - T), (0, 0), (0, Hp - H)))
    xproj = xproj.reshape(Bp, Tp, 4 * Hp)

    # W_hh^T, gate-grouped, zero padded, bf16 MXU operand.
    whh_t = weight_hh.astype(f32).T.reshape(H, 4, H)                  # (H, 4, H)
    whh_t = jnp.pad(whh_t, ((0, Hp - H), (0, 0), (0, Hp - H)))
    whh_t = whh_t.reshape(Hp, 4 * Hp).astype(bf16)                    # (Hp, 4*Hp)

    # Zero padding of the state is required for pad-inertness of the recurrence.
    h0p = jnp.pad(h0.reshape(B, H).astype(f32), ((0, Bp - B), (0, Hp - H)))
    c0p = jnp.pad(c0.reshape(B, H).astype(f32), ((0, Bp - B), (0, Hp - H)))

    kernel = functools.partial(_lstm_chunk_kernel,
                               t_chunk=TC, seq_len=T, seq_len_pad=Tp)

    grid_spec = pltpu.PrefetchScalarGridSpec(
        num_scalar_prefetch=0,
        grid=(n_b, n_t),                                             # (batch shards, time chunks)
        in_specs=[
            pl.BlockSpec((BB, TC, 4 * Hp), lambda b, t: (b, t, 0)),  # xproj chunk
            pl.BlockSpec((Hp, 4 * Hp), lambda b, t: (0, 0)),         # W_hh^T (grid-invariant)
            pl.BlockSpec((BB, Hp), lambda b, t: (b, 0)),             # h0 shard
            pl.BlockSpec((BB, Hp), lambda b, t: (b, 0)),             # c0 shard
        ],
        out_specs=[
            pl.BlockSpec((BB, TC, Hp), lambda b, t: (b, t, 0)),      # allOut chunk (batch-major)
            pl.BlockSpec((BB, Hp), lambda b, t: (b, 0)),             # h_n (resident carry)
            pl.BlockSpec((BB, Hp), lambda b, t: (b, 0)),             # c_n (resident carry)
        ],
    )

    cp_kwargs = dict(
        # batch shards are independent (megacore on v7x); the time-chunk
        # recurrence must run sequentially.
        dimension_semantics=("parallel", "arbitrary"))
    if vmem_est(BB, TC, Hp) > 24 * 1024 * 1024:
        cp_kwargs["vmem_limit_bytes"] = 48 * 1024 * 1024

    allout_p, hn_p, cn_p = pl.pallas_call(
        kernel,
        out_shape=(
            jax.ShapeDtypeStruct((Bp, Tp, Hp), f32),
            jax.ShapeDtypeStruct((Bp, Hp), f32),
            jax.ShapeDtypeStruct((Bp, Hp), f32),
        ),
        grid_spec=grid_spec,
        compiler_params=pltpu.CompilerParams(**cp_kwargs),
    )(xproj, whh_t, h0p, c0p)

    all_out = allout_p[:B, :T, :H]                                   # (B, T, H), no transpose
    h_n = hn_p[:B, :H].reshape(1, B, H)
    c_n = cn_p[:B, :H].reshape(1, B, H)
    return all_out, (h_n, c_n)


def decoder_reference(x_ids, h0, c0, embedding, weight_ih, weight_hh,
                      bias_ih, bias_hh):
    """Pure-JAX reference matching torch.nn.Embedding + nn.LSTM(batch_first)."""
    H = h0.shape[-1]
    emb = embedding[x_ids]                                           # (B, T, E)
    bias = bias_ih + bias_hh

    def step(carry, x_t):
        h, c = carry
        gates = x_t @ weight_ih.T + h @ weight_hh.T + bias
        i = jax.nn.sigmoid(gates[:, 0:H])
        f = jax.nn.sigmoid(gates[:, H:2 * H])
        g = jnp.tanh(gates[:, 2 * H:3 * H])
        o = jax.nn.sigmoid(gates[:, 3 * H:4 * H])
        c_new = f * c + i * g
        h_new = o * jnp.tanh(c_new)
        return (h_new, c_new), h_new

    (h_n, c_n), outs = jax.lax.scan(step, (h0[0], c0[0]),
                                    jnp.transpose(emb, (1, 0, 2)))
    return jnp.transpose(outs, (1, 0, 2)), (h_n[None], c_n[None])


if __name__ == "__main__":
    # Small, deterministic setup consistent with the module's __init__.
    B, T = 2, 8           # batch, sequence length
    V, E, H = 16, 32, 32  # vocabSize, embedDim, hidDim

    key = jax.random.PRNGKey(0)
    k_emb, k_wih, k_whh, k_bih, k_bhh, k_x, k_h, k_c = jax.random.split(key, 8)

    embedding = 0.1 * jax.random.normal(k_emb, (V, E), jnp.float32)
    weight_ih = 0.1 * jax.random.normal(k_wih, (4 * H, E), jnp.float32)
    weight_hh = 0.1 * jax.random.normal(k_whh, (4 * H, H), jnp.float32)
    bias_ih = 0.1 * jax.random.normal(k_bih, (4 * H,), jnp.float32)
    bias_hh = 0.1 * jax.random.normal(k_bhh, (4 * H,), jnp.float32)

    x_ids = jax.random.randint(k_x, (B, T), 0, V, dtype=jnp.int32)
    h0 = 0.1 * jax.random.normal(k_h, (1, B, H), jnp.float32)
    c0 = 0.1 * jax.random.normal(k_c, (1, B, H), jnp.float32)

    all_out, (h_n, c_n) = decoder_forward(
        x_ids, h0, c0, embedding, weight_ih, weight_hh, bias_ih, bias_hh)
    jax.block_until_ready(all_out)
    jax.block_until_ready(h_n)
    jax.block_until_ready(c_n)

    # Cross-check against a pure-JAX reference.  Tolerances are loosened vs the
    # previous version because the recurrent matmul now uses bf16 operands
    # (f32 accumulation); observed error is O(1e-4) over this sequence length.
    ref_out, (ref_h, ref_c) = decoder_reference(
        x_ids, h0, c0, embedding, weight_ih, weight_hh, bias_ih, bias_hh)
    assert all_out.shape == (B, T, H) and h_n.shape == (1, B, H)
    assert jnp.allclose(all_out, ref_out, atol=5e-3, rtol=5e-3)
    assert jnp.allclose(h_n, ref_h, atol=5e-3, rtol=5e-3)
    assert jnp.allclose(c_n, ref_c, atol=5e-3, rtol=5e-3)

    print("KERNEL_OK")
</pallas_src>

<mosaic_0001>
module attributes {stable_mosaic.version = 11 : i64} {
  func.func @_lstm_chunk_kernel(%arg0: i32, %arg1: i32, %arg2: memref<8x8x512xf32, #tpu.memory_space<vmem>>, %arg3: memref<128x512xbf16, #tpu.memory_space<vmem>>, %arg4: memref<8x128xf32, #tpu.memory_space<vmem>>, %arg5: memref<8x128xf32, #tpu.memory_space<vmem>>, %arg6: memref<8x8x128xf32, #tpu.memory_space<vmem>>, %arg7: memref<8x128xf32, #tpu.memory_space<vmem>>, %arg8: memref<8x128xf32, #tpu.memory_space<vmem>>) attributes {dimension_semantics = [#tpu.dimension_semantics<parallel>, #tpu.dimension_semantics<arbitrary>], iteration_bounds = array<i64: 1, 1>, scalar_prefetch = 0 : i64, scratch_operands = 0 : i64, tpu.core_type = #tpu.core_type<tc>, window_params = [{transform_indices = @transform_0, window_bounds = array<i64: 8, 8, 512>}, {pipeline_mode = #tpu.pipeline_mode<synchronous>, transform_indices = @transform_1, window_bounds = array<i64: 128, 512>}, {transform_indices = @transform_2, window_bounds = array<i64: 8, 128>}, {transform_indices = @transform_3, window_bounds = array<i64: 8, 128>}, {transform_indices = @transform_4, window_bounds = array<i64: 8, 8, 128>}, {transform_indices = @transform_5, window_bounds = array<i64: 8, 128>}, {transform_indices = @transform_6, window_bounds = array<i64: 8, 128>}]} {
    %c0_i32 = arith.constant 0 : i32
    %0 = arith.cmpi eq, %arg1, %c0_i32 : i32
    %1 = arith.extui %0 : i1 to i32
    %c0_i32_0 = arith.constant 0 : i32
    %2 = arith.cmpi ne, %1, %c0_i32_0 : i32
    scf.if %2 {
      %c0_96 = arith.constant 0 : index
      %c0_97 = arith.constant 0 : index
      %279 = vector.load %arg4[%c0_96, %c0_97] : memref<8x128xf32, #tpu.memory_space<vmem>>, vector<8x128xf32>
      %c0_98 = arith.constant 0 : index
      %c0_99 = arith.constant 0 : index
      %280 = vector.load %arg7[%c0_98, %c0_99] : memref<8x128xf32, #tpu.memory_space<vmem>>, vector<8x128xf32>
      tpu.vector_store %arg7[%c0_98, %c0_99], %279 {strides = array<i32>} : memref<8x128xf32, #tpu.memory_space<vmem>>, vector<8x128xf32>,
      %c0_100 = arith.constant 0 : index
      %c0_101 = arith.constant 0 : index
      %281 = vector.load %arg5[%c0_100, %c0_101] : memref<8x128xf32, #tpu.memory_space<vmem>>, vector<8x128xf32>
      %c0_102 = arith.constant 0 : index
      %c0_103 = arith.constant 0 : index
      %282 = vector.load %arg8[%c0_102, %c0_103] : memref<8x128xf32, #tpu.memory_space<vmem>>, vector<8x128xf32>
      tpu.vector_store %arg8[%c0_102, %c0_103], %281 {strides = array<i32>} : memref<8x128xf32, #tpu.memory_space<vmem>>, vector<8x128xf32>,
    } else {
    }
    %c0 = arith.constant 0 : index
    %c0_1 = arith.constant 0 : index
    %3 = vector.load %arg7[%c0, %c0_1] : memref<8x128xf32, #tpu.memory_space<vmem>>, vector<8x128xf32>
    %c0_2 = arith.constant 0 : index
    %c0_3 = arith.constant 0 : index
    %4 = vector.load %arg8[%c0_2, %c0_3] : memref<8x128xf32, #tpu.memory_space<vmem>>, vector<8x128xf32>
    %c0_4 = arith.constant 0 : index
    %c0_5 = arith.constant 0 : index
    %c0_6 = arith.constant 0 : index
    %5 = vector.load %arg2[%c0_4, %c0_5, %c0_6] : memref<8x8x512xf32, #tpu.memory_space<vmem>>, vector<8x1x512xf32>
    %6 = vector.shape_cast %5 : vector<8x1x512xf32> to vector<8x512xf32>
    %7 = arith.truncf %3 : vector<8x128xf32> to vector<8x128xbf16>
    %c0_7 = arith.constant 0 : index
    %c0_8 = arith.constant 0 : index
    %8 = vector.load %arg3[%c0_7, %c0_8] : memref<128x512xbf16, #tpu.memory_space<vmem>>, vector<128x512xbf16>
    %cst = arith.constant dense<0.000000e+00> : vector<8x512xf32>
    %9 = tpu.matmul %7, %8, %cst {dimension_numbers = #tpu.dot_dimension_numbers<[1], [0], [0], [1], [0, 0, 1, 1], [], []>} : vector<8x128xbf16>, vector<128x512xbf16>, vector<8x512xf32> -> vector<8x512xf32>
    %10 = arith.addf %6, %9 : vector<8x512xf32>
    %11 = vector.extract_strided_slice %10 {offsets = [0, 0], sizes = [8, 128], strides = [1, 1]} : vector<8x512xf32> to vector<8x128xf32>
    %12 = arith.negf %11 : vector<8x128xf32>
    %13 = math.exp %12 : vector<8x128xf32>
    %cst_9 = arith.constant 1.000000e+00 : f32
    %14 = vector.broadcast %cst_9 : f32 to vector<8x128xf32>
    %15 = arith.addf %14, %13 : vector<8x128xf32>
    %16 = arith.divf %14, %15 : vector<8x128xf32>
    %17 = vector.extract_strided_slice %10 {offsets = [0, 128], sizes = [8, 128], strides = [1, 1]} : vector<8x512xf32> to vector<8x128xf32>
    %18 = arith.negf %17 : vector<8x128xf32>
    %19 = math.exp %18 : vector<8x128xf32>
    %cst_10 = arith.constant 1.000000e+00 : f32
    %20 = vector.broadcast %cst_10 : f32 to vector<8x128xf32>
    %21 = arith.addf %20, %19 : vector<8x128xf32>
    %22 = arith.divf %20, %21 : vector<8x128xf32>
    %23 = vector.extract_strided_slice %10 {offsets = [0, 256], sizes = [8, 128], strides = [1, 1]} : vector<8x512xf32> to vector<8x128xf32>
    %24 = math.tanh %23 : vector<8x128xf32>
    %25 = vector.extract_strided_slice %10 {offsets = [0, 384], sizes = [8, 128], strides = [1, 1]} : vector<8x512xf32> to vector<8x128xf32>
    %26 = arith.negf %25 : vector<8x128xf32>
    %27 = math.exp %26 : vector<8x128xf32>
    %cst_11 = arith.constant 1.000000e+00 : f32
    %28 = vector.broadcast %cst_11 : f32 to vector<8x128xf32>
    %29 = arith.addf %28, %27 : vector<8x128xf32>
    %30 = arith.divf %28, %29 : vector<8x128xf32>
    %31 = arith.mulf %22, %4 : vector<8x128xf32>
    %32 = arith.mulf %16, %24 : vector<8x128xf32>
    %33 = arith.addf %31, %32 : vector<8x128xf32>
    %34 = math.tanh %33 : vector<8x128xf32>
    %35 = arith.mulf %30, %34 : vector<8x128xf32>
    %c0_12 = arith.constant 0 : index
    %c0_13 = arith.constant 0 : index
    %c0_14 = arith.constant 0 : index
    %36 = vector.load %arg6[%c0_12, %c0_13, %c0_14] : memref<8x8x128xf32, #tpu.memory_space<vmem>>, vector<8x1x128xf32>
    %37 = vector.shape_cast %36 : vector<8x1x128xf32> to vector<8x128xf32>
    %38 = vector.shape_cast %35 : vector<8x128xf32> to vector<8x1x128xf32>
    tpu.vector_store %arg6[%c0_12, %c0_13, %c0_14], %38 {strides = array<i32>} : memref<8x8x128xf32, #tpu.memory_space<vmem>>, vector<8x1x128xf32>,
    %c0_15 = arith.constant 0 : index
    %c1 = arith.constant 1 : index
    %c0_16 = arith.constant 0 : index
    %39 = vector.load %arg2[%c0_15, %c1, %c0_16] : memref<8x8x512xf32, #tpu.memory_space<vmem>>, vector<8x1x512xf32>
    %40 = vector.shape_cast %39 : vector<8x1x512xf32> to vector<8x512xf32>
    %41 = arith.truncf %35 : vector<8x128xf32> to vector<8x128xbf16>
    %c0_17 = arith.constant 0 : index
    %c0_18 = arith.constant 0 : index
    %42 = vector.load %arg3[%c0_17, %c0_18] : memref<128x512xbf16, #tpu.memory_space<vmem>>, vector<128x512xbf16>
    %cst_19 = arith.constant dense<0.000000e+00> : vector<8x512xf32>
    %43 = tpu.matmul %41, %42, %cst_19 {dimension_numbers = #tpu.dot_dimension_numbers<[1], [0], [0], [1], [0, 0, 1, 1], [], []>} : vector<8x128xbf16>, vector<128x512xbf16>, vector<8x512xf32> -> vector<8x512xf32>
    %44 = arith.addf %40, %43 : vector<8x512xf32>
    %45 = vector.extract_strided_slice %44 {offsets = [0, 0], sizes = [8, 128], strides = [1, 1]} : vector<8x512xf32> to vector<8x128xf32>
    %46 = arith.negf %45 : vector<8x128xf32>
    %47 = math.exp %46 : vector<8x128xf32>
    %cst_20 = arith.constant 1.000000e+00 : f32
    %48 = vector.broadcast %cst_20 : f32 to vector<8x128xf32>
    %49 = arith.addf %48, %47 : vector<8x128xf32>
    %50 = arith.divf %48, %49 : vector<8x128xf32>
    %51 = vector.extract_strided_slice %44 {offsets = [0, 128], sizes = [8, 128], strides = [1, 1]} : vector<8x512xf32> to vector<8x128xf32>
    %52 = arith.negf %51 : vector<8x128xf32>
    %53 = math.exp %52 : vector<8x128xf32>
    %cst_21 = arith.constant 1.000000e+00 : f32
    %54 = vector.broadcast %cst_21 : f32 to vector<8x128xf32>
    %55 = arith.addf %54, %53 : vector<8x128xf32>
    %56 = arith.divf %54, %55 : vector<8x128xf32>
    %57 = vector.extract_strided_slice %44 {offsets = [0, 256], sizes = [8, 128], strides = [1, 1]} : vector<8x512xf32> to vector<8x128xf32>
    %58 = math.tanh %57 : vector<8x128xf32>
    %59 = vector.extract_strided_slice %44 {offsets = [0, 384], sizes = [8, 128], strides = [1, 1]} : vector<8x512xf32> to vector<8x128xf32>
    %60 = arith.negf %59 : vector<8x128xf32>
    %61 = math.exp %60 : vector<8x128xf32>
    %cst_22 = arith.constant 1.000000e+00 : f32
    %62 = vector.broadcast %cst_22 : f32 to vector<8x128xf32>
    %63 = arith.addf %62, %61 : vector<8x128xf32>
    %64 = arith.divf %62, %63 : vector<8x128xf32>
    %65 = arith.mulf %56, %33 : vector<8x128xf32>
    %66 = arith.mulf %50, %58 : vector<8x128xf32>
    %67 = arith.addf %65, %66 : vector<8x128xf32>
    %68 = math.tanh %67 : vector<8x128xf32>
    %69 = arith.mulf %64, %68 : vector<8x128xf32>
    %c0_23 = arith.constant 0 : index
    %c1_24 = arith.constant 1 : index
    %c0_25 = arith.constant 0 : index
    %70 = vector.load %arg6[%c0_23, %c1_24, %c0_25] : memref<8x8x128xf32, #tpu.memory_space<vmem>>, vector<8x1x128xf32>
    %71 = vector.shape_cast %70 : vector<8x1x128xf32> to vector<8x128xf32>
    %72 = vector.shape_cast %69 : vector<8x128xf32> to vector<8x1x128xf32>
    tpu.vector_store %arg6[%c0_23, %c1_24, %c0_25], %72 {strides = array<i32>} : memref<8x8x128xf32, #tpu.memory_space<vmem>>, vector<8x1x128xf32>,
    %c0_26 = arith.constant 0 : index
    %c2 = arith.constant 2 : index
    %c0_27 = arith.constant 0 : index
    %73 = vector.load %arg2[%c0_26, %c2, %c0_27] : memref<8x8x512xf32, #tpu.memory_space<vmem>>, vector<8x1x512xf32>
    %74 = vector.shape_cast %73 : vector<8x1x512xf32> to vector<8x512xf32>
    %75 = arith.truncf %69 : vector<8x128xf32> to vector<8x128xbf16>
    %c0_28 = arith.constant 0 : index
    %c0_29 = arith.constant 0 : index
    %76 = vector.load %arg3[%c0_28, %c0_29] : memref<128x512xbf16, #tpu.memory_space<vmem>>, vector<128x512xbf16>
    %cst_30 = arith.constant dense<0.000000e+00> : vector<8x512xf32>
    %77 = tpu.matmul %75, %76, %cst_30 {dimension_numbers = #tpu.dot_dimension_numbers<[1], [0], [0], [1], [0, 0, 1, 1], [], []>} : vector<8x128xbf16>, vector<128x512xbf16>, vector<8x512xf32> -> vector<8x512xf32>
    %78 = arith.addf %74, %77 : vector<8x512xf32>
    %79 = vector.extract_strided_slice %78 {offsets = [0, 0], sizes = [8, 128], strides = [1, 1]} : vector<8x512xf32> to vector<8x128xf32>
    %80 = arith.negf %79 : vector<8x128xf32>
    %81 = math.exp %80 : vector<8x128xf32>
    %cst_31 = arith.constant 1.000000e+00 : f32
    %82 = vector.broadcast %cst_31 : f32 to vector<8x128xf32>
    %83 = arith.addf %82, %81 : vector<8x128xf32>
    %84 = arith.divf %82, %83 : vector<8x128xf32>
    %85 = vector.extract_strided_slice %78 {offsets = [0, 128], sizes = [8, 128], strides = [1, 1]} : vector<8x512xf32> to vector<8x128xf32>
    %86 = arith.negf %85 : vector<8x128xf32>
    %87 = math.exp %86 : vector<8x128xf32>
    %cst_32 = arith.constant 1.000000e+00 : f32
    %88 = vector.broadcast %cst_32 : f32 to vector<8x128xf32>
    %89 = arith.addf %88, %87 : vector<8x128xf32>
    %90 = arith.divf %88, %89 : vector<8x128xf32>
    %91 = vector.extract_strided_slice %78 {offsets = [0, 256], sizes = [8, 128], strides = [1, 1]} : vector<8x512xf32> to vector<8x128xf32>
    %92 = math.tanh %91 : vector<8x128xf32>
    %93 = vector.extract_strided_slice %78 {offsets = [0, 384], sizes = [8, 128], strides = [1, 1]} : vector<8x512xf32> to vector<8x128xf32>
    %94 = arith.negf %93 : vector<8x128xf32>
    %95 = math.exp %94 : vector<8x128xf32>
    %cst_33 = arith.constant 1.000000e+00 : f32
    %96 = vector.broadcast %cst_33 : f32 to vector<8x128xf32>
    %97 = arith.addf %96, %95 : vector<8x128xf32>
    %98 = arith.divf %96, %97 : vector<8x128xf32>
    %99 = arith.mulf %90, %67 : vector<8x128xf32>
    %100 = arith.mulf %84, %92 : vector<8x128xf32>
    %101 = arith.addf %99, %100 : vector<8x128xf32>
    %102 = math.tanh %101 : vector<8x128xf32>
    %103 = arith.mulf %98, %102 : vector<8x128xf32>
    %c0_34 = arith.constant 0 : index
    %c2_35 = arith.constant 2 : index
    %c0_36 = arith.constant 0 : index
    %104 = vector.load %arg6[%c0_34, %c2_35, %c0_36] : memref<8x8x128xf32, #tpu.memory_space<vmem>>, vector<8x1x128xf32>
    %105 = vector.shape_cast %104 : vector<8x1x128xf32> to vector<8x128xf32>
    %106 = vector.shape_cast %103 : vector<8x128xf32> to vector<8x1x128xf32>
    tpu.vector_store %arg6[%c0_34, %c2_35, %c0_36], %106 {strides = array<i32>} : memref<8x8x128xf32, #tpu.memory_space<vmem>>, vector<8x1x128xf32>,
    %c0_37 = arith.constant 0 : index
    %c3 = arith.constant 3 : index
    %c0_38 = arith.constant 0 : index
    %107 = vector.load %arg2[%c0_37, %c3, %c0_38] : memref<8x8x512xf32, #tpu.memory_space<vmem>>, vector<8x1x512xf32>
    %108 = vector.shape_cast %107 : vector<8x1x512xf32> to vector<8x512xf32>
    %109 = arith.truncf %103 : vector<8x128xf32> to vector<8x128xbf16>
    %c0_39 = arith.constant 0 : index
    %c0_40 = arith.constant 0 : index
    %110 = vector.load %arg3[%c0_39, %c0_40] : memref<128x512xbf16, #tpu.memory_space<vmem>>, vector<128x512xbf16>
    %cst_41 = arith.constant dense<0.000000e+00> : vector<8x512xf32>
    %111 = tpu.matmul %109, %110, %cst_41 {dimension_numbers = #tpu.dot_dimension_numbers<[1], [0], [0], [1], [0, 0, 1, 1], [], []>} : vector<8x128xbf16>, vector<128x512xbf16>, vector<8x512xf32> -> vector<8x512xf32>
    %112 = arith.addf %108, %111 : vector<8x512xf32>
    %113 = vector.extract_strided_slice %112 {offsets = [0, 0], sizes = [8, 128], strides = [1, 1]} : vector<8x512xf32> to vector<8x128xf32>
    %114 = arith.negf %113 : vector<8x128xf32>
    %115 = math.exp %114 : vector<8x128xf32>
    %cst_42 = arith.constant 1.000000e+00 : f32
    %116 = vector.broadcast %cst_42 : f32 to vector<8x128xf32>
    %117 = arith.addf %116, %115 : vector<8x128xf32>
    %118 = arith.divf %116, %117 : vector<8x128xf32>
    %119 = vector.extract_strided_slice %112 {offsets = [0, 128], sizes = [8, 128], strides = [1, 1]} : vector<8x512xf32> to vector<8x128xf32>
    %120 = arith.negf %119 : vector<8x128xf32>
    %121 = math.exp %120 : vector<8x128xf32>
    %cst_43 = arith.constant 1.000000e+00 : f32
    %122 = vector.broadcast %cst_43 : f32 to vector<8x128xf32>
    %123 = arith.addf %122, %121 : vector<8x128xf32>
    %124 = arith.divf %122, %123 : vector<8x128xf32>
    %125 = vector.extract_strided_slice %112 {offsets = [0, 256], sizes = [8, 128], strides = [1, 1]} : vector<8x512xf32> to vector<8x128xf32>
    %126 = math.tanh %125 : vector<8x128xf32>
    %127 = vector.extract_strided_slice %112 {offsets = [0, 384], sizes = [8, 128], strides = [1, 1]} : vector<8x512xf32> to vector<8x128xf32>
    %128 = arith.negf %127 : vector<8x128xf32>
    %129 = math.exp %128 : vector<8x128xf32>
    %cst_44 = arith.constant 1.000000e+00 : f32
    %130 = vector.broadcast %cst_44 : f32 to vector<8x128xf32>
    %131 = arith.addf %130, %129 : vector<8x128xf32>
    %132 = arith.divf %130, %131 : vector<8x128xf32>
    %133 = arith.mulf %124, %101 : vector<8x128xf32>
    %134 = arith.mulf %118, %126 : vector<8x128xf32>
    %135 = arith.addf %133, %134 : vector<8x128xf32>
    %136 = math.tanh %135 : vector<8x128xf32>
    %137 = arith.mulf %132, %136 : vector<8x128xf32>
    %c0_45 = arith.constant 0 : index
    %c3_46 = arith.constant 3 : index
    %c0_47 = arith.constant 0 : index
    %138 = vector.load %arg6[%c0_45, %c3_46, %c0_47] : memref<8x8x128xf32, #tpu.memory_space<vmem>>, vector<8x1x128xf32>
    %139 = vector.shape_cast %138 : vector<8x1x128xf32> to vector<8x128xf32>
    %140 = vector.shape_cast %137 : vector<8x128xf32> to vector<8x1x128xf32>
    tpu.vector_store %arg6[%c0_45, %c3_46, %c0_47], %140 {strides = array<i32>} : memref<8x8x128xf32, #tpu.memory_space<vmem>>, vector<8x1x128xf32>,
    %c0_48 = arith.constant 0 : index
    %c4 = arith.constant 4 : index
    %c0_49 = arith.constant 0 : index
    %141 = vector.load %arg2[%c0_48, %c4, %c0_49] : memref<8x8x512xf32, #tpu.memory_space<vmem>>, vector<8x1x512xf32>
    %142 = vector.shape_cast %141 : vector<8x1x512xf32> to vector<8x512xf32>
    %143 = arith.truncf %137 : vector<8x128xf32> to vector<8x128xbf16>
    %c0_50 = arith.constant 0 : index
    %c0_51 = arith.constant 0 : index
    %144 = vector.load %arg3[%c0_50, %c0_51] : memref<128x512xbf16, #tpu.memory_space<vmem>>, vector<128x512xbf16>
    %cst_52 = arith.constant dense<0.000000e+00> : vector<8x512xf32>
    %145 = tpu.matmul %143, %144, %cst_52 {dimension_numbers = #tpu.dot_dimension_numbers<[1], [0], [0], [1], [0, 0, 1, 1], [], []>} : vector<8x128xbf16>, vector<128x512xbf16>, vector<8x512xf32> -> vector<8x512xf32>
    %146 = arith.addf %142, %145 : vector<8x512xf32>
    %147 = vector.extract_strided_slice %146 {offsets = [0, 0], sizes = [8, 128], strides = [1, 1]} : vector<8x512xf32> to vector<8x128xf32>
    %148 = arith.negf %147 : vector<8x128xf32>
    %149 = math.exp %148 : vector<8x128xf32>
    %cst_53 = arith.constant 1.000000e+00 : f32
    %150 = vector.broadcast %cst_53 : f32 to vector<8x128xf32>
    %151 = arith.addf %150, %149 : vector<8x128xf32>
    %152 = arith.divf %150, %151 : vector<8x128xf32>
    %153 = vector.extract_strided_slice %146 {offsets = [0, 128], sizes = [8, 128], strides = [1, 1]} : vector<8x512xf32> to vector<8x128xf32>
    %154 = arith.negf %153 : vector<8x128xf32>
    %155 = math.exp %154 : vector<8x128xf32>
    %cst_54 = arith.constant 1.000000e+00 : f32
    %156 = vector.broadcast %cst_54 : f32 to vector<8x128xf32>
    %157 = arith.addf %156, %155 : vector<8x128xf32>
    %158 = arith.divf %156, %157 : vector<8x128xf32>
    %159 = vector.extract_strided_slice %146 {offsets = [0, 256], sizes = [8, 128], strides = [1, 1]} : vector<8x512xf32> to vector<8x128xf32>
    %160 = math.tanh %159 : vector<8x128xf32>
    %161 = vector.extract_strided_slice %146 {offsets = [0, 384], sizes = [8, 128], strides = [1, 1]} : vector<8x512xf32> to vector<8x128xf32>
    %162 = arith.negf %161 : vector<8x128xf32>
    %163 = math.exp %162 : vector<8x128xf32>
    %cst_55 = arith.constant 1.000000e+00 : f32
    %164 = vector.broadcast %cst_55 : f32 to vector<8x128xf32>
    %165 = arith.addf %164, %163 : vector<8x128xf32>
    %166 = arith.divf %164, %165 : vector<8x128xf32>
    %167 = arith.mulf %158, %135 : vector<8x128xf32>
    %168 = arith.mulf %152, %160 : vector<8x128xf32>
    %169 = arith.addf %167, %168 : vector<8x128xf32>
    %170 = math.tanh %169 : vector<8x128xf32>
    %171 = arith.mulf %166, %170 : vector<8x128xf32>
    %c0_56 = arith.constant 0 : index
    %c4_57 = arith.constant 4 : index
    %c0_58 = arith.constant 0 : index
    %172 = vector.load %arg6[%c0_56, %c4_57, %c0_58] : memref<8x8x128xf32, #tpu.memory_space<vmem>>, vector<8x1x128xf32>
    %173 = vector.shape_cast %172 : vector<8x1x128xf32> to vector<8x128xf32>
    %174 = vector.shape_cast %171 : vector<8x128xf32> to vector<8x1x128xf32>
    tpu.vector_store %arg6[%c0_56, %c4_57, %c0_58], %174 {strides = array<i32>} : memref<8x8x128xf32, #tpu.memory_space<vmem>>, vector<8x1x128xf32>,
    %c0_59 = arith.constant 0 : index
    %c5 = arith.constant 5 : index
    %c0_60 = arith.constant 0 : index
    %175 = vector.load %arg2[%c0_59, %c5, %c0_60] : memref<8x8x512xf32, #tpu.memory_space<vmem>>, vector<8x1x512xf32>
    %176 = vector.shape_cast %175 : vector<8x1x512xf32> to vector<8x512xf32>
    %177 = arith.truncf %171 : vector<8x128xf32> to vector<8x128xbf16>
    %c0_61 = arith.constant 0 : index
    %c0_62 = arith.constant 0 : index
    %178 = vector.load %arg3[%c0_61, %c0_62] : memref<128x512xbf16, #tpu.memory_space<vmem>>, vector<128x512xbf16>
    %cst_63 = arith.constant dense<0.000000e+00> : vector<8x512xf32>
    %179 = tpu.matmul %177, %178, %cst_63 {dimension_numbers = #tpu.dot_dimension_numbers<[1], [0], [0], [1], [0, 0, 1, 1], [], []>} : vector<8x128xbf16>, vector<128x512xbf16>, vector<8x512xf32> -> vector<8x512xf32>
    %180 = arith.addf %176, %179 : vector<8x512xf32>
    %181 = vector.extract_strided_slice %180 {offsets = [0, 0], sizes = [8, 128], strides = [1, 1]} : vector<8x512xf32> to vector<8x128xf32>
    %182 = arith.negf %181 : vector<8x128xf32>
    %183 = math.exp %182 : vector<8x128xf32>
    %cst_64 = arith.constant 1.000000e+00 : f32
    %184 = vector.broadcast %cst_64 : f32 to vector<8x128xf32>
    %185 = arith.addf %184, %183 : vector<8x128xf32>
    %186 = arith.divf %184, %185 : vector<8x128xf32>
    %187 = vector.extract_strided_slice %180 {offsets = [0, 128], sizes = [8, 128], strides = [1, 1]} : vector<8x512xf32> to vector<8x128xf32>
    %188 = arith.negf %187 : vector<8x128xf32>
    %189 = math.exp %188 : vector<8x128xf32>
    %cst_65 = arith.constant 1.000000e+00 : f32
    %190 = vector.broadcast %cst_65 : f32 to vector<8x128xf32>
    %191 = arith.addf %190, %189 : vector<8x128xf32>
    %192 = arith.divf %190, %191 : vector<8x128xf32>
    %193 = vector.extract_strided_slice %180 {offsets = [0, 256], sizes = [8, 128], strides = [1, 1]} : vector<8x512xf32> to vector<8x128xf32>
    %194 = math.tanh %193 : vector<8x128xf32>
    %195 = vector.extract_strided_slice %180 {offsets = [0, 384], sizes = [8, 128], strides = [1, 1]} : vector<8x512xf32> to vector<8x128xf32>
    %196 = arith.negf %195 : vector<8x128xf32>
    %197 = math.exp %196 : vector<8x128xf32>
    %cst_66 = arith.constant 1.000000e+00 : f32
    %198 = vector.broadcast %cst_66 : f32 to vector<8x128xf32>
    %199 = arith.addf %198, %197 : vector<8x128xf32>
    %200 = arith.divf %198, %199 : vector<8x128xf32>
    %201 = arith.mulf %192, %169 : vector<8x128xf32>
    %202 = arith.mulf %186, %194 : vector<8x128xf32>
    %203 = arith.addf %201, %202 : vector<8x128xf32>
    %204 = math.tanh %203 : vector<8x128xf32>
    %205 = arith.mulf %200, %204 : vector<8x128xf32>
    %c0_67 = arith.constant 0 : index
    %c5_68 = arith.constant 5 : index
    %c0_69 = arith.constant 0 : index
    %206 = vector.load %arg6[%c0_67, %c5_68, %c0_69] : memref<8x8x128xf32, #tpu.memory_space<vmem>>, vector<8x1x128xf32>
    %207 = vector.shape_cast %206 : vector<8x1x128xf32> to vector<8x128xf32>
    %208 = vector.shape_cast %205 : vector<8x128xf32> to vector<8x1x128xf32>
    tpu.vector_store %arg6[%c0_67, %c5_68, %c0_69], %208 {strides = array<i32>} : memref<8x8x128xf32, #tpu.memory_space<vmem>>, vector<8x1x128xf32>,
    %c0_70 = arith.constant 0 : index
    %c6 = arith.constant 6 : index
    %c0_71 = arith.constant 0 : index
    %209 = vector.load %arg2[%c0_70, %c6, %c0_71] : memref<8x8x512xf32, #tpu.memory_space<vmem>>, vector<8x1x512xf32>
    %210 = vector.shape_cast %209 : vector<8x1x512xf32> to vector<8x512xf32>
    %211 = arith.truncf %205 : vector<8x128xf32> to vector<8x128xbf16>
    %c0_72 = arith.constant 0 : index
    %c0_73 = arith.constant 0 : index
    %212 = vector.load %arg3[%c0_72, %c0_73] : memref<128x512xbf16, #tpu.memory_space<vmem>>, vector<128x512xbf16>
    %cst_74 = arith.constant dense<0.000000e+00> : vector<8x512xf32>
    %213 = tpu.matmul %211, %212, %cst_74 {dimension_numbers = #tpu.dot_dimension_numbers<[1], [0], [0], [1], [0, 0, 1, 1], [], []>} : vector<8x128xbf16>, vector<128x512xbf16>, vector<8x512xf32> -> vector<8x512xf32>
    %214 = arith.addf %210, %213 : vector<8x512xf32>
    %215 = vector.extract_strided_slice %214 {offsets = [0, 0], sizes = [8, 128], strides = [1, 1]} : vector<8x512xf32> to vector<8x128xf32>
    %216 = arith.negf %215 : vector<8x128xf32>
    %217 = math.exp %216 : vector<8x128xf32>
    %cst_75 = arith.constant 1.000000e+00 : f32
    %218 = vector.broadcast %cst_75 : f32 to vector<8x128xf32>
    %219 = arith.addf %218, %217 : vector<8x128xf32>
    %220 = arith.divf %218, %219 : vector<8x128xf32>
    %221 = vector.extract_strided_slice %214 {offsets = [0, 128], sizes = [8, 128], strides = [1, 1]} : vector<8x512xf32> to vector<8x128xf32>
    %222 = arith.negf %221 : vector<8x128xf32>
    %223 = math.exp %222 : vector<8x128xf32>
    %cst_76 = arith.constant 1.000000e+00 : f32
    %224 = vector.broadcast %cst_76 : f32 to vector<8x128xf32>
    %225 = arith.addf %224, %223 : vector<8x128xf32>
    %226 = arith.divf %224, %225 : vector<8x128xf32>
    %227 = vector.extract_strided_slice %214 {offsets = [0, 256], sizes = [8, 128], strides = [1, 1]} : vector<8x512xf32> to vector<8x128xf32>
    %228 = math.tanh %227 : vector<8x128xf32>
    %229 = vector.extract_strided_slice %214 {offsets = [0, 384], sizes = [8, 128], strides = [1, 1]} : vector<8x512xf32> to vector<8x128xf32>
    %230 = arith.negf %229 : vector<8x128xf32>
    %231 = math.exp %230 : vector<8x128xf32>
    %cst_77 = arith.constant 1.000000e+00 : f32
    %232 = vector.broadcast %cst_77 : f32 to vector<8x128xf32>
    %233 = arith.addf %232, %231 : vector<8x128xf32>
    %234 = arith.divf %232, %233 : vector<8x128xf32>
    %235 = arith.mulf %226, %203 : vector<8x128xf32>
    %236 = arith.mulf %220, %228 : vector<8x128xf32>
    %237 = arith.addf %235, %236 : vector<8x128xf32>
    %238 = math.tanh %237 : vector<8x128xf32>
    %239 = arith.mulf %234, %238 : vector<8x128xf32>
    %c0_78 = arith.constant 0 : index
    %c6_79 = arith.constant 6 : index
    %c0_80 = arith.constant 0 : index
    %240 = vector.load %arg6[%c0_78, %c6_79, %c0_80] : memref<8x8x128xf32, #tpu.memory_space<vmem>>, vector<8x1x128xf32>
    %241 = vector.shape_cast %240 : vector<8x1x128xf32> to vector<8x128xf32>
    %242 = vector.shape_cast %239 : vector<8x128xf32> to vector<8x1x128xf32>
    tpu.vector_store %arg6[%c0_78, %c6_79, %c0_80], %242 {strides = array<i32>} : memref<8x8x128xf32, #tpu.memory_space<vmem>>, vector<8x1x128xf32>,
    %c0_81 = arith.constant 0 : index
    %c7 = arith.constant 7 : index
    %c0_82 = arith.constant 0 : index
    %243 = vector.load %arg2[%c0_81, %c7, %c0_82] : memref<8x8x512xf32, #tpu.memory_space<vmem>>, vector<8x1x512xf32>
    %244 = vector.shape_cast %243 : vector<8x1x512xf32> to vector<8x512xf32>
    %245 = arith.truncf %239 : vector<8x128xf32> to vector<8x128xbf16>
    %c0_83 = arith.constant 0 : index
    %c0_84 = arith.constant 0 : index
    %246 = vector.load %arg3[%c0_83, %c0_84] : memref<128x512xbf16, #tpu.memory_space<vmem>>, vector<128x512xbf16>
    %cst_85 = arith.constant dense<0.000000e+00> : vector<8x512xf32>
    %247 = tpu.matmul %245, %246, %cst_85 {dimension_numbers = #tpu.dot_dimension_numbers<[1], [0], [0], [1], [0, 0, 1, 1], [], []>} : vector<8x128xbf16>, vector<128x512xbf16>, vector<8x512xf32> -> vector<8x512xf32>
    %248 = arith.addf %244, %247 : vector<8x512xf32>
    %249 = vector.extract_strided_slice %248 {offsets = [0, 0], sizes = [8, 128], strides = [1, 1]} : vector<8x512xf32> to vector<8x128xf32>
    %250 = arith.negf %249 : vector<8x128xf32>
    %251 = math.exp %250 : vector<8x128xf32>
    %cst_86 = arith.constant 1.000000e+00 : f32
    %252 = vector.broadcast %cst_86 : f32 to vector<8x128xf32>
    %253 = arith.addf %252, %251 : vector<8x128xf32>
    %254 = arith.divf %252, %253 : vector<8x128xf32>
    %255 = vector.extract_strided_slice %248 {offsets = [0, 128], sizes = [8, 128], strides = [1, 1]} : vector<8x512xf32> to vector<8x128xf32>
    %256 = arith.negf %255 : vector<8x128xf32>
    %257 = math.exp %256 : vector<8x128xf32>
    %cst_87 = arith.constant 1.000000e+00 : f32
    %258 = vector.broadcast %cst_87 : f32 to vector<8x128xf32>
    %259 = arith.addf %258, %257 : vector<8x128xf32>
    %260 = arith.divf %258, %259 : vector<8x128xf32>
    %261 = vector.extract_strided_slice %248 {offsets = [0, 256], sizes = [8, 128], strides = [1, 1]} : vector<8x512xf32> to vector<8x128xf32>
    %262 = math.tanh %261 : vector<8x128xf32>
    %263 = vector.extract_strided_slice %248 {offsets = [0, 384], sizes = [8, 128], strides = [1, 1]} : vector<8x512xf32> to vector<8x128xf32>
    %264 = arith.negf %263 : vector<8x128xf32>
    %265 = math.exp %264 : vector<8x128xf32>
    %cst_88 = arith.constant 1.000000e+00 : f32
    %266 = vector.broadcast %cst_88 : f32 to vector<8x128xf32>
    %267 = arith.addf %266, %265 : vector<8x128xf32>
    %268 = arith.divf %266, %267 : vector<8x128xf32>
    %269 = arith.mulf %260, %237 : vector<8x128xf32>
    %270 = arith.mulf %254, %262 : vector<8x128xf32>
    %271 = arith.addf %269, %270 : vector<8x128xf32>
    %272 = math.tanh %271 : vector<8x128xf32>
    %273 = arith.mulf %268, %272 : vector<8x128xf32>
    %c0_89 = arith.constant 0 : index
    %c7_90 = arith.constant 7 : index
    %c0_91 = arith.constant 0 : index
    %274 = vector.load %arg6[%c0_89, %c7_90, %c0_91] : memref<8x8x128xf32, #tpu.memory_space<vmem>>, vector<8x1x128xf32>
    %275 = vector.shape_cast %274 : vector<8x1x128xf32> to vector<8x128xf32>
    %276 = vector.shape_cast %273 : vector<8x128xf32> to vector<8x1x128xf32>
    tpu.vector_store %arg6[%c0_89, %c7_90, %c0_91], %276 {strides = array<i32>} : memref<8x8x128xf32, #tpu.memory_space<vmem>>, vector<8x1x128xf32>,
    %c0_92 = arith.constant 0 : index
    %c0_93 = arith.constant 0 : index
    %277 = vector.load %arg7[%c0_92, %c0_93] : memref<8x128xf32, #tpu.memory_space<vmem>>, vector<8x128xf32>
    tpu.vector_store %arg7[%c0_92, %c0_93], %273 {strides = array<i32>} : memref<8x128xf32, #tpu.memory_space<vmem>>, vector<8x128xf32>,
    %c0_94 = arith.constant 0 : index
    %c0_95 = arith.constant 0 : index
    %278 = vector.load %arg8[%c0_94, %c0_95] : memref<8x128xf32, #tpu.memory_space<vmem>>, vector<8x128xf32>
    tpu.vector_store %arg8[%c0_94, %c0_95], %271 {strides = array<i32>} : memref<8x128xf32, #tpu.memory_space<vmem>>, vector<8x128xf32>,
    return
  }
  func.func @transform_0(%arg0: i32, %arg1: i32) -> (i32, i32, i32) {
    %c0_i32 = arith.constant 0 : i32
    %c0_i32_0 = arith.constant 0 : i32
    return %arg0, %arg1, %c0_i32 : i32, i32, i32
  }
  func.func @transform_1(%arg0: i32, %arg1: i32) -> (i32, i32) {
    %c0_i32 = arith.constant 0 : i32
    %c0_i32_0 = arith.constant 0 : i32
    %c0_i32_1 = arith.constant 0 : i32
    return %c0_i32, %c0_i32_0 : i32, i32
  }
  func.func @transform_2(%arg0: i32, %arg1: i32) -> (i32, i32) {
    %c0_i32 = arith.constant 0 : i32
    %c0_i32_0 = arith.constant 0 : i32
    return %arg0, %c0_i32 : i32, i32
  }
  func.func @transform_3(%arg0: i32, %arg1: i32) -> (i32, i32) {
    %c0_i32 = arith.constant 0 : i32
    %c0_i32_0 = arith.constant 0 : i32
    return %arg0, %c0_i32 : i32, i32
  }
  func.func @transform_4(%arg0: i32, %arg1: i32) -> (i32, i32, i32) {
    %c0_i32 = arith.constant 0 : i32
    %c0_i32_0 = arith.constant 0 : i32
    return %arg0, %arg1, %c0_i32 : i32, i32, i32
  }
  func.func @transform_5(%arg0: i32, %arg1: i32) -> (i32, i32) {
    %c0_i32 = arith.constant 0 : i32
    %c0_i32_0 = arith.constant 0 : i32
    return %arg0, %c0_i32 : i32, i32
  }
  func.func @transform_6(%arg0: i32, %arg1: i32) -> (i32, i32) {
    %c0_i32 = arith.constant 0 : i32
    %c0_i32_0 = arith.constant 0 : i32
    return %arg0, %c0_i32 : i32, i32
  }
}

</mosaic_0001>

<llo_original>
// kernel: decoder_forward.1
$region0: #{decoder_forward.1}
  #allocation0 [shape = 'u32[]', space=smem, size = 0x4, offset = 0x4, fixed_abs, tag = 'smem constant byte address 0x4 - core index']
  #allocation1 [shape = 'u32[72,128]{1,0:T(1,128)}', space=vmem, size = 0x9000, scoped, tag = 'internal scratch']
  %s0 = inlined_call_operand.vmem [shape: f32[8,8,512], index: 0, kind: input, shape index: {}]
  %s1 = inlined_call_operand.vmem [shape: bf16[128,512], index: 1, kind: input, shape index: {}]
  %s2 = inlined_call_operand.vmem [shape: f32[8,128], index: 2, kind: input, shape index: {}]
  %s3 = inlined_call_operand.vmem [shape: f32[8,128], index: 3, kind: input, shape index: {}]
  %s4 = inlined_call_operand.vmem [shape: f32[8,8,128], index: 4, kind: output, shape index: {0}]
  %s5 = inlined_call_operand.vmem [shape: f32[8,128], index: 5, kind: output, shape index: {1}]
  %s6 = inlined_call_operand.vmem [shape: f32[8,128], index: 6, kind: output, shape index: {2}]
  %7 = xla_tuple %s4, %s5, %s6
  %s8 = sld [smem:[#allocation0]]
  $region46: #{decoder_forward.1} parent=0
    _
  %s10 = ssub.s32 1, %s8
  %s11 = scalar_select 0, %s10, %s8
  // Predicated region
  $region2: #{decoder_forward.1} parent=0 // pred_check
    _
  $region3: #{decoder_forward.1} parent=0 // pred_check_branch
    %13 = sbr.rel (0) target = $region5
  $region4: #{decoder_forward.1} parent=0 // pred_region
    _
  $region5: #{decoder_forward.1} parent=0 // pred_fallthru
    _
  // Predicated region
  $region6: #{decoder_forward.1} parent=0 // pred_check
    _
  $region7: #{decoder_forward.1} parent=0 // pred_check_branch
    %15 = sbr.rel (0) target = $region9
  $region8: #{decoder_forward.1} parent=0 // pred_region
    _
  $region9: #{decoder_forward.1} parent=0 // pred_fallthru
    _
  // Predicated region
  $region10: #{decoder_forward.1} parent=0 // pred_check
    _
  $region11: #{decoder_forward.1} parent=0 // pred_check_branch
    %17 = sbr.rel (0) target = $region13
  $region12: #{decoder_forward.1} parent=0 // pred_region
    _
  $region13: #{decoder_forward.1} parent=0 // pred_fallthru
    _
  // Predicated region
  $region14: #{decoder_forward.1} parent=0 // pred_check
    _
  $region15: #{decoder_forward.1} parent=0 // pred_check_branch
    %19 = sbr.rel (0) target = $region17
  $region16: #{decoder_forward.1} parent=0 // pred_region
    _
  $region17: #{decoder_forward.1} parent=0 // pred_fallthru
    _
  %p20 = scmp.eq.s32.totalorder 0, 0
  // Predicated region
  $region18: #{decoder_forward.1} parent=0 // pred_check
    %p21 = pneg %p20
  $region19: #{decoder_forward.1} parent=0 // pred_check_branch
    %23 = sbr.rel (%p21) target = $region21
  $region20: #{decoder_forward.1} parent=0 // pred_region
    %v24 = vld [vmem:[%s2] sm:$0xff]
    %25 = vst [vmem:[%s5] sm:$0xff] %v24
    %v26 = vld [vmem:[%s3] sm:$0xff]
    %27 = vst [vmem:[%s6] sm:$0xff] %v26
  $region21: #{decoder_forward.1} parent=0 // pred_fallthru
    _
  %v28 = vld [vmem:[%s5] sm:$0xff]
  %v29 = vld [vmem:[%s6] sm:$0xff]
  %v30 = vld [vmem:[%s0] ss:$8 sm:$0xf]
  %s31 = scalar_lea.vmem %s0, 32
  %v32 = vld [vmem:[%s31] ss:$8 sm:$0xf]
  %s33 = scalar_lea.vmem %s0, 64
  %v34 = vld [vmem:[%s33] ss:$8 sm:$0xf]
  %s35 = scalar_lea.vmem %s0, 96
  %v36 = vld [vmem:[%s35] ss:$8 sm:$0xf]
  %s37 = scalar_lea.vmem %s0, 128
  %v38 = vld [vmem:[%s37] ss:$8 sm:$0xf]
  %s39 = scalar_lea.vmem %s0, 160
  %v40 = vld [vmem:[%s39] ss:$8 sm:$0xf]
  %s41 = scalar_lea.vmem %s0, 192
  %v42 = vld [vmem:[%s41] ss:$8 sm:$0xf]
  %s43 = scalar_lea.vmem %s0, 224
  %v44 = vld [vmem:[%s43] ss:$8 sm:$0xf]
  %v45 = vpack.c.bf16 %v28, %v28
  %v46 = vld [vmem:[%s1] sm:$0xff]
  %v47 = vld [vmem:[%s1 + $0x8] sm:$0xff]
  %v48 = vld [vmem:[%s1 + $0x10] sm:$0xff]
  %v49 = vld [vmem:[%s1 + $0x18] sm:$0xff]
  %v50 = vld [vmem:[%s1 + $0x20] sm:$0xff]
  %v51 = vld [vmem:[%s1 + $0x28] sm:$0xff]
  %v52 = vld [vmem:[%s1 + $0x30] sm:$0xff]
  %v53 = vld [vmem:[%s1 + $0x38] sm:$0xff]
  %v54 = vld [vmem:[%s1 + $0x40] sm:$0xff]
  %v55 = vld [vmem:[%s1 + $0x48] sm:$0xff]
  %v56 = vld [vmem:[%s1 + $0x50] sm:$0xff]
  %v57 = vld [vmem:[%s1 + $0x58] sm:$0xff]
  %v58 = vld [vmem:[%s1 + $0x60] sm:$0xff]
  %v59 = vld [vmem:[%s1 + $0x68] sm:$0xff]
  %v60 = vld [vmem:[%s1 + $0x70] sm:$0xff]
  %v61 = vld [vmem:[%s1 + $0x78] sm:$0xff]
  %v62 = vld [vmem:[%s1 + $0x80] sm:$0xff]
  %v63 = vld [vmem:[%s1 + $0x88] sm:$0xff]
  %v64 = vld [vmem:[%s1 + $0x90] sm:$0xff]
  %v65 = vld [vmem:[%s1 + $0x98] sm:$0xff]
  %v66 = vld [vmem:[%s1 + $0xa0] sm:$0xff]
  %v67 = vld [vmem:[%s1 + $0xa8] sm:$0xff]
  %v68 = vld [vmem:[%s1 + $0xb0] sm:$0xff]
  %v69 = vld [vmem:[%s1 + $0xb8] sm:$0xff]
  %v70 = vld [vmem:[%s1 + $0xc0] sm:$0xff]
  %v71 = vld [vmem:[%s1 + $0xc8] sm:$0xff]
  %v72 = vld [vmem:[%s1 + $0xd0] sm:$0xff]
  %v73 = vld [vmem:[%s1 + $0xd8] sm:$0xff]
  %v74 = vld [vmem:[%s1 + $0xe0] sm:$0xff]
  %v75 = vld [vmem:[%s1 + $0xe8] sm:$0xff]
  %v76 = vld [vmem:[%s1 + $0xf0] sm:$0xff]
  %v77 = vld [vmem:[%s1 + $0xf8] sm:$0xff]
  %v110 = vunpack.c.l.b16 %v46
  %v111 = vunpack.c.h.b16 %v46
  %v112 = vunpack.c.l.b16 %v47
  %v113 = vunpack.c.h.b16 %v47
  %v114 = vunpack.c.l.b16 %v48
  %v115 = vunpack.c.h.b16 %v48
  %v116 = vunpack.c.l.b16 %v49
  %v117 = vunpack.c.h.b16 %v49
  %v118 = vunpack.c.l.b16 %v50
  %v119 = vunpack.c.h.b16 %v50
  %v120 = vunpack.c.l.b16 %v51
  %v121 = vunpack.c.h.b16 %v51
  %v122 = vunpack.c.l.b16 %v52
  %v123 = vunpack.c.h.b16 %v52
  %v124 = vunpack.c.l.b16 %v53
  %v125 = vunpack.c.h.b16 %v53
  %v126 = vunpack.c.l.b16 %v54
  %v127 = vunpack.c.h.b16 %v54
  %v128 = vunpack.c.l.b16 %v55
  %v129 = vunpack.c.h.b16 %v55
  %v130 = vunpack.c.l.b16 %v56
  %v131 = vunpack.c.h.b16 %v56
  %v132 = vunpack.c.l.b16 %v57
  %v133 = vunpack.c.h.b16 %v57
  %v134 = vunpack.c.l.b16 %v58
  %v135 = vunpack.c.h.b16 %v58
  %v136 = vunpack.c.l.b16 %v59
  %v137 = vunpack.c.h.b16 %v59
  %v138 = vunpack.c.l.b16 %v60
  %v139 = vunpack.c.h.b16 %v60
  %v140 = vunpack.c.l.b16 %v61
  %v141 = vunpack.c.h.b16 %v61
  %v142 = vunpack.c.l.b16 %v62
  %v143 = vunpack.c.h.b16 %v62
  %v144 = vunpack.c.l.b16 %v63
  %v145 = vunpack.c.h.b16 %v63
  %v146 = vunpack.c.l.b16 %v64
  %v147 = vunpack.c.h.b16 %v64
  %v148 = vunpack.c.l.b16 %v65
  %v149 = vunpack.c.h.b16 %v65
  %v150 = vunpack.c.l.b16 %v66
  %v151 = vunpack.c.h.b16 %v66
  %v152 = vunpack.c.l.b16 %v67
  %v153 = vunpack.c.h.b16 %v67
  %v154 = vunpack.c.l.b16 %v68
  %v155 = vunpack.c.h.b16 %v68
  %v156 = vunpack.c.l.b16 %v69
  %v157 = vunpack.c.h.b16 %v69
  %v158 = vunpack.c.l.b16 %v70
  %v159 = vunpack.c.h.b16 %v70
  %v160 = vunpack.c.l.b16 %v71
  %v161 = vunpack.c.h.b16 %v71
  %v162 = vunpack.c.l.b16 %v72
  %v163 = vunpack.c.h.b16 %v72
  %v164 = vunpack.c.l.b16 %v73
  %v165 = vunpack.c.h.b16 %v73
  %v166 = vunpack.c.l.b16 %v74
  %v167 = vunpack.c.h.b16 %v74
  %v168 = vunpack.c.l.b16 %v75
  %v169 = vunpack.c.h.b16 %v75
  %v170 = vunpack.c.l.b16 %v76
  %v171 = vunpack.c.h.b16 %v76
  %v172 = vunpack.c.l.b16 %v77
  %v173 = vunpack.c.h.b16 %v77
  %v174 = vpack.c.b16 %v114, %v110
  %v175 = vpack.c.b16 %v115, %v111
  %v176 = vpack.c.b16 %v116, %v112
  %v177 = vpack.c.b16 %v117, %v113
  %v178 = vpack.c.b16 %v122, %v118
  %v179 = vpack.c.b16 %v123, %v119
  %v180 = vpack.c.b16 %v124, %v120
  %v181 = vpack.c.b16 %v125, %v121
  %v182 = vpack.c.b16 %v130, %v126
  %v183 = vpack.c.b16 %v131, %v127
  %v184 = vpack.c.b16 %v132, %v128
  %v185 = vpack.c.b16 %v133, %v129
  %v186 = vpack.c.b16 %v138, %v134
  %v187 = vpack.c.b16 %v139, %v135
  %v188 = vpack.c.b16 %v140, %v136
  %v189 = vpack.c.b16 %v141, %v137
  %v190 = vpack.c.b16 %v146, %v142
  %v191 = vpack.c.b16 %v147, %v143
  %v192 = vpack.c.b16 %v148, %v144
  %v193 = vpack.c.b16 %v149, %v145
  %v194 = vpack.c.b16 %v154, %v150
  %v195 = vpack.c.b16 %v155, %v151
  %v196 = vpack.c.b16 %v156, %v152
  %v197 = vpack.c.b16 %v157, %v153
  %v198 = vpack.c.b16 %v162, %v158
  %v199 = vpack.c.b16 %v163, %v159
  %v200 = vpack.c.b16 %v164, %v160
  %v201 = vpack.c.b16 %v165, %v161
  %v202 = vpack.c.b16 %v170, %v166
  %v203 = vpack.c.b16 %v171, %v167
  %v204 = vpack.c.b16 %v172, %v168
  %v205 = vpack.c.b16 %v173, %v169
  %238 = vmatpush.bf16.msra.mxu0 %v202
  %239 = vmatpush.bf16.msra.mxu0 %v198
  %240 = vmatpush.bf16.msra.mxu0 %v194
  %241 = vmatpush.bf16.msra.mxu0 %v190
  %242 = vmatpush.bf16.msra.mxu0 %v186
  %243 = vmatpush.bf16.msra.mxu0 %v182
  %244 = vmatpush.bf16.msra.mxu0 %v178
  %245 = vmatpush.bf16.msra.mxu0 %v174
  %246 = vmatmul.bf16.gmra.mxu0 %v45
  %v247 = vpop.f32.mrf.mxu0
  %v248 = vadd.f32 0.0, %v247
  %v249 = vpop.f32.mrf.mxu0
  %250 = vdwg.mxu0
  %251 = vmatpush.bf16.msra.mxu0 %v203
  %252 = vmatpush.bf16.msra.mxu0 %v199
  %253 = vmatpush.bf16.msra.mxu0 %v195
  %254 = vmatpush.bf16.msra.mxu0 %v191
  %255 = vmatpush.bf16.msra.mxu0 %v187
  %256 = vmatpush.bf16.msra.mxu0 %v183
  %257 = vmatpush.bf16.msra.mxu0 %v179
  %258 = vmatpush.bf16.msra.mxu0 %v175
  %259 = vmatmul.bf16.gmra.mxu0 %v45
  %v260 = vpop.f32.mrf.mxu0
  %v261 = vadd.f32 0.0, %v260
  %v262 = vpop.f32.mrf.mxu0
  %263 = vdwg.mxu0
  %264 = vmatpush.bf16.msra.mxu0 %v204
  %265 = vmatpush.bf16.msra.mxu0 %v200
  %266 = vmatpush.bf16.msra.mxu0 %v196
  %267 = vmatpush.bf16.msra.mxu0 %v192
  %268 = vmatpush.bf16.msra.mxu0 %v188
  %269 = vmatpush.bf16.msra.mxu0 %v184
  %270 = vmatpush.bf16.msra.mxu0 %v180
  %271 = vmatpush.bf16.msra.mxu0 %v176
  %272 = vmatmul.bf16.gmra.mxu0 %v45
  %v273 = vpop.f32.mrf.mxu0
  %v274 = vadd.f32 0.0, %v273
  %v275 = vpop.f32.mrf.mxu0
  %276 = vdwg.mxu0
  %277 = vmatpush.bf16.msra.mxu0 %v205
  %278 = vmatpush.bf16.msra.mxu0 %v201
  %279 = vmatpush.bf16.msra.mxu0 %v197
  %280 = vmatpush.bf16.msra.mxu0 %v193
  %281 = vmatpush.bf16.msra.mxu0 %v189
  %282 = vmatpush.bf16.msra.mxu0 %v185
  %283 = vmatpush.bf16.msra.mxu0 %v181
  %284 = vmatpush.bf16.msra.mxu0 %v177
  %285 = vmatmul.bf16.gmra.mxu0 %v45
  %v286 = vpop.f32.mrf.mxu0
  %v287 = vadd.f32 0.0, %v286
  %v288 = vpop.f32.mrf.mxu0
  %289 = vdwg.mxu0
  %v294 = vrot.slane %v261, 7
  %v295 = vrot.slane %v274, 6
  %v296 = vrot.slane %v287, 5
  %vm297 = vcmask 1040384
  %v298 = vsel %vm297, %v248, %v294
  %vm299 = vcmask 1042434
  %v300 = vsel %vm299, %v295, %v296
  %vm301 = vcmask 1041408
  %v302 = vsel %vm301, %v298, %v300
  %vm303 = vcmask 1041409
  %v304 = vsel %vm303, %v248, %v294
  %vm305 = vcmask 1043459
  %v306 = vsel %vm305, %v295, %v296
  %vm307 = vcmask 1042433
  %v308 = vsel %vm307, %v304, %v306
  %v309 = vrot.slane %v308, 1
  %v310 = vsel %vm299, %v248, %v294
  %vm311 = vcmask 1044484
  %v312 = vsel %vm311, %v295, %v296
  %vm313 = vcmask 1043458
  %v314 = vsel %vm313, %v310, %v312
  %v315 = vrot.slane %v314, 2
  %v316 = vsel %vm305, %v248, %v294
  %vm317 = vcmask 1045509
  %v318 = vsel %vm317, %v295, %v296
  %vm319 = vcmask 1044483
  %v320 = vsel %vm319, %v316, %v318
  %v321 = vrot.slane %v320, 3
  %v322 = vsel %vm311, %v248, %v294
  %vm323 = vcmask 1046534
  %v324 = vsel %vm323, %v295, %v296
  %vm325 = vcmask 1045508
  %v326 = vsel %vm325, %v322, %v324
  %v327 = vrot.slane %v326, 4
  %v328 = vsel %vm317, %v248, %v294
  %vm329 = vcmask 1046528
  %v330 = vsel %vm329, %v296, %v295
  %vm331 = vcmask 1046533
  %v332 = vsel %vm331, %v328, %v330
  %v333 = vrot.slane %v332, 5
  %v334 = vsel %vm323, %v248, %v294
  %v335 = vsel %vm297, %v295, %v296
  %vm336 = vcmask 1045504
  %v337 = vsel %vm336, %v335, %v334
  %v338 = vrot.slane %v337, 6
  %v339 = vsel %vm329, %v294, %v248
  %v340 = vsel %vm303, %v295, %v296
  %vm341 = vcmask 1046529
  %v342 = vsel %vm341, %v340, %v339
  %v343 = vrot.slane %v342, 7
  %v352 = vadd.f32 %v30, %v302
  %v353 = vadd.f32 %v32, %v309
  %v354 = vadd.f32 %v34, %v315
  %v355 = vadd.f32 %v36, %v321
  %v356 = vadd.f32 %v38, %v327
  %v357 = vadd.f32 %v40, %v333
  %v358 = vadd.f32 %v42, %v338
  %v359 = vadd.f32 %v44, %v343
  %v360 = vxor.u32 %v352, 2147483648
  %v361 = vxor.u32 %v353, 2147483648
  %v362 = vxor.u32 %v354, 2147483648
  %v363 = vxor.u32 %v355, 2147483648
  %v364 = vxor.u32 %v356, 2147483648
  %v365 = vxor.u32 %v357, 2147483648
  %v366 = vxor.u32 %v358, 2147483648
  %v367 = vxor.u32 %v359, 2147483648
  %v368 = vmul.f32 %v360, 1.442695
  %v369 = vpow.pop %v368
  %v370 = vmul.f32 %v361, 1.442695
  %v371 = vpow.pop %v370
  %v372 = vmul.f32 %v362, 1.442695
  %v373 = vpow.pop %v372
  %v374 = vmul.f32 %v363, 1.442695
  %v375 = vpow.pop %v374
  %v376 = vmul.f32 %v364, 1.442695
  %v377 = vpow.pop %v376
  %v378 = vmul.f32 %v365, 1.442695
  %v379 = vpow.pop %v378
  %v380 = vmul.f32 %v366, 1.442695
  %v381 = vpow.pop %v380
  %v382 = vmul.f32 %v367, 1.442695
  %v383 = vpow.pop %v382
  %v384 = vadd.f32 %v369, 1.0
  %v385 = vadd.f32 %v371, 1.0
  %v386 = vadd.f32 %v373, 1.0
  %v387 = vadd.f32 %v375, 1.0
  %v388 = vadd.f32 %v377, 1.0
  %v389 = vadd.f32 %v379, 1.0
  %v390 = vadd.f32 %v381, 1.0
  %v391 = vadd.f32 %v383, 1.0
  %v392 = vrcp.pop %v384
  %v393 = vmul.f32 %v384, %v392
  %v394 = vsub.f32 1.0, %v393
  %v395 = vmul.f32 %v392, %v394
  %v396 = vadd.f32 %v392, %v395
  %vm397 = vweird.f32 %v384
  %vm398 = vweird.f32 %v392
  %vm399 = vmor %vm397, %vm398
  %v400 = vsel %vm399, %v392, %v396
  %v401 = vand.u32 2147483647, %v384
  %vm402 = vcmp.eq.f32.partialorder %v401, 8.507059e+37
  %v403 = vand.u32 %v384, 2147483648
  %v404 = vor.u32 1.1754944e-38, %v403
  %v405 = vsel %vm402, %v404, %v400
  %v406 = vmul.f32 1.0, %v405
  %v407 = vrcp.pop %v385
  %v408 = vmul.f32 %v385, %v407
  %v409 = vsub.f32 1.0, %v408
  %v410 = vmul.f32 %v407, %v409
  %v411 = vadd.f32 %v407, %v410
  %vm412 = vweird.f32 %v385
  %vm413 = vweird.f32 %v407
  %vm414 = vmor %vm412, %vm413
  %v415 = vsel %vm414, %v407, %v411
  %v416 = vand.u32 2147483647, %v385
  %vm417 = vcmp.eq.f32.partialorder %v416, 8.507059e+37
  %v418 = vand.u32 %v385, 2147483648
  %v419 = vor.u32 1.1754944e-38, %v418
  %v420 = vsel %vm417, %v419, %v415
  %v421 = vmul.f32 1.0, %v420
  %v422 = vrcp.pop %v386
  %v423 = vmul.f32 %v386, %v422
  %v424 = vsub.f32 1.0, %v423
  %v425 = vmul.f32 %v422, %v424
  %v426 = vadd.f32 %v422, %v425
  %vm427 = vweird.f32 %v386
  %vm428 = vweird.f32 %v422
  %vm429 = vmor %vm427, %vm428
  %v430 = vsel %vm429, %v422, %v426
  %v431 = vand.u32 2147483647, %v386
  %vm432 = vcmp.eq.f32.partialorder %v431, 8.507059e+37
  %v433 = vand.u32 %v386, 2147483648
  %v434 = vor.u32 1.1754944e-38, %v433
  %v435 = vsel %vm432, %v434, %v430
  %v436 = vmul.f32 1.0, %v435
  %v437 = vrcp.pop %v387
  %v438 = vmul.f32 %v387, %v437
  %v439 = vsub.f32 1.0, %v438
  %v440 = vmul.f32 %v437, %v439
  %v441 = vadd.f32 %v437, %v440
  %vm442 = vweird.f32 %v387
  %vm443 = vweird.f32 %v437
  %vm444 = vmor %vm442, %vm443
  %v445 = vsel %vm444, %v437, %v441
  %v446 = vand.u32 2147483647, %v387
  %vm447 = vcmp.eq.f32.partialorder %v446, 8.507059e+37
  %v448 = vand.u32 %v387, 2147483648
  %v449 = vor.u32 1.1754944e-38, %v448
  %v450 = vsel %vm447, %v449, %v445
  %v451 = vmul.f32 1.0, %v450
  %v452 = vrcp.pop %v388
  %v453 = vmul.f32 %v388, %v452
  %v454 = vsub.f32 1.0, %v453
  %v455 = vmul.f32 %v452, %v454
  %v456 = vadd.f32 %v452, %v455
  %vm457 = vweird.f32 %v388
  %vm458 = vweird.f32 %v452
  %vm459 = vmor %vm457, %vm458
  %v460 = vsel %vm459, %v452, %v456
  %v461 = vand.u32 2147483647, %v388
  %vm462 = vcmp.eq.f32.partialorder %v461, 8.507059e+37
  %v463 = vand.u32 %v388, 2147483648
  %v464 = vor.u32 1.1754944e-38, %v463
  %v465 = vsel %vm462, %v464, %v460
  %v466 = vmul.f32 1.0, %v465
  %v467 = vrcp.pop %v389
  %v468 = vmul.f32 %v389, %v467
  %v469 = vsub.f32 1.0, %v468
  %v470 = vmul.f32 %v467, %v469
  %v471 = vadd.f32 %v467, %v470
  %vm472 = vweird.f32 %v389
  %vm473 = vweird.f32 %v467
  %vm474 = vmor %vm472, %vm473
  %v475 = vsel %vm474, %v467, %v471
  %v476 = vand.u32 2147483647, %v389
  %vm477 = vcmp.eq.f32.partialorder %v476, 8.507059e+37
  %v478 = vand.u32 %v389, 2147483648
  %v479 = vor.u32 1.1754944e-38, %v478
  %v480 = vsel %vm477, %v479, %v475
  %v481 = vmul.f32 1.0, %v480
  %v482 = vrcp.pop %v390
  %v483 = vmul.f32 %v390, %v482
  %v484 = vsub.f32 1.0, %v483
  %v485 = vmul.f32 %v482, %v484
  %v486 = vadd.f32 %v482, %v485
  %vm487 = vweird.f32 %v390
  %vm488 = vweird.f32 %v482
  %vm489 = vmor %vm487, %vm488
  %v490 = vsel %vm489, %v482, %v486
  %v491 = vand.u32 2147483647, %v390
  %vm492 = vcmp.eq.f32.partialorder %v491, 8.507059e+37
  %v493 = vand.u32 %v390, 2147483648
  %v494 = vor.u32 1.1754944e-38, %v493
  %v495 = vsel %vm492, %v494, %v490
  %v496 = vmul.f32 1.0, %v495
  %v497 = vrcp.pop %v391
  %v498 = vmul.f32 %v391, %v497
  %v499 = vsub.f32 1.0, %v498
  %v500 = vmul.f32 %v497, %v499
  %v501 = vadd.f32 %v497, %v500
  %vm502 = vweird.f32 %v391
  %vm503 = vweird.f32 %v497
  %vm504 = vmor %vm502, %vm503
  %v505 = vsel %vm504, %v497, %v501
  %v506 = vand.u32 2147483647, %v391
  %vm507 = vcmp.eq.f32.partialorder %v506, 8.507059e+37
  %v508 = vand.u32 %v391, 2147483648
  %v509 = vor.u32 1.1754944e-38, %v508
  %v510 = vsel %vm507, %v509, %v505
  %v511 = vmul.f32 1.0, %v510
  %v520 = vrot.slane %v352, 1
  %v521 = vrot.slane %v353, 1
  %v522 = vrot.slane %v354, 1
  %v523 = vrot.slane %v355, 1
  %v524 = vrot.slane %v356, 1
  %v525 = vrot.slane %v357, 1
  %v526 = vrot.slane %v358, 1
  %v527 = vrot.slane %v359, 1
  %v536 = vxor.u32 %v520, 2147483648
  %v537 = vxor.u32 %v521, 2147483648
  %v538 = vxor.u32 %v522, 2147483648
  %v539 = vxor.u32 %v523, 2147483648
  %v540 = vxor.u32 %v524, 2147483648
  %v541 = vxor.u32 %v525, 2147483648
  %v542 = vxor.u32 %v526, 2147483648
  %v543 = vxor.u32 %v527, 2147483648
  %v544 = vmul.f32 %v536, 1.442695
  %v545 = vpow.pop %v544
  %v546 = vmul.f32 %v537, 1.442695
  %v547 = vpow.pop %v546
  %v548 = vmul.f32 %v538, 1.442695
  %v549 = vpow.pop %v548
  %v550 = vmul.f32 %v539, 1.442695
  %v551 = vpow.pop %v550
  %v552 = vmul.f32 %v540, 1.442695
  %v553 = vpow.pop %v552
  %v554 = vmul.f32 %v541, 1.442695
  %v555 = vpow.pop %v554
  %v556 = vmul.f32 %v542, 1.442695
  %v557 = vpow.pop %v556
  %v558 = vmul.f32 %v543, 1.442695
  %v559 = vpow.pop %v558
  %v560 = vadd.f32 %v545, 1.0
  %v561 = vadd.f32 %v547, 1.0
  %v562 = vadd.f32 %v549, 1.0
  %v563 = vadd.f32 %v551, 1.0
  %v564 = vadd.f32 %v553, 1.0
  %v565 = vadd.f32 %v555, 1.0
  %v566 = vadd.f32 %v557, 1.0
  %v567 = vadd.f32 %v559, 1.0
  %v568 = vrcp.pop %v560
  %v569 = vmul.f32 %v560, %v568
  %v570 = vsub.f32 1.0, %v569
  %v571 = vmul.f32 %v568, %v570
  %v572 = vadd.f32 %v568, %v571
  %vm573 = vweird.f32 %v560
  %vm574 = vweird.f32 %v568
  %vm575 = vmor %vm573, %vm574
  %v576 = vsel %vm575, %v568, %v572
  %v577 = vand.u32 2147483647, %v560
  %vm578 = vcmp.eq.f32.partialorder %v577, 8.507059e+37
  %v579 = vand.u32 %v560, 2147483648
  %v580 = vor.u32 1.1754944e-38, %v579
  %v581 = vsel %vm578, %v580, %v576
  %v582 = vmul.f32 1.0, %v581
  %v583 = vrcp.pop %v561
  %v584 = vmul.f32 %v561, %v583
  %v585 = vsub.f32 1.0, %v584
  %v586 = vmul.f32 %v583, %v585
  %v587 = vadd.f32 %v583, %v586
  %vm588 = vweird.f32 %v561
  %vm589 = vweird.f32 %v583
  %vm590 = vmor %vm588, %vm589
  %v591 = vsel %vm590, %v583, %v587
  %v592 = vand.u32 2147483647, %v561
  %vm593 = vcmp.eq.f32.partialorder %v592, 8.507059e+37
  %v594 = vand.u32 %v561, 2147483648
  %v595 = vor.u32 1.1754944e-38, %v594
  %v596 = vsel %vm593, %v595, %v591
  %v597 = vmul.f32 1.0, %v596
  %v598 = vrcp.pop %v562
  %v599 = vmul.f32 %v562, %v598
  %v600 = vsub.f32 1.0, %v599
  %v601 = vmul.f32 %v598, %v600
  %v602 = vadd.f32 %v598, %v601
  %vm603 = vweird.f32 %v562
  %vm604 = vweird.f32 %v598
  %vm605 = vmor %vm603, %vm604
  %v606 = vsel %vm605, %v598, %v602
  %v607 = vand.u32 2147483647, %v562
  %vm608 = vcmp.eq.f32.partialorder %v607, 8.507059e+37
  %v609 = vand.u32 %v562, 2147483648
  %v610 = vor.u32 1.1754944e-38, %v609
  %v611 = vsel %vm608, %v610, %v606
  %v612 = vmul.f32 1.0, %v611
  %v613 = vrcp.pop %v563
  %v614 = vmul.f32 %v563, %v613
  %v615 = vsub.f32 1.0, %v614
  %v616 = vmul.f32 %v613, %v615
  %v617 = vadd.f32 %v613, %v616
  %vm618 = vweird.f32 %v563
  %vm619 = vweird.f32 %v613
  %vm620 = vmor %vm618, %vm619
  %v621 = vsel %vm620, %v613, %v617
  %v622 = vand.u32 2147483647, %v563
  %vm623 = vcmp.eq.f32.partialorder %v622, 8.507059e+37
  %v624 = vand.u32 %v563, 2147483648
  %v625 = vor.u32 1.1754944e-38, %v624
  %v626 = vsel %vm623, %v625, %v621
  %v627 = vmul.f32 1.0, %v626
  %v628 = vrcp.pop %v564
  %v629 = vmul.f32 %v564, %v628
  %v630 = vsub.f32 1.0, %v629
  %v631 = vmul.f32 %v628, %v630
  %v632 = vadd.f32 %v628, %v631
  %vm633 = vweird.f32 %v564
  %vm634 = vweird.f32 %v628
  %vm635 = vmor %vm633, %vm634
  %v636 = vsel %vm635, %v628, %v632
  %v637 = vand.u32 2147483647, %v564
  %vm638 = vcmp.eq.f32.partialorder %v637, 8.507059e+37
  %v639 = vand.u32 %v564, 2147483648
  %v640 = vor.u32 1.1754944e-38, %v639
  %v641 = vsel %vm638, %v640, %v636
  %v642 = vmul.f32 1.0, %v641
  %v643 = vrcp.pop %v565
  %v644 = vmul.f32 %v565, %v643
  %v645 = vsub.f32 1.0, %v644
  %v646 = vmul.f32 %v643, %v645
  %v647 = vadd.f32 %v643, %v646
  %vm648 = vweird.f32 %v565
  %vm649 = vweird.f32 %v643
  %vm650 = vmor %vm648, %vm649
  %v651 = vsel %vm650, %v643, %v647
  %v652 = vand.u32 2147483647, %v565
  %vm653 = vcmp.eq.f32.partialorder %v652, 8.507059e+37
  %v654 = vand.u32 %v565, 2147483648
  %v655 = vor.u32 1.1754944e-38, %v654
  %v656 = vsel %vm653, %v655, %v651
  %v657 = vmul.f32 1.0, %v656
  %v658 = vrcp.pop %v566
  %v659 = vmul.f32 %v566, %v658
  %v660 = vsub.f32 1.0, %v659
  %v661 = vmul.f32 %v658, %v660
  %v662 = vadd.f32 %v658, %v661
  %vm663 = vweird.f32 %v566
  %vm664 = vweird.f32 %v658
  %vm665 = vmor %vm663, %vm664
  %v666 = vsel %vm665, %v658, %v662
  %v667 = vand.u32 2147483647, %v566
  %vm668 = vcmp.eq.f32.partialorder %v667, 8.507059e+37
  %v669 = vand.u32 %v566, 2147483648
  %v670 = vor.u32 1.1754944e-38, %v669
  %v671 = vsel %vm668, %v670, %v666
  %v672 = vmul.f32 1.0, %v671
  %v673 = vrcp.pop %v567
  %v674 = vmul.f32 %v567, %v673
  %v675 = vsub.f32 1.0, %v674
  %v676 = vmul.f32 %v673, %v675
  %v677 = vadd.f32 %v673, %v676
  %vm678 = vweird.f32 %v567
  %vm679 = vweird.f32 %v673
  %vm680 = vmor %vm678, %vm679
  %v681 = vsel %vm680, %v673, %v677
  %v682 = vand.u32 2147483647, %v567
  %vm683 = vcmp.eq.f32.partialorder %v682, 8.507059e+37
  %v684 = vand.u32 %v567, 2147483648
  %v685 = vor.u32 1.1754944e-38, %v684
  %v686 = vsel %vm683, %v685, %v681
  %v687 = vmul.f32 1.0, %v686
  %v688 = vrot.slane %v352, 2
  %v689 = vrot.slane %v353, 2
  %v690 = vrot.slane %v354, 2
  %v691 = vrot.slane %v355, 2
  %v692 = vrot.slane %v356, 2
  %v693 = vrot.slane %v357, 2
  %v694 = vrot.slane %v358, 2
  %v695 = vrot.slane %v359, 2
  %v704 = vtanh.pop %v688
  %v705 = vtanh.pop %v689
  %v706 = vtanh.pop %v690
  %v707 = vtanh.pop %v691
  %v708 = vtanh.pop %v692
  %v709 = vtanh.pop %v693
  %v710 = vtanh.pop %v694
  %v711 = vtanh.pop %v695
  %v712 = vrot.slane %v352, 3
  %v713 = vrot.slane %v353, 3
  %v714 = vrot.slane %v354, 3
  %v715 = vrot.slane %v355, 3
  %v716 = vrot.slane %v356, 3
  %v717 = vrot.slane %v357, 3
  %v718 = vrot.slane %v358, 3
  %v719 = vrot.slane %v359, 3
  %v728 = vxor.u32 %v712, 2147483648
  %v729 = vxor.u32 %v713, 2147483648
  %v730 = vxor.u32 %v714, 2147483648
  %v731 = vxor.u32 %v715, 2147483648
  %v732 = vxor.u32 %v716, 2147483648
  %v733 = vxor.u32 %v717, 2147483648
  %v734 = vxor.u32 %v718, 2147483648
  %v735 = vxor.u32 %v719, 2147483648
  %v736 = vmul.f32 %v728, 1.442695
  %v737 = vpow.pop %v736
  %v738 = vmul.f32 %v729, 1.442695
  %v739 = vpow.pop %v738
  %v740 = vmul.f32 %v730, 1.442695
  %v741 = vpow.pop %v740
  %v742 = vmul.f32 %v731, 1.442695
  %v743 = vpow.pop %v742
  %v744 = vmul.f32 %v732, 1.442695
  %v745 = vpow.pop %v744
  %v746 = vmul.f32 %v733, 1.442695
  %v747 = vpow.pop %v746
  %v748 = vmul.f32 %v734, 1.442695
  %v749 = vpow.pop %v748
  %v750 = vmul.f32 %v735, 1.442695
  %v751 = vpow.pop %v750
  %v752 = vadd.f32 %v737, 1.0
  %v753 = vadd.f32 %v739, 1.0
  %v754 = vadd.f32 %v741, 1.0
  %v755 = vadd.f32 %v743, 1.0
  %v756 = vadd.f32 %v745, 1.0
  %v757 = vadd.f32 %v747, 1.0
  %v758 = vadd.f32 %v749, 1.0
  %v759 = vadd.f32 %v751, 1.0
  %v760 = vrcp.pop %v752
  %v761 = vmul.f32 %v752, %v760
  %v762 = vsub.f32 1.0, %v761
  %v763 = vmul.f32 %v760, %v762
  %v764 = vadd.f32 %v760, %v763
  %vm765 = vweird.f32 %v752
  %vm766 = vweird.f32 %v760
  %vm767 = vmor %vm765, %vm766
  %v768 = vsel %vm767, %v760, %v764
  %v769 = vand.u32 2147483647, %v752
  %vm770 = vcmp.eq.f32.partialorder %v769, 8.507059e+37
  %v771 = vand.u32 %v752, 2147483648
  %v772 = vor.u32 1.1754944e-38, %v771
  %v773 = vsel %vm770, %v772, %v768
  %v774 = vmul.f32 1.0, %v773
  %v775 = vrcp.pop %v753
  %v776 = vmul.f32 %v753, %v775
  %v777 = vsub.f32 1.0, %v776
  %v778 = vmul.f32 %v775, %v777
  %v779 = vadd.f32 %v775, %v778
  %vm780 = vweird.f32 %v753
  %vm781 = vweird.f32 %v775
  %vm782 = vmor %vm780, %vm781
  %v783 = vsel %vm782, %v775, %v779
  %v784 = vand.u32 2147483647, %v753
  %vm785 = vcmp.eq.f32.partialorder %v784, 8.507059e+37
  %v786 = vand.u32 %v753, 2147483648
  %v787 = vor.u32 1.1754944e-38, %v786
  %v788 = vsel %vm785, %v787, %v783
  %v789 = vmul.f32 1.0, %v788
  %v790 = vrcp.pop %v754
  %v791 = vmul.f32 %v754, %v790
  %v792 = vsub.f32 1.0, %v791
  %v793 = vmul.f32 %v790, %v792
  %v794 = vadd.f32 %v790, %v793
  %vm795 = vweird.f32 %v754
  %vm796 = vweird.f32 %v790
  %vm797 = vmor %vm795, %vm796
  %v798 = vsel %vm797, %v790, %v794
  %v799 = vand.u32 2147483647, %v754
  %vm800 = vcmp.eq.f32.partialorder %v799, 8.507059e+37
  %v801 = vand.u32 %v754, 2147483648
  %v802 = vor.u32 1.1754944e-38, %v801
  %v803 = vsel %vm800, %v802, %v798
  %v804 = vmul.f32 1.0, %v803
  %v805 = vrcp.pop %v755
  %v806 = vmul.f32 %v755, %v805
  %v807 = vsub.f32 1.0, %v806
  %v808 = vmul.f32 %v805, %v807
  %v809 = vadd.f32 %v805, %v808
  %vm810 = vweird.f32 %v755
  %vm811 = vweird.f32 %v805
  %vm812 = vmor %vm810, %vm811
  %v813 = vsel %vm812, %v805, %v809
  %v814 = vand.u32 2147483647, %v755
  %vm815 = vcmp.eq.f32.partialorder %v814, 8.507059e+37
  %v816 = vand.u32 %v755, 2147483648
  %v817 = vor.u32 1.1754944e-38, %v816
  %v818 = vsel %vm815, %v817, %v813
  %v819 = vmul.f32 1.0, %v818
  %v820 = vrcp.pop %v756
  %v821 = vmul.f32 %v756, %v820
  %v822 = vsub.f32 1.0, %v821
  %v823 = vmul.f32 %v820, %v822
  %v824 = vadd.f32 %v820, %v823
  %vm825 = vweird.f32 %v756
  %vm826 = vweird.f32 %v820
  %vm827 = vmor %vm825, %vm826
  %v828 = vsel %vm827, %v820, %v824
  %v829 = vand.u32 2147483647, %v756
  %vm830 = vcmp.eq.f32.partialorder %v829, 8.507059e+37
  %v831 = vand.u32 %v756, 2147483648
  %v832 = vor.u32 1.1754944e-38, %v831
  %v833 = vsel %vm830, %v832, %v828
  %v834 = vmul.f32 1.0, %v833
  %v835 = vrcp.pop %v757
  %v836 = vmul.f32 %v757, %v835
  %v837 = vsub.f32 1.0, %v836
  %v838 = vmul.f32 %v835, %v837
  %v839 = vadd.f32 %v835, %v838
  %vm840 = vweird.f32 %v757
  %vm841 = vweird.f32 %v835
  %vm842 = vmor %vm840, %vm841
  %v843 = vsel %vm842, %v835, %v839
  %v844 = vand.u32 2147483647, %v757
  %vm845 = vcmp.eq.f32.partialorder %v844, 8.507059e+37
  %v846 = vand.u32 %v757, 2147483648
  %v847 = vor.u32 1.1754944e-38, %v846
  %v848 = vsel %vm845, %v847, %v843
  %v849 = vmul.f32 1.0, %v848
  %v850 = vrcp.pop %v758
  %v851 = vmul.f32 %v758, %v850
  %v852 = vsub.f32 1.0, %v851
  %v853 = vmul.f32 %v850, %v852
  %v854 = vadd.f32 %v850, %v853
  %vm855 = vweird.f32 %v758
  %vm856 = vweird.f32 %v850
  %vm857 = vmor %vm855, %vm856
  %v858 = vsel %vm857, %v850, %v854
  %v859 = vand.u32 2147483647, %v758
  %vm860 = vcmp.eq.f32.partialorder %v859, 8.507059e+37
  %v861 = vand.u32 %v758, 2147483648
  %v862 = vor.u32 1.1754944e-38, %v861
  %v863 = vsel %vm860, %v862, %v858
  %v864 = vmul.f32 1.0, %v863
  %v865 = vrcp.pop %v759
  %v866 = vmul.f32 %v759, %v865
  %v867 = vsub.f32 1.0, %v866
  %v868 = vmul.f32 %v865, %v867
  %v869 = vadd.f32 %v865, %v868
  %vm870 = vweird.f32 %v759
  %vm871 = vweird.f32 %v865
  %vm872 = vmor %vm870, %vm871
  %v873 = vsel %vm872, %v865, %v869
  %v874 = vand.u32 2147483647, %v759
  %vm875 = vcmp.eq.f32.partialorder %v874, 8.507059e+37
  %v876 = vand.u32 %v759, 2147483648
  %v877 = vor.u32 1.1754944e-38, %v876
  %v878 = vsel %vm875, %v877, %v873
  %v879 = vmul.f32 1.0, %v878
  %v881 = vrot.slane %v29, 1
  %v882 = vrot.slane %v29, 2
  %v883 = vrot.slane %v29, 3
  %v884 = vrot.slane %v29, 4
  %v885 = vrot.slane %v29, 5
  %v886 = vrot.slane %v29, 6
  %v887 = vrot.slane %v29, 7
  %v895 = vmul.f32 %v582, %v29
  %v896 = vmul.f32 %v597, %v881
  %v897 = vmul.f32 %v612, %v882
  %v898 = vmul.f32 %v627, %v883
  %v899 = vmul.f32 %v642, %v884
  %v900 = vmul.f32 %v657, %v885
  %v901 = vmul.f32 %v672, %v886
  %v902 = vmul.f32 %v687, %v887
  %v903 = vmul.f32 %v406, %v704
  %v904 = vmul.f32 %v421, %v705
  %v905 = vmul.f32 %v436, %v706
  %v906 = vmul.f32 %v451, %v707
  %v907 = vmul.f32 %v466, %v708
  %v908 = vmul.f32 %v481, %v709
  %v909 = vmul.f32 %v496, %v710
  %v910 = vmul.f32 %v511, %v711
  %v911 = vadd.f32 %v895, %v903
  %v912 = vadd.f32 %v896, %v904
  %v913 = vadd.f32 %v897, %v905
  %v914 = vadd.f32 %v898, %v906
  %v915 = vadd.f32 %v899, %v907
  %v916 = vadd.f32 %v900, %v908
  %v917 = vadd.f32 %v901, %v909
  %v918 = vadd.f32 %v902, %v910
  %v919 = vtanh.pop %v911
  %v920 = vtanh.pop %v912
  %v921 = vtanh.pop %v913
  %v922 = vtanh.pop %v914
  %v923 = vtanh.pop %v915
  %v924 = vtanh.pop %v916
  %v925 = vtanh.pop %v917
  %v926 = vtanh.pop %v918
  %v927 = vmul.f32 %v774, %v919
  %v928 = vmul.f32 %v789, %v920
  %v929 = vmul.f32 %v804, %v921
  %v930 = vmul.f32 %v819, %v922
  %v931 = vmul.f32 %v834, %v923
  %v932 = vmul.f32 %v849, %v924
  %v933 = vmul.f32 %v864, %v925
  %v934 = vmul.f32 %v879, %v926
  %935 = vst [vmem:[%s4] sm:$0x1] %v927
  %936 = vst [vmem:[%s4 + $0x8] sm:$0x1] %v928
  %937 = vst [vmem:[%s4 + $0x10] sm:$0x1] %v929
  %938 = vst [vmem:[%s4 + $0x18] sm:$0x1] %v930
  %939 = vst [vmem:[%s4 + $0x20] sm:$0x1] %v931
  %940 = vst [vmem:[%s4 + $0x28] sm:$0x1] %v932
  %941 = vst [vmem:[%s4 + $0x30] sm:$0x1] %v933
  %942 = vst [vmem:[%s4 + $0x38] sm:$0x1] %v934
  %s943 = scalar_lea.vmem %s0, 1
  %v944 = vld [vmem:[%s943] ss:$8 sm:$0xf]
  %s945 = scalar_lea.vmem %s0, 33
  %v946 = vld [vmem:[%s945] ss:$8 sm:$0xf]
  %s947 = scalar_lea.vmem %s0, 65
  %v948 = vld [vmem:[%s947] ss:$8 sm:$0xf]
  %s949 = scalar_lea.vmem %s0, 97
  %v950 = vld [vmem:[%s949] ss:$8 sm:$0xf]
  %s951 = scalar_lea.vmem %s0, 129
  %v952 = vld [vmem:[%s951] ss:$8 sm:$0xf]
  %s953 = scalar_lea.vmem %s0, 161
  %v954 = vld [vmem:[%s953] ss:$8 sm:$0xf]
  %s955 = scalar_lea.vmem %s0, 193
  %v956 = vld [vmem:[%s955] ss:$8 sm:$0xf]
  %s957 = scalar_lea.vmem %s0, 225
  %v958 = vld [vmem:[%s957] ss:$8 sm:$0xf]
  %v959 = vpack.c.bf16 %v927, %v927
  %v960 = vpack.c.bf16 %v928, %v928
  %v961 = vpack.c.bf16 %v929, %v929
  %v962 = vpack.c.bf16 %v930, %v930
  %v963 = vpack.c.bf16 %v931, %v931
  %v964 = vpack.c.bf16 %v932, %v932
  %v965 = vpack.c.bf16 %v933, %v933
  %v966 = vpack.c.bf16 %v934, %v934
  %v967 = vld [vmem:[%s1] sm:$0xff]
  %v968 = vld [vmem:[%s1 + $0x8] sm:$0xff]
  %v969 = vld [vmem:[%s1 + $0x10] sm:$0xff]
  %v970 = vld [vmem:[%s1 + $0x18] sm:$0xff]
  %v971 = vld [vmem:[%s1 + $0x20] sm:$0xff]
  %v972 = vld [vmem:[%s1 + $0x28] sm:$0xff]
  %v973 = vld [vmem:[%s1 + $0x30] sm:$0xff]
  %v974 = vld [vmem:[%s1 + $0x38] sm:$0xff]
  %v975 = vld [vmem:[%s1 + $0x40] sm:$0xff]
  %v976 = vld [vmem:[%s1 + $0x48] sm:$0xff]
  %v977 = vld [vmem:[%s1 + $0x50] sm:$0xff]
  %v978 = vld [vmem:[%s1 + $0x58] sm:$0xff]
  %v979 = vld [vmem:[%s1 + $0x60] sm:$0xff]
  %v980 = vld [vmem:[%s1 + $0x68] sm:$0xff]
  %v981 = vld [vmem:[%s1 + $0x70] sm:$0xff]
  %v982 = vld [vmem:[%s1 + $0x78] sm:$0xff]
  %v983 = vld [vmem:[%s1 + $0x80] sm:$0xff]
  %v984 = vld [vmem:[%s1 + $0x88] sm:$0xff]
  %v985 = vld [vmem:[%s1 + $0x90] sm:$0xff]
  %v986 = vld [vmem:[%s1 + $0x98] sm:$0xff]
  %v987 = vld [vmem:[%s1 + $0xa0] sm:$0xff]
  %v988 = vld [vmem:[%s1 + $0xa8] sm:$0xff]
  %v989 = vld [vmem:[%s1 + $0xb0] sm:$0xff]
  %v990 = vld [vmem:[%s1 + $0xb8] sm:$0xff]
  %v991 = vld [vmem:[%s1 + $0xc0] sm:$0xff]
  %v992 = vld [vmem:[%s1 + $0xc8] sm:$0xff]
  %v993 = vld [vmem:[%s1 + $0xd0] sm:$0xff]
  %v994 = vld [vmem:[%s1 + $0xd8] sm:$0xff]
  %v995 = vld [vmem:[%s1 + $0xe0] sm:$0xff]
  %v996 = vld [vmem:[%s1 + $0xe8] sm:$0xff]
  %v997 = vld [vmem:[%s1 + $0xf0] sm:$0xff]
  %v998 = vld [vmem:[%s1 + $0xf8] sm:$0xff]
  %v1007 = vunpack.c.l.b16 %v959
  %v1008 = vunpack.c.l.b16 %v960
  %v1009 = vunpack.c.l.b16 %v961
  %v1010 = vunpack.c.l.b16 %v962
  %v1011 = vunpack.c.l.b16 %v963
  %v1012 = vunpack.c.l.b16 %v964
  %v1013 = vunpack.c.l.b16 %v965
  %v1014 = vunpack.c.l.b16 %v966
  %v1015 = vrot.slane %v1008, 7
  %v1016 = vsel %vm303, %v1015, %v1007
  %v1017 = vrot.slane %v1009, 6
  %v1018 = vsel %vm299, %v1017, %v1016
  %v1019 = vrot.slane %v1010, 5
  %v1020 = vsel %vm305, %v1019, %v1018
  %v1021 = vrot.slane %v1011, 4
  %v1022 = vsel %vm311, %v1021, %v1020
  %v1023 = vrot.slane %v1012, 3
  %v1024 = vsel %vm317, %v1023, %v1022
  %v1025 = vrot.slane %v1013, 2
  %v1026 = vsel %vm323, %v1025, %v1024
  %v1027 = vrot.slane %v1014, 1
  %vm1028 = vcmask 1047559
  %v1029 = vsel %vm1028, %v1027, %v1026
  %v1030 = vpack.c.b16 %v1029, %v1029
  %v1064 = vunpack.c.l.b16 %v967
  %v1065 = vunpack.c.h.b16 %v967
  %v1066 = vunpack.c.l.b16 %v968
  %v1067 = vunpack.c.h.b16 %v968
  %v1068 = vunpack.c.l.b16 %v969
  %v1069 = vunpack.c.h.b16 %v969
  %v1070 = vunpack.c.l.b16 %v970
  %v1071 = vunpack.c.h.b16 %v970
  %v1072 = vunpack.c.l.b16 %v971
  %v1073 = vunpack.c.h.b16 %v971
  %v1074 = vunpack.c.l.b16 %v972
  %v1075 = vunpack.c.h.b16 %v972
  %v1076 = vunpack.c.l.b16 %v973
  %v1077 = vunpack.c.h.b16 %v973
  %v1078 = vunpack.c.l.b16 %v974
  %v1079 = vunpack.c.h.b16 %v974
  %v1080 = vunpack.c.l.b16 %v975
  %v1081 = vunpack.c.h.b16 %v975
  %v1082 = vunpack.c.l.b16 %v976
  %v1083 = vunpack.c.h.b16 %v976
  %v1084 = vunpack.c.l.b16 %v977
  %v1085 = vunpack.c.h.b16 %v977
  %v1086 = vunpack.c.l.b16 %v978
  %v1087 = vunpack.c.h.b16 %v978
  %v1088 = vunpack.c.l.b16 %v979
  %v1089 = vunpack.c.h.b16 %v979
  %v1090 = vunpack.c.l.b16 %v980
  %v1091 = vunpack.c.h.b16 %v980
  %v1092 = vunpack.c.l.b16 %v981
  %v1093 = vunpack.c.h.b16 %v981
  %v1094 = vunpack.c.l.b16 %v982
  %v1095 = vunpack.c.h.b16 %v982
  %v1096 = vunpack.c.l.b16 %v983
  %v1097 = vunpack.c.h.b16 %v983
  %v1098 = vunpack.c.l.b16 %v984
  %v1099 = vunpack.c.h.b16 %v984
  %v1100 = vunpack.c.l.b16 %v985
  %v1101 = vunpack.c.h.b16 %v985
  %v1102 = vunpack.c.l.b16 %v986
  %v1103 = vunpack.c.h.b16 %v986
  %v1104 = vunpack.c.l.b16 %v987
  %v1105 = vunpack.c.h.b16 %v987
  %v1106 = vunpack.c.l.b16 %v988
  %v1107 = vunpack.c.h.b16 %v988
  %v1108 = vunpack.c.l.b16 %v989
  %v1109 = vunpack.c.h.b16 %v989
  %v1110 = vunpack.c.l.b16 %v990
  %v1111 = vunpack.c.h.b16 %v990
  %v1112 = vunpack.c.l.b16 %v991
  %v1113 = vunpack.c.h.b16 %v991
  %v1114 = vunpack.c.l.b16 %v992
  %v1115 = vunpack.c.h.b16 %v992
  %v1116 = vunpack.c.l.b16 %v993
  %v1117 = vunpack.c.h.b16 %v993
  %v1118 = vunpack.c.l.b16 %v994
  %v1119 = vunpack.c.h.b16 %v994
  %v1120 = vunpack.c.l.b16 %v995
  %v1121 = vunpack.c.h.b16 %v995
  %v1122 = vunpack.c.l.b16 %v996
  %v1123 = vunpack.c.h.b16 %v996
  %v1124 = vunpack.c.l.b16 %v997
  %v1125 = vunpack.c.h.b16 %v997
  %v1126 = vunpack.c.l.b16 %v998
  %v1127 = vunpack.c.h.b16 %v998
  %v1128 = vpack.c.b16 %v1068, %v1064
  %v1129 = vpack.c.b16 %v1069, %v1065
  %v1130 = vpack.c.b16 %v1070, %v1066
  %v1131 = vpack.c.b16 %v1071, %v1067
  %v1132 = vpack.c.b16 %v1076, %v1072
  %v1133 = vpack.c.b16 %v1077, %v1073
  %v1134 = vpack.c.b16 %v1078, %v1074
  %v1135 = vpack.c.b16 %v1079, %v1075
  %v1136 = vpack.c.b16 %v1084, %v1080
  %v1137 = vpack.c.b16 %v1085, %v1081
  %v1138 = vpack.c.b16 %v1086, %v1082
  %v1139 = vpack.c.b16 %v1087, %v1083
  %v1140 = vpack.c.b16 %v1092, %v1088
  %v1141 = vpack.c.b16 %v1093, %v1089
  %v1142 = vpack.c.b16 %v1094, %v1090
  %v1143 = vpack.c.b16 %v1095, %v1091
  %v1144 = vpack.c.b16 %v1100, %v1096
  %v1145 = vpack.c.b16 %v1101, %v1097
  %v1146 = vpack.c.b16 %v1102, %v1098
  %v1147 = vpack.c.b16 %v1103, %v1099
  %v1148 = vpack.c.b16 %v1108, %v1104
  %v1149 = vpack.c.b16 %v1109, %v1105
  %v1150 = vpack.c.b16 %v1110, %v1106
  %v1151 = vpack.c.b16 %v1111, %v1107
  %v1152 = vpack.c.b16 %v1116, %v1112
  %v1153 = vpack.c.b16 %v1117, %v1113
  %v1154 = vpack.c.b16 %v1118, %v1114
  %v1155 = vpack.c.b16 %v1119, %v1115
  %v1156 = vpack.c.b16 %v1124, %v1120
  %v1157 = vpack.c.b16 %v1125, %v1121
  %v1158 = vpack.c.b16 %v1126, %v1122
  %v1159 = vpack.c.b16 %v1127, %v1123
  %1192 = vmatpush.bf16.msra.mxu0 %v1156
  %1193 = vmatpush.bf16.msra.mxu0 %v1152
  %1194 = vmatpush.bf16.msra.mxu0 %v1148
  %1195 = vmatpush.bf16.msra.mxu0 %v1144
  %1196 = vmatpush.bf16.msra.mxu0 %v1140
  %1197 = vmatpush.bf16.msra.mxu0 %v1136
  %1198 = vmatpush.bf16.msra.mxu0 %v1132
  %1199 = vmatpush.bf16.msra.mxu0 %v1128
  %1200 = vmatmul.bf16.gmra.mxu0 %v1030
  %v1201 = vpop.f32.mrf.mxu0
  %v1202 = vadd.f32 0.0, %v1201
  %v1203 = vpop.f32.mrf.mxu0
  %1204 = vdwg.mxu0
  %1205 = vmatpush.bf16.msra.mxu0 %v1157
  %1206 = vmatpush.bf16.msra.mxu0 %v1153
  %1207 = vmatpush.bf16.msra.mxu0 %v1149
  %1208 = vmatpush.bf16.msra.mxu0 %v1145
  %1209 = vmatpush.bf16.msra.mxu0 %v1141
  %1210 = vmatpush.bf16.msra.mxu0 %v1137
  %1211 = vmatpush.bf16.msra.mxu0 %v1133
  %1212 = vmatpush.bf16.msra.mxu0 %v1129
  %1213 = vmatmul.bf16.gmra.mxu0 %v1030
  %v1214 = vpop.f32.mrf.mxu0
  %v1215 = vadd.f32 0.0, %v1214
  %v1216 = vpop.f32.mrf.mxu0
  %1217 = vdwg.mxu0
  %1218 = vmatpush.bf16.msra.mxu0 %v1158
  %1219 = vmatpush.bf16.msra.mxu0 %v1154
  %1220 = vmatpush.bf16.msra.mxu0 %v1150
  %1221 = vmatpush.bf16.msra.mxu0 %v1146
  %1222 = vmatpush.bf16.msra.mxu0 %v1142
  %1223 = vmatpush.bf16.msra.mxu0 %v1138
  %1224 = vmatpush.bf16.msra.mxu0 %v1134
  %1225 = vmatpush.bf16.msra.mxu0 %v1130
  %1226 = vmatmul.bf16.gmra.mxu0 %v1030
  %v1227 = vpop.f32.mrf.mxu0
  %v1228 = vadd.f32 0.0, %v1227
  %v1229 = vpop.f32.mrf.mxu0
  %1230 = vdwg.mxu0
  %1231 = vmatpush.bf16.msra.mxu0 %v1159
  %1232 = vmatpush.bf16.msra.mxu0 %v1155
  %1233 = vmatpush.bf16.msra.mxu0 %v1151
  %1234 = vmatpush.bf16.msra.mxu0 %v1147
  %1235 = vmatpush.bf16.msra.mxu0 %v1143
  %1236 = vmatpush.bf16.msra.mxu0 %v1139
  %1237 = vmatpush.bf16.msra.mxu0 %v1135
  %1238 = vmatpush.bf16.msra.mxu0 %v1131
  %1239 = vmatmul.bf16.gmra.mxu0 %v1030
  %v1240 = vpop.f32.mrf.mxu0
  %v1241 = vadd.f32 0.0, %v1240
  %v1242 = vpop.f32.mrf.mxu0
  %1243 = vdwg.mxu0
  %v1248 = vrot.slane %v1215, 7
  %v1249 = vrot.slane %v1228, 6
  %v1250 = vrot.slane %v1241, 5
  %v1251 = vsel %vm297, %v1202, %v1248
  %v1252 = vsel %vm299, %v1249, %v1250
  %v1253 = vsel %vm301, %v1251, %v1252
  %v1254 = vsel %vm303, %v1202, %v1248
  %v1255 = vsel %vm305, %v1249, %v1250
  %v1256 = vsel %vm307, %v1254, %v1255
  %v1257 = vrot.slane %v1256, 1
  %v1258 = vsel %vm299, %v1202, %v1248
  %v1259 = vsel %vm311, %v1249, %v1250
  %v1260 = vsel %vm313, %v1258, %v1259
  %v1261 = vrot.slane %v1260, 2
  %v1262 = vsel %vm305, %v1202, %v1248
  %v1263 = vsel %vm317, %v1249, %v1250
  %v1264 = vsel %vm319, %v1262, %v1263
  %v1265 = vrot.slane %v1264, 3
  %v1266 = vsel %vm311, %v1202, %v1248
  %v1267 = vsel %vm323, %v1249, %v1250
  %v1268 = vsel %vm325, %v1266, %v1267
  %v1269 = vrot.slane %v1268, 4
  %v1270 = vsel %vm317, %v1202, %v1248
  %v1271 = vsel %vm329, %v1250, %v1249
  %v1272 = vsel %vm331, %v1270, %v1271
  %v1273 = vrot.slane %v1272, 5
  %v1274 = vsel %vm323, %v1202, %v1248
  %v1275 = vsel %vm297, %v1249, %v1250
  %v1276 = vsel %vm336, %v1275, %v1274
  %v1277 = vrot.slane %v1276, 6
  %v1278 = vsel %vm329, %v1248, %v1202
  %v1279 = vsel %vm303, %v1249, %v1250
  %v1280 = vsel %vm341, %v1279, %v1278
  %v1281 = vrot.slane %v1280, 7
  %v1290 = vadd.f32 %v944, %v1253
  %v1291 = vadd.f32 %v946, %v1257
  %v1292 = vadd.f32 %v948, %v1261
  %v1293 = vadd.f32 %v950, %v1265
  %v1294 = vadd.f32 %v952, %v1269
  %v1295 = vadd.f32 %v954, %v1273
  %v1296 = vadd.f32 %v956, %v1277
  %v1297 = vadd.f32 %v958, %v1281
  %v1298 = vxor.u32 %v1290, 2147483648
  %v1299 = vxor.u32 %v1291, 2147483648
  %v1300 = vxor.u32 %v1292, 2147483648
  %v1301 = vxor.u32 %v1293, 2147483648
  %v1302 = vxor.u32 %v1294, 2147483648
  %v1303 = vxor.u32 %v1295, 2147483648
  %v1304 = vxor.u32 %v1296, 2147483648
  %v1305 = vxor.u32 %v1297, 2147483648
  %v1306 = vmul.f32 %v1298, 1.442695
  %v1307 = vpow.pop %v1306
  %v1308 = vmul.f32 %v1299, 1.442695
  %v1309 = vpow.pop %v1308
  %v1310 = vmul.f32 %v1300, 1.442695
  %v1311 = vpow.pop %v1310
  %v1312 = vmul.f32 %v1301, 1.442695
  %v1313 = vpow.pop %v1312
  %v1314 = vmul.f32 %v1302, 1.442695
  %v1315 = vpow.pop %v1314
  %v1316 = vmul.f32 %v1303, 1.442695
  %v1317 = vpow.pop %v1316
  %v1318 = vmul.f32 %v1304, 1.442695
  %v1319 = vpow.pop %v1318
  %v1320 = vmul.f32 %v1305, 1.442695
  %v1321 = vpow.pop %v1320
  %v1322 = vadd.f32 %v1307, 1.0
  %v1323 = vadd.f32 %v1309, 1.0
  %v1324 = vadd.f32 %v1311, 1.0
  %v1325 = vadd.f32 %v1313, 1.0
  %v1326 = vadd.f32 %v1315, 1.0
  %v1327 = vadd.f32 %v1317, 1.0
  %v1328 = vadd.f32 %v1319, 1.0
  %v1329 = vadd.f32 %v1321, 1.0
  %v1330 = vrcp.pop %v1322
  %v1331 = vmul.f32 %v1322, %v1330
  %v1332 = vsub.f32 1.0, %v1331
  %v1333 = vmul.f32 %v1330, %v1332
  %v1334 = vadd.f32 %v1330, %v1333
  %vm1335 = vweird.f32 %v1322
  %vm1336 = vweird.f32 %v1330
  %vm1337 = vmor %vm1335, %vm1336
  %v1338 = vsel %vm1337, %v1330, %v1334
  %v1339 = vand.u32 2147483647, %v1322
  %vm1340 = vcmp.eq.f32.partialorder %v1339, 8.507059e+37
  %v1341 = vand.u32 %v1322, 2147483648
  %v1342 = vor.u32 1.1754944e-38, %v1341
  %v1343 = vsel %vm1340, %v1342, %v1338
  %v1344 = vmul.f32 1.0, %v1343
  %v1345 = vrcp.pop %v1323
  %v1346 = vmul.f32 %v1323, %v1345
  %v1347 = vsub.f32 1.0, %v1346
  %v1348 = vmul.f32 %v1345, %v1347
  %v1349 = vadd.f32 %v1345, %v1348
  %vm1350 = vweird.f32 %v1323
  %vm1351 = vweird.f32 %v1345
  %vm1352 = vmor %vm1350, %vm1351
  %v1353 = vsel %vm1352, %v1345, %v1349
  %v1354 = vand.u32 2147483647, %v1323
  %vm1355 = vcmp.eq.f32.partialorder %v1354, 8.507059e+37
  %v1356 = vand.u32 %v1323, 2147483648
  %v1357 = vor.u32 1.1754944e-38, %v1356
  %v1358 = vsel %vm1355, %v1357, %v1353
  %v1359 = vmul.f32 1.0, %v1358
  %v1360 = vrcp.pop %v1324
  %v1361 = vmul.f32 %v1324, %v1360
  %v1362 = vsub.f32 1.0, %v1361
  %v1363 = vmul.f32 %v1360, %v1362
  %v1364 = vadd.f32 %v1360, %v1363
  %vm1365 = vweird.f32 %v1324
  %vm1366 = vweird.f32 %v1360
  %vm1367 = vmor %vm1365, %vm1366
  %v1368 = vsel %vm1367, %v1360, %v1364
  %v1369 = vand.u32 2147483647, %v1324
  %vm1370 = vcmp.eq.f32.partialorder %v1369, 8.507059e+37
  %v1371 = vand.u32 %v1324, 2147483648
  %v1372 = vor.u32 1.1754944e-38, %v1371
  %v1373 = vsel %vm1370, %v1372, %v1368
  %v1374 = vmul.f32 1.0, %v1373
  %v1375 = vrcp.pop %v1325
  %v1376 = vmul.f32 %v1325, %v1375
  %v1377 = vsub.f32 1.0, %v1376
  %v1378 = vmul.f32 %v1375, %v1377
  %v1379 = vadd.f32 %v1375, %v1378
  %vm1380 = vweird.f32 %v1325
  %vm1381 = vweird.f32 %v1375
  %vm1382 = vmor %vm1380, %vm1381
  %v1383 = vsel %vm1382, %v1375, %v1379
  %v1384 = vand.u32 2147483647, %v1325
  %vm1385 = vcmp.eq.f32.partialorder %v1384, 8.507059e+37
  %v1386 = vand.u32 %v1325, 2147483648
  %v1387 = vor.u32 1.1754944e-38, %v1386
  %v1388 = vsel %vm1385, %v1387, %v1383
  %v1389 = vmul.f32 1.0, %v1388
  %v1390 = vrcp.pop %v1326
  %v1391 = vmul.f32 %v1326, %v1390
  %v1392 = vsub.f32 1.0, %v1391
  %v1393 = vmul.f32 %v1390, %v1392
  %v1394 = vadd.f32 %v1390, %v1393
  %vm1395 = vweird.f32 %v1326
  %vm1396 = vweird.f32 %v1390
  %vm1397 = vmor %vm1395, %vm1396
  %v1398 = vsel %vm1397, %v1390, %v1394
  %v1399 = vand.u32 2147483647, %v1326
  %vm1400 = vcmp.eq.f32.partialorder %v1399, 8.507059e+37
  %v1401 = vand.u32 %v1326, 2147483648
  %v1402 = vor.u32 1.1754944e-38, %v1401
  %v1403 = vsel %vm1400, %v1402, %v1398
  %v1404 = vmul.f32 1.0, %v1403
  %v1405 = vrcp.pop %v1327
  %v1406 = vmul.f32 %v1327, %v1405
  %v1407 = vsub.f32 1.0, %v1406
  %v1408 = vmul.f32 %v1405, %v1407
  %v1409 = vadd.f32 %v1405, %v1408
  %vm1410 = vweird.f32 %v1327
  %vm1411 = vweird.f32 %v1405
  %vm1412 = vmor %vm1410, %vm1411
  %v1413 = vsel %vm1412, %v1405, %v1409
  %v1414 = vand.u32 2147483647, %v1327
  %vm1415 = vcmp.eq.f32.partialorder %v1414, 8.507059e+37
  %v1416 = vand.u32 %v1327, 2147483648
  %v1417 = vor.u32 1.1754944e-38, %v1416
  %v1418 = vsel %vm1415, %v1417, %v1413
  %v1419 = vmul.f32 1.0, %v1418
  %v1420 = vrcp.pop %v1328
  %v1421 = vmul.f32 %v1328, %v1420
  %v1422 = vsub.f32 1.0, %v1421
  %v1423 = vmul.f32 %v1420, %v1422
  %v1424 = vadd.f32 %v1420, %v1423
  %vm1425 = vweird.f32 %v1328
  %vm1426 = vweird.f32 %v1420
  %vm1427 = vmor %vm1425, %vm1426
  %v1428 = vsel %vm1427, %v1420, %v1424
  %v1429 = vand.u32 2147483647, %v1328
  %vm1430 = vcmp.eq.f32.partialorder %v1429, 8.507059e+37
  %v1431 = vand.u32 %v1328, 2147483648
  %v1432 = vor.u32 1.1754944e-38, %v1431
  %v1433 = vsel %vm1430, %v1432, %v1428
  %v1434 = vmul.f32 1.0, %v1433
  %v1435 = vrcp.pop %v1329
  %v1436 = vmul.f32 %v1329, %v1435
  %v1437 = vsub.f32 1.0, %v1436
  %v1438 = vmul.f32 %v1435, %v1437
  %v1439 = vadd.f32 %v1435, %v1438
  %vm1440 = vweird.f32 %v1329
  %vm1441 = vweird.f32 %v1435
  %vm1442 = vmor %vm1440, %vm1441
  %v1443 = vsel %vm1442, %v1435, %v1439
  %v1444 = vand.u32 2147483647, %v1329
  %vm1445 = vcmp.eq.f32.partialorder %v1444, 8.507059e+37
  %v1446 = vand.u32 %v1329, 2147483648
  %v1447 = vor.u32 1.1754944e-38, %v1446
  %v1448 = vsel %vm1445, %v1447, %v1443
  %v1449 = vmul.f32 1.0, %v1448
  %v1458 = vrot.slane %v1290, 1
  %v1459 = vrot.slane %v1291, 1
  %v1460 = vrot.slane %v1292, 1
  %v1461 = vrot.slane %v1293, 1
  %v1462 = vrot.slane %v1294, 1
  %v1463 = vrot.slane %v1295, 1
  %v1464 = vrot.slane %v1296, 1
  %v1465 = vrot.slane %v1297, 1
  %v1474 = vxor.u32 %v1458, 2147483648
  %v1475 = vxor.u32 %v1459, 2147483648
  %v1476 = vxor.u32 %v1460, 2147483648
  %v1477 = vxor.u32 %v1461, 2147483648
  %v1478 = vxor.u32 %v1462, 2147483648
  %v1479 = vxor.u32 %v1463, 2147483648
  %v1480 = vxor.u32 %v1464, 2147483648
  %v1481 = vxor.u32 %v1465, 2147483648
  %v1482 = vmul.f32 %v1474, 1.442695
  %v1483 = vpow.pop %v1482
  %v1484 = vmul.f32 %v1475, 1.442695
  %v1485 = vpow.pop %v1484
  %v1486 = vmul.f32 %v1476, 1.442695
  %v1487 = vpow.pop %v1486
  %v1488 = vmul.f32 %v1477, 1.442695
  %v1489 = vpow.pop %v1488
  %v1490 = vmul.f32 %v1478, 1.442695
  %v1491 = vpow.pop %v1490
  %v1492 = vmul.f32 %v1479, 1.442695
  %v1493 = vpow.pop %v1492
  %v1494 = vmul.f32 %v1480, 1.442695
  %v1495 = vpow.pop %v1494
  %v1496 = vmul.f32 %v1481, 1.442695
  %v1497 = vpow.pop %v1496
  %v1498 = vadd.f32 %v1483, 1.0
  %v1499 = vadd.f32 %v1485, 1.0
  %v1500 = vadd.f32 %v1487, 1.0
  %v1501 = vadd.f32 %v1489, 1.0
  %v1502 = vadd.f32 %v1491, 1.0
  %v1503 = vadd.f32 %v1493, 1.0
  %v1504 = vadd.f32 %v1495, 1.0
  %v1505 = vadd.f32 %v1497, 1.0
  %v1506 = vrcp.pop %v1498
  %v1507 = vmul.f32 %v1498, %v1506
  %v1508 = vsub.f32 1.0, %v1507
  %v1509 = vmul.f32 %v1506, %v1508
  %v1510 = vadd.f32 %v1506, %v1509
  %vm1511 = vweird.f32 %v1498
  %vm1512 = vweird.f32 %v1506
  %vm1513 = vmor %vm1511, %vm1512
  %v1514 = vsel %vm1513, %v1506, %v1510
  %v1515 = vand.u32 2147483647, %v1498
  %vm1516 = vcmp.eq.f32.partialorder %v1515, 8.507059e+37
  %v1517 = vand.u32 %v1498, 2147483648
  %v1518 = vor.u32 1.1754944e-38, %v1517
  %v1519 = vsel %vm1516, %v1518, %v1514
  %v1520 = vmul.f32 1.0, %v1519
  %v1521 = vrcp.pop %v1499
  %v1522 = vmul.f32 %v1499, %v1521
  %v1523 = vsub.f32 1.0, %v1522
  %v1524 = vmul.f32 %v1521, %v1523
  %v1525 = vadd.f32 %v1521, %v1524
  %vm1526 = vweird.f32 %v1499
  %vm1527 = vweird.f32 %v1521
  %vm1528 = vmor %vm1526, %vm1527
  %v1529 = vsel %vm1528, %v1521, %v1525
  %v1530 = vand.u32 2147483647, %v1499
  %vm1531 = vcmp.eq.f32.partialorder %v1530, 8.507059e+37
  %v1532 = vand.u32 %v1499, 2147483648
  %v1533 = vor.u32 1.1754944e-38, %v1532
  %v1534 = vsel %vm1531, %v1533, %v1529
  %v1535 = vmul.f32 1.0, %v1534
  %v1536 = vrcp.pop %v1500
  %v1537 = vmul.f32 %v1500, %v1536
  %v1538 = vsub.f32 1.0, %v1537
  %v1539 = vmul.f32 %v1536, %v1538
  %v1540 = vadd.f32 %v1536, %v1539
  %vm1541 = vweird.f32 %v1500
  %vm1542 = vweird.f32 %v1536
  %vm1543 = vmor %vm1541, %vm1542
  %v1544 = vsel %vm1543, %v1536, %v1540
  %v1545 = vand.u32 2147483647, %v1500
  %vm1546 = vcmp.eq.f32.partialorder %v1545, 8.507059e+37
  %v1547 = vand.u32 %v1500, 2147483648
  %v1548 = vor.u32 1.1754944e-38, %v1547
  %v1549 = vsel %vm1546, %v1548, %v1544
  %v1550 = vmul.f32 1.0, %v1549
  %v1551 = vrcp.pop %v1501
  %v1552 = vmul.f32 %v1501, %v1551
  %v1553 = vsub.f32 1.0, %v1552
  %v1554 = vmul.f32 %v1551, %v1553
  %v1555 = vadd.f32 %v1551, %v1554
  %vm1556 = vweird.f32 %v1501
  %vm1557 = vweird.f32 %v1551
  %vm1558 = vmor %vm1556, %vm1557
  %v1559 = vsel %vm1558, %v1551, %v1555
  %v1560 = vand.u32 2147483647, %v1501
  %vm1561 = vcmp.eq.f32.partialorder %v1560, 8.507059e+37
  %v1562 = vand.u32 %v1501, 2147483648
  %v1563 = vor.u32 1.1754944e-38, %v1562
  %v1564 = vsel %vm1561, %v1563, %v1559
  %v1565 = vmul.f32 1.0, %v1564
  %v1566 = vrcp.pop %v1502
  %v1567 = vmul.f32 %v1502, %v1566
  %v1568 = vsub.f32 1.0, %v1567
  %v1569 = vmul.f32 %v1566, %v1568
  %v1570 = vadd.f32 %v1566, %v1569
  %vm1571 = vweird.f32 %v1502
  %vm1572 = vweird.f32 %v1566
  %vm1573 = vmor %vm1571, %vm1572
  %v1574 = vsel %vm1573, %v1566, %v1570
  %v1575 = vand.u32 2147483647, %v1502
  %vm1576 = vcmp.eq.f32.partialorder %v1575, 8.507059e+37
  %v1577 = vand.u32 %v1502, 2147483648
  %v1578 = vor.u32 1.1754944e-38, %v1577
  %v1579 = vsel %vm1576, %v1578, %v1574
  %v1580 = vmul.f32 1.0, %v1579
  %v1581 = vrcp.pop %v1503
  %v1582 = vmul.f32 %v1503, %v1581
  %v1583 = vsub.f32 1.0, %v1582
  %v1584 = vmul.f32 %v1581, %v1583
  %v1585 = vadd.f32 %v1581, %v1584
  %vm1586 = vweird.f32 %v1503
  %vm1587 = vweird.f32 %v1581
  %vm1588 = vmor %vm1586, %vm1587
  %v1589 = vsel %vm1588, %v1581, %v1585
  %v1590 = vand.u32 2147483647, %v1503
  %vm1591 = vcmp.eq.f32.partialorder %v1590, 8.507059e+37
  %v1592 = vand.u32 %v1503, 2147483648
  %v1593 = vor.u32 1.1754944e-38, %v1592
  %v1594 = vsel %vm1591, %v1593, %v1589
  %v1595 = vmul.f32 1.0, %v1594
  %v1596 = vrcp.pop %v1504
  %v1597 = vmul.f32 %v1504, %v1596
  %v1598 = vsub.f32 1.0, %v1597
  %v1599 = vmul.f32 %v1596, %v1598
  %v1600 = vadd.f32 %v1596, %v1599
  %vm1601 = vweird.f32 %v1504
  %vm1602 = vweird.f32 %v1596
  %vm1603 = vmor %vm1601, %vm1602
  %v1604 = vsel %vm1603, %v1596, %v1600
  %v1605 = vand.u32 2147483647, %v1504
  %vm1606 = vcmp.eq.f32.partialorder %v1605, 8.507059e+37
  %v1607 = vand.u32 %v1504, 2147483648
  %v1608 = vor.u32 1.1754944e-38, %v1607
  %v1609 = vsel %vm1606, %v1608, %v1604
  %v1610 = vmul.f32 1.0, %v1609
  %v1611 = vrcp.pop %v1505
  %v1612 = vmul.f32 %v1505, %v1611
  %v1613 = vsub.f32 1.0, %v1612
  %v1614 = vmul.f32 %v1611, %v1613
  %v1615 = vadd.f32 %v1611, %v1614
  %vm1616 = vweird.f32 %v1505
  %vm1617 = vweird.f32 %v1611
  %vm1618 = vmor %vm1616, %vm1617
  %v1619 = vsel %vm1618, %v1611, %v1615
  %v1620 = vand.u32 2147483647, %v1505
  %vm1621 = vcmp.eq.f32.partialorder %v1620, 8.507059e+37
  %v1622 = vand.u32 %v1505, 2147483648
  %v1623 = vor.u32 1.1754944e-38, %v1622
  %v1624 = vsel %vm1621, %v1623, %v1619
  %v1625 = vmul.f32 1.0, %v1624
  %v1626 = vrot.slane %v1290, 2
  %v1627 = vrot.slane %v1291, 2
  %v1628 = vrot.slane %v1292, 2
  %v1629 = vrot.slane %v1293, 2
  %v1630 = vrot.slane %v1294, 2
  %v1631 = vrot.slane %v1295, 2
  %v1632 = vrot.slane %v1296, 2
  %v1633 = vrot.slane %v1297, 2
  %v1642 = vtanh.pop %v1626
  %v1643 = vtanh.pop %v1627
  %v1644 = vtanh.pop %v1628
  %v1645 = vtanh.pop %v1629
  %v1646 = vtanh.pop %v1630
  %v1647 = vtanh.pop %v1631
  %v1648 = vtanh.pop %v1632
  %v1649 = vtanh.pop %v1633
  %v1650 = vrot.slane %v1290, 3
  %v1651 = vrot.slane %v1291, 3
  %v1652 = vrot.slane %v1292, 3
  %v1653 = vrot.slane %v1293, 3
  %v1654 = vrot.slane %v1294, 3
  %v1655 = vrot.slane %v1295, 3
  %v1656 = vrot.slane %v1296, 3
  %v1657 = vrot.slane %v1297, 3
  %v1666 = vxor.u32 %v1650, 2147483648
  %v1667 = vxor.u32 %v1651, 2147483648
  %v1668 = vxor.u32 %v1652, 2147483648
  %v1669 = vxor.u32 %v1653, 2147483648
  %v1670 = vxor.u32 %v1654, 2147483648
  %v1671 = vxor.u32 %v1655, 2147483648
  %v1672 = vxor.u32 %v1656, 2147483648
  %v1673 = vxor.u32 %v1657, 2147483648
  %v1674 = vmul.f32 %v1666, 1.442695
  %v1675 = vpow.pop %v1674
  %v1676 = vmul.f32 %v1667, 1.442695
  %v1677 = vpow.pop %v1676
  %v1678 = vmul.f32 %v1668, 1.442695
  %v1679 = vpow.pop %v1678
  %v1680 = vmul.f32 %v1669, 1.442695
  %v1681 = vpow.pop %v1680
  %v1682 = vmul.f32 %v1670, 1.442695
  %v1683 = vpow.pop %v1682
  %v1684 = vmul.f32 %v1671, 1.442695
  %v1685 = vpow.pop %v1684
  %v1686 = vmul.f32 %v1672, 1.442695
  %v1687 = vpow.pop %v1686
  %v1688 = vmul.f32 %v1673, 1.442695
  %v1689 = vpow.pop %v1688
  %v1690 = vadd.f32 %v1675, 1.0
  %v1691 = vadd.f32 %v1677, 1.0
  %v1692 = vadd.f32 %v1679, 1.0
  %v1693 = vadd.f32 %v1681, 1.0
  %v1694 = vadd.f32 %v1683, 1.0
  %v1695 = vadd.f32 %v1685, 1.0
  %v1696 = vadd.f32 %v1687, 1.0
  %v1697 = vadd.f32 %v1689, 1.0
  %v1698 = vrcp.pop %v1690
  %v1699 = vmul.f32 %v1690, %v1698
  %v1700 = vsub.f32 1.0, %v1699
  %v1701 = vmul.f32 %v1698, %v1700
  %v1702 = vadd.f32 %v1698, %v1701
  %vm1703 = vweird.f32 %v1690
  %vm1704 = vweird.f32 %v1698
  %vm1705 = vmor %vm1703, %vm1704
  %v1706 = vsel %vm1705, %v1698, %v1702
  %v1707 = vand.u32 2147483647, %v1690
  %vm1708 = vcmp.eq.f32.partialorder %v1707, 8.507059e+37
  %v1709 = vand.u32 %v1690, 2147483648
  %v1710 = vor.u32 1.1754944e-38, %v1709
  %v1711 = vsel %vm1708, %v1710, %v1706
  %v1712 = vmul.f32 1.0, %v1711
  %v1713 = vrcp.pop %v1691
  %v1714 = vmul.f32 %v1691, %v1713
  %v1715 = vsub.f32 1.0, %v1714
  %v1716 = vmul.f32 %v1713, %v1715
  %v1717 = vadd.f32 %v1713, %v1716
  %vm1718 = vweird.f32 %v1691
  %vm1719 = vweird.f32 %v1713
  %vm1720 = vmor %vm1718, %vm1719
  %v1721 = vsel %vm1720, %v1713, %v1717
  %v1722 = vand.u32 2147483647, %v1691
  %vm1723 = vcmp.eq.f32.partialorder %v1722, 8.507059e+37
  %v1724 = vand.u32 %v1691, 2147483648
  %v1725 = vor.u32 1.1754944e-38, %v1724
  %v1726 = vsel %vm1723, %v1725, %v1721
  %v1727 = vmul.f32 1.0, %v1726
  %v1728 = vrcp.pop %v1692
  %v1729 = vmul.f32 %v1692, %v1728
  %v1730 = vsub.f32 1.0, %v1729
  %v1731 = vmul.f32 %v1728, %v1730
  %v1732 = vadd.f32 %v1728, %v1731
  %vm1733 = vweird.f32 %v1692
  %vm1734 = vweird.f32 %v1728
  %vm1735 = vmor %vm1733, %vm1734
  %v1736 = vsel %vm1735, %v1728, %v1732
  %v1737 = vand.u32 2147483647, %v1692
  %vm1738 = vcmp.eq.f32.partialorder %v1737, 8.507059e+37
  %v1739 = vand.u32 %v1692, 2147483648
  %v1740 = vor.u32 1.1754944e-38, %v1739
  %v1741 = vsel %vm1738, %v1740, %v1736
  %v1742 = vmul.f32 1.0, %v1741
  %v1743 = vrcp.pop %v1693
  %v1744 = vmul.f32 %v1693, %v1743
  %v1745 = vsub.f32 1.0, %v1744
  %v1746 = vmul.f32 %v1743, %v1745
  %v1747 = vadd.f32 %v1743, %v1746
  %vm1748 = vweird.f32 %v1693
  %vm1749 = vweird.f32 %v1743
  %vm1750 = vmor %vm1748, %vm1749
  %v1751 = vsel %vm1750, %v1743, %v1747
  %v1752 = vand.u32 2147483647, %v1693
  %vm1753 = vcmp.eq.f32.partialorder %v1752, 8.507059e+37
  %v1754 = vand.u32 %v1693, 2147483648
  %v1755 = vor.u32 1.1754944e-38, %v1754
  %v1756 = vsel %vm1753, %v1755, %v1751
  %v1757 = vmul.f32 1.0, %v1756
  %v1758 = vrcp.pop %v1694
  %v1759 = vmul.f32 %v1694, %v1758
  %v1760 = vsub.f32 1.0, %v1759
  %v1761 = vmul.f32 %v1758, %v1760
  %v1762 = vadd.f32 %v1758, %v1761
  %vm1763 = vweird.f32 %v1694
  %vm1764 = vweird.f32 %v1758
  %vm1765 = vmor %vm1763, %vm1764
  %v1766 = vsel %vm1765, %v1758, %v1762
  %v1767 = vand.u32 2147483647, %v1694
  %vm1768 = vcmp.eq.f32.partialorder %v1767, 8.507059e+37
  %v1769 = vand.u32 %v1694, 2147483648
  %v1770 = vor.u32 1.1754944e-38, %v1769
  %v1771 = vsel %vm1768, %v1770, %v1766
  %v1772 = vmul.f32 1.0, %v1771
  %v1773 = vrcp.pop %v1695
  %v1774 = vmul.f32 %v1695, %v1773
  %v1775 = vsub.f32 1.0, %v1774
  %v1776 = vmul.f32 %v1773, %v1775
  %v1777 = vadd.f32 %v1773, %v1776
  %vm1778 = vweird.f32 %v1695
  %vm1779 = vweird.f32 %v1773
  %vm1780 = vmor %vm1778, %vm1779
  %v1781 = vsel %vm1780, %v1773, %v1777
  %v1782 = vand.u32 2147483647, %v1695
  %vm1783 = vcmp.eq.f32.partialorder %v1782, 8.507059e+37
  %v1784 = vand.u32 %v1695, 2147483648
  %v1785 = vor.u32 1.1754944e-38, %v1784
  %v1786 = vsel %vm1783, %v1785, %v1781
  %v1787 = vmul.f32 1.0, %v1786
  %v1788 = vrcp.pop %v1696
  %v1789 = vmul.f32 %v1696, %v1788
  %v1790 = vsub.f32 1.0, %v1789
  %v1791 = vmul.f32 %v1788, %v1790
  %v1792 = vadd.f32 %v1788, %v1791
  %vm1793 = vweird.f32 %v1696
  %vm1794 = vweird.f32 %v1788
  %vm1795 = vmor %vm1793, %vm1794
  %v1796 = vsel %vm1795, %v1788, %v1792
  %v1797 = vand.u32 2147483647, %v1696
  %vm1798 = vcmp.eq.f32.partialorder %v1797, 8.507059e+37
  %v1799 = vand.u32 %v1696, 2147483648
  %v1800 = vor.u32 1.1754944e-38, %v1799
  %v1801 = vsel %vm1798, %v1800, %v1796
  %v1802 = vmul.f32 1.0, %v1801
  %v1803 = vrcp.pop %v1697
  %v1804 = vmul.f32 %v1697, %v1803
  %v1805 = vsub.f32 1.0, %v1804
  %v1806 = vmul.f32 %v1803, %v1805
  %v1807 = vadd.f32 %v1803, %v1806
  %vm1808 = vweird.f32 %v1697
  %vm1809 = vweird.f32 %v1803
  %vm1810 = vmor %vm1808, %vm1809
  %v1811 = vsel %vm1810, %v1803, %v1807
  %v1812 = vand.u32 2147483647, %v1697
  %vm1813 = vcmp.eq.f32.partialorder %v1812, 8.507059e+37
  %v1814 = vand.u32 %v1697, 2147483648
  %v1815 = vor.u32 1.1754944e-38, %v1814
  %v1816 = vsel %vm1813, %v1815, %v1811
  %v1817 = vmul.f32 1.0, %v1816
  %v1818 = vmul.f32 %v1520, %v911
  %v1819 = vmul.f32 %v1535, %v912
  %v1820 = vmul.f32 %v1550, %v913
  %v1821 = vmul.f32 %v1565, %v914
  %v1822 = vmul.f32 %v1580, %v915
  %v1823 = vmul.f32 %v1595, %v916
  %v1824 = vmul.f32 %v1610, %v917
  %v1825 = vmul.f32 %v1625, %v918
  %v1826 = vmul.f32 %v1344, %v1642
  %v1827 = vmul.f32 %v1359, %v1643
  %v1828 = vmul.f32 %v1374, %v1644
  %v1829 = vmul.f32 %v1389, %v1645
  %v1830 = vmul.f32 %v1404, %v1646
  %v1831 = vmul.f32 %v1419, %v1647
  %v1832 = vmul.f32 %v1434, %v1648
  %v1833 = vmul.f32 %v1449, %v1649
  %v1834 = vadd.f32 %v1818, %v1826
  %v1835 = vadd.f32 %v1819, %v1827
  %v1836 = vadd.f32 %v1820, %v1828
  %v1837 = vadd.f32 %v1821, %v1829
  %v1838 = vadd.f32 %v1822, %v1830
  %v1839 = vadd.f32 %v1823, %v1831
  %v1840 = vadd.f32 %v1824, %v1832
  %v1841 = vadd.f32 %v1825, %v1833
  %v1842 = vtanh.pop %v1834
  %v1843 = vtanh.pop %v1835
  %v1844 = vtanh.pop %v1836
  %v1845 = vtanh.pop %v1837
  %v1846 = vtanh.pop %v1838
  %v1847 = vtanh.pop %v1839
  %v1848 = vtanh.pop %v1840
  %v1849 = vtanh.pop %v1841
  %v1850 = vmul.f32 %v1712, %v1842
  %v1851 = vmul.f32 %v1727, %v1843
  %v1852 = vmul.f32 %v1742, %v1844
  %v1853 = vmul.f32 %v1757, %v1845
  %v1854 = vmul.f32 %v1772, %v1846
  %v1855 = vmul.f32 %v1787, %v1847
  %v1856 = vmul.f32 %v1802, %v1848
  %v1857 = vmul.f32 %v1817, %v1849
  %1858 = vst [vmem:[%s4 + $0x1] sm:$0x1] %v1850
  %1859 = vst [vmem:[%s4 + $0x9] sm:$0x1] %v1851
  %1860 = vst [vmem:[%s4 + $0x11] sm:$0x1] %v1852
  %1861 = vst [vmem:[%s4 + $0x19] sm:$0x1] %v1853
  %1862 = vst [vmem:[%s4 + $0x21] sm:$0x1] %v1854
  %1863 = vst [vmem:[%s4 + $0x29] sm:$0x1] %v1855
  %1864 = vst [vmem:[%s4 + $0x31] sm:$0x1] %v1856
  %1865 = vst [vmem:[%s4 + $0x39] sm:$0x1] %v1857
  %s1866 = scalar_lea.vmem %s0, 2
  %v1867 = vld [vmem:[%s1866] ss:$8 sm:$0xf]
  %s1868 = scalar_lea.vmem %s0, 34
  %v1869 = vld [vmem:[%s1868] ss:$8 sm:$0xf]
  %s1870 = scalar_lea.vmem %s0, 66
  %v1871 = vld [vmem:[%s1870] ss:$8 sm:$0xf]
  %s1872 = scalar_lea.vmem %s0, 98
  %v1873 = vld [vmem:[%s1872] ss:$8 sm:$0xf]
  %s1874 = scalar_lea.vmem %s0, 130
  %v1875 = vld [vmem:[%s1874] ss:$8 sm:$0xf]
  %s1876 = scalar_lea.vmem %s0, 162
  %v1877 = vld [vmem:[%s1876] ss:$8 sm:$0xf]
  %s1878 = scalar_lea.vmem %s0, 194
  %v1879 = vld [vmem:[%s1878] ss:$8 sm:$0xf]
  %s1880 = scalar_lea.vmem %s0, 226
  %v1881 = vld [vmem:[%s1880] ss:$8 sm:$0xf]
  %v1882 = vpack.c.bf16 %v1850, %v1850
  %v1883 = vpack.c.bf16 %v1851, %v1851
  %v1884 = vpack.c.bf16 %v1852, %v1852
  %v1885 = vpack.c.bf16 %v1853, %v1853
  %v1886 = vpack.c.bf16 %v1854, %v1854
  %v1887 = vpack.c.bf16 %v1855, %v1855
  %v1888 = vpack.c.bf16 %v1856, %v1856
  %v1889 = vpack.c.bf16 %v1857, %v1857
  %v1890 = vld [vmem:[%s1] sm:$0xff]
  %v1891 = vld [vmem:[%s1 + $0x8] sm:$0xff]
  %v1892 = vld [vmem:[%s1 + $0x10] sm:$0xff]
  %v1893 = vld [vmem:[%s1 + $0x18] sm:$0xff]
  %v1894 = vld [vmem:[%s1 + $0x20] sm:$0xff]
  %v1895 = vld [vmem:[%s1 + $0x28] sm:$0xff]
  %v1896 = vld [vmem:[%s1 + $0x30] sm:$0xff]
  %v1897 = vld [vmem:[%s1 + $0x38] sm:$0xff]
  %v1898 = vld [vmem:[%s1 + $0x40] sm:$0xff]
  %v1899 = vld [vmem:[%s1 + $0x48] sm:$0xff]
  %v1900 = vld [vmem:[%s1 + $0x50] sm:$0xff]
  %v1901 = vld [vmem:[%s1 + $0x58] sm:$0xff]
  %v1902 = vld [vmem:[%s1 + $0x60] sm:$0xff]
  %v1903 = vld [vmem:[%s1 + $0x68] sm:$0xff]
  %v1904 = vld [vmem:[%s1 + $0x70] sm:$0xff]
  %v1905 = vld [vmem:[%s1 + $0x78] sm:$0xff]
  %v1906 = vld [vmem:[%s1 + $0x80] sm:$0xff]
  %v1907 = vld [vmem:[%s1 + $0x88] sm:$0xff]
  %v1908 = vld [vmem:[%s1 + $0x90] sm:$0xff]
  %v1909 = vld [vmem:[%s1 + $0x98] sm:$0xff]
  %v1910 = vld [vmem:[%s1 + $0xa0] sm:$0xff]
  %v1911 = vld [vmem:[%s1 + $0xa8] sm:$0xff]
  %v1912 = vld [vmem:[%s1 + $0xb0] sm:$0xff]
  %v1913 = vld [vmem:[%s1 + $0xb8] sm:$0xff]
  %v1914 = vld [vmem:[%s1 + $0xc0] sm:$0xff]
  %v1915 = vld [vmem:[%s1 + $0xc8] sm:$0xff]
  %v1916 = vld [vmem:[%s1 + $0xd0] sm:$0xff]
  %v1917 = vld [vmem:[%s1 + $0xd8] sm:$0xff]
  %v1918 = vld [vmem:[%s1 + $0xe0] sm:$0xff]
  %v1919 = vld [vmem:[%s1 + $0xe8] sm:$0xff]
  %v1920 = vld [vmem:[%s1 + $0xf0] sm:$0xff]
  %v1921 = vld [vmem:[%s1 + $0xf8] sm:$0xff]
  %v1930 = vunpack.c.l.b16 %v1882
  %v1931 = vunpack.c.l.b16 %v1883
  %v1932 = vunpack.c.l.b16 %v1884
  %v1933 = vunpack.c.l.b16 %v1885
  %v1934 = vunpack.c.l.b16 %v1886
  %v1935 = vunpack.c.l.b16 %v1887
  %v1936 = vunpack.c.l.b16 %v1888
  %v1937 = vunpack.c.l.b16 %v1889
  %v1938 = vrot.slane %v1931, 7
  %v1939 = vsel %vm303, %v1938, %v1930
  %v1940 = vrot.slane %v1932, 6
  %v1941 = vsel %vm299, %v1940, %v1939
  %v1942 = vrot.slane %v1933, 5
  %v1943 = vsel %vm305, %v1942, %v1941
  %v1944 = vrot.slane %v1934, 4
  %v1945 = vsel %vm311, %v1944, %v1943
  %v1946 = vrot.slane %v1935, 3
  %v1947 = vsel %vm317, %v1946, %v1945
  %v1948 = vrot.slane %v1936, 2
  %v1949 = vsel %vm323, %v1948, %v1947
  %v1950 = vrot.slane %v1937, 1
  %v1951 = vsel %vm1028, %v1950, %v1949
  %v1952 = vpack.c.b16 %v1951, %v1951
  %v1986 = vunpack.c.l.b16 %v1890
  %v1987 = vunpack.c.h.b16 %v1890
  %v1988 = vunpack.c.l.b16 %v1891
  %v1989 = vunpack.c.h.b16 %v1891
  %v1990 = vunpack.c.l.b16 %v1892
  %v1991 = vunpack.c.h.b16 %v1892
  %v1992 = vunpack.c.l.b16 %v1893
  %v1993 = vunpack.c.h.b16 %v1893
  %v1994 = vunpack.c.l.b16 %v1894
  %v1995 = vunpack.c.h.b16 %v1894
  %v1996 = vunpack.c.l.b16 %v1895
  %v1997 = vunpack.c.h.b16 %v1895
  %v1998 = vunpack.c.l.b16 %v1896
  %v1999 = vunpack.c.h.b16 %v1896
  %v2000 = vunpack.c.l.b16 %v1897
  %v2001 = vunpack.c.h.b16 %v1897
  %v2002 = vunpack.c.l.b16 %v1898
  %v2003 = vunpack.c.h.b16 %v1898
  %v2004 = vunpack.c.l.b16 %v1899
  %v2005 = vunpack.c.h.b16 %v1899
  %v2006 = vunpack.c.l.b16 %v1900
  %v2007 = vunpack.c.h.b16 %v1900
  %v2008 = vunpack.c.l.b16 %v1901
  %v2009 = vunpack.c.h.b16 %v1901
  %v2010 = vunpack.c.l.b16 %v1902
  %v2011 = vunpack.c.h.b16 %v1902
  %v2012 = vunpack.c.l.b16 %v1903
  %v2013 = vunpack.c.h.b16 %v1903
  %v2014 = vunpack.c.l.b16 %v1904
  %v2015 = vunpack.c.h.b16 %v1904
  %v2016 = vunpack.c.l.b16 %v1905
  %v2017 = vunpack.c.h.b16 %v1905
  %v2018 = vunpack.c.l.b16 %v1906
  %v2019 = vunpack.c.h.b16 %v1906
  %v2020 = vunpack.c.l.b16 %v1907
  %v2021 = vunpack.c.h.b16 %v1907
  %v2022 = vunpack.c.l.b16 %v1908
  %v2023 = vunpack.c.h.b16 %v1908
  %v2024 = vunpack.c.l.b16 %v1909
  %v2025 = vunpack.c.h.b16 %v1909
  %v2026 = vunpack.c.l.b16 %v1910
  %v2027 = vunpack.c.h.b16 %v1910
  %v2028 = vunpack.c.l.b16 %v1911
  %v2029 = vunpack.c.h.b16 %v1911
  %v2030 = vunpack.c.l.b16 %v1912
  %v2031 = vunpack.c.h.b16 %v1912
  %v2032 = vunpack.c.l.b16 %v1913
  %v2033 = vunpack.c.h.b16 %v1913
  %v2034 = vunpack.c.l.b16 %v1914
  %v2035 = vunpack.c.h.b16 %v1914
  %v2036 = vunpack.c.l.b16 %v1915
  %v2037 = vunpack.c.h.b16 %v1915
  %v2038 = vunpack.c.l.b16 %v1916
  %v2039 = vunpack.c.h.b16 %v1916
  %v2040 = vunpack.c.l.b16 %v1917
  %v2041 = vunpack.c.h.b16 %v1917
  %v2042 = vunpack.c.l.b16 %v1918
  %v2043 = vunpack.c.h.b16 %v1918
  %v2044 = vunpack.c.l.b16 %v1919
  %v2045 = vunpack.c.h.b16 %v1919
  %v2046 = vunpack.c.l.b16 %v1920
  %v2047 = vunpack.c.h.b16 %v1920
  %v2048 = vunpack.c.l.b16 %v1921
  %v2049 = vunpack.c.h.b16 %v1921
  %v2050 = vpack.c.b16 %v1990, %v1986
  %v2051 = vpack.c.b16 %v1991, %v1987
  %v2052 = vpack.c.b16 %v1992, %v1988
  %v2053 = vpack.c.b16 %v1993, %v1989
  %v2054 = vpack.c.b16 %v1998, %v1994
  %v2055 = vpack.c.b16 %v1999, %v1995
  %v2056 = vpack.c.b16 %v2000, %v1996
  %v2057 = vpack.c.b16 %v2001, %v1997
  %v2058 = vpack.c.b16 %v2006, %v2002
  %v2059 = vpack.c.b16 %v2007, %v2003
  %v2060 = vpack.c.b16 %v2008, %v2004
  %v2061 = vpack.c.b16 %v2009, %v2005
  %v2062 = vpack.c.b16 %v2014, %v2010
  %v2063 = vpack.c.b16 %v2015, %v2011
  %v2064 = vpack.c.b16 %v2016, %v2012
  %v2065 = vpack.c.b16 %v2017, %v2013
  %v2066 = vpack.c.b16 %v2022, %v2018
  %v2067 = vpack.c.b16 %v2023, %v2019
  %v2068 = vpack.c.b16 %v2024, %v2020
  %v2069 = vpack.c.b16 %v2025, %v2021
  %v2070 = vpack.c.b16 %v2030, %v2026
  %v2071 = vpack.c.b16 %v2031, %v2027
  %v2072 = vpack.c.b16 %v2032, %v2028
  %v2073 = vpack.c.b16 %v2033, %v2029
  %v2074 = vpack.c.b16 %v2038, %v2034
  %v2075 = vpack.c.b16 %v2039, %v2035
  %v2076 = vpack.c.b16 %v2040, %v2036
  %v2077 = vpack.c.b16 %v2041, %v2037
  %v2078 = vpack.c.b16 %v2046, %v2042
  %v2079 = vpack.c.b16 %v2047, %v2043
  %v2080 = vpack.c.b16 %v2048, %v2044
  %v2081 = vpack.c.b16 %v2049, %v2045
  %2114 = vmatpush.bf16.msra.mxu0 %v2078
  %2115 = vmatpush.bf16.msra.mxu0 %v2074
  %2116 = vmatpush.bf16.msra.mxu0 %v2070
  %2117 = vmatpush.bf16.msra.mxu0 %v2066
  %2118 = vmatpush.bf16.msra.mxu0 %v2062
  %2119 = vmatpush.bf16.msra.mxu0 %v2058
  %2120 = vmatpush.bf16.msra.mxu0 %v2054
  %2121 = vmatpush.bf16.msra.mxu0 %v2050
  %2122 = vmatmul.bf16.gmra.mxu0 %v1952
  %v2123 = vpop.f32.mrf.mxu0
  %v2124 = vadd.f32 0.0, %v2123
  %v2125 = vpop.f32.mrf.mxu0
  %2126 = vdwg.mxu0
  %2127 = vmatpush.bf16.msra.mxu0 %v2079
  %2128 = vmatpush.bf16.msra.mxu0 %v2075
  %2129 = vmatpush.bf16.msra.mxu0 %v2071
  %2130 = vmatpush.bf16.msra.mxu0 %v2067
  %2131 = vmatpush.bf16.msra.mxu0 %v2063
  %2132 = vmatpush.bf16.msra.mxu0 %v2059
  %2133 = vmatpush.bf16.msra.mxu0 %v2055
  %2134 = vmatpush.bf16.msra.mxu0 %v2051
  %2135 = vmatmul.bf16.gmra.mxu0 %v1952
  %v2136 = vpop.f32.mrf.mxu0
  %v2137 = vadd.f32 0.0, %v2136
  %v2138 = vpop.f32.mrf.mxu0
  %2139 = vdwg.mxu0
  %2140 = vmatpush.bf16.msra.mxu0 %v2080
  %2141 = vmatpush.bf16.msra.mxu0 %v2076
  %2142 = vmatpush.bf16.msra.mxu0 %v2072
  %2143 = vmatpush.bf16.msra.mxu0 %v2068
  %2144 = vmatpush.bf16.msra.mxu0 %v2064
  %2145 = vmatpush.bf16.msra.mxu0 %v2060
  %2146 = vmatpush.bf16.msra.mxu0 %v2056
  %2147 = vmatpush.bf16.msra.mxu0 %v2052
  %2148 = vmatmul.bf16.gmra.mxu0 %v1952
  %v2149 = vpop.f32.mrf.mxu0
  %v2150 = vadd.f32 0.0, %v2149
  %v2151 = vpop.f32.mrf.mxu0
  %2152 = vdwg.mxu0
  %2153 = vmatpush.bf16.msra.mxu0 %v2081
  %2154 = vmatpush.bf16.msra.mxu0 %v2077
  %2155 = vmatpush.bf16.msra.mxu0 %v2073
  %2156 = vmatpush.bf16.msra.mxu0 %v2069
  %2157 = vmatpush.bf16.msra.mxu0 %v2065
  %2158 = vmatpush.bf16.msra.mxu0 %v2061
  %2159 = vmatpush.bf16.msra.mxu0 %v2057
  %2160 = vmatpush.bf16.msra.mxu0 %v2053
  %2161 = vmatmul.bf16.gmra.mxu0 %v1952
  %v2162 = vpop.f32.mrf.mxu0
  %v2163 = vadd.f32 0.0, %v2162
  %v2164 = vpop.f32.mrf.mxu0
  %2165 = vdwg.mxu0
  %v2170 = vrot.slane %v2137, 7
  %v2171 = vrot.slane %v2150, 6
  %v2172 = vrot.slane %v2163, 5
  %v2173 = vsel %vm297, %v2124, %v2170
  %v2174 = vsel %vm299, %v2171, %v2172
  %v2175 = vsel %vm301, %v2173, %v2174
  %v2176 = vsel %vm303, %v2124, %v2170
  %v2177 = vsel %vm305, %v2171, %v2172
  %v2178 = vsel %vm307, %v2176, %v2177
  %v2179 = vrot.slane %v2178, 1
  %v2180 = vsel %vm299, %v2124, %v2170
  %v2181 = vsel %vm311, %v2171, %v2172
  %v2182 = vsel %vm313, %v2180, %v2181
  %v2183 = vrot.slane %v2182, 2
  %v2184 = vsel %vm305, %v2124, %v2170
  %v2185 = vsel %vm317, %v2171, %v2172
  %v2186 = vsel %vm319, %v2184, %v2185
  %v2187 = vrot.slane %v2186, 3
  %v2188 = vsel %vm311, %v2124, %v2170
  %v2189 = vsel %vm323, %v2171, %v2172
  %v2190 = vsel %vm325, %v2188, %v2189
  %v2191 = vrot.slane %v2190, 4
  %v2192 = vsel %vm317, %v2124, %v2170
  %v2193 = vsel %vm329, %v2172, %v2171
  %v2194 = vsel %vm331, %v2192, %v2193
  %v2195 = vrot.slane %v2194, 5
  %v2196 = vsel %vm323, %v2124, %v2170
  %v2197 = vsel %vm297, %v2171, %v2172
  %v2198 = vsel %vm336, %v2197, %v2196
  %v2199 = vrot.slane %v2198, 6
  %v2200 = vsel %vm329, %v2170, %v2124
  %v2201 = vsel %vm303, %v2171, %v2172
  %v2202 = vsel %vm341, %v2201, %v2200
  %v2203 = vrot.slane %v2202, 7
  %v2212 = vadd.f32 %v1867, %v2175
  %v2213 = vadd.f32 %v1869, %v2179
  %v2214 = vadd.f32 %v1871, %v2183
  %v2215 = vadd.f32 %v1873, %v2187
  %v2216 = vadd.f32 %v1875, %v2191
  %v2217 = vadd.f32 %v1877, %v2195
  %v2218 = vadd.f32 %v1879, %v2199
  %v2219 = vadd.f32 %v1881, %v2203
  %v2220 = vxor.u32 %v2212, 2147483648
  %v2221 = vxor.u32 %v2213, 2147483648
  %v2222 = vxor.u32 %v2214, 2147483648
  %v2223 = vxor.u32 %v2215, 2147483648
  %v2224 = vxor.u32 %v2216, 2147483648
  %v2225 = vxor.u32 %v2217, 2147483648
  %v2226 = vxor.u32 %v2218, 2147483648
  %v2227 = vxor.u32 %v2219, 2147483648
  %v2228 = vmul.f32 %v2220, 1.442695
  %v2229 = vpow.pop %v2228
  %v2230 = vmul.f32 %v2221, 1.442695
  %v2231 = vpow.pop %v2230
  %v2232 = vmul.f32 %v2222, 1.442695
  %v2233 = vpow.pop %v2232
  %v2234 = vmul.f32 %v2223, 1.442695
  %v2235 = vpow.pop %v2234
  %v2236 = vmul.f32 %v2224, 1.442695
  %v2237 = vpow.pop %v2236
  %v2238 = vmul.f32 %v2225, 1.442695
  %v2239 = vpow.pop %v2238
  %v2240 = vmul.f32 %v2226, 1.442695
  %v2241 = vpow.pop %v2240
  %v2242 = vmul.f32 %v2227, 1.442695
  %v2243 = vpow.pop %v2242
  %v2244 = vadd.f32 %v2229, 1.0
  %v2245 = vadd.f32 %v2231, 1.0
  %v2246 = vadd.f32 %v2233, 1.0
  %v2247 = vadd.f32 %v2235, 1.0
  %v2248 = vadd.f32 %v2237, 1.0
  %v2249 = vadd.f32 %v2239, 1.0
  %v2250 = vadd.f32 %v2241, 1.0
  %v2251 = vadd.f32 %v2243, 1.0
  %v2252 = vrcp.pop %v2244
  %v2253 = vmul.f32 %v2244, %v2252
  %v2254 = vsub.f32 1.0, %v2253
  %v2255 = vmul.f32 %v2252, %v2254
  %v2256 = vadd.f32 %v2252, %v2255
  %vm2257 = vweird.f32 %v2244
  %vm2258 = vweird.f32 %v2252
  %vm2259 = vmor %vm2257, %vm2258
  %v2260 = vsel %vm2259, %v2252, %v2256
  %v2261 = vand.u32 2147483647, %v2244
  %vm2262 = vcmp.eq.f32.partialorder %v2261, 8.507059e+37
  %v2263 = vand.u32 %v2244, 2147483648
  %v2264 = vor.u32 1.1754944e-38, %v2263
  %v2265 = vsel %vm2262, %v2264, %v2260
  %v2266 = vmul.f32 1.0, %v2265
  %v2267 = vrcp.pop %v2245
  %v2268 = vmul.f32 %v2245, %v2267
  %v2269 = vsub.f32 1.0, %v2268
  %v2270 = vmul.f32 %v2267, %v2269
  %v2271 = vadd.f32 %v2267, %v2270
  %vm2272 = vweird.f32 %v2245
  %vm2273 = vweird.f32 %v2267
  %vm2274 = vmor %vm2272, %vm2273
  %v2275 = vsel %vm2274, %v2267, %v2271
  %v2276 = vand.u32 2147483647, %v2245
  %vm2277 = vcmp.eq.f32.partialorder %v2276, 8.507059e+37
  %v2278 = vand.u32 %v2245, 2147483648
  %v2279 = vor.u32 1.1754944e-38, %v2278
  %v2280 = vsel %vm2277, %v2279, %v2275
  %v2281 = vmul.f32 1.0, %v2280
  %v2282 = vrcp.pop %v2246
  %v2283 = vmul.f32 %v2246, %v2282
  %v2284 = vsub.f32 1.0, %v2283
  %v2285 = vmul.f32 %v2282, %v2284
  %v2286 = vadd.f32 %v2282, %v2285
  %vm2287 = vweird.f32 %v2246
  %vm2288 = vweird.f32 %v2282
  %vm2289 = vmor %vm2287, %vm2288
  %v2290 = vsel %vm2289, %v2282, %v2286
  %v2291 = vand.u32 2147483647, %v2246
  %vm2292 = vcmp.eq.f32.partialorder %v2291, 8.507059e+37
  %v2293 = vand.u32 %v2246, 2147483648
  %v2294 = vor.u32 1.1754944e-38, %v2293
  %v2295 = vsel %vm2292, %v2294, %v2290
  %v2296 = vmul.f32 1.0, %v2295
  %v2297 = vrcp.pop %v2247
  %v2298 = vmul.f32 %v2247, %v2297
  %v2299 = vsub.f32 1.0, %v2298
  %v2300 = vmul.f32 %v2297, %v2299
  %v2301 = vadd.f32 %v2297, %v2300
  %vm2302 = vweird.f32 %v2247
  %vm2303 = vweird.f32 %v2297
  %vm2304 = vmor %vm2302, %vm2303
  %v2305 = vsel %vm2304, %v2297, %v2301
  %v2306 = vand.u32 2147483647, %v2247
  %vm2307 = vcmp.eq.f32.partialorder %v2306, 8.507059e+37
  %v2308 = vand.u32 %v2247, 2147483648
  %v2309 = vor.u32 1.1754944e-38, %v2308
  %v2310 = vsel %vm2307, %v2309, %v2305
  %v2311 = vmul.f32 1.0, %v2310
  %v2312 = vrcp.pop %v2248
  %v2313 = vmul.f32 %v2248, %v2312
  %v2314 = vsub.f32 1.0, %v2313
  %v2315 = vmul.f32 %v2312, %v2314
  %v2316 = vadd.f32 %v2312, %v2315
  %vm2317 = vweird.f32 %v2248
  %vm2318 = vweird.f32 %v2312
  %vm2319 = vmor %vm2317, %vm2318
  %v2320 = vsel %vm2319, %v2312, %v2316
  %v2321 = vand.u32 2147483647, %v2248
  %vm2322 = vcmp.eq.f32.partialorder %v2321, 8.507059e+37
  %v2323 = vand.u32 %v2248, 2147483648
  %v2324 = vor.u32 1.1754944e-38, %v2323
  %v2325 = vsel %vm2322, %v2324, %v2320
  %v2326 = vmul.f32 1.0, %v2325
  %v2327 = vrcp.pop %v2249
  %v2328 = vmul.f32 %v2249, %v2327
  %v2329 = vsub.f32 1.0, %v2328
  %v2330 = vmul.f32 %v2327, %v2329
  %v2331 = vadd.f32 %v2327, %v2330
  %vm2332 = vweird.f32 %v2249
  %vm2333 = vweird.f32 %v2327
  %vm2334 = vmor %vm2332, %vm2333
  %v2335 = vsel %vm2334, %v2327, %v2331
  %v2336 = vand.u32 2147483647, %v2249
  %vm2337 = vcmp.eq.f32.partialorder %v2336, 8.507059e+37
  %v2338 = vand.u32 %v2249, 2147483648
  %v2339 = vor.u32 1.1754944e-38, %v2338
  %v2340 = vsel %vm2337, %v2339, %v2335
  %v2341 = vmul.f32 1.0, %v2340
  %v2342 = vrcp.pop %v2250
  %v2343 = vmul.f32 %v2250, %v2342
  %v2344 = vsub.f32 1.0, %v2343
  %v2345 = vmul.f32 %v2342, %v2344
  %v2346 = vadd.f32 %v2342, %v2345
  %vm2347 = vweird.f32 %v2250
  %vm2348 = vweird.f32 %v2342
  %vm2349 = vmor %vm2347, %vm2348
  %v2350 = vsel %vm2349, %v2342, %v2346
  %v2351 = vand.u32 2147483647, %v2250
  %vm2352 = vcmp.eq.f32.partialorder %v2351, 8.507059e+37
  %v2353 = vand.u32 %v2250, 2147483648
  %v2354 = vor.u32 1.1754944e-38, %v2353
  %v2355 = vsel %vm2352, %v2354, %v2350
  %v2356 = vmul.f32 1.0, %v2355
  %v2357 = vrcp.pop %v2251
  %v2358 = vmul.f32 %v2251, %v2357
  %v2359 = vsub.f32 1.0, %v2358
  %v2360 = vmul.f32 %v2357, %v2359
  %v2361 = vadd.f32 %v2357, %v2360
  %vm2362 = vweird.f32 %v2251
  %vm2363 = vweird.f32 %v2357
  %vm2364 = vmor %vm2362, %vm2363
  %v2365 = vsel %vm2364, %v2357, %v2361
  %v2366 = vand.u32 2147483647, %v2251
  %vm2367 = vcmp.eq.f32.partialorder %v2366, 8.507059e+37
  %v2368 = vand.u32 %v2251, 2147483648
  %v2369 = vor.u32 1.1754944e-38, %v2368
  %v2370 = vsel %vm2367, %v2369, %v2365
  %v2371 = vmul.f32 1.0, %v2370
  %v2380 = vrot.slane %v2212, 1
  %v2381 = vrot.slane %v2213, 1
  %v2382 = vrot.slane %v2214, 1
  %v2383 = vrot.slane %v2215, 1
  %v2384 = vrot.slane %v2216, 1
  %v2385 = vrot.slane %v2217, 1
  %v2386 = vrot.slane %v2218, 1
  %v2387 = vrot.slane %v2219, 1
  %v2396 = vxor.u32 %v2380, 2147483648
  %v2397 = vxor.u32 %v2381, 2147483648
  %v2398 = vxor.u32 %v2382, 2147483648
  %v2399 = vxor.u32 %v2383, 2147483648
  %v2400 = vxor.u32 %v2384, 2147483648
  %v2401 = vxor.u32 %v2385, 2147483648
  %v2402 = vxor.u32 %v2386, 2147483648
  %v2403 = vxor.u32 %v2387, 2147483648
  %v2404 = vmul.f32 %v2396, 1.442695
  %v2405 = vpow.pop %v2404
  %v2406 = vmul.f32 %v2397, 1.442695
  %v2407 = vpow.pop %v2406
  %v2408 = vmul.f32 %v2398, 1.442695
  %v2409 = vpow.pop %v2408
  %v2410 = vmul.f32 %v2399, 1.442695
  %v2411 = vpow.pop %v2410
  %v2412 = vmul.f32 %v2400, 1.442695
  %v2413 = vpow.pop %v2412
  %v2414 = vmul.f32 %v2401, 1.442695
  %v2415 = vpow.pop %v2414
  %v2416 = vmul.f32 %v2402, 1.442695
  %v2417 = vpow.pop %v2416
  %v2418 = vmul.f32 %v2403, 1.442695
  %v2419 = vpow.pop %v2418
  %v2420 = vadd.f32 %v2405, 1.0
  %v2421 = vadd.f32 %v2407, 1.0
  %v2422 = vadd.f32 %v2409, 1.0
  %v2423 = vadd.f32 %v2411, 1.0
  %v2424 = vadd.f32 %v2413, 1.0
  %v2425 = vadd.f32 %v2415, 1.0
  %v2426 = vadd.f32 %v2417, 1.0
  %v2427 = vadd.f32 %v2419, 1.0
  %v2428 = vrcp.pop %v2420
  %v2429 = vmul.f32 %v2420, %v2428
  %v2430 = vsub.f32 1.0, %v2429
  %v2431 = vmul.f32 %v2428, %v2430
  %v2432 = vadd.f32 %v2428, %v2431
  %vm2433 = vweird.f32 %v2420
  %vm2434 = vweird.f32 %v2428
  %vm2435 = vmor %vm2433, %vm2434
  %v2436 = vsel %vm2435, %v2428, %v2432
  %v2437 = vand.u32 2147483647, %v2420
  %vm2438 = vcmp.eq.f32.partialorder %v2437, 8.507059e+37
  %v2439 = vand.u32 %v2420, 2147483648
  %v2440 = vor.u32 1.1754944e-38, %v2439
  %v2441 = vsel %vm2438, %v2440, %v2436
  %v2442 = vmul.f32 1.0, %v2441
  %v2443 = vrcp.pop %v2421
  %v2444 = vmul.f32 %v2421, %v2443
  %v2445 = vsub.f32 1.0, %v2444
  %v2446 = vmul.f32 %v2443, %v2445
  %v2447 = vadd.f32 %v2443, %v2446
  %vm2448 = vweird.f32 %v2421
  %vm2449 = vweird.f32 %v2443
  %vm2450 = vmor %vm2448, %vm2449
  %v2451 = vsel %vm2450, %v2443, %v2447
  %v2452 = vand.u32 2147483647, %v2421
  %vm2453 = vcmp.eq.f32.partialorder %v2452, 8.507059e+37
  %v2454 = vand.u32 %v2421, 2147483648
  %v2455 = vor.u32 1.1754944e-38, %v2454
  %v2456 = vsel %vm2453, %v2455, %v2451
  %v2457 = vmul.f32 1.0, %v2456
  %v2458 = vrcp.pop %v2422
  %v2459 = vmul.f32 %v2422, %v2458
  %v2460 = vsub.f32 1.0, %v2459
  %v2461 = vmul.f32 %v2458, %v2460
  %v2462 = vadd.f32 %v2458, %v2461
  %vm2463 = vweird.f32 %v2422
  %vm2464 = vweird.f32 %v2458
  %vm2465 = vmor %vm2463, %vm2464
  %v2466 = vsel %vm2465, %v2458, %v2462
  %v2467 = vand.u32 2147483647, %v2422
  %vm2468 = vcmp.eq.f32.partialorder %v2467, 8.507059e+37
  %v2469 = vand.u32 %v2422, 2147483648
  %v2470 = vor.u32 1.1754944e-38, %v2469
  %v2471 = vsel %vm2468, %v2470, %v2466
  %v2472 = vmul.f32 1.0, %v2471
  %v2473 = vrcp.pop %v2423
  %v2474 = vmul.f32 %v2423, %v2473
  %v2475 = vsub.f32 1.0, %v2474
  %v2476 = vmul.f32 %v2473, %v2475
  %v2477 = vadd.f32 %v2473, %v2476
  %vm2478 = vweird.f32 %v2423
  %vm2479 = vweird.f32 %v2473
  %vm2480 = vmor %vm2478, %vm2479
  %v2481 = vsel %vm2480, %v2473, %v2477
  %v2482 = vand.u32 2147483647, %v2423
  %vm2483 = vcmp.eq.f32.partialorder %v2482, 8.507059e+37
  %v2484 = vand.u32 %v2423, 2147483648
  %v2485 = vor.u32 1.1754944e-38, %v2484
  %v2486 = vsel %vm2483, %v2485, %v2481
  %v2487 = vmul.f32 1.0, %v2486
  %v2488 = vrcp.pop %v2424
  %v2489 = vmul.f32 %v2424, %v2488
  %v2490 = vsub.f32 1.0, %v2489
  %v2491 = vmul.f32 %v2488, %v2490
  %v2492 = vadd.f32 %v2488, %v2491
  %vm2493 = vweird.f32 %v2424
  %vm2494 = vweird.f32 %v2488
  %vm2495 = vmor %vm2493, %vm2494
  %v2496 = vsel %vm2495, %v2488, %v2492
  %v2497 = vand.u32 2147483647, %v2424
  %vm2498 = vcmp.eq.f32.partialorder %v2497, 8.507059e+37
  %v2499 = vand.u32 %v2424, 2147483648
  %v2500 = vor.u32 1.1754944e-38, %v2499
  %v2501 = vsel %vm2498, %v2500, %v2496
  %v2502 = vmul.f32 1.0, %v2501
  %v2503 = vrcp.pop %v2425
  %v2504 = vmul.f32 %v2425, %v2503
  %v2505 = vsub.f32 1.0, %v2504
  %v2506 = vmul.f32 %v2503, %v2505
  %v2507 = vadd.f32 %v2503, %v2506
  %vm2508 = vweird.f32 %v2425
  %vm2509 = vweird.f32 %v2503
  %vm2510 = vmor %vm2508, %vm2509
  %v2511 = vsel %vm2510, %v2503, %v2507
  %v2512 = vand.u32 2147483647, %v2425
  %vm2513 = vcmp.eq.f32.partialorder %v2512, 8.507059e+37
  %v2514 = vand.u32 %v2425, 2147483648
  %v2515 = vor.u32 1.1754944e-38, %v2514
  %v2516 = vsel %vm2513, %v2515, %v2511
  %v2517 = vmul.f32 1.0, %v2516
  %v2518 = vrcp.pop %v2426
  %v2519 = vmul.f32 %v2426, %v2518
  %v2520 = vsub.f32 1.0, %v2519
  %v2521 = vmul.f32 %v2518, %v2520
  %v2522 = vadd.f32 %v2518, %v2521
  %vm2523 = vweird.f32 %v2426
  %vm2524 = vweird.f32 %v2518
  %vm2525 = vmor %vm2523, %vm2524
  %v2526 = vsel %vm2525, %v2518, %v2522
  %v2527 = vand.u32 2147483647, %v2426
  %vm2528 = vcmp.eq.f32.partialorder %v2527, 8.507059e+37
  %v2529 = vand.u32 %v2426, 2147483648
  %v2530 = vor.u32 1.1754944e-38, %v2529
  %v2531 = vsel %vm2528, %v2530, %v2526
  %v2532 = vmul.f32 1.0, %v2531
  %v2533 = vrcp.pop %v2427
  %v2534 = vmul.f32 %v2427, %v2533
  %v2535 = vsub.f32 1.0, %v2534
  %v2536 = vmul.f32 %v2533, %v2535
  %v2537 = vadd.f32 %v2533, %v2536
  %vm2538 = vweird.f32 %v2427
  %vm2539 = vweird.f32 %v2533
  %vm2540 = vmor %vm2538, %vm2539
  %v2541 = vsel %vm2540, %v2533, %v2537
  %v2542 = vand.u32 2147483647, %v2427
  %vm2543 = vcmp.eq.f32.partialorder %v2542, 8.507059e+37
  %v2544 = vand.u32 %v2427, 2147483648
  %v2545 = vor.u32 1.1754944e-38, %v2544
  %v2546 = vsel %vm2543, %v2545, %v2541
  %v2547 = vmul.f32 1.0, %v2546
  %v2548 = vrot.slane %v2212, 2
  %v2549 = vrot.slane %v2213, 2
  %v2550 = vrot.slane %v2214, 2
  %v2551 = vrot.slane %v2215, 2
  %v2552 = vrot.slane %v2216, 2
  %v2553 = vrot.slane %v2217, 2
  %v2554 = vrot.slane %v2218, 2
  %v2555 = vrot.slane %v2219, 2
  %v2564 = vtanh.pop %v2548
  %v2565 = vtanh.pop %v2549
  %v2566 = vtanh.pop %v2550
  %v2567 = vtanh.pop %v2551
  %v2568 = vtanh.pop %v2552
  %v2569 = vtanh.pop %v2553
  %v2570 = vtanh.pop %v2554
  %v2571 = vtanh.pop %v2555
  %v2572 = vrot.slane %v2212, 3
  %v2573 = vrot.slane %v2213, 3
  %v2574 = vrot.slane %v2214, 3
  %v2575 = vrot.slane %v2215, 3
  %v2576 = vrot.slane %v2216, 3
  %v2577 = vrot.slane %v2217, 3
  %v2578 = vrot.slane %v2218, 3
  %v2579 = vrot.slane %v2219, 3
  %v2588 = vxor.u32 %v2572, 2147483648
  %v2589 = vxor.u32 %v2573, 2147483648
  %v2590 = vxor.u32 %v2574, 2147483648
  %v2591 = vxor.u32 %v2575, 2147483648
  %v2592 = vxor.u32 %v2576, 2147483648
  %v2593 = vxor.u32 %v2577, 2147483648
  %v2594 = vxor.u32 %v2578, 2147483648
  %v2595 = vxor.u32 %v2579, 2147483648
  %v2596 = vmul.f32 %v2588, 1.442695
  %v2597 = vpow.pop %v2596
  %v2598 = vmul.f32 %v2589, 1.442695
  %v2599 = vpow.pop %v2598
  %v2600 = vmul.f32 %v2590, 1.442695
  %v2601 = vpow.pop %v2600
  %v2602 = vmul.f32 %v2591, 1.442695
  %v2603 = vpow.pop %v2602
  %v2604 = vmul.f32 %v2592, 1.442695
  %v2605 = vpow.pop %v2604
  %v2606 = vmul.f32 %v2593, 1.442695
  %v2607 = vpow.pop %v2606
  %v2608 = vmul.f32 %v2594, 1.442695
  %v2609 = vpow.pop %v2608
  %v2610 = vmul.f32 %v2595, 1.442695
  %v2611 = vpow.pop %v2610
  %v2612 = vadd.f32 %v2597, 1.0
  %v2613 = vadd.f32 %v2599, 1.0
  %v2614 = vadd.f32 %v2601, 1.0
  %v2615 = vadd.f32 %v2603, 1.0
  %v2616 = vadd.f32 %v2605, 1.0
  %v2617 = vadd.f32 %v2607, 1.0
  %v2618 = vadd.f32 %v2609, 1.0
  %v2619 = vadd.f32 %v2611, 1.0
  %v2620 = vrcp.pop %v2612
  %v2621 = vmul.f32 %v2612, %v2620
  %v2622 = vsub.f32 1.0, %v2621
  %v2623 = vmul.f32 %v2620, %v2622
  %v2624 = vadd.f32 %v2620, %v2623
  %vm2625 = vweird.f32 %v2612
  %vm2626 = vweird.f32 %v2620
  %vm2627 = vmor %vm2625, %vm2626
  %v2628 = vsel %vm2627, %v2620, %v2624
  %v2629 = vand.u32 2147483647, %v2612
  %vm2630 = vcmp.eq.f32.partialorder %v2629, 8.507059e+37
  %v2631 = vand.u32 %v2612, 2147483648
  %v2632 = vor.u32 1.1754944e-38, %v2631
  %v2633 = vsel %vm2630, %v2632, %v2628
  %v2634 = vmul.f32 1.0, %v2633
  %v2635 = vrcp.pop %v2613
  %v2636 = vmul.f32 %v2613, %v2635
  %v2637 = vsub.f32 1.0, %v2636
  %v2638 = vmul.f32 %v2635, %v2637
  %v2639 = vadd.f32 %v2635, %v2638
  %vm2640 = vweird.f32 %v2613
  %vm2641 = vweird.f32 %v2635
  %vm2642 = vmor %vm2640, %vm2641
  %v2643 = vsel %vm2642, %v2635, %v2639
  %v2644 = vand.u32 2147483647, %v2613
  %vm2645 = vcmp.eq.f32.partialorder %v2644, 8.507059e+37
  %v2646 = vand.u32 %v2613, 2147483648
  %v2647 = vor.u32 1.1754944e-38, %v2646
  %v2648 = vsel %vm2645, %v2647, %v2643
  %v2649 = vmul.f32 1.0, %v2648
  %v2650 = vrcp.pop %v2614
  %v2651 = vmul.f32 %v2614, %v2650
  %v2652 = vsub.f32 1.0, %v2651
  %v2653 = vmul.f32 %v2650, %v2652
  %v2654 = vadd.f32 %v2650, %v2653
  %vm2655 = vweird.f32 %v2614
  %vm2656 = vweird.f32 %v2650
  %vm2657 = vmor %vm2655, %vm2656
  %v2658 = vsel %vm2657, %v2650, %v2654
  %v2659 = vand.u32 2147483647, %v2614
  %vm2660 = vcmp.eq.f32.partialorder %v2659, 8.507059e+37
  %v2661 = vand.u32 %v2614, 2147483648
  %v2662 = vor.u32 1.1754944e-38, %v2661
  %v2663 = vsel %vm2660, %v2662, %v2658
  %v2664 = vmul.f32 1.0, %v2663
  %v2665 = vrcp.pop %v2615
  %v2666 = vmul.f32 %v2615, %v2665
  %v2667 = vsub.f32 1.0, %v2666
  %v2668 = vmul.f32 %v2665, %v2667
  %v2669 = vadd.f32 %v2665, %v2668
  %vm2670 = vweird.f32 %v2615
  %vm2671 = vweird.f32 %v2665
  %vm2672 = vmor %vm2670, %vm2671
  %v2673 = vsel %vm2672, %v2665, %v2669
  %v2674 = vand.u32 2147483647, %v2615
  %vm2675 = vcmp.eq.f32.partialorder %v2674, 8.507059e+37
  %v2676 = vand.u32 %v2615, 2147483648
  %v2677 = vor.u32 1.1754944e-38, %v2676
  %v2678 = vsel %vm2675, %v2677, %v2673
  %v2679 = vmul.f32 1.0, %v2678
  %v2680 = vrcp.pop %v2616
  %v2681 = vmul.f32 %v2616, %v2680
  %v2682 = vsub.f32 1.0, %v2681
  %v2683 = vmul.f32 %v2680, %v2682
  %v2684 = vadd.f32 %v2680, %v2683
  %vm2685 = vweird.f32 %v2616
  %vm2686 = vweird.f32 %v2680
  %vm2687 = vmor %vm2685, %vm2686
  %v2688 = vsel %vm2687, %v2680, %v2684
  %v2689 = vand.u32 2147483647, %v2616
  %vm2690 = vcmp.eq.f32.partialorder %v2689, 8.507059e+37
  %v2691 = vand.u32 %v2616, 2147483648
  %v2692 = vor.u32 1.1754944e-38, %v2691
  %v2693 = vsel %vm2690, %v2692, %v2688
  %v2694 = vmul.f32 1.0, %v2693
  %v2695 = vrcp.pop %v2617
  %v2696 = vmul.f32 %v2617, %v2695
  %v2697 = vsub.f32 1.0, %v2696
  %v2698 = vmul.f32 %v2695, %v2697
  %v2699 = vadd.f32 %v2695, %v2698
  %vm2700 = vweird.f32 %v2617
  %vm2701 = vweird.f32 %v2695
  %vm2702 = vmor %vm2700, %vm2701
  %v2703 = vsel %vm2702, %v2695, %v2699
  %v2704 = vand.u32 2147483647, %v2617
  %vm2705 = vcmp.eq.f32.partialorder %v2704, 8.507059e+37
  %v2706 = vand.u32 %v2617, 2147483648
  %v2707 = vor.u32 1.1754944e-38, %v2706
  %v2708 = vsel %vm2705, %v2707, %v2703
  %v2709 = vmul.f32 1.0, %v2708
  %v2710 = vrcp.pop %v2618
  %v2711 = vmul.f32 %v2618, %v2710
  %v2712 = vsub.f32 1.0, %v2711
  %v2713 = vmul.f32 %v2710, %v2712
  %v2714 = vadd.f32 %v2710, %v2713
  %vm2715 = vweird.f32 %v2618
  %vm2716 = vweird.f32 %v2710
  %vm2717 = vmor %vm2715, %vm2716
  %v2718 = vsel %vm2717, %v2710, %v2714
  %v2719 = vand.u32 2147483647, %v2618
  %vm2720 = vcmp.eq.f32.partialorder %v2719, 8.507059e+37
  %v2721 = vand.u32 %v2618, 2147483648
  %v2722 = vor.u32 1.1754944e-38, %v2721
  %v2723 = vsel %vm2720, %v2722, %v2718
  %v2724 = vmul.f32 1.0, %v2723
  %v2725 = vrcp.pop %v2619
  %v2726 = vmul.f32 %v2619, %v2725
  %v2727 = vsub.f32 1.0, %v2726
  %v2728 = vmul.f32 %v2725, %v2727
  %v2729 = vadd.f32 %v2725, %v2728
  %vm2730 = vweird.f32 %v2619
  %vm2731 = vweird.f32 %v2725
  %vm2732 = vmor %vm2730, %vm2731
  %v2733 = vsel %vm2732, %v2725, %v2729
  %v2734 = vand.u32 2147483647, %v2619
  %vm2735 = vcmp.eq.f32.partialorder %v2734, 8.507059e+37
  %v2736 = vand.u32 %v2619, 2147483648
  %v2737 = vor.u32 1.1754944e-38, %v2736
  %v2738 = vsel %vm2735, %v2737, %v2733
  %v2739 = vmul.f32 1.0, %v2738
  %v2740 = vmul.f32 %v2442, %v1834
  %v2741 = vmul.f32 %v2457, %v1835
  %v2742 = vmul.f32 %v2472, %v1836
  %v2743 = vmul.f32 %v2487, %v1837
  %v2744 = vmul.f32 %v2502, %v1838
  %v2745 = vmul.f32 %v2517, %v1839
  %v2746 = vmul.f32 %v2532, %v1840
  %v2747 = vmul.f32 %v2547, %v1841
  %v2748 = vmul.f32 %v2266, %v2564
  %v2749 = vmul.f32 %v2281, %v2565
  %v2750 = vmul.f32 %v2296, %v2566
  %v2751 = vmul.f32 %v2311, %v2567
  %v2752 = vmul.f32 %v2326, %v2568
  %v2753 = vmul.f32 %v2341, %v2569
  %v2754 = vmul.f32 %v2356, %v2570
  %v2755 = vmul.f32 %v2371, %v2571
  %v2756 = vadd.f32 %v2740, %v2748
  %v2757 = vadd.f32 %v2741, %v2749
  %v2758 = vadd.f32 %v2742, %v2750
  %v2759 = vadd.f32 %v2743, %v2751
  %v2760 = vadd.f32 %v2744, %v2752
  %v2761 = vadd.f32 %v2745, %v2753
  %v2762 = vadd.f32 %v2746, %v2754
  %v2763 = vadd.f32 %v2747, %v2755
  %v2764 = vtanh.pop %v2756
  %v2765 = vtanh.pop %v2757
  %v2766 = vtanh.pop %v2758
  %v2767 = vtanh.pop %v2759
  %v2768 = vtanh.pop %v2760
  %v2769 = vtanh.pop %v2761
  %v2770 = vtanh.pop %v2762
  %v2771 = vtanh.pop %v2763
  %v2772 = vmul.f32 %v2634, %v2764
  %v2773 = vmul.f32 %v2649, %v2765
  %v2774 = vmul.f32 %v2664, %v2766
  %v2775 = vmul.f32 %v2679, %v2767
  %v2776 = vmul.f32 %v2694, %v2768
  %v2777 = vmul.f32 %v2709, %v2769
  %v2778 = vmul.f32 %v2724, %v2770
  %v2779 = vmul.f32 %v2739, %v2771
  %2780 = vst [vmem:[%s4 + $0x2] sm:$0x1] %v2772
  %2781 = vst [vmem:[%s4 + $0xa] sm:$0x1] %v2773
  %2782 = vst [vmem:[%s4 + $0x12] sm:$0x1] %v2774
  %2783 = vst [vmem:[%s4 + $0x1a] sm:$0x1] %v2775
  %2784 = vst [vmem:[%s4 + $0x22] sm:$0x1] %v2776
  %2785 = vst [vmem:[%s4 + $0x2a] sm:$0x1] %v2777
  %2786 = vst [vmem:[%s4 + $0x32] sm:$0x1] %v2778
  %2787 = vst [vmem:[%s4 + $0x3a] sm:$0x1] %v2779
  %s2788 = scalar_lea.vmem %s0, 3
  %v2789 = vld [vmem:[%s2788] ss:$8 sm:$0xf]
  %s2790 = scalar_lea.vmem %s0, 35
  %v2791 = vld [vmem:[%s2790] ss:$8 sm:$0xf]
  %s2792 = scalar_lea.vmem %s0, 67
  %v2793 = vld [vmem:[%s2792] ss:$8 sm:$0xf]
  %s2794 = scalar_lea.vmem %s0, 99
  %v2795 = vld [vmem:[%s2794] ss:$8 sm:$0xf]
  %s2796 = scalar_lea.vmem %s0, 131
  %v2797 = vld [vmem:[%s2796] ss:$8 sm:$0xf]
  %s2798 = scalar_lea.vmem %s0, 163
  %v2799 = vld [vmem:[%s2798] ss:$8 sm:$0xf]
  %s2800 = scalar_lea.vmem %s0, 195
  %v2801 = vld [vmem:[%s2800] ss:$8 sm:$0xf]
  %s2802 = scalar_lea.vmem %s0, 227
  %v2803 = vld [vmem:[%s2802] ss:$8 sm:$0xf]
  %v2804 = vpack.c.bf16 %v2772, %v2772
  %v2805 = vpack.c.bf16 %v2773, %v2773
  %v2806 = vpack.c.bf16 %v2774, %v2774
  %v2807 = vpack.c.bf16 %v2775, %v2775
  %v2808 = vpack.c.bf16 %v2776, %v2776
  %v2809 = vpack.c.bf16 %v2777, %v2777
  %v2810 = vpack.c.bf16 %v2778, %v2778
  %v2811 = vpack.c.bf16 %v2779, %v2779
  %v2812 = vld [vmem:[%s1] sm:$0xff]
  %v2813 = vld [vmem:[%s1 + $0x8] sm:$0xff]
  %v2814 = vld [vmem:[%s1 + $0x10] sm:$0xff]
  %v2815 = vld [vmem:[%s1 + $0x18] sm:$0xff]
  %v2816 = vld [vmem:[%s1 + $0x20] sm:$0xff]
  %v2817 = vld [vmem:[%s1 + $0x28] sm:$0xff]
  %v2818 = vld [vmem:[%s1 + $0x30] sm:$0xff]
  %v2819 = vld [vmem:[%s1 + $0x38] sm:$0xff]
  %v2820 = vld [vmem:[%s1 + $0x40] sm:$0xff]
  %v2821 = vld [vmem:[%s1 + $0x48] sm:$0xff]
  %v2822 = vld [vmem:[%s1 + $0x50] sm:$0xff]
  %v2823 = vld [vmem:[%s1 + $0x58] sm:$0xff]
  %v2824 = vld [vmem:[%s1 + $0x60] sm:$0xff]
  %v2825 = vld [vmem:[%s1 + $0x68] sm:$0xff]
  %v2826 = vld [vmem:[%s1 + $0x70] sm:$0xff]
  %v2827 = vld [vmem:[%s1 + $0x78] sm:$0xff]
  %v2828 = vld [vmem:[%s1 + $0x80] sm:$0xff]
  %v2829 = vld [vmem:[%s1 + $0x88] sm:$0xff]
  %v2830 = vld [vmem:[%s1 + $0x90] sm:$0xff]
  %v2831 = vld [vmem:[%s1 + $0x98] sm:$0xff]
  %v2832 = vld [vmem:[%s1 + $0xa0] sm:$0xff]
  %v2833 = vld [vmem:[%s1 + $0xa8] sm:$0xff]
  %v2834 = vld [vmem:[%s1 + $0xb0] sm:$0xff]
  %v2835 = vld [vmem:[%s1 + $0xb8] sm:$0xff]
  %v2836 = vld [vmem:[%s1 + $0xc0] sm:$0xff]
  %v2837 = vld [vmem:[%s1 + $0xc8] sm:$0xff]
  %v2838 = vld [vmem:[%s1 + $0xd0] sm:$0xff]
  %v2839 = vld [vmem:[%s1 + $0xd8] sm:$0xff]
  %v2840 = vld [vmem:[%s1 + $0xe0] sm:$0xff]
  %v2841 = vld [vmem:[%s1 + $0xe8] sm:$0xff]
  %v2842 = vld [vmem:[%s1 + $0xf0] sm:$0xff]
  %v2843 = vld [vmem:[%s1 + $0xf8] sm:$0xff]
  %v2852 = vunpack.c.l.b16 %v2804
  %v2853 = vunpack.c.l.b16 %v2805
  %v2854 = vunpack.c.l.b16 %v2806
  %v2855 = vunpack.c.l.b16 %v2807
  %v2856 = vunpack.c.l.b16 %v2808
  %v2857 = vunpack.c.l.b16 %v2809
  %v2858 = vunpack.c.l.b16 %v2810
  %v2859 = vunpack.c.l.b16 %v2811
  %v2860 = vrot.slane %v2853, 7
  %v2861 = vsel %vm303, %v2860, %v2852
  %v2862 = vrot.slane %v2854, 6
  %v2863 = vsel %vm299, %v2862, %v2861
  %v2864 = vrot.slane %v2855, 5
  %v2865 = vsel %vm305, %v2864, %v2863
  %v2866 = vrot.slane %v2856, 4
  %v2867 = vsel %vm311, %v2866, %v2865
  %v2868 = vrot.slane %v2857, 3
  %v2869 = vsel %vm317, %v2868, %v2867
  %v2870 = vrot.slane %v2858, 2
  %v2871 = vsel %vm323, %v2870, %v2869
  %v2872 = vrot.slane %v2859, 1
  %v2873 = vsel %vm1028, %v2872, %v2871
  %v2874 = vpack.c.b16 %v2873, %v2873
  %v2908 = vunpack.c.l.b16 %v2812
  %v2909 = vunpack.c.h.b16 %v2812
  %v2910 = vunpack.c.l.b16 %v2813
  %v2911 = vunpack.c.h.b16 %v2813
  %v2912 = vunpack.c.l.b16 %v2814
  %v2913 = vunpack.c.h.b16 %v2814
  %v2914 = vunpack.c.l.b16 %v2815
  %v2915 = vunpack.c.h.b16 %v2815
  %v2916 = vunpack.c.l.b16 %v2816
  %v2917 = vunpack.c.h.b16 %v2816
  %v2918 = vunpack.c.l.b16 %v2817
  %v2919 = vunpack.c.h.b16 %v2817
  %v2920 = vunpack.c.l.b16 %v2818
  %v2921 = vunpack.c.h.b16 %v2818
  %v2922 = vunpack.c.l.b16 %v2819
  %v2923 = vunpack.c.h.b16 %v2819
  %v2924 = vunpack.c.l.b16 %v2820
  %v2925 = vunpack.c.h.b16 %v2820
  %v2926 = vunpack.c.l.b16 %v2821
  %v2927 = vunpack.c.h.b16 %v2821
  %v2928 = vunpack.c.l.b16 %v2822
  %v2929 = vunpack.c.h.b16 %v2822
  %v2930 = vunpack.c.l.b16 %v2823
  %v2931 = vunpack.c.h.b16 %v2823
  %v2932 = vunpack.c.l.b16 %v2824
  %v2933 = vunpack.c.h.b16 %v2824
  %v2934 = vunpack.c.l.b16 %v2825
  %v2935 = vunpack.c.h.b16 %v2825
  %v2936 = vunpack.c.l.b16 %v2826
  %v2937 = vunpack.c.h.b16 %v2826
  %v2938 = vunpack.c.l.b16 %v2827
  %v2939 = vunpack.c.h.b16 %v2827
  %v2940 = vunpack.c.l.b16 %v2828
  %v2941 = vunpack.c.h.b16 %v2828
  %v2942 = vunpack.c.l.b16 %v2829
  %v2943 = vunpack.c.h.b16 %v2829
  %v2944 = vunpack.c.l.b16 %v2830
  %v2945 = vunpack.c.h.b16 %v2830
  %v2946 = vunpack.c.l.b16 %v2831
  %v2947 = vunpack.c.h.b16 %v2831
  %v2948 = vunpack.c.l.b16 %v2832
  %v2949 = vunpack.c.h.b16 %v2832
  %v2950 = vunpack.c.l.b16 %v2833
  %v2951 = vunpack.c.h.b16 %v2833
  %v2952 = vunpack.c.l.b16 %v2834
  %v2953 = vunpack.c.h.b16 %v2834
  %v2954 = vunpack.c.l.b16 %v2835
  %v2955 = vunpack.c.h.b16 %v2835
  %v2956 = vunpack.c.l.b16 %v2836
  %v2957 = vunpack.c.h.b16 %v2836
  %v2958 = vunpack.c.l.b16 %v2837
  %v2959 = vunpack.c.h.b16 %v2837
  %v2960 = vunpack.c.l.b16 %v2838
  %v2961 = vunpack.c.h.b16 %v2838
  %v2962 = vunpack.c.l.b16 %v2839
  %v2963 = vunpack.c.h.b16 %v2839
  %v2964 = vunpack.c.l.b16 %v2840
  %v2965 = vunpack.c.h.b16 %v2840
  %v2966 = vunpack.c.l.b16 %v2841
  %v2967 = vunpack.c.h.b16 %v2841
  %v2968 = vunpack.c.l.b16 %v2842
  %v2969 = vunpack.c.h.b16 %v2842
  %v2970 = vunpack.c.l.b16 %v2843
  %v2971 = vunpack.c.h.b16 %v2843
  %v2972 = vpack.c.b16 %v2912, %v2908
  %v2973 = vpack.c.b16 %v2913, %v2909
  %v2974 = vpack.c.b16 %v2914, %v2910
  %v2975 = vpack.c.b16 %v2915, %v2911
  %v2976 = vpack.c.b16 %v2920, %v2916
  %v2977 = vpack.c.b16 %v2921, %v2917
  %v2978 = vpack.c.b16 %v2922, %v2918
  %v2979 = vpack.c.b16 %v2923, %v2919
  %v2980 = vpack.c.b16 %v2928, %v2924
  %v2981 = vpack.c.b16 %v2929, %v2925
  %v2982 = vpack.c.b16 %v2930, %v2926
  %v2983 = vpack.c.b16 %v2931, %v2927
  %v2984 = vpack.c.b16 %v2936, %v2932
  %v2985 = vpack.c.b16 %v2937, %v2933
  %v2986 = vpack.c.b16 %v2938, %v2934
  %v2987 = vpack.c.b16 %v2939, %v2935
  %v2988 = vpack.c.b16 %v2944, %v2940
  %v2989 = vpack.c.b16 %v2945, %v2941
  %v2990 = vpack.c.b16 %v2946, %v2942
  %v2991 = vpack.c.b16 %v2947, %v2943
  %v2992 = vpack.c.b16 %v2952, %v2948
  %v2993 = vpack.c.b16 %v2953, %v2949
  %v2994 = vpack.c.b16 %v2954, %v2950
  %v2995 = vpack.c.b16 %v2955, %v2951
  %v2996 = vpack.c.b16 %v2960, %v2956
  %v2997 = vpack.c.b16 %v2961, %v2957
  %v2998 = vpack.c.b16 %v2962, %v2958
  %v2999 = vpack.c.b16 %v2963, %v2959
  %v3000 = vpack.c.b16 %v2968, %v2964
  %v3001 = vpack.c.b16 %v2969, %v2965
  %v3002 = vpack.c.b16 %v2970, %v2966
  %v3003 = vpack.c.b16 %v2971, %v2967
  %3036 = vmatpush.bf16.msra.mxu0 %v3000
  %3037 = vmatpush.bf16.msra.mxu0 %v2996
  %3038 = vmatpush.bf16.msra.mxu0 %v2992
  %3039 = vmatpush.bf16.msra.mxu0 %v2988
  %3040 = vmatpush.bf16.msra.mxu0 %v2984
  %3041 = vmatpush.bf16.msra.mxu0 %v2980
  %3042 = vmatpush.bf16.msra.mxu0 %v2976
  %3043 = vmatpush.bf16.msra.mxu0 %v2972
  %3044 = vmatmul.bf16.gmra.mxu0 %v2874
  %v3045 = vpop.f32.mrf.mxu0
  %v3046 = vadd.f32 0.0, %v3045
  %v3047 = vpop.f32.mrf.mxu0
  %3048 = vdwg.mxu0
  %3049 = vmatpush.bf16.msra.mxu0 %v3001
  %3050 = vmatpush.bf16.msra.mxu0 %v2997
  %3051 = vmatpush.bf16.msra.mxu0 %v2993
  %3052 = vmatpush.bf16.msra.mxu0 %v2989
  %3053 = vmatpush.bf16.msra.mxu0 %v2985
  %3054 = vmatpush.bf16.msra.mxu0 %v2981
  %3055 = vmatpush.bf16.msra.mxu0 %v2977
  %3056 = vmatpush.bf16.msra.mxu0 %v2973
  %3057 = vmatmul.bf16.gmra.mxu0 %v2874
  %v3058 = vpop.f32.mrf.mxu0
  %v3059 = vadd.f32 0.0, %v3058
  %v3060 = vpop.f32.mrf.mxu0
  %3061 = vdwg.mxu0
  %3062 = vmatpush.bf16.msra.mxu0 %v3002
  %3063 = vmatpush.bf16.msra.mxu0 %v2998
  %3064 = vmatpush.bf16.msra.mxu0 %v2994
  %3065 = vmatpush.bf16.msra.mxu0 %v2990
  %3066 = vmatpush.bf16.msra.mxu0 %v2986
  %3067 = vmatpush.bf16.msra.mxu0 %v2982
  %3068 = vmatpush.bf16.msra.mxu0 %v2978
  %3069 = vmatpush.bf16.msra.mxu0 %v2974
  %3070 = vmatmul.bf16.gmra.mxu0 %v2874
  %v3071 = vpop.f32.mrf.mxu0
  %v3072 = vadd.f32 0.0, %v3071
  %v3073 = vpop.f32.mrf.mxu0
  %3074 = vdwg.mxu0
  %3075 = vmatpush.bf16.msra.mxu0 %v3003
  %3076 = vmatpush.bf16.msra.mxu0 %v2999
  %3077 = vmatpush.bf16.msra.mxu0 %v2995
  %3078 = vmatpush.bf16.msra.mxu0 %v2991
  %3079 = vmatpush.bf16.msra.mxu0 %v2987
  %3080 = vmatpush.bf16.msra.mxu0 %v2983
  %3081 = vmatpush.bf16.msra.mxu0 %v2979
  %3082 = vmatpush.bf16.msra.mxu0 %v2975
  %3083 = vmatmul.bf16.gmra.mxu0 %v2874
  %v3084 = vpop.f32.mrf.mxu0
  %v3085 = vadd.f32 0.0, %v3084
  %v3086 = vpop.f32.mrf.mxu0
  %3087 = vdwg.mxu0
  %v3092 = vrot.slane %v3059, 7
  %v3093 = vrot.slane %v3072, 6
  %v3094 = vrot.slane %v3085, 5
  %v3095 = vsel %vm297, %v3046, %v3092
  %v3096 = vsel %vm299, %v3093, %v3094
  %v3097 = vsel %vm301, %v3095, %v3096
  %v3098 = vsel %vm303, %v3046, %v3092
  %v3099 = vsel %vm305, %v3093, %v3094
  %v3100 = vsel %vm307, %v3098, %v3099
  %v3101 = vrot.slane %v3100, 1
  %v3102 = vsel %vm299, %v3046, %v3092
  %v3103 = vsel %vm311, %v3093, %v3094
  %v3104 = vsel %vm313, %v3102, %v3103
  %v3105 = vrot.slane %v3104, 2
  %v3106 = vsel %vm305, %v3046, %v3092
  %v3107 = vsel %vm317, %v3093, %v3094
  %v3108 = vsel %vm319, %v3106, %v3107
  %v3109 = vrot.slane %v3108, 3
  %v3110 = vsel %vm311, %v3046, %v3092
  %v3111 = vsel %vm323, %v3093, %v3094
  %v3112 = vsel %vm325, %v3110, %v3111
  %v3113 = vrot.slane %v3112, 4
  %v3114 = vsel %vm317, %v3046, %v3092
  %v3115 = vsel %vm329, %v3094, %v3093
  %v3116 = vsel %vm331, %v3114, %v3115
  %v3117 = vrot.slane %v3116, 5
  %v3118 = vsel %vm323, %v3046, %v3092
  %v3119 = vsel %vm297, %v3093, %v3094
  %v3120 = vsel %vm336, %v3119, %v3118
  %v3121 = vrot.slane %v3120, 6
  %v3122 = vsel %vm329, %v3092, %v3046
  %v3123 = vsel %vm303, %v3093, %v3094
  %v3124 = vsel %vm341, %v3123, %v3122
  %v3125 = vrot.slane %v3124, 7
  %v3134 = vadd.f32 %v2789, %v3097
  %v3135 = vadd.f32 %v2791, %v3101
  %v3136 = vadd.f32 %v2793, %v3105
  %v3137 = vadd.f32 %v2795, %v3109
  %v3138 = vadd.f32 %v2797, %v3113
  %v3139 = vadd.f32 %v2799, %v3117
  %v3140 = vadd.f32 %v2801, %v3121
  %v3141 = vadd.f32 %v2803, %v3125
  %v3142 = vxor.u32 %v3134, 2147483648
  %v3143 = vxor.u32 %v3135, 2147483648
  %v3144 = vxor.u32 %v3136, 2147483648
  %v3145 = vxor.u32 %v3137, 2147483648
  %v3146 = vxor.u32 %v3138, 2147483648
  %v3147 = vxor.u32 %v3139, 2147483648
  %v3148 = vxor.u32 %v3140, 2147483648
  %v3149 = vxor.u32 %v3141, 2147483648
  %v3150 = vmul.f32 %v3142, 1.442695
  %v3151 = vpow.pop %v3150
  %v3152 = vmul.f32 %v3143, 1.442695
  %v3153 = vpow.pop %v3152
  %v3154 = vmul.f32 %v3144, 1.442695
  %v3155 = vpow.pop %v3154
  %v3156 = vmul.f32 %v3145, 1.442695
  %v3157 = vpow.pop %v3156
  %v3158 = vmul.f32 %v3146, 1.442695
  %v3159 = vpow.pop %v3158
  %v3160 = vmul.f32 %v3147, 1.442695
  %v3161 = vpow.pop %v3160
  %v3162 = vmul.f32 %v3148, 1.442695
  %v3163 = vpow.pop %v3162
  %v3164 = vmul.f32 %v3149, 1.442695
  %v3165 = vpow.pop %v3164
  %v3166 = vadd.f32 %v3151, 1.0
  %v3167 = vadd.f32 %v3153, 1.0
  %v3168 = vadd.f32 %v3155, 1.0
  %v3169 = vadd.f32 %v3157, 1.0
  %v3170 = vadd.f32 %v3159, 1.0
  %v3171 = vadd.f32 %v3161, 1.0
  %v3172 = vadd.f32 %v3163, 1.0
  %v3173 = vadd.f32 %v3165, 1.0
  %v3174 = vrcp.pop %v3166
  %v3175 = vmul.f32 %v3166, %v3174
  %v3176 = vsub.f32 1.0, %v3175
  %v3177 = vmul.f32 %v3174, %v3176
  %v3178 = vadd.f32 %v3174, %v3177
  %vm3179 = vweird.f32 %v3166
  %vm3180 = vweird.f32 %v3174
  %vm3181 = vmor %vm3179, %vm3180
  %v3182 = vsel %vm3181, %v3174, %v3178
  %v3183 = vand.u32 2147483647, %v3166
  %vm3184 = vcmp.eq.f32.partialorder %v3183, 8.507059e+37
  %v3185 = vand.u32 %v3166, 2147483648
  %v3186 = vor.u32 1.1754944e-38, %v3185
  %v3187 = vsel %vm3184, %v3186, %v3182
  %v3188 = vmul.f32 1.0, %v3187
  %v3189 = vrcp.pop %v3167
  %v3190 = vmul.f32 %v3167, %v3189
  %v3191 = vsub.f32 1.0, %v3190
  %v3192 = vmul.f32 %v3189, %v3191
  %v3193 = vadd.f32 %v3189, %v3192
  %vm3194 = vweird.f32 %v3167
  %vm3195 = vweird.f32 %v3189
  %vm3196 = vmor %vm3194, %vm3195
  %v3197 = vsel %vm3196, %v3189, %v3193
  %v3198 = vand.u32 2147483647, %v3167
  %vm3199 = vcmp.eq.f32.partialorder %v3198, 8.507059e+37
  %v3200 = vand.u32 %v3167, 2147483648
  %v3201 = vor.u32 1.1754944e-38, %v3200
  %v3202 = vsel %vm3199, %v3201, %v3197
  %v3203 = vmul.f32 1.0, %v3202
  %v3204 = vrcp.pop %v3168
  %v3205 = vmul.f32 %v3168, %v3204
  %v3206 = vsub.f32 1.0, %v3205
  %v3207 = vmul.f32 %v3204, %v3206
  %v3208 = vadd.f32 %v3204, %v3207
  %vm3209 = vweird.f32 %v3168
  %vm3210 = vweird.f32 %v3204
  %vm3211 = vmor %vm3209, %vm3210
  %v3212 = vsel %vm3211, %v3204, %v3208
  %v3213 = vand.u32 2147483647, %v3168
  %vm3214 = vcmp.eq.f32.partialorder %v3213, 8.507059e+37
  %v3215 = vand.u32 %v3168, 2147483648
  %v3216 = vor.u32 1.1754944e-38, %v3215
  %v3217 = vsel %vm3214, %v3216, %v3212
  %v3218 = vmul.f32 1.0, %v3217
  %v3219 = vrcp.pop %v3169
  %v3220 = vmul.f32 %v3169, %v3219
  %v3221 = vsub.f32 1.0, %v3220
  %v3222 = vmul.f32 %v3219, %v3221
  %v3223 = vadd.f32 %v3219, %v3222
  %vm3224 = vweird.f32 %v3169
  %vm3225 = vweird.f32 %v3219
  %vm3226 = vmor %vm3224, %vm3225
  %v3227 = vsel %vm3226, %v3219, %v3223
  %v3228 = vand.u32 2147483647, %v3169
  %vm3229 = vcmp.eq.f32.partialorder %v3228, 8.507059e+37
  %v3230 = vand.u32 %v3169, 2147483648
  %v3231 = vor.u32 1.1754944e-38, %v3230
  %v3232 = vsel %vm3229, %v3231, %v3227
  %v3233 = vmul.f32 1.0, %v3232
  %v3234 = vrcp.pop %v3170
  %v3235 = vmul.f32 %v3170, %v3234
  %v3236 = vsub.f32 1.0, %v3235
  %v3237 = vmul.f32 %v3234, %v3236
  %v3238 = vadd.f32 %v3234, %v3237
  %vm3239 = vweird.f32 %v3170
  %vm3240 = vweird.f32 %v3234
  %vm3241 = vmor %vm3239, %vm3240
  %v3242 = vsel %vm3241, %v3234, %v3238
  %v3243 = vand.u32 2147483647, %v3170
  %vm3244 = vcmp.eq.f32.partialorder %v3243, 8.507059e+37
  %v3245 = vand.u32 %v3170, 2147483648
  %v3246 = vor.u32 1.1754944e-38, %v3245
  %v3247 = vsel %vm3244, %v3246, %v3242
  %v3248 = vmul.f32 1.0, %v3247
  %v3249 = vrcp.pop %v3171
  %v3250 = vmul.f32 %v3171, %v3249
  %v3251 = vsub.f32 1.0, %v3250
  %v3252 = vmul.f32 %v3249, %v3251
  %v3253 = vadd.f32 %v3249, %v3252
  %vm3254 = vweird.f32 %v3171
  %vm3255 = vweird.f32 %v3249
  %vm3256 = vmor %vm3254, %vm3255
  %v3257 = vsel %vm3256, %v3249, %v3253
  %v3258 = vand.u32 2147483647, %v3171
  %vm3259 = vcmp.eq.f32.partialorder %v3258, 8.507059e+37
  %v3260 = vand.u32 %v3171, 2147483648
  %v3261 = vor.u32 1.1754944e-38, %v3260
  %v3262 = vsel %vm3259, %v3261, %v3257
  %v3263 = vmul.f32 1.0, %v3262
  %v3264 = vrcp.pop %v3172
  %v3265 = vmul.f32 %v3172, %v3264
  %v3266 = vsub.f32 1.0, %v3265
  %v3267 = vmul.f32 %v3264, %v3266
  %v3268 = vadd.f32 %v3264, %v3267
  %vm3269 = vweird.f32 %v3172
  %vm3270 = vweird.f32 %v3264
  %vm3271 = vmor %vm3269, %vm3270
  %v3272 = vsel %vm3271, %v3264, %v3268
  %v3273 = vand.u32 2147483647, %v3172
  %vm3274 = vcmp.eq.f32.partialorder %v3273, 8.507059e+37
  %v3275 = vand.u32 %v3172, 2147483648
  %v3276 = vor.u32 1.1754944e-38, %v3275
  %v3277 = vsel %vm3274, %v3276, %v3272
  %v3278 = vmul.f32 1.0, %v3277
  %v3279 = vrcp.pop %v3173
  %v3280 = vmul.f32 %v3173, %v3279
  %v3281 = vsub.f32 1.0, %v3280
  %v3282 = vmul.f32 %v3279, %v3281
  %v3283 = vadd.f32 %v3279, %v3282
  %vm3284 = vweird.f32 %v3173
  %vm3285 = vweird.f32 %v3279
  %vm3286 = vmor %vm3284, %vm3285
  %v3287 = vsel %vm3286, %v3279, %v3283
  %v3288 = vand.u32 2147483647, %v3173
  %vm3289 = vcmp.eq.f32.partialorder %v3288, 8.507059e+37
  %v3290 = vand.u32 %v3173, 2147483648
  %v3291 = vor.u32 1.1754944e-38, %v3290
  %v3292 = vsel %vm3289, %v3291, %v3287
  %v3293 = vmul.f32 1.0, %v3292
  %v3302 = vrot.slane %v3134, 1
  %v3303 = vrot.slane %v3135, 1
  %v3304 = vrot.slane %v3136, 1
  %v3305 = vrot.slane %v3137, 1
  %v3306 = vrot.slane %v3138, 1
  %v3307 = vrot.slane %v3139, 1
  %v3308 = vrot.slane %v3140, 1
  %v3309 = vrot.slane %v3141, 1
  %v3318 = vxor.u32 %v3302, 2147483648
  %v3319 = vxor.u32 %v3303, 2147483648
  %v3320 = vxor.u32 %v3304, 2147483648
  %v3321 = vxor.u32 %v3305, 2147483648
  %v3322 = vxor.u32 %v3306, 2147483648
  %v3323 = vxor.u32 %v3307, 2147483648
  %v3324 = vxor.u32 %v3308, 2147483648
  %v3325 = vxor.u32 %v3309, 2147483648
  %v3326 = vmul.f32 %v3318, 1.442695
  %v3327 = vpow.pop %v3326
  %v3328 = vmul.f32 %v3319, 1.442695
  %v3329 = vpow.pop %v3328
  %v3330 = vmul.f32 %v3320, 1.442695
  %v3331 = vpow.pop %v3330
  %v3332 = vmul.f32 %v3321, 1.442695
  %v3333 = vpow.pop %v3332
  %v3334 = vmul.f32 %v3322, 1.442695
  %v3335 = vpow.pop %v3334
  %v3336 = vmul.f32 %v3323, 1.442695
  %v3337 = vpow.pop %v3336
  %v3338 = vmul.f32 %v3324, 1.442695
  %v3339 = vpow.pop %v3338
  %v3340 = vmul.f32 %v3325, 1.442695
  %v3341 = vpow.pop %v3340
  %v3342 = vadd.f32 %v3327, 1.0
  %v3343 = vadd.f32 %v3329, 1.0
  %v3344 = vadd.f32 %v3331, 1.0
  %v3345 = vadd.f32 %v3333, 1.0
  %v3346 = vadd.f32 %v3335, 1.0
  %v3347 = vadd.f32 %v3337, 1.0
  %v3348 = vadd.f32 %v3339, 1.0
  %v3349 = vadd.f32 %v3341, 1.0
  %v3350 = vrcp.pop %v3342
  %v3351 = vmul.f32 %v3342, %v3350
  %v3352 = vsub.f32 1.0, %v3351
  %v3353 = vmul.f32 %v3350, %v3352
  %v3354 = vadd.f32 %v3350, %v3353
  %vm3355 = vweird.f32 %v3342
  %vm3356 = vweird.f32 %v3350
  %vm3357 = vmor %vm3355, %vm3356
  %v3358 = vsel %vm3357, %v3350, %v3354
  %v3359 = vand.u32 2147483647, %v3342
  %vm3360 = vcmp.eq.f32.partialorder %v3359, 8.507059e+37
  %v3361 = vand.u32 %v3342, 2147483648
  %v3362 = vor.u32 1.1754944e-38, %v3361
  %v3363 = vsel %vm3360, %v3362, %v3358
  %v3364 = vmul.f32 1.0, %v3363
  %v3365 = vrcp.pop %v3343
  %v3366 = vmul.f32 %v3343, %v3365
  %v3367 = vsub.f32 1.0, %v3366
  %v3368 = vmul.f32 %v3365, %v3367
  %v3369 = vadd.f32 %v3365, %v3368
  %vm3370 = vweird.f32 %v3343
  %vm3371 = vweird.f32 %v3365
  %vm3372 = vmor %vm3370, %vm3371
  %v3373 = vsel %vm3372, %v3365, %v3369
  %v3374 = vand.u32 2147483647, %v3343
  %vm3375 = vcmp.eq.f32.partialorder %v3374, 8.507059e+37
  %v3376 = vand.u32 %v3343, 2147483648
  %v3377 = vor.u32 1.1754944e-38, %v3376
  %v3378 = vsel %vm3375, %v3377, %v3373
  %v3379 = vmul.f32 1.0, %v3378
  %v3380 = vrcp.pop %v3344
  %v3381 = vmul.f32 %v3344, %v3380
  %v3382 = vsub.f32 1.0, %v3381
  %v3383 = vmul.f32 %v3380, %v3382
  %v3384 = vadd.f32 %v3380, %v3383
  %vm3385 = vweird.f32 %v3344
  %vm3386 = vweird.f32 %v3380
  %vm3387 = vmor %vm3385, %vm3386
  %v3388 = vsel %vm3387, %v3380, %v3384
  %v3389 = vand.u32 2147483647, %v3344
  %vm3390 = vcmp.eq.f32.partialorder %v3389, 8.507059e+37
  %v3391 = vand.u32 %v3344, 2147483648
  %v3392 = vor.u32 1.1754944e-38, %v3391
  %v3393 = vsel %vm3390, %v3392, %v3388
  %v3394 = vmul.f32 1.0, %v3393
  %v3395 = vrcp.pop %v3345
  %v3396 = vmul.f32 %v3345, %v3395
  %v3397 = vsub.f32 1.0, %v3396
  %v3398 = vmul.f32 %v3395, %v3397
  %v3399 = vadd.f32 %v3395, %v3398
  %vm3400 = vweird.f32 %v3345
  %vm3401 = vweird.f32 %v3395
  %vm3402 = vmor %vm3400, %vm3401
  %v3403 = vsel %vm3402, %v3395, %v3399
  %v3404 = vand.u32 2147483647, %v3345
  %vm3405 = vcmp.eq.f32.partialorder %v3404, 8.507059e+37
  %v3406 = vand.u32 %v3345, 2147483648
  %v3407 = vor.u32 1.1754944e-38, %v3406
  %v3408 = vsel %vm3405, %v3407, %v3403
  %v3409 = vmul.f32 1.0, %v3408
  %v3410 = vrcp.pop %v3346
  %v3411 = vmul.f32 %v3346, %v3410
  %v3412 = vsub.f32 1.0, %v3411
  %v3413 = vmul.f32 %v3410, %v3412
  %v3414 = vadd.f32 %v3410, %v3413
  %vm3415 = vweird.f32 %v3346
  %vm3416 = vweird.f32 %v3410
  %vm3417 = vmor %vm3415, %vm3416
  %v3418 = vsel %vm3417, %v3410, %v3414
  %v3419 = vand.u32 2147483647, %v3346
  %vm3420 = vcmp.eq.f32.partialorder %v3419, 8.507059e+37
  %v3421 = vand.u32 %v3346, 2147483648
  %v3422 = vor.u32 1.1754944e-38, %v3421
  %v3423 = vsel %vm3420, %v3422, %v3418
  %v3424 = vmul.f32 1.0, %v3423
  %v3425 = vrcp.pop %v3347
  %v3426 = vmul.f32 %v3347, %v3425
  %v3427 = vsub.f32 1.0, %v3426
  %v3428 = vmul.f32 %v3425, %v3427
  %v3429 = vadd.f32 %v3425, %v3428
  %vm3430 = vweird.f32 %v3347
  %vm3431 = vweird.f32 %v3425
  %vm3432 = vmor %vm3430, %vm3431
  %v3433 = vsel %vm3432, %v3425, %v3429
  %v3434 = vand.u32 2147483647, %v3347
  %vm3435 = vcmp.eq.f32.partialorder %v3434, 8.507059e+37
  %v3436 = vand.u32 %v3347, 2147483648
  %v3437 = vor.u32 1.1754944e-38, %v3436
  %v3438 = vsel %vm3435, %v3437, %v3433
  %v3439 = vmul.f32 1.0, %v3438
  %v3440 = vrcp.pop %v3348
  %v3441 = vmul.f32 %v3348, %v3440
  %v3442 = vsub.f32 1.0, %v3441
  %v3443 = vmul.f32 %v3440, %v3442
  %v3444 = vadd.f32 %v3440, %v3443
  %vm3445 = vweird.f32 %v3348
  %vm3446 = vweird.f32 %v3440
  %vm3447 = vmor %vm3445, %vm3446
  %v3448 = vsel %vm3447, %v3440, %v3444
  %v3449 = vand.u32 2147483647, %v3348
  %vm3450 = vcmp.eq.f32.partialorder %v3449, 8.507059e+37
  %v3451 = vand.u32 %v3348, 2147483648
  %v3452 = vor.u32 1.1754944e-38, %v3451
  %v3453 = vsel %vm3450, %v3452, %v3448
  %v3454 = vmul.f32 1.0, %v3453
  %v3455 = vrcp.pop %v3349
  %v3456 = vmul.f32 %v3349, %v3455
  %v3457 = vsub.f32 1.0, %v3456
  %v3458 = vmul.f32 %v3455, %v3457
  %v3459 = vadd.f32 %v3455, %v3458
  %vm3460 = vweird.f32 %v3349
  %vm3461 = vweird.f32 %v3455
  %vm3462 = vmor %vm3460, %vm3461
  %v3463 = vsel %vm3462, %v3455, %v3459
  %v3464 = vand.u32 2147483647, %v3349
  %vm3465 = vcmp.eq.f32.partialorder %v3464, 8.507059e+37
  %v3466 = vand.u32 %v3349, 2147483648
  %v3467 = vor.u32 1.1754944e-38, %v3466
  %v3468 = vsel %vm3465, %v3467, %v3463
  %v3469 = vmul.f32 1.0, %v3468
  %v3470 = vrot.slane %v3134, 2
  %v3471 = vrot.slane %v3135, 2
  %v3472 = vrot.slane %v3136, 2
  %v3473 = vrot.slane %v3137, 2
  %v3474 = vrot.slane %v3138, 2
  %v3475 = vrot.slane %v3139, 2
  %v3476 = vrot.slane %v3140, 2
  %v3477 = vrot.slane %v3141, 2
  %v3486 = vtanh.pop %v3470
  %v3487 = vtanh.pop %v3471
  %v3488 = vtanh.pop %v3472
  %v3489 = vtanh.pop %v3473
  %v3490 = vtanh.pop %v3474
  %v3491 = vtanh.pop %v3475
  %v3492 = vtanh.pop %v3476
  %v3493 = vtanh.pop %v3477
  %v3494 = vrot.slane %v3134, 3
  %v3495 = vrot.slane %v3135, 3
  %v3496 = vrot.slane %v3136, 3
  %v3497 = vrot.slane %v3137, 3
  %v3498 = vrot.slane %v3138, 3
  %v3499 = vrot.slane %v3139, 3
  %v3500 = vrot.slane %v3140, 3
  %v3501 = vrot.slane %v3141, 3
  %v3510 = vxor.u32 %v3494, 2147483648
  %v3511 = vxor.u32 %v3495, 2147483648
  %v3512 = vxor.u32 %v3496, 2147483648
  %v3513 = vxor.u32 %v3497, 2147483648
  %v3514 = vxor.u32 %v3498, 2147483648
  %v3515 = vxor.u32 %v3499, 2147483648
  %v3516 = vxor.u32 %v3500, 2147483648
  %v3517 = vxor.u32 %v3501, 2147483648
  %v3518 = vmul.f32 %v3510, 1.442695
  %v3519 = vpow.pop %v3518
  %v3520 = vmul.f32 %v3511, 1.442695
  %v3521 = vpow.pop %v3520
  %v3522 = vmul.f32 %v3512, 1.442695
  %v3523 = vpow.pop %v3522
  %v3524 = vmul.f32 %v3513, 1.442695
  %v3525 = vpow.pop %v3524
  %v3526 = vmul.f32 %v3514, 1.442695
  %v3527 = vpow.pop %v3526
  %v3528 = vmul.f32 %v3515, 1.442695
  %v3529 = vpow.pop %v3528
  %v3530 = vmul.f32 %v3516, 1.442695
  %v3531 = vpow.pop %v3530
  %v3532 = vmul.f32 %v3517, 1.442695
  %v3533 = vpow.pop %v3532
  %v3534 = vadd.f32 %v3519, 1.0
  %v3535 = vadd.f32 %v3521, 1.0
  %v3536 = vadd.f32 %v3523, 1.0
  %v3537 = vadd.f32 %v3525, 1.0
  %v3538 = vadd.f32 %v3527, 1.0
  %v3539 = vadd.f32 %v3529, 1.0
  %v3540 = vadd.f32 %v3531, 1.0
  %v3541 = vadd.f32 %v3533, 1.0
  %v3542 = vrcp.pop %v3534
  %v3543 = vmul.f32 %v3534, %v3542
  %v3544 = vsub.f32 1.0, %v3543
  %v3545 = vmul.f32 %v3542, %v3544
  %v3546 = vadd.f32 %v3542, %v3545
  %vm3547 = vweird.f32 %v3534
  %vm3548 = vweird.f32 %v3542
  %vm3549 = vmor %vm3547, %vm3548
  %v3550 = vsel %vm3549, %v3542, %v3546
  %v3551 = vand.u32 2147483647, %v3534
  %vm3552 = vcmp.eq.f32.partialorder %v3551, 8.507059e+37
  %v3553 = vand.u32 %v3534, 2147483648
  %v3554 = vor.u32 1.1754944e-38, %v3553
  %v3555 = vsel %vm3552, %v3554, %v3550
  %v3556 = vmul.f32 1.0, %v3555
  %v3557 = vrcp.pop %v3535
  %v3558 = vmul.f32 %v3535, %v3557
  %v3559 = vsub.f32 1.0, %v3558
  %v3560 = vmul.f32 %v3557, %v3559
  %v3561 = vadd.f32 %v3557, %v3560
  %vm3562 = vweird.f32 %v3535
  %vm3563 = vweird.f32 %v3557
  %vm3564 = vmor %vm3562, %vm3563
  %v3565 = vsel %vm3564, %v3557, %v3561
  %v3566 = vand.u32 2147483647, %v3535
  %vm3567 = vcmp.eq.f32.partialorder %v3566, 8.507059e+37
  %v3568 = vand.u32 %v3535, 2147483648
  %v3569 = vor.u32 1.1754944e-38, %v3568
  %v3570 = vsel %vm3567, %v3569, %v3565
  %v3571 = vmul.f32 1.0, %v3570
  %v3572 = vrcp.pop %v3536
  %v3573 = vmul.f32 %v3536, %v3572
  %v3574 = vsub.f32 1.0, %v3573
  %v3575 = vmul.f32 %v3572, %v3574
  %v3576 = vadd.f32 %v3572, %v3575
  %vm3577 = vweird.f32 %v3536
  %vm3578 = vweird.f32 %v3572
  %vm3579 = vmor %vm3577, %vm3578
  %v3580 = vsel %vm3579, %v3572, %v3576
  %v3581 = vand.u32 2147483647, %v3536
  %vm3582 = vcmp.eq.f32.partialorder %v3581, 8.507059e+37
  %v3583 = vand.u32 %v3536, 2147483648
  %v3584 = vor.u32 1.1754944e-38, %v3583
  %v3585 = vsel %vm3582, %v3584, %v3580
  %v3586 = vmul.f32 1.0, %v3585
  %v3587 = vrcp.pop %v3537
  %v3588 = vmul.f32 %v3537, %v3587
  %v3589 = vsub.f32 1.0, %v3588
  %v3590 = vmul.f32 %v3587, %v3589
  %v3591 = vadd.f32 %v3587, %v3590
  %vm3592 = vweird.f32 %v3537
  %vm3593 = vweird.f32 %v3587
  %vm3594 = vmor %vm3592, %vm3593
  %v3595 = vsel %vm3594, %v3587, %v3591
  %v3596 = vand.u32 2147483647, %v3537
  %vm3597 = vcmp.eq.f32.partialorder %v3596, 8.507059e+37
  %v3598 = vand.u32 %v3537, 2147483648
  %v3599 = vor.u32 1.1754944e-38, %v3598
  %v3600 = vsel %vm3597, %v3599, %v3595
  %v3601 = vmul.f32 1.0, %v3600
  %v3602 = vrcp.pop %v3538
  %v3603 = vmul.f32 %v3538, %v3602
  %v3604 = vsub.f32 1.0, %v3603
  %v3605 = vmul.f32 %v3602, %v3604
  %v3606 = vadd.f32 %v3602, %v3605
  %vm3607 = vweird.f32 %v3538
  %vm3608 = vweird.f32 %v3602
  %vm3609 = vmor %vm3607, %vm3608
  %v3610 = vsel %vm3609, %v3602, %v3606
  %v3611 = vand.u32 2147483647, %v3538
  %vm3612 = vcmp.eq.f32.partialorder %v3611, 8.507059e+37
  %v3613 = vand.u32 %v3538, 2147483648
  %v3614 = vor.u32 1.1754944e-38, %v3613
  %v3615 = vsel %vm3612, %v3614, %v3610
  %v3616 = vmul.f32 1.0, %v3615
  %v3617 = vrcp.pop %v3539
  %v3618 = vmul.f32 %v3539, %v3617
  %v3619 = vsub.f32 1.0, %v3618
  %v3620 = vmul.f32 %v3617, %v3619
  %v3621 = vadd.f32 %v3617, %v3620
  %vm3622 = vweird.f32 %v3539
  %vm3623 = vweird.f32 %v3617
  %vm3624 = vmor %vm3622, %vm3623
  %v3625 = vsel %vm3624, %v3617, %v3621
  %v3626 = vand.u32 2147483647, %v3539
  %vm3627 = vcmp.eq.f32.partialorder %v3626, 8.507059e+37
  %v3628 = vand.u32 %v3539, 2147483648
  %v3629 = vor.u32 1.1754944e-38, %v3628
  %v3630 = vsel %vm3627, %v3629, %v3625
  %v3631 = vmul.f32 1.0, %v3630
  %v3632 = vrcp.pop %v3540
  %v3633 = vmul.f32 %v3540, %v3632
  %v3634 = vsub.f32 1.0, %v3633
  %v3635 = vmul.f32 %v3632, %v3634
  %v3636 = vadd.f32 %v3632, %v3635
  %vm3637 = vweird.f32 %v3540
  %vm3638 = vweird.f32 %v3632
  %vm3639 = vmor %vm3637, %vm3638
  %v3640 = vsel %vm3639, %v3632, %v3636
  %v3641 = vand.u32 2147483647, %v3540
  %vm3642 = vcmp.eq.f32.partialorder %v3641, 8.507059e+37
  %v3643 = vand.u32 %v3540, 2147483648
  %v3644 = vor.u32 1.1754944e-38, %v3643
  %v3645 = vsel %vm3642, %v3644, %v3640
  %v3646 = vmul.f32 1.0, %v3645
  %v3647 = vrcp.pop %v3541
  %v3648 = vmul.f32 %v3541, %v3647
  %v3649 = vsub.f32 1.0, %v3648
  %v3650 = vmul.f32 %v3647, %v3649
  %v3651 = vadd.f32 %v3647, %v3650
  %vm3652 = vweird.f32 %v3541
  %vm3653 = vweird.f32 %v3647
  %vm3654 = vmor %vm3652, %vm3653
  %v3655 = vsel %vm3654, %v3647, %v3651
  %v3656 = vand.u32 2147483647, %v3541
  %vm3657 = vcmp.eq.f32.partialorder %v3656, 8.507059e+37
  %v3658 = vand.u32 %v3541, 2147483648
  %v3659 = vor.u32 1.1754944e-38, %v3658
  %v3660 = vsel %vm3657, %v3659, %v3655
  %v3661 = vmul.f32 1.0, %v3660
  %v3662 = vmul.f32 %v3364, %v2756
  %v3663 = vmul.f32 %v3379, %v2757
  %v3664 = vmul.f32 %v3394, %v2758
  %v3665 = vmul.f32 %v3409, %v2759
  %v3666 = vmul.f32 %v3424, %v2760
  %v3667 = vmul.f32 %v3439, %v2761
  %v3668 = vmul.f32 %v3454, %v2762
  %v3669 = vmul.f32 %v3469, %v2763
  %v3670 = vmul.f32 %v3188, %v3486
  %v3671 = vmul.f32 %v3203, %v3487
  %v3672 = vmul.f32 %v3218, %v3488
  %v3673 = vmul.f32 %v3233, %v3489
  %v3674 = vmul.f32 %v3248, %v3490
  %v3675 = vmul.f32 %v3263, %v3491
  %v3676 = vmul.f32 %v3278, %v3492
  %v3677 = vmul.f32 %v3293, %v3493
  %v3678 = vadd.f32 %v3662, %v3670
  %v3679 = vadd.f32 %v3663, %v3671
  %v3680 = vadd.f32 %v3664, %v3672
  %v3681 = vadd.f32 %v3665, %v3673
  %v3682 = vadd.f32 %v3666, %v3674
  %v3683 = vadd.f32 %v3667, %v3675
  %v3684 = vadd.f32 %v3668, %v3676
  %v3685 = vadd.f32 %v3669, %v3677
  %v3686 = vtanh.pop %v3678
  %v3687 = vtanh.pop %v3679
  %v3688 = vtanh.pop %v3680
  %v3689 = vtanh.pop %v3681
  %v3690 = vtanh.pop %v3682
  %v3691 = vtanh.pop %v3683
  %v3692 = vtanh.pop %v3684
  %v3693 = vtanh.pop %v3685
  %v3694 = vmul.f32 %v3556, %v3686
  %v3695 = vmul.f32 %v3571, %v3687
  %v3696 = vmul.f32 %v3586, %v3688
  %v3697 = vmul.f32 %v3601, %v3689
  %v3698 = vmul.f32 %v3616, %v3690
  %v3699 = vmul.f32 %v3631, %v3691
  %v3700 = vmul.f32 %v3646, %v3692
  %v3701 = vmul.f32 %v3661, %v3693
  %3702 = vst [vmem:[%s4 + $0x3] sm:$0x1] %v3694
  %3703 = vst [vmem:[%s4 + $0xb] sm:$0x1] %v3695
  %3704 = vst [vmem:[%s4 + $0x13] sm:$0x1] %v3696
  %3705 = vst [vmem:[%s4 + $0x1b] sm:$0x1] %v3697
  %3706 = vst [vmem:[%s4 + $0x23] sm:$0x1] %v3698
  %3707 = vst [vmem:[%s4 + $0x2b] sm:$0x1] %v3699
  %3708 = vst [vmem:[%s4 + $0x33] sm:$0x1] %v3700
  %3709 = vst [vmem:[%s4 + $0x3b] sm:$0x1] %v3701
  %s3710 = scalar_lea.vmem %s0, 4
  %v3711 = vld [vmem:[%s3710] ss:$8 sm:$0xf]
  %s3712 = scalar_lea.vmem %s0, 36
  %v3713 = vld [vmem:[%s3712] ss:$8 sm:$0xf]
  %s3714 = scalar_lea.vmem %s0, 68
  %v3715 = vld [vmem:[%s3714] ss:$8 sm:$0xf]
  %s3716 = scalar_lea.vmem %s0, 100
  %v3717 = vld [vmem:[%s3716] ss:$8 sm:$0xf]
  %s3718 = scalar_lea.vmem %s0, 132
  %v3719 = vld [vmem:[%s3718] ss:$8 sm:$0xf]
  %s3720 = scalar_lea.vmem %s0, 164
  %v3721 = vld [vmem:[%s3720] ss:$8 sm:$0xf]
  %s3722 = scalar_lea.vmem %s0, 196
  %v3723 = vld [vmem:[%s3722] ss:$8 sm:$0xf]
  %s3724 = scalar_lea.vmem %s0, 228
  %v3725 = vld [vmem:[%s3724] ss:$8 sm:$0xf]
  %v3726 = vpack.c.bf16 %v3694, %v3694
  %v3727 = vpack.c.bf16 %v3695, %v3695
  %v3728 = vpack.c.bf16 %v3696, %v3696
  %v3729 = vpack.c.bf16 %v3697, %v3697
  %v3730 = vpack.c.bf16 %v3698, %v3698
  %v3731 = vpack.c.bf16 %v3699, %v3699
  %v3732 = vpack.c.bf16 %v3700, %v3700
  %v3733 = vpack.c.bf16 %v3701, %v3701
  %v3734 = vld [vmem:[%s1] sm:$0xff]
  %v3735 = vld [vmem:[%s1 + $0x8] sm:$0xff]
  %v3736 = vld [vmem:[%s1 + $0x10] sm:$0xff]
  %v3737 = vld [vmem:[%s1 + $0x18] sm:$0xff]
  %v3738 = vld [vmem:[%s1 + $0x20] sm:$0xff]
  %v3739 = vld [vmem:[%s1 + $0x28] sm:$0xff]
  %v3740 = vld [vmem:[%s1 + $0x30] sm:$0xff]
  %v3741 = vld [vmem:[%s1 + $0x38] sm:$0xff]
  %v3742 = vld [vmem:[%s1 + $0x40] sm:$0xff]
  %v3743 = vld [vmem:[%s1 + $0x48] sm:$0xff]
  %v3744 = vld [vmem:[%s1 + $0x50] sm:$0xff]
  %v3745 = vld [vmem:[%s1 + $0x58] sm:$0xff]
  %v3746 = vld [vmem:[%s1 + $0x60] sm:$0xff]
  %v3747 = vld [vmem:[%s1 + $0x68] sm:$0xff]
  %v3748 = vld [vmem:[%s1 + $0x70] sm:$0xff]
  %v3749 = vld [vmem:[%s1 + $0x78] sm:$0xff]
  %v3750 = vld [vmem:[%s1 + $0x80] sm:$0xff]
  %v3751 = vld [vmem:[%s1 + $0x88] sm:$0xff]
  %v3752 = vld [vmem:[%s1 + $0x90] sm:$0xff]
  %v3753 = vld [vmem:[%s1 + $0x98] sm:$0xff]
  %v3754 = vld [vmem:[%s1 + $0xa0] sm:$0xff]
  %v3755 = vld [vmem:[%s1 + $0xa8] sm:$0xff]
  %v3756 = vld [vmem:[%s1 + $0xb0] sm:$0xff]
  %v3757 = vld [vmem:[%s1 + $0xb8] sm:$0xff]
  %v3758 = vld [vmem:[%s1 + $0xc0] sm:$0xff]
  %v3759 = vld [vmem:[%s1 + $0xc8] sm:$0xff]
  %v3760 = vld [vmem:[%s1 + $0xd0] sm:$0xff]
  %v3761 = vld [vmem:[%s1 + $0xd8] sm:$0xff]
  %v3762 = vld [vmem:[%s1 + $0xe0] sm:$0xff]
  %v3763 = vld [vmem:[%s1 + $0xe8] sm:$0xff]
  %v3764 = vld [vmem:[%s1 + $0xf0] sm:$0xff]
  %v3765 = vld [vmem:[%s1 + $0xf8] sm:$0xff]
  %v3774 = vunpack.c.l.b16 %v3726
  %v3775 = vunpack.c.l.b16 %v3727
  %v3776 = vunpack.c.l.b16 %v3728
  %v3777 = vunpack.c.l.b16 %v3729
  %v3778 = vunpack.c.l.b16 %v3730
  %v3779 = vunpack.c.l.b16 %v3731
  %v3780 = vunpack.c.l.b16 %v3732
  %v3781 = vunpack.c.l.b16 %v3733
  %v3782 = vrot.slane %v3775, 7
  %v3783 = vsel %vm303, %v3782, %v3774
  %v3784 = vrot.slane %v3776, 6
  %v3785 = vsel %vm299, %v3784, %v3783
  %v3786 = vrot.slane %v3777, 5
  %v3787 = vsel %vm305, %v3786, %v3785
  %v3788 = vrot.slane %v3778, 4
  %v3789 = vsel %vm311, %v3788, %v3787
  %v3790 = vrot.slane %v3779, 3
  %v3791 = vsel %vm317, %v3790, %v3789
  %v3792 = vrot.slane %v3780, 2
  %v3793 = vsel %vm323, %v3792, %v3791
  %v3794 = vrot.slane %v3781, 1
  %v3795 = vsel %vm1028, %v3794, %v3793
  %v3796 = vpack.c.b16 %v3795, %v3795
  %v3830 = vunpack.c.l.b16 %v3734
  %v3831 = vunpack.c.h.b16 %v3734
  %v3832 = vunpack.c.l.b16 %v3735
  %v3833 = vunpack.c.h.b16 %v3735
  %v3834 = vunpack.c.l.b16 %v3736
  %v3835 = vunpack.c.h.b16 %v3736
  %v3836 = vunpack.c.l.b16 %v3737
  %v3837 = vunpack.c.h.b16 %v3737
  %v3838 = vunpack.c.l.b16 %v3738
  %v3839 = vunpack.c.h.b16 %v3738
  %v3840 = vunpack.c.l.b16 %v3739
  %v3841 = vunpack.c.h.b16 %v3739
  %v3842 = vunpack.c.l.b16 %v3740
  %v3843 = vunpack.c.h.b16 %v3740
  %v3844 = vunpack.c.l.b16 %v3741
  %v3845 = vunpack.c.h.b16 %v3741
  %v3846 = vunpack.c.l.b16 %v3742
  %v3847 = vunpack.c.h.b16 %v3742
  %v3848 = vunpack.c.l.b16 %v3743
  %v3849 = vunpack.c.h.b16 %v3743
  %v3850 = vunpack.c.l.b16 %v3744
  %v3851 = vunpack.c.h.b16 %v3744
  %v3852 = vunpack.c.l.b16 %v3745
  %v3853 = vunpack.c.h.b16 %v3745
  %v3854 = vunpack.c.l.b16 %v3746
  %v3855 = vunpack.c.h.b16 %v3746
  %v3856 = vunpack.c.l.b16 %v3747
  %v3857 = vunpack.c.h.b16 %v3747
  %v3858 = vunpack.c.l.b16 %v3748
  %v3859 = vunpack.c.h.b16 %v3748
  %v3860 = vunpack.c.l.b16 %v3749
  %v3861 = vunpack.c.h.b16 %v3749
  %v3862 = vunpack.c.l.b16 %v3750
  %v3863 = vunpack.c.h.b16 %v3750
  %v3864 = vunpack.c.l.b16 %v3751
  %v3865 = vunpack.c.h.b16 %v3751
  %v3866 = vunpack.c.l.b16 %v3752
  %v3867 = vunpack.c.h.b16 %v3752
  %v3868 = vunpack.c.l.b16 %v3753
  %v3869 = vunpack.c.h.b16 %v3753
  %v3870 = vunpack.c.l.b16 %v3754
  %v3871 = vunpack.c.h.b16 %v3754
  %v3872 = vunpack.c.l.b16 %v3755
  %v3873 = vunpack.c.h.b16 %v3755
  %v3874 = vunpack.c.l.b16 %v3756
  %v3875 = vunpack.c.h.b16 %v3756
  %v3876 = vunpack.c.l.b16 %v3757
  %v3877 = vunpack.c.h.b16 %v3757
  %v3878 = vunpack.c.l.b16 %v3758
  %v3879 = vunpack.c.h.b16 %v3758
  %v3880 = vunpack.c.l.b16 %v3759
  %v3881 = vunpack.c.h.b16 %v3759
  %v3882 = vunpack.c.l.b16 %v3760
  %v3883 = vunpack.c.h.b16 %v3760
  %v3884 = vunpack.c.l.b16 %v3761
  %v3885 = vunpack.c.h.b16 %v3761
  %v3886 = vunpack.c.l.b16 %v3762
  %v3887 = vunpack.c.h.b16 %v3762
  %v3888 = vunpack.c.l.b16 %v3763
  %v3889 = vunpack.c.h.b16 %v3763
  %v3890 = vunpack.c.l.b16 %v3764
  %v3891 = vunpack.c.h.b16 %v3764
  %v3892 = vunpack.c.l.b16 %v3765
  %v3893 = vunpack.c.h.b16 %v3765
  %v3894 = vpack.c.b16 %v3834, %v3830
  %v3895 = vpack.c.b16 %v3835, %v3831
  %v3896 = vpack.c.b16 %v3836, %v3832
  %v3897 = vpack.c.b16 %v3837, %v3833
  %v3898 = vpack.c.b16 %v3842, %v3838
  %v3899 = vpack.c.b16 %v3843, %v3839
  %v3900 = vpack.c.b16 %v3844, %v3840
  %v3901 = vpack.c.b16 %v3845, %v3841
  %v3902 = vpack.c.b16 %v3850, %v3846
  %v3903 = vpack.c.b16 %v3851, %v3847
  %v3904 = vpack.c.b16 %v3852, %v3848
  %v3905 = vpack.c.b16 %v3853, %v3849
  %v3906 = vpack.c.b16 %v3858, %v3854
  %v3907 = vpack.c.b16 %v3859, %v3855
  %v3908 = vpack.c.b16 %v3860, %v3856
  %v3909 = vpack.c.b16 %v3861, %v3857
  %v3910 = vpack.c.b16 %v3866, %v3862
  %v3911 = vpack.c.b16 %v3867, %v3863
  %v3912 = vpack.c.b16 %v3868, %v3864
  %v3913 = vpack.c.b16 %v3869, %v3865
  %v3914 = vpack.c.b16 %v3874, %v3870
  %v3915 = vpack.c.b16 %v3875, %v3871
  %v3916 = vpack.c.b16 %v3876, %v3872
  %v3917 = vpack.c.b16 %v3877, %v3873
  %v3918 = vpack.c.b16 %v3882, %v3878
  %v3919 = vpack.c.b16 %v3883, %v3879
  %v3920 = vpack.c.b16 %v3884, %v3880
  %v3921 = vpack.c.b16 %v3885, %v3881
  %v3922 = vpack.c.b16 %v3890, %v3886
  %v3923 = vpack.c.b16 %v3891, %v3887
  %v3924 = vpack.c.b16 %v3892, %v3888
  %v3925 = vpack.c.b16 %v3893, %v3889
  %3958 = vmatpush.bf16.msra.mxu0 %v3922
  %3959 = vmatpush.bf16.msra.mxu0 %v3918
  %3960 = vmatpush.bf16.msra.mxu0 %v3914
  %3961 = vmatpush.bf16.msra.mxu0 %v3910
  %3962 = vmatpush.bf16.msra.mxu0 %v3906
  %3963 = vmatpush.bf16.msra.mxu0 %v3902
  %3964 = vmatpush.bf16.msra.mxu0 %v3898
  %3965 = vmatpush.bf16.msra.mxu0 %v3894
  %3966 = vmatmul.bf16.gmra.mxu0 %v3796
  %v3967 = vpop.f32.mrf.mxu0
  %v3968 = vadd.f32 0.0, %v3967
  %v3969 = vpop.f32.mrf.mxu0
  %3970 = vdwg.mxu0
  %3971 = vmatpush.bf16.msra.mxu0 %v3923
  %3972 = vmatpush.bf16.msra.mxu0 %v3919
  %3973 = vmatpush.bf16.msra.mxu0 %v3915
  %3974 = vmatpush.bf16.msra.mxu0 %v3911
  %3975 = vmatpush.bf16.msra.mxu0 %v3907
  %3976 = vmatpush.bf16.msra.mxu0 %v3903
  %3977 = vmatpush.bf16.msra.mxu0 %v3899
  %3978 = vmatpush.bf16.msra.mxu0 %v3895
  %3979 = vmatmul.bf16.gmra.mxu0 %v3796
  %v3980 = vpop.f32.mrf.mxu0
  %v3981 = vadd.f32 0.0, %v3980
  %v3982 = vpop.f32.mrf.mxu0
  %3983 = vdwg.mxu0
  %3984 = vmatpush.bf16.msra.mxu0 %v3924
  %3985 = vmatpush.bf16.msra.mxu0 %v3920
  %3986 = vmatpush.bf16.msra.mxu0 %v3916
  %3987 = vmatpush.bf16.msra.mxu0 %v3912
  %3988 = vmatpush.bf16.msra.mxu0 %v3908
  %3989 = vmatpush.bf16.msra.mxu0 %v3904
  %3990 = vmatpush.bf16.msra.mxu0 %v3900
  %3991 = vmatpush.bf16.msra.mxu0 %v3896
  %3992 = vmatmul.bf16.gmra.mxu0 %v3796
  %v3993 = vpop.f32.mrf.mxu0
  %v3994 = vadd.f32 0.0, %v3993
  %v3995 = vpop.f32.mrf.mxu0
  %3996 = vdwg.mxu0
  %3997 = vmatpush.bf16.msra.mxu0 %v3925
  %3998 = vmatpush.bf16.msra.mxu0 %v3921
  %3999 = vmatpush.bf16.msra.mxu0 %v3917
  %4000 = vmatpush.bf16.msra.mxu0 %v3913
  %4001 = vmatpush.bf16.msra.mxu0 %v3909
  %4002 = vmatpush.bf16.msra.mxu0 %v3905
  %4003 = vmatpush.bf16.msra.mxu0 %v3901
  %4004 = vmatpush.bf16.msra.mxu0 %v3897
  %4005 = vmatmul.bf16.gmra.mxu0 %v3796
  %v4006 = vpop.f32.mrf.mxu0
  %v4007 = vadd.f32 0.0, %v4006
  %v4008 = vpop.f32.mrf.mxu0
  %4009 = vdwg.mxu0
  %v4014 = vrot.slane %v3981, 7
  %v4015 = vrot.slane %v3994, 6
  %v4016 = vrot.slane %v4007, 5
  %v4017 = vsel %vm297, %v3968, %v4014
  %v4018 = vsel %vm299, %v4015, %v4016
  %v4019 = vsel %vm301, %v4017, %v4018
  %v4020 = vsel %vm303, %v3968, %v4014
  %v4021 = vsel %vm305, %v4015, %v4016
  %v4022 = vsel %vm307, %v4020, %v4021
  %v4023 = vrot.slane %v4022, 1
  %v4024 = vsel %vm299, %v3968, %v4014
  %v4025 = vsel %vm311, %v4015, %v4016
  %v4026 = vsel %vm313, %v4024, %v4025
  %v4027 = vrot.slane %v4026, 2
  %v4028 = vsel %vm305, %v3968, %v4014
  %v4029 = vsel %vm317, %v4015, %v4016
  %v4030 = vsel %vm319, %v4028, %v4029
  %v4031 = vrot.slane %v4030, 3
  %v4032 = vsel %vm311, %v3968, %v4014
  %v4033 = vsel %vm323, %v4015, %v4016
  %v4034 = vsel %vm325, %v4032, %v4033
  %v4035 = vrot.slane %v4034, 4
  %v4036 = vsel %vm317, %v3968, %v4014
  %v4037 = vsel %vm329, %v4016, %v4015
  %v4038 = vsel %vm331, %v4036, %v4037
  %v4039 = vrot.slane %v4038, 5
  %v4040 = vsel %vm323, %v3968, %v4014
  %v4041 = vsel %vm297, %v4015, %v4016
  %v4042 = vsel %vm336, %v4041, %v4040
  %v4043 = vrot.slane %v4042, 6
  %v4044 = vsel %vm329, %v4014, %v3968
  %v4045 = vsel %vm303, %v4015, %v4016
  %v4046 = vsel %vm341, %v4045, %v4044
  %v4047 = vrot.slane %v4046, 7
  %v4056 = vadd.f32 %v3711, %v4019
  %v4057 = vadd.f32 %v3713, %v4023
  %v4058 = vadd.f32 %v3715, %v4027
  %v4059 = vadd.f32 %v3717, %v4031
  %v4060 = vadd.f32 %v3719, %v4035
  %v4061 = vadd.f32 %v3721, %v4039
  %v4062 = vadd.f32 %v3723, %v4043
  %v4063 = vadd.f32 %v3725, %v4047
  %v4064 = vxor.u32 %v4056, 2147483648
  %v4065 = vxor.u32 %v4057, 2147483648
  %v4066 = vxor.u32 %v4058, 2147483648
  %v4067 = vxor.u32 %v4059, 2147483648
  %v4068 = vxor.u32 %v4060, 2147483648
  %v4069 = vxor.u32 %v4061, 2147483648
  %v4070 = vxor.u32 %v4062, 2147483648
  %v4071 = vxor.u32 %v4063, 2147483648
  %v4072 = vmul.f32 %v4064, 1.442695
  %v4073 = vpow.pop %v4072
  %v4074 = vmul.f32 %v4065, 1.442695
  %v4075 = vpow.pop %v4074
  %v4076 = vmul.f32 %v4066, 1.442695
  %v4077 = vpow.pop %v4076
  %v4078 = vmul.f32 %v4067, 1.442695
  %v4079 = vpow.pop %v4078
  %v4080 = vmul.f32 %v4068, 1.442695
  %v4081 = vpow.pop %v4080
  %v4082 = vmul.f32 %v4069, 1.442695
  %v4083 = vpow.pop %v4082
  %v4084 = vmul.f32 %v4070, 1.442695
  %v4085 = vpow.pop %v4084
  %v4086 = vmul.f32 %v4071, 1.442695
  %v4087 = vpow.pop %v4086
  %v4088 = vadd.f32 %v4073, 1.0
  %v4089 = vadd.f32 %v4075, 1.0
  %v4090 = vadd.f32 %v4077, 1.0
  %v4091 = vadd.f32 %v4079, 1.0
  %v4092 = vadd.f32 %v4081, 1.0
  %v4093 = vadd.f32 %v4083, 1.0
  %v4094 = vadd.f32 %v4085, 1.0
  %v4095 = vadd.f32 %v4087, 1.0
  %v4096 = vrcp.pop %v4088
  %v4097 = vmul.f32 %v4088, %v4096
  %v4098 = vsub.f32 1.0, %v4097
  %v4099 = vmul.f32 %v4096, %v4098
  %v4100 = vadd.f32 %v4096, %v4099
  %vm4101 = vweird.f32 %v4088
  %vm4102 = vweird.f32 %v4096
  %vm4103 = vmor %vm4101, %vm4102
  %v4104 = vsel %vm4103, %v4096, %v4100
  %v4105 = vand.u32 2147483647, %v4088
  %vm4106 = vcmp.eq.f32.partialorder %v4105, 8.507059e+37
  %v4107 = vand.u32 %v4088, 2147483648
  %v4108 = vor.u32 1.1754944e-38, %v4107
  %v4109 = vsel %vm4106, %v4108, %v4104
  %v4110 = vmul.f32 1.0, %v4109
  %v4111 = vrcp.pop %v4089
  %v4112 = vmul.f32 %v4089, %v4111
  %v4113 = vsub.f32 1.0, %v4112
  %v4114 = vmul.f32 %v4111, %v4113
  %v4115 = vadd.f32 %v4111, %v4114
  %vm4116 = vweird.f32 %v4089
  %vm4117 = vweird.f32 %v4111
  %vm4118 = vmor %vm4116, %vm4117
  %v4119 = vsel %vm4118, %v4111, %v4115
  %v4120 = vand.u32 2147483647, %v4089
  %vm4121 = vcmp.eq.f32.partialorder %v4120, 8.507059e+37
  %v4122 = vand.u32 %v4089, 2147483648
  %v4123 = vor.u32 1.1754944e-38, %v4122
  %v4124 = vsel %vm4121, %v4123, %v4119
  %v4125 = vmul.f32 1.0, %v4124
  %v4126 = vrcp.pop %v4090
  %v4127 = vmul.f32 %v4090, %v4126
  %v4128 = vsub.f32 1.0, %v4127
  %v4129 = vmul.f32 %v4126, %v4128
  %v4130 = vadd.f32 %v4126, %v4129
  %vm4131 = vweird.f32 %v4090
  %vm4132 = vweird.f32 %v4126
  %vm4133 = vmor %vm4131, %vm4132
  %v4134 = vsel %vm4133, %v4126, %v4130
  %v4135 = vand.u32 2147483647, %v4090
  %vm4136 = vcmp.eq.f32.partialorder %v4135, 8.507059e+37
  %v4137 = vand.u32 %v4090, 2147483648
  %v4138 = vor.u32 1.1754944e-38, %v4137
  %v4139 = vsel %vm4136, %v4138, %v4134
  %v4140 = vmul.f32 1.0, %v4139
  %v4141 = vrcp.pop %v4091
  %v4142 = vmul.f32 %v4091, %v4141
  %v4143 = vsub.f32 1.0, %v4142
  %v4144 = vmul.f32 %v4141, %v4143
  %v4145 = vadd.f32 %v4141, %v4144
  %vm4146 = vweird.f32 %v4091
  %vm4147 = vweird.f32 %v4141
  %vm4148 = vmor %vm4146, %vm4147
  %v4149 = vsel %vm4148, %v4141, %v4145
  %v4150 = vand.u32 2147483647, %v4091
  %vm4151 = vcmp.eq.f32.partialorder %v4150, 8.507059e+37
  %v4152 = vand.u32 %v4091, 2147483648
  %v4153 = vor.u32 1.1754944e-38, %v4152
  %v4154 = vsel %vm4151, %v4153, %v4149
  %v4155 = vmul.f32 1.0, %v4154
  %v4156 = vrcp.pop %v4092
  %v4157 = vmul.f32 %v4092, %v4156
  %v4158 = vsub.f32 1.0, %v4157
  %v4159 = vmul.f32 %v4156, %v4158
  %v4160 = vadd.f32 %v4156, %v4159
  %vm4161 = vweird.f32 %v4092
  %vm4162 = vweird.f32 %v4156
  %vm4163 = vmor %vm4161, %vm4162
  %v4164 = vsel %vm4163, %v4156, %v4160
  %v4165 = vand.u32 2147483647, %v4092
  %vm4166 = vcmp.eq.f32.partialorder %v4165, 8.507059e+37
  %v4167 = vand.u32 %v4092, 2147483648
  %v4168 = vor.u32 1.1754944e-38, %v4167
  %v4169 = vsel %vm4166, %v4168, %v4164
  %v4170 = vmul.f32 1.0, %v4169
  %v4171 = vrcp.pop %v4093
  %v4172 = vmul.f32 %v4093, %v4171
  %v4173 = vsub.f32 1.0, %v4172
  %v4174 = vmul.f32 %v4171, %v4173
  %v4175 = vadd.f32 %v4171, %v4174
  %vm4176 = vweird.f32 %v4093
  %vm4177 = vweird.f32 %v4171
  %vm4178 = vmor %vm4176, %vm4177
  %v4179 = vsel %vm4178, %v4171, %v4175
  %v4180 = vand.u32 2147483647, %v4093
  %vm4181 = vcmp.eq.f32.partialorder %v4180, 8.507059e+37
  %v4182 = vand.u32 %v4093, 2147483648
  %v4183 = vor.u32 1.1754944e-38, %v4182
  %v4184 = vsel %vm4181, %v4183, %v4179
  %v4185 = vmul.f32 1.0, %v4184
  %v4186 = vrcp.pop %v4094
  %v4187 = vmul.f32 %v4094, %v4186
  %v4188 = vsub.f32 1.0, %v4187
  %v4189 = vmul.f32 %v4186, %v4188
  %v4190 = vadd.f32 %v4186, %v4189
  %vm4191 = vweird.f32 %v4094
  %vm4192 = vweird.f32 %v4186
  %vm4193 = vmor %vm4191, %vm4192
  %v4194 = vsel %vm4193, %v4186, %v4190
  %v4195 = vand.u32 2147483647, %v4094
  %vm4196 = vcmp.eq.f32.partialorder %v4195, 8.507059e+37
  %v4197 = vand.u32 %v4094, 2147483648
  %v4198 = vor.u32 1.1754944e-38, %v4197
  %v4199 = vsel %vm4196, %v4198, %v4194
  %v4200 = vmul.f32 1.0, %v4199
  %v4201 = vrcp.pop %v4095
  %v4202 = vmul.f32 %v4095, %v4201
  %v4203 = vsub.f32 1.0, %v4202
  %v4204 = vmul.f32 %v4201, %v4203
  %v4205 = vadd.f32 %v4201, %v4204
  %vm4206 = vweird.f32 %v4095
  %vm4207 = vweird.f32 %v4201
  %vm4208 = vmor %vm4206, %vm4207
  %v4209 = vsel %vm4208, %v4201, %v4205
  %v4210 = vand.u32 2147483647, %v4095
  %vm4211 = vcmp.eq.f32.partialorder %v4210, 8.507059e+37
  %v4212 = vand.u32 %v4095, 2147483648
  %v4213 = vor.u32 1.1754944e-38, %v4212
  %v4214 = vsel %vm4211, %v4213, %v4209
  %v4215 = vmul.f32 1.0, %v4214
  %v4224 = vrot.slane %v4056, 1
  %v4225 = vrot.slane %v4057, 1
  %v4226 = vrot.slane %v4058, 1
  %v4227 = vrot.slane %v4059, 1
  %v4228 = vrot.slane %v4060, 1
  %v4229 = vrot.slane %v4061, 1
  %v4230 = vrot.slane %v4062, 1
  %v4231 = vrot.slane %v4063, 1
  %v4240 = vxor.u32 %v4224, 2147483648
  %v4241 = vxor.u32 %v4225, 2147483648
  %v4242 = vxor.u32 %v4226, 2147483648
  %v4243 = vxor.u32 %v4227, 2147483648
  %v4244 = vxor.u32 %v4228, 2147483648
  %v4245 = vxor.u32 %v4229, 2147483648
  %v4246 = vxor.u32 %v4230, 2147483648
  %v4247 = vxor.u32 %v4231, 2147483648
  %v4248 = vmul.f32 %v4240, 1.442695
  %v4249 = vpow.pop %v4248
  %v4250 = vmul.f32 %v4241, 1.442695
  %v4251 = vpow.pop %v4250
  %v4252 = vmul.f32 %v4242, 1.442695
  %v4253 = vpow.pop %v4252
  %v4254 = vmul.f32 %v4243, 1.442695
  %v4255 = vpow.pop %v4254
  %v4256 = vmul.f32 %v4244, 1.442695
  %v4257 = vpow.pop %v4256
  %v4258 = vmul.f32 %v4245, 1.442695
  %v4259 = vpow.pop %v4258
  %v4260 = vmul.f32 %v4246, 1.442695
  %v4261 = vpow.pop %v4260
  %v4262 = vmul.f32 %v4247, 1.442695
  %v4263 = vpow.pop %v4262
  %v4264 = vadd.f32 %v4249, 1.0
  %v4265 = vadd.f32 %v4251, 1.0
  %v4266 = vadd.f32 %v4253, 1.0
  %v4267 = vadd.f32 %v4255, 1.0
  %v4268 = vadd.f32 %v4257, 1.0
  %v4269 = vadd.f32 %v4259, 1.0
  %v4270 = vadd.f32 %v4261, 1.0
  %v4271 = vadd.f32 %v4263, 1.0
  %v4272 = vrcp.pop %v4264
  %v4273 = vmul.f32 %v4264, %v4272
  %v4274 = vsub.f32 1.0, %v4273
  %v4275 = vmul.f32 %v4272, %v4274
  %v4276 = vadd.f32 %v4272, %v4275
  %vm4277 = vweird.f32 %v4264
  %vm4278 = vweird.f32 %v4272
  %vm4279 = vmor %vm4277, %vm4278
  %v4280 = vsel %vm4279, %v4272, %v4276
  %v4281 = vand.u32 2147483647, %v4264
  %vm4282 = vcmp.eq.f32.partialorder %v4281, 8.507059e+37
  %v4283 = vand.u32 %v4264, 2147483648
  %v4284 = vor.u32 1.1754944e-38, %v4283
  %v4285 = vsel %vm4282, %v4284, %v4280
  %v4286 = vmul.f32 1.0, %v4285
  %v4287 = vrcp.pop %v4265
  %v4288 = vmul.f32 %v4265, %v4287
  %v4289 = vsub.f32 1.0, %v4288
  %v4290 = vmul.f32 %v4287, %v4289
  %v4291 = vadd.f32 %v4287, %v4290
  %vm4292 = vweird.f32 %v4265
  %vm4293 = vweird.f32 %v4287
  %vm4294 = vmor %vm4292, %vm4293
  %v4295 = vsel %vm4294, %v4287, %v4291
  %v4296 = vand.u32 2147483647, %v4265
  %vm4297 = vcmp.eq.f32.partialorder %v4296, 8.507059e+37
  %v4298 = vand.u32 %v4265, 2147483648
  %v4299 = vor.u32 1.1754944e-38, %v4298
  %v4300 = vsel %vm4297, %v4299, %v4295
  %v4301 = vmul.f32 1.0, %v4300
  %v4302 = vrcp.pop %v4266
  %v4303 = vmul.f32 %v4266, %v4302
  %v4304 = vsub.f32 1.0, %v4303
  %v4305 = vmul.f32 %v4302, %v4304
  %v4306 = vadd.f32 %v4302, %v4305
  %vm4307 = vweird.f32 %v4266
  %vm4308 = vweird.f32 %v4302
  %vm4309 = vmor %vm4307, %vm4308
  %v4310 = vsel %vm4309, %v4302, %v4306
  %v4311 = vand.u32 2147483647, %v4266
  %vm4312 = vcmp.eq.f32.partialorder %v4311, 8.507059e+37
  %v4313 = vand.u32 %v4266, 2147483648
  %v4314 = vor.u32 1.1754944e-38, %v4313
  %v4315 = vsel %vm4312, %v4314, %v4310
  %v4316 = vmul.f32 1.0, %v4315
  %v4317 = vrcp.pop %v4267
  %v4318 = vmul.f32 %v4267, %v4317
  %v4319 = vsub.f32 1.0, %v4318
  %v4320 = vmul.f32 %v4317, %v4319
  %v4321 = vadd.f32 %v4317, %v4320
  %vm4322 = vweird.f32 %v4267
  %vm4323 = vweird.f32 %v4317
  %vm4324 = vmor %vm4322, %vm4323
  %v4325 = vsel %vm4324, %v4317, %v4321
  %v4326 = vand.u32 2147483647, %v4267
  %vm4327 = vcmp.eq.f32.partialorder %v4326, 8.507059e+37
  %v4328 = vand.u32 %v4267, 2147483648
  %v4329 = vor.u32 1.1754944e-38, %v4328
  %v4330 = vsel %vm4327, %v4329, %v4325
  %v4331 = vmul.f32 1.0, %v4330
  %v4332 = vrcp.pop %v4268
  %v4333 = vmul.f32 %v4268, %v4332
  %v4334 = vsub.f32 1.0, %v4333
  %v4335 = vmul.f32 %v4332, %v4334
  %v4336 = vadd.f32 %v4332, %v4335
  %vm4337 = vweird.f32 %v4268
  %vm4338 = vweird.f32 %v4332
  %vm4339 = vmor %vm4337, %vm4338
  %v4340 = vsel %vm4339, %v4332, %v4336
  %v4341 = vand.u32 2147483647, %v4268
  %vm4342 = vcmp.eq.f32.partialorder %v4341, 8.507059e+37
  %v4343 = vand.u32 %v4268, 2147483648
  %v4344 = vor.u32 1.1754944e-38, %v4343
  %v4345 = vsel %vm4342, %v4344, %v4340
  %v4346 = vmul.f32 1.0, %v4345
  %v4347 = vrcp.pop %v4269
  %v4348 = vmul.f32 %v4269, %v4347
  %v4349 = vsub.f32 1.0, %v4348
  %v4350 = vmul.f32 %v4347, %v4349
  %v4351 = vadd.f32 %v4347, %v4350
  %vm4352 = vweird.f32 %v4269
  %vm4353 = vweird.f32 %v4347
  %vm4354 = vmor %vm4352, %vm4353
  %v4355 = vsel %vm4354, %v4347, %v4351
  %v4356 = vand.u32 2147483647, %v4269
  %vm4357 = vcmp.eq.f32.partialorder %v4356, 8.507059e+37
  %v4358 = vand.u32 %v4269, 2147483648
  %v4359 = vor.u32 1.1754944e-38, %v4358
  %v4360 = vsel %vm4357, %v4359, %v4355
  %v4361 = vmul.f32 1.0, %v4360
  %v4362 = vrcp.pop %v4270
  %v4363 = vmul.f32 %v4270, %v4362
  %v4364 = vsub.f32 1.0, %v4363
  %v4365 = vmul.f32 %v4362, %v4364
  %v4366 = vadd.f32 %v4362, %v4365
  %vm4367 = vweird.f32 %v4270
  %vm4368 = vweird.f32 %v4362
  %vm4369 = vmor %vm4367, %vm4368
  %v4370 = vsel %vm4369, %v4362, %v4366
  %v4371 = vand.u32 2147483647, %v4270
  %vm4372 = vcmp.eq.f32.partialorder %v4371, 8.507059e+37
  %v4373 = vand.u32 %v4270, 2147483648
  %v4374 = vor.u32 1.1754944e-38, %v4373
  %v4375 = vsel %vm4372, %v4374, %v4370
  %v4376 = vmul.f32 1.0, %v4375
  %v4377 = vrcp.pop %v4271
  %v4378 = vmul.f32 %v4271, %v4377
  %v4379 = vsub.f32 1.0, %v4378
  %v4380 = vmul.f32 %v4377, %v4379
  %v4381 = vadd.f32 %v4377, %v4380
  %vm4382 = vweird.f32 %v4271
  %vm4383 = vweird.f32 %v4377
  %vm4384 = vmor %vm4382, %vm4383
  %v4385 = vsel %vm4384, %v4377, %v4381
  %v4386 = vand.u32 2147483647, %v4271
  %vm4387 = vcmp.eq.f32.partialorder %v4386, 8.507059e+37
  %v4388 = vand.u32 %v4271, 2147483648
  %v4389 = vor.u32 1.1754944e-38, %v4388
  %v4390 = vsel %vm4387, %v4389, %v4385
  %v4391 = vmul.f32 1.0, %v4390
  %v4392 = vrot.slane %v4056, 2
  %v4393 = vrot.slane %v4057, 2
  %v4394 = vrot.slane %v4058, 2
  %v4395 = vrot.slane %v4059, 2
  %v4396 = vrot.slane %v4060, 2
  %v4397 = vrot.slane %v4061, 2
  %v4398 = vrot.slane %v4062, 2
  %v4399 = vrot.slane %v4063, 2
  %v4408 = vtanh.pop %v4392
  %v4409 = vtanh.pop %v4393
  %v4410 = vtanh.pop %v4394
  %v4411 = vtanh.pop %v4395
  %v4412 = vtanh.pop %v4396
  %v4413 = vtanh.pop %v4397
  %v4414 = vtanh.pop %v4398
  %v4415 = vtanh.pop %v4399
  %v4416 = vrot.slane %v4056, 3
  %v4417 = vrot.slane %v4057, 3
  %v4418 = vrot.slane %v4058, 3
  %v4419 = vrot.slane %v4059, 3
  %v4420 = vrot.slane %v4060, 3
  %v4421 = vrot.slane %v4061, 3
  %v4422 = vrot.slane %v4062, 3
  %v4423 = vrot.slane %v4063, 3
  %v4432 = vxor.u32 %v4416, 2147483648
  %v4433 = vxor.u32 %v4417, 2147483648
  %v4434 = vxor.u32 %v4418, 2147483648
  %v4435 = vxor.u32 %v4419, 2147483648
  %v4436 = vxor.u32 %v4420, 2147483648
  %v4437 = vxor.u32 %v4421, 2147483648
  %v4438 = vxor.u32 %v4422, 2147483648
  %v4439 = vxor.u32 %v4423, 2147483648
  %v4440 = vmul.f32 %v4432, 1.442695
  %v4441 = vpow.pop %v4440
  %v4442 = vmul.f32 %v4433, 1.442695
  %v4443 = vpow.pop %v4442
  %v4444 = vmul.f32 %v4434, 1.442695
  %v4445 = vpow.pop %v4444
  %v4446 = vmul.f32 %v4435, 1.442695
  %v4447 = vpow.pop %v4446
  %v4448 = vmul.f32 %v4436, 1.442695
  %v4449 = vpow.pop %v4448
  %v4450 = vmul.f32 %v4437, 1.442695
  %v4451 = vpow.pop %v4450
  %v4452 = vmul.f32 %v4438, 1.442695
  %v4453 = vpow.pop %v4452
  %v4454 = vmul.f32 %v4439, 1.442695
  %v4455 = vpow.pop %v4454
  %v4456 = vadd.f32 %v4441, 1.0
  %v4457 = vadd.f32 %v4443, 1.0
  %v4458 = vadd.f32 %v4445, 1.0
  %v4459 = vadd.f32 %v4447, 1.0
  %v4460 = vadd.f32 %v4449, 1.0
  %v4461 = vadd.f32 %v4451, 1.0
  %v4462 = vadd.f32 %v4453, 1.0
  %v4463 = vadd.f32 %v4455, 1.0
  %v4464 = vrcp.pop %v4456
  %v4465 = vmul.f32 %v4456, %v4464
  %v4466 = vsub.f32 1.0, %v4465
  %v4467 = vmul.f32 %v4464, %v4466
  %v4468 = vadd.f32 %v4464, %v4467
  %vm4469 = vweird.f32 %v4456
  %vm4470 = vweird.f32 %v4464
  %vm4471 = vmor %vm4469, %vm4470
  %v4472 = vsel %vm4471, %v4464, %v4468
  %v4473 = vand.u32 2147483647, %v4456
  %vm4474 = vcmp.eq.f32.partialorder %v4473, 8.507059e+37
  %v4475 = vand.u32 %v4456, 2147483648
  %v4476 = vor.u32 1.1754944e-38, %v4475
  %v4477 = vsel %vm4474, %v4476, %v4472
  %v4478 = vmul.f32 1.0, %v4477
  %v4479 = vrcp.pop %v4457
  %v4480 = vmul.f32 %v4457, %v4479
  %v4481 = vsub.f32 1.0, %v4480
  %v4482 = vmul.f32 %v4479, %v4481
  %v4483 = vadd.f32 %v4479, %v4482
  %vm4484 = vweird.f32 %v4457
  %vm4485 = vweird.f32 %v4479
  %vm4486 = vmor %vm4484, %vm4485
  %v4487 = vsel %vm4486, %v4479, %v4483
  %v4488 = vand.u32 2147483647, %v4457
  %vm4489 = vcmp.eq.f32.partialorder %v4488, 8.507059e+37
  %v4490 = vand.u32 %v4457, 2147483648
  %v4491 = vor.u32 1.1754944e-38, %v4490
  %v4492 = vsel %vm4489, %v4491, %v4487
  %v4493 = vmul.f32 1.0, %v4492
  %v4494 = vrcp.pop %v4458
  %v4495 = vmul.f32 %v4458, %v4494
  %v4496 = vsub.f32 1.0, %v4495
  %v4497 = vmul.f32 %v4494, %v4496
  %v4498 = vadd.f32 %v4494, %v4497
  %vm4499 = vweird.f32 %v4458
  %vm4500 = vweird.f32 %v4494
  %vm4501 = vmor %vm4499, %vm4500
  %v4502 = vsel %vm4501, %v4494, %v4498
  %v4503 = vand.u32 2147483647, %v4458
  %vm4504 = vcmp.eq.f32.partialorder %v4503, 8.507059e+37
  %v4505 = vand.u32 %v4458, 2147483648
  %v4506 = vor.u32 1.1754944e-38, %v4505
  %v4507 = vsel %vm4504, %v4506, %v4502
  %v4508 = vmul.f32 1.0, %v4507
  %v4509 = vrcp.pop %v4459
  %v4510 = vmul.f32 %v4459, %v4509
  %v4511 = vsub.f32 1.0, %v4510
  %v4512 = vmul.f32 %v4509, %v4511
  %v4513 = vadd.f32 %v4509, %v4512
  %vm4514 = vweird.f32 %v4459
  %vm4515 = vweird.f32 %v4509
  %vm4516 = vmor %vm4514, %vm4515
  %v4517 = vsel %vm4516, %v4509, %v4513
  %v4518 = vand.u32 2147483647, %v4459
  %vm4519 = vcmp.eq.f32.partialorder %v4518, 8.507059e+37
  %v4520 = vand.u32 %v4459, 2147483648
  %v4521 = vor.u32 1.1754944e-38, %v4520
  %v4522 = vsel %vm4519, %v4521, %v4517
  %v4523 = vmul.f32 1.0, %v4522
  %v4524 = vrcp.pop %v4460
  %v4525 = vmul.f32 %v4460, %v4524
  %v4526 = vsub.f32 1.0, %v4525
  %v4527 = vmul.f32 %v4524, %v4526
  %v4528 = vadd.f32 %v4524, %v4527
  %vm4529 = vweird.f32 %v4460
  %vm4530 = vweird.f32 %v4524
  %vm4531 = vmor %vm4529, %vm4530
  %v4532 = vsel %vm4531, %v4524, %v4528
  %v4533 = vand.u32 2147483647, %v4460
  %vm4534 = vcmp.eq.f32.partialorder %v4533, 8.507059e+37
  %v4535 = vand.u32 %v4460, 2147483648
  %v4536 = vor.u32 1.1754944e-38, %v4535
  %v4537 = vsel %vm4534, %v4536, %v4532
  %v4538 = vmul.f32 1.0, %v4537
  %v4539 = vrcp.pop %v4461
  %v4540 = vmul.f32 %v4461, %v4539
  %v4541 = vsub.f32 1.0, %v4540
  %v4542 = vmul.f32 %v4539, %v4541
  %v4543 = vadd.f32 %v4539, %v4542
  %vm4544 = vweird.f32 %v4461
  %vm4545 = vweird.f32 %v4539
  %vm4546 = vmor %vm4544, %vm4545
  %v4547 = vsel %vm4546, %v4539, %v4543
  %v4548 = vand.u32 2147483647, %v4461
  %vm4549 = vcmp.eq.f32.partialorder %v4548, 8.507059e+37
  %v4550 = vand.u32 %v4461, 2147483648
  %v4551 = vor.u32 1.1754944e-38, %v4550
  %v4552 = vsel %vm4549, %v4551, %v4547
  %v4553 = vmul.f32 1.0, %v4552
  %v4554 = vrcp.pop %v4462
  %v4555 = vmul.f32 %v4462, %v4554
  %v4556 = vsub.f32 1.0, %v4555
  %v4557 = vmul.f32 %v4554, %v4556
  %v4558 = vadd.f32 %v4554, %v4557
  %vm4559 = vweird.f32 %v4462
  %vm4560 = vweird.f32 %v4554
  %vm4561 = vmor %vm4559, %vm4560
  %v4562 = vsel %vm4561, %v4554, %v4558
  %v4563 = vand.u32 2147483647, %v4462
  %vm4564 = vcmp.eq.f32.partialorder %v4563, 8.507059e+37
  %v4565 = vand.u32 %v4462, 2147483648
  %v4566 = vor.u32 1.1754944e-38, %v4565
  %v4567 = vsel %vm4564, %v4566, %v4562
  %v4568 = vmul.f32 1.0, %v4567
  %v4569 = vrcp.pop %v4463
  %v4570 = vmul.f32 %v4463, %v4569
  %v4571 = vsub.f32 1.0, %v4570
  %v4572 = vmul.f32 %v4569, %v4571
  %v4573 = vadd.f32 %v4569, %v4572
  %vm4574 = vweird.f32 %v4463
  %vm4575 = vweird.f32 %v4569
  %vm4576 = vmor %vm4574, %vm4575
  %v4577 = vsel %vm4576, %v4569, %v4573
  %v4578 = vand.u32 2147483647, %v4463
  %vm4579 = vcmp.eq.f32.partialorder %v4578, 8.507059e+37
  %v4580 = vand.u32 %v4463, 2147483648
  %v4581 = vor.u32 1.1754944e-38, %v4580
  %v4582 = vsel %vm4579, %v4581, %v4577
  %v4583 = vmul.f32 1.0, %v4582
  %v4584 = vmul.f32 %v4286, %v3678
  %v4585 = vmul.f32 %v4301, %v3679
  %v4586 = vmul.f32 %v4316, %v3680
  %v4587 = vmul.f32 %v4331, %v3681
  %v4588 = vmul.f32 %v4346, %v3682
  %v4589 = vmul.f32 %v4361, %v3683
  %v4590 = vmul.f32 %v4376, %v3684
  %v4591 = vmul.f32 %v4391, %v3685
  %v4592 = vmul.f32 %v4110, %v4408
  %v4593 = vmul.f32 %v4125, %v4409
  %v4594 = vmul.f32 %v4140, %v4410
  %v4595 = vmul.f32 %v4155, %v4411
  %v4596 = vmul.f32 %v4170, %v4412
  %v4597 = vmul.f32 %v4185, %v4413
  %v4598 = vmul.f32 %v4200, %v4414
  %v4599 = vmul.f32 %v4215, %v4415
  %v4600 = vadd.f32 %v4584, %v4592
  %v4601 = vadd.f32 %v4585, %v4593
  %v4602 = vadd.f32 %v4586, %v4594
  %v4603 = vadd.f32 %v4587, %v4595
  %v4604 = vadd.f32 %v4588, %v4596
  %v4605 = vadd.f32 %v4589, %v4597
  %v4606 = vadd.f32 %v4590, %v4598
  %v4607 = vadd.f32 %v4591, %v4599
  %v4608 = vtanh.pop %v4600
  %v4609 = vtanh.pop %v4601
  %v4610 = vtanh.pop %v4602
  %v4611 = vtanh.pop %v4603
  %v4612 = vtanh.pop %v4604
  %v4613 = vtanh.pop %v4605
  %v4614 = vtanh.pop %v4606
  %v4615 = vtanh.pop %v4607
  %v4616 = vmul.f32 %v4478, %v4608
  %v4617 = vmul.f32 %v4493, %v4609
  %v4618 = vmul.f32 %v4508, %v4610
  %v4619 = vmul.f32 %v4523, %v4611
  %v4620 = vmul.f32 %v4538, %v4612
  %v4621 = vmul.f32 %v4553, %v4613
  %v4622 = vmul.f32 %v4568, %v4614
  %v4623 = vmul.f32 %v4583, %v4615
  %4624 = vst [vmem:[%s4 + $0x4] sm:$0x1] %v4616
  %4625 = vst [vmem:[%s4 + $0xc] sm:$0x1] %v4617
  %4626 = vst [vmem:[%s4 + $0x14] sm:$0x1] %v4618
  %4627 = vst [vmem:[%s4 + $0x1c] sm:$0x1] %v4619
  %4628 = vst [vmem:[%s4 + $0x24] sm:$0x1] %v4620
  %4629 = vst [vmem:[%s4 + $0x2c] sm:$0x1] %v4621
  %4630 = vst [vmem:[%s4 + $0x34] sm:$0x1] %v4622
  %4631 = vst [vmem:[%s4 + $0x3c] sm:$0x1] %v4623
  %s4632 = scalar_lea.vmem %s0, 5
  %v4633 = vld [vmem:[%s4632] ss:$8 sm:$0xf]
  %s4634 = scalar_lea.vmem %s0, 37
  %v4635 = vld [vmem:[%s4634] ss:$8 sm:$0xf]
  %s4636 = scalar_lea.vmem %s0, 69
  %v4637 = vld [vmem:[%s4636] ss:$8 sm:$0xf]
  %s4638 = scalar_lea.vmem %s0, 101
  %v4639 = vld [vmem:[%s4638] ss:$8 sm:$0xf]
  %s4640 = scalar_lea.vmem %s0, 133
  %v4641 = vld [vmem:[%s4640] ss:$8 sm:$0xf]
  %s4642 = scalar_lea.vmem %s0, 165
  %v4643 = vld [vmem:[%s4642] ss:$8 sm:$0xf]
  %s4644 = scalar_lea.vmem %s0, 197
  %v4645 = vld [vmem:[%s4644] ss:$8 sm:$0xf]
  %s4646 = scalar_lea.vmem %s0, 229
  %v4647 = vld [vmem:[%s4646] ss:$8 sm:$0xf]
  %v4648 = vpack.c.bf16 %v4616, %v4616
  %v4649 = vpack.c.bf16 %v4617, %v4617
  %v4650 = vpack.c.bf16 %v4618, %v4618
  %v4651 = vpack.c.bf16 %v4619, %v4619
  %v4652 = vpack.c.bf16 %v4620, %v4620
  %v4653 = vpack.c.bf16 %v4621, %v4621
  %v4654 = vpack.c.bf16 %v4622, %v4622
  %v4655 = vpack.c.bf16 %v4623, %v4623
  %v4656 = vld [vmem:[%s1] sm:$0xff]
  %v4657 = vld [vmem:[%s1 + $0x8] sm:$0xff]
  %v4658 = vld [vmem:[%s1 + $0x10] sm:$0xff]
  %v4659 = vld [vmem:[%s1 + $0x18] sm:$0xff]
  %v4660 = vld [vmem:[%s1 + $0x20] sm:$0xff]
  %v4661 = vld [vmem:[%s1 + $0x28] sm:$0xff]
  %v4662 = vld [vmem:[%s1 + $0x30] sm:$0xff]
  %v4663 = vld [vmem:[%s1 + $0x38] sm:$0xff]
  %v4664 = vld [vmem:[%s1 + $0x40] sm:$0xff]
  %v4665 = vld [vmem:[%s1 + $0x48] sm:$0xff]
  %v4666 = vld [vmem:[%s1 + $0x50] sm:$0xff]
  %v4667 = vld [vmem:[%s1 + $0x58] sm:$0xff]
  %v4668 = vld [vmem:[%s1 + $0x60] sm:$0xff]
  %v4669 = vld [vmem:[%s1 + $0x68] sm:$0xff]
  %v4670 = vld [vmem:[%s1 + $0x70] sm:$0xff]
  %v4671 = vld [vmem:[%s1 + $0x78] sm:$0xff]
  %v4672 = vld [vmem:[%s1 + $0x80] sm:$0xff]
  %v4673 = vld [vmem:[%s1 + $0x88] sm:$0xff]
  %v4674 = vld [vmem:[%s1 + $0x90] sm:$0xff]
  %v4675 = vld [vmem:[%s1 + $0x98] sm:$0xff]
  %v4676 = vld [vmem:[%s1 + $0xa0] sm:$0xff]
  %v4677 = vld [vmem:[%s1 + $0xa8] sm:$0xff]
  %v4678 = vld [vmem:[%s1 + $0xb0] sm:$0xff]
  %v4679 = vld [vmem:[%s1 + $0xb8] sm:$0xff]
  %v4680 = vld [vmem:[%s1 + $0xc0] sm:$0xff]
  %v4681 = vld [vmem:[%s1 + $0xc8] sm:$0xff]
  %v4682 = vld [vmem:[%s1 + $0xd0] sm:$0xff]
  %v4683 = vld [vmem:[%s1 + $0xd8] sm:$0xff]
  %v4684 = vld [vmem:[%s1 + $0xe0] sm:$0xff]
  %v4685 = vld [vmem:[%s1 + $0xe8] sm:$0xff]
  %v4686 = vld [vmem:[%s1 + $0xf0] sm:$0xff]
  %v4687 = vld [vmem:[%s1 + $0xf8] sm:$0xff]
  %v4696 = vunpack.c.l.b16 %v4648
  %v4697 = vunpack.c.l.b16 %v4649
  %v4698 = vunpack.c.l.b16 %v4650
  %v4699 = vunpack.c.l.b16 %v4651
  %v4700 = vunpack.c.l.b16 %v4652
  %v4701 = vunpack.c.l.b16 %v4653
  %v4702 = vunpack.c.l.b16 %v4654
  %v4703 = vunpack.c.l.b16 %v4655
  %v4704 = vrot.slane %v4697, 7
  %v4705 = vsel %vm303, %v4704, %v4696
  %v4706 = vrot.slane %v4698, 6
  %v4707 = vsel %vm299, %v4706, %v4705
  %v4708 = vrot.slane %v4699, 5
  %v4709 = vsel %vm305, %v4708, %v4707
  %v4710 = vrot.slane %v4700, 4
  %v4711 = vsel %vm311, %v4710, %v4709
  %v4712 = vrot.slane %v4701, 3
  %v4713 = vsel %vm317, %v4712, %v4711
  %v4714 = vrot.slane %v4702, 2
  %v4715 = vsel %vm323, %v4714, %v4713
  %v4716 = vrot.slane %v4703, 1
  %v4717 = vsel %vm1028, %v4716, %v4715
  %v4718 = vpack.c.b16 %v4717, %v4717
  %v4752 = vunpack.c.l.b16 %v4656
  %v4753 = vunpack.c.h.b16 %v4656
  %v4754 = vunpack.c.l.b16 %v4657
  %v4755 = vunpack.c.h.b16 %v4657
  %v4756 = vunpack.c.l.b16 %v4658
  %v4757 = vunpack.c.h.b16 %v4658
  %v4758 = vunpack.c.l.b16 %v4659
  %v4759 = vunpack.c.h.b16 %v4659
  %v4760 = vunpack.c.l.b16 %v4660
  %v4761 = vunpack.c.h.b16 %v4660
  %v4762 = vunpack.c.l.b16 %v4661
  %v4763 = vunpack.c.h.b16 %v4661
  %v4764 = vunpack.c.l.b16 %v4662
  %v4765 = vunpack.c.h.b16 %v4662
  %v4766 = vunpack.c.l.b16 %v4663
  %v4767 = vunpack.c.h.b16 %v4663
  %v4768 = vunpack.c.l.b16 %v4664
  %v4769 = vunpack.c.h.b16 %v4664
  %v4770 = vunpack.c.l.b16 %v4665
  %v4771 = vunpack.c.h.b16 %v4665
  %v4772 = vunpack.c.l.b16 %v4666
  %v4773 = vunpack.c.h.b16 %v4666
  %v4774 = vunpack.c.l.b16 %v4667
  %v4775 = vunpack.c.h.b16 %v4667
  %v4776 = vunpack.c.l.b16 %v4668
  %v4777 = vunpack.c.h.b16 %v4668
  %v4778 = vunpack.c.l.b16 %v4669
  %v4779 = vunpack.c.h.b16 %v4669
  %v4780 = vunpack.c.l.b16 %v4670
  %v4781 = vunpack.c.h.b16 %v4670
  %v4782 = vunpack.c.l.b16 %v4671
  %v4783 = vunpack.c.h.b16 %v4671
  %v4784 = vunpack.c.l.b16 %v4672
  %v4785 = vunpack.c.h.b16 %v4672
  %v4786 = vunpack.c.l.b16 %v4673
  %v4787 = vunpack.c.h.b16 %v4673
  %v4788 = vunpack.c.l.b16 %v4674
  %v4789 = vunpack.c.h.b16 %v4674
  %v4790 = vunpack.c.l.b16 %v4675
  %v4791 = vunpack.c.h.b16 %v4675
  %v4792 = vunpack.c.l.b16 %v4676
  %v4793 = vunpack.c.h.b16 %v4676
  %v4794 = vunpack.c.l.b16 %v4677
  %v4795 = vunpack.c.h.b16 %v4677
  %v4796 = vunpack.c.l.b16 %v4678
  %v4797 = vunpack.c.h.b16 %v4678
  %v4798 = vunpack.c.l.b16 %v4679
  %v4799 = vunpack.c.h.b16 %v4679
  %v4800 = vunpack.c.l.b16 %v4680
  %v4801 = vunpack.c.h.b16 %v4680
  %v4802 = vunpack.c.l.b16 %v4681
  %v4803 = vunpack.c.h.b16 %v4681
  %v4804 = vunpack.c.l.b16 %v4682
  %v4805 = vunpack.c.h.b16 %v4682
  %v4806 = vunpack.c.l.b16 %v4683
  %v4807 = vunpack.c.h.b16 %v4683
  %v4808 = vunpack.c.l.b16 %v4684
  %v4809 = vunpack.c.h.b16 %v4684
  %v4810 = vunpack.c.l.b16 %v4685
  %v4811 = vunpack.c.h.b16 %v4685
  %v4812 = vunpack.c.l.b16 %v4686
  %v4813 = vunpack.c.h.b16 %v4686
  %v4814 = vunpack.c.l.b16 %v4687
  %v4815 = vunpack.c.h.b16 %v4687
  %v4816 = vpack.c.b16 %v4756, %v4752
  %v4817 = vpack.c.b16 %v4757, %v4753
  %v4818 = vpack.c.b16 %v4758, %v4754
  %v4819 = vpack.c.b16 %v4759, %v4755
  %v4820 = vpack.c.b16 %v4764, %v4760
  %v4821 = vpack.c.b16 %v4765, %v4761
  %v4822 = vpack.c.b16 %v4766, %v4762
  %v4823 = vpack.c.b16 %v4767, %v4763
  %v4824 = vpack.c.b16 %v4772, %v4768
  %v4825 = vpack.c.b16 %v4773, %v4769
  %v4826 = vpack.c.b16 %v4774, %v4770
  %v4827 = vpack.c.b16 %v4775, %v4771
  %v4828 = vpack.c.b16 %v4780, %v4776
  %v4829 = vpack.c.b16 %v4781, %v4777
  %v4830 = vpack.c.b16 %v4782, %v4778
  %v4831 = vpack.c.b16 %v4783, %v4779
  %v4832 = vpack.c.b16 %v4788, %v4784
  %v4833 = vpack.c.b16 %v4789, %v4785
  %v4834 = vpack.c.b16 %v4790, %v4786
  %v4835 = vpack.c.b16 %v4791, %v4787
  %v4836 = vpack.c.b16 %v4796, %v4792
  %v4837 = vpack.c.b16 %v4797, %v4793
  %v4838 = vpack.c.b16 %v4798, %v4794
  %v4839 = vpack.c.b16 %v4799, %v4795
  %v4840 = vpack.c.b16 %v4804, %v4800
  %v4841 = vpack.c.b16 %v4805, %v4801
  %v4842 = vpack.c.b16 %v4806, %v4802
  %v4843 = vpack.c.b16 %v4807, %v4803
  %v4844 = vpack.c.b16 %v4812, %v4808
  %v4845 = vpack.c.b16 %v4813, %v4809
  %v4846 = vpack.c.b16 %v4814, %v4810
  %v4847 = vpack.c.b16 %v4815, %v4811
  %4880 = vmatpush.bf16.msra.mxu0 %v4844
  %4881 = vmatpush.bf16.msra.mxu0 %v4840
  %4882 = vmatpush.bf16.msra.mxu0 %v4836
  %4883 = vmatpush.bf16.msra.mxu0 %v4832
  %4884 = vmatpush.bf16.msra.mxu0 %v4828
  %4885 = vmatpush.bf16.msra.mxu0 %v4824
  %4886 = vmatpush.bf16.msra.mxu0 %v4820
  %4887 = vmatpush.bf16.msra.mxu0 %v4816
  %4888 = vmatmul.bf16.gmra.mxu0 %v4718
  %v4889 = vpop.f32.mrf.mxu0
  %v4890 = vadd.f32 0.0, %v4889
  %v4891 = vpop.f32.mrf.mxu0
  %4892 = vdwg.mxu0
  %4893 = vmatpush.bf16.msra.mxu0 %v4845
  %4894 = vmatpush.bf16.msra.mxu0 %v4841
  %4895 = vmatpush.bf16.msra.mxu0 %v4837
  %4896 = vmatpush.bf16.msra.mxu0 %v4833
  %4897 = vmatpush.bf16.msra.mxu0 %v4829
  %4898 = vmatpush.bf16.msra.mxu0 %v4825
  %4899 = vmatpush.bf16.msra.mxu0 %v4821
  %4900 = vmatpush.bf16.msra.mxu0 %v4817
  %4901 = vmatmul.bf16.gmra.mxu0 %v4718
  %v4902 = vpop.f32.mrf.mxu0
  %v4903 = vadd.f32 0.0, %v4902
  %v4904 = vpop.f32.mrf.mxu0
  %4905 = vdwg.mxu0
  %4906 = vmatpush.bf16.msra.mxu0 %v4846
  %4907 = vmatpush.bf16.msra.mxu0 %v4842
  %4908 = vmatpush.bf16.msra.mxu0 %v4838
  %4909 = vmatpush.bf16.msra.mxu0 %v4834
  %4910 = vmatpush.bf16.msra.mxu0 %v4830
  %4911 = vmatpush.bf16.msra.mxu0 %v4826
  %4912 = vmatpush.bf16.msra.mxu0 %v4822
  %4913 = vmatpush.bf16.msra.mxu0 %v4818
  %4914 = vmatmul.bf16.gmra.mxu0 %v4718
  %v4915 = vpop.f32.mrf.mxu0
  %v4916 = vadd.f32 0.0, %v4915
  %v4917 = vpop.f32.mrf.mxu0
  %4918 = vdwg.mxu0
  %4919 = vmatpush.bf16.msra.mxu0 %v4847
  %4920 = vmatpush.bf16.msra.mxu0 %v4843
  %4921 = vmatpush.bf16.msra.mxu0 %v4839
  %4922 = vmatpush.bf16.msra.mxu0 %v4835
  %4923 = vmatpush.bf16.msra.mxu0 %v4831
  %4924 = vmatpush.bf16.msra.mxu0 %v4827
  %4925 = vmatpush.bf16.msra.mxu0 %v4823
  %4926 = vmatpush.bf16.msra.mxu0 %v4819
  %4927 = vmatmul.bf16.gmra.mxu0 %v4718
  %v4928 = vpop.f32.mrf.mxu0
  %v4929 = vadd.f32 0.0, %v4928
  %v4930 = vpop.f32.mrf.mxu0
  %4931 = vdwg.mxu0
  %v4936 = vrot.slane %v4903, 7
  %v4937 = vrot.slane %v4916, 6
  %v4938 = vrot.slane %v4929, 5
  %v4939 = vsel %vm297, %v4890, %v4936
  %v4940 = vsel %vm299, %v4937, %v4938
  %v4941 = vsel %vm301, %v4939, %v4940
  %v4942 = vsel %vm303, %v4890, %v4936
  %v4943 = vsel %vm305, %v4937, %v4938
  %v4944 = vsel %vm307, %v4942, %v4943
  %v4945 = vrot.slane %v4944, 1
  %v4946 = vsel %vm299, %v4890, %v4936
  %v4947 = vsel %vm311, %v4937, %v4938
  %v4948 = vsel %vm313, %v4946, %v4947
  %v4949 = vrot.slane %v4948, 2
  %v4950 = vsel %vm305, %v4890, %v4936
  %v4951 = vsel %vm317, %v4937, %v4938
  %v4952 = vsel %vm319, %v4950, %v4951
  %v4953 = vrot.slane %v4952, 3
  %v4954 = vsel %vm311, %v4890, %v4936
  %v4955 = vsel %vm323, %v4937, %v4938
  %v4956 = vsel %vm325, %v4954, %v4955
  %v4957 = vrot.slane %v4956, 4
  %v4958 = vsel %vm317, %v4890, %v4936
  %v4959 = vsel %vm329, %v4938, %v4937
  %v4960 = vsel %vm331, %v4958, %v4959
  %v4961 = vrot.slane %v4960, 5
  %v4962 = vsel %vm323, %v4890, %v4936
  %v4963 = vsel %vm297, %v4937, %v4938
  %v4964 = vsel %vm336, %v4963, %v4962
  %v4965 = vrot.slane %v4964, 6
  %v4966 = vsel %vm329, %v4936, %v4890
  %v4967 = vsel %vm303, %v4937, %v4938
  %v4968 = vsel %vm341, %v4967, %v4966
  %v4969 = vrot.slane %v4968, 7
  %v4978 = vadd.f32 %v4633, %v4941
  %v4979 = vadd.f32 %v4635, %v4945
  %v4980 = vadd.f32 %v4637, %v4949
  %v4981 = vadd.f32 %v4639, %v4953
  %v4982 = vadd.f32 %v4641, %v4957
  %v4983 = vadd.f32 %v4643, %v4961
  %v4984 = vadd.f32 %v4645, %v4965
  %v4985 = vadd.f32 %v4647, %v4969
  %v4986 = vxor.u32 %v4978, 2147483648
  %v4987 = vxor.u32 %v4979, 2147483648
  %v4988 = vxor.u32 %v4980, 2147483648
  %v4989 = vxor.u32 %v4981, 2147483648
  %v4990 = vxor.u32 %v4982, 2147483648
  %v4991 = vxor.u32 %v4983, 2147483648
  %v4992 = vxor.u32 %v4984, 2147483648
  %v4993 = vxor.u32 %v4985, 2147483648
  %v4994 = vmul.f32 %v4986, 1.442695
  %v4995 = vpow.pop %v4994
  %v4996 = vmul.f32 %v4987, 1.442695
  %v4997 = vpow.pop %v4996
  %v4998 = vmul.f32 %v4988, 1.442695
  %v4999 = vpow.pop %v4998
  %v5000 = vmul.f32 %v4989, 1.442695
  %v5001 = vpow.pop %v5000
  %v5002 = vmul.f32 %v4990, 1.442695
  %v5003 = vpow.pop %v5002
  %v5004 = vmul.f32 %v4991, 1.442695
  %v5005 = vpow.pop %v5004
  %v5006 = vmul.f32 %v4992, 1.442695
  %v5007 = vpow.pop %v5006
  %v5008 = vmul.f32 %v4993, 1.442695
  %v5009 = vpow.pop %v5008
  %v5010 = vadd.f32 %v4995, 1.0
  %v5011 = vadd.f32 %v4997, 1.0
  %v5012 = vadd.f32 %v4999, 1.0
  %v5013 = vadd.f32 %v5001, 1.0
  %v5014 = vadd.f32 %v5003, 1.0
  %v5015 = vadd.f32 %v5005, 1.0
  %v5016 = vadd.f32 %v5007, 1.0
  %v5017 = vadd.f32 %v5009, 1.0
  %v5018 = vrcp.pop %v5010
  %v5019 = vmul.f32 %v5010, %v5018
  %v5020 = vsub.f32 1.0, %v5019
  %v5021 = vmul.f32 %v5018, %v5020
  %v5022 = vadd.f32 %v5018, %v5021
  %vm5023 = vweird.f32 %v5010
  %vm5024 = vweird.f32 %v5018
  %vm5025 = vmor %vm5023, %vm5024
  %v5026 = vsel %vm5025, %v5018, %v5022
  %v5027 = vand.u32 2147483647, %v5010
  %vm5028 = vcmp.eq.f32.partialorder %v5027, 8.507059e+37
  %v5029 = vand.u32 %v5010, 2147483648
  %v5030 = vor.u32 1.1754944e-38, %v5029
  %v5031 = vsel %vm5028, %v5030, %v5026
  %v5032 = vmul.f32 1.0, %v5031
  %v5033 = vrcp.pop %v5011
  %v5034 = vmul.f32 %v5011, %v5033
  %v5035 = vsub.f32 1.0, %v5034
  %v5036 = vmul.f32 %v5033, %v5035
  %v5037 = vadd.f32 %v5033, %v5036
  %vm5038 = vweird.f32 %v5011
  %vm5039 = vweird.f32 %v5033
  %vm5040 = vmor %vm5038, %vm5039
  %v5041 = vsel %vm5040, %v5033, %v5037
  %v5042 = vand.u32 2147483647, %v5011
  %vm5043 = vcmp.eq.f32.partialorder %v5042, 8.507059e+37
  %v5044 = vand.u32 %v5011, 2147483648
  %v5045 = vor.u32 1.1754944e-38, %v5044
  %v5046 = vsel %vm5043, %v5045, %v5041
  %v5047 = vmul.f32 1.0, %v5046
  %v5048 = vrcp.pop %v5012
  %v5049 = vmul.f32 %v5012, %v5048
  %v5050 = vsub.f32 1.0, %v5049
  %v5051 = vmul.f32 %v5048, %v5050
  %v5052 = vadd.f32 %v5048, %v5051
  %vm5053 = vweird.f32 %v5012
  %vm5054 = vweird.f32 %v5048
  %vm5055 = vmor %vm5053, %vm5054
  %v5056 = vsel %vm5055, %v5048, %v5052
  %v5057 = vand.u32 2147483647, %v5012
  %vm5058 = vcmp.eq.f32.partialorder %v5057, 8.507059e+37
  %v5059 = vand.u32 %v5012, 2147483648
  %v5060 = vor.u32 1.1754944e-38, %v5059
  %v5061 = vsel %vm5058, %v5060, %v5056
  %v5062 = vmul.f32 1.0, %v5061
  %v5063 = vrcp.pop %v5013
  %v5064 = vmul.f32 %v5013, %v5063
  %v5065 = vsub.f32 1.0, %v5064
  %v5066 = vmul.f32 %v5063, %v5065
  %v5067 = vadd.f32 %v5063, %v5066
  %vm5068 = vweird.f32 %v5013
  %vm5069 = vweird.f32 %v5063
  %vm5070 = vmor %vm5068, %vm5069
  %v5071 = vsel %vm5070, %v5063, %v5067
  %v5072 = vand.u32 2147483647, %v5013
  %vm5073 = vcmp.eq.f32.partialorder %v5072, 8.507059e+37
  %v5074 = vand.u32 %v5013, 2147483648
  %v5075 = vor.u32 1.1754944e-38, %v5074
  %v5076 = vsel %vm5073, %v5075, %v5071
  %v5077 = vmul.f32 1.0, %v5076
  %v5078 = vrcp.pop %v5014
  %v5079 = vmul.f32 %v5014, %v5078
  %v5080 = vsub.f32 1.0, %v5079
  %v5081 = vmul.f32 %v5078, %v5080
  %v5082 = vadd.f32 %v5078, %v5081
  %vm5083 = vweird.f32 %v5014
  %vm5084 = vweird.f32 %v5078
  %vm5085 = vmor %vm5083, %vm5084
  %v5086 = vsel %vm5085, %v5078, %v5082
  %v5087 = vand.u32 2147483647, %v5014
  %vm5088 = vcmp.eq.f32.partialorder %v5087, 8.507059e+37
  %v5089 = vand.u32 %v5014, 2147483648
  %v5090 = vor.u32 1.1754944e-38, %v5089
  %v5091 = vsel %vm5088, %v5090, %v5086
  %v5092 = vmul.f32 1.0, %v5091
  %v5093 = vrcp.pop %v5015
  %v5094 = vmul.f32 %v5015, %v5093
  %v5095 = vsub.f32 1.0, %v5094
  %v5096 = vmul.f32 %v5093, %v5095
  %v5097 = vadd.f32 %v5093, %v5096
  %vm5098 = vweird.f32 %v5015
  %vm5099 = vweird.f32 %v5093
  %vm5100 = vmor %vm5098, %vm5099
  %v5101 = vsel %vm5100, %v5093, %v5097
  %v5102 = vand.u32 2147483647, %v5015
  %vm5103 = vcmp.eq.f32.partialorder %v5102, 8.507059e+37
  %v5104 = vand.u32 %v5015, 2147483648
  %v5105 = vor.u32 1.1754944e-38, %v5104
  %v5106 = vsel %vm5103, %v5105, %v5101
  %v5107 = vmul.f32 1.0, %v5106
  %v5108 = vrcp.pop %v5016
  %v5109 = vmul.f32 %v5016, %v5108
  %v5110 = vsub.f32 1.0, %v5109
  %v5111 = vmul.f32 %v5108, %v5110
  %v5112 = vadd.f32 %v5108, %v5111
  %vm5113 = vweird.f32 %v5016
  %vm5114 = vweird.f32 %v5108
  %vm5115 = vmor %vm5113, %vm5114
  %v5116 = vsel %vm5115, %v5108, %v5112
  %v5117 = vand.u32 2147483647, %v5016
  %vm5118 = vcmp.eq.f32.partialorder %v5117, 8.507059e+37
  %v5119 = vand.u32 %v5016, 2147483648
  %v5120 = vor.u32 1.1754944e-38, %v5119
  %v5121 = vsel %vm5118, %v5120, %v5116
  %v5122 = vmul.f32 1.0, %v5121
  %v5123 = vrcp.pop %v5017
  %v5124 = vmul.f32 %v5017, %v5123
  %v5125 = vsub.f32 1.0, %v5124
  %v5126 = vmul.f32 %v5123, %v5125
  %v5127 = vadd.f32 %v5123, %v5126
  %vm5128 = vweird.f32 %v5017
  %vm5129 = vweird.f32 %v5123
  %vm5130 = vmor %vm5128, %vm5129
  %v5131 = vsel %vm5130, %v5123, %v5127
  %v5132 = vand.u32 2147483647, %v5017
  %vm5133 = vcmp.eq.f32.partialorder %v5132, 8.507059e+37
  %v5134 = vand.u32 %v5017, 2147483648
  %v5135 = vor.u32 1.1754944e-38, %v5134
  %v5136 = vsel %vm5133, %v5135, %v5131
  %v5137 = vmul.f32 1.0, %v5136
  %v5146 = vrot.slane %v4978, 1
  %v5147 = vrot.slane %v4979, 1
  %v5148 = vrot.slane %v4980, 1
  %v5149 = vrot.slane %v4981, 1
  %v5150 = vrot.slane %v4982, 1
  %v5151 = vrot.slane %v4983, 1
  %v5152 = vrot.slane %v4984, 1
  %v5153 = vrot.slane %v4985, 1
  %v5162 = vxor.u32 %v5146, 2147483648
  %v5163 = vxor.u32 %v5147, 2147483648
  %v5164 = vxor.u32 %v5148, 2147483648
  %v5165 = vxor.u32 %v5149, 2147483648
  %v5166 = vxor.u32 %v5150, 2147483648
  %v5167 = vxor.u32 %v5151, 2147483648
  %v5168 = vxor.u32 %v5152, 2147483648
  %v5169 = vxor.u32 %v5153, 2147483648
  %v5170 = vmul.f32 %v5162, 1.442695
  %v5171 = vpow.pop %v5170
  %v5172 = vmul.f32 %v5163, 1.442695
  %v5173 = vpow.pop %v5172
  %v5174 = vmul.f32 %v5164, 1.442695
  %v5175 = vpow.pop %v5174
  %v5176 = vmul.f32 %v5165, 1.442695
  %v5177 = vpow.pop %v5176
  %v5178 = vmul.f32 %v5166, 1.442695
  %v5179 = vpow.pop %v5178
  %v5180 = vmul.f32 %v5167, 1.442695
  %v5181 = vpow.pop %v5180
  %v5182 = vmul.f32 %v5168, 1.442695
  %v5183 = vpow.pop %v5182
  %v5184 = vmul.f32 %v5169, 1.442695
  %v5185 = vpow.pop %v5184
  %v5186 = vadd.f32 %v5171, 1.0
  %v5187 = vadd.f32 %v5173, 1.0
  %v5188 = vadd.f32 %v5175, 1.0
  %v5189 = vadd.f32 %v5177, 1.0
  %v5190 = vadd.f32 %v5179, 1.0
  %v5191 = vadd.f32 %v5181, 1.0
  %v5192 = vadd.f32 %v5183, 1.0
  %v5193 = vadd.f32 %v5185, 1.0
  %v5194 = vrcp.pop %v5186
  %v5195 = vmul.f32 %v5186, %v5194
  %v5196 = vsub.f32 1.0, %v5195
  %v5197 = vmul.f32 %v5194, %v5196
  %v5198 = vadd.f32 %v5194, %v5197
  %vm5199 = vweird.f32 %v5186
  %vm5200 = vweird.f32 %v5194
  %vm5201 = vmor %vm5199, %vm5200
  %v5202 = vsel %vm5201, %v5194, %v5198
  %v5203 = vand.u32 2147483647, %v5186
  %vm5204 = vcmp.eq.f32.partialorder %v5203, 8.507059e+37
  %v5205 = vand.u32 %v5186, 2147483648
  %v5206 = vor.u32 1.1754944e-38, %v5205
  %v5207 = vsel %vm5204, %v5206, %v5202
  %v5208 = vmul.f32 1.0, %v5207
  %v5209 = vrcp.pop %v5187
  %v5210 = vmul.f32 %v5187, %v5209
  %v5211 = vsub.f32 1.0, %v5210
  %v5212 = vmul.f32 %v5209, %v5211
  %v5213 = vadd.f32 %v5209, %v5212
  %vm5214 = vweird.f32 %v5187
  %vm5215 = vweird.f32 %v5209
  %vm5216 = vmor %vm5214, %vm5215
  %v5217 = vsel %vm5216, %v5209, %v5213
  %v5218 = vand.u32 2147483647, %v5187
  %vm5219 = vcmp.eq.f32.partialorder %v5218, 8.507059e+37
  %v5220 = vand.u32 %v5187, 2147483648
  %v5221 = vor.u32 1.1754944e-38, %v5220
  %v5222 = vsel %vm5219, %v5221, %v5217
  %v5223 = vmul.f32 1.0, %v5222
  %v5224 = vrcp.pop %v5188
  %v5225 = vmul.f32 %v5188, %v5224
  %v5226 = vsub.f32 1.0, %v5225
  %v5227 = vmul.f32 %v5224, %v5226
  %v5228 = vadd.f32 %v5224, %v5227
  %vm5229 = vweird.f32 %v5188
  %vm5230 = vweird.f32 %v5224
  %vm5231 = vmor %vm5229, %vm5230
  %v5232 = vsel %vm5231, %v5224, %v5228
  %v5233 = vand.u32 2147483647, %v5188
  %vm5234 = vcmp.eq.f32.partialorder %v5233, 8.507059e+37
  %v5235 = vand.u32 %v5188, 2147483648
  %v5236 = vor.u32 1.1754944e-38, %v5235
  %v5237 = vsel %vm5234, %v5236, %v5232
  %v5238 = vmul.f32 1.0, %v5237
  %v5239 = vrcp.pop %v5189
  %v5240 = vmul.f32 %v5189, %v5239
  %v5241 = vsub.f32 1.0, %v5240
  %v5242 = vmul.f32 %v5239, %v5241
  %v5243 = vadd.f32 %v5239, %v5242
  %vm5244 = vweird.f32 %v5189
  %vm5245 = vweird.f32 %v5239
  %vm5246 = vmor %vm5244, %vm5245
  %v5247 = vsel %vm5246, %v5239, %v5243
  %v5248 = vand.u32 2147483647, %v5189
  %vm5249 = vcmp.eq.f32.partialorder %v5248, 8.507059e+37
  %v5250 = vand.u32 %v5189, 2147483648
  %v5251 = vor.u32 1.1754944e-38, %v5250
  %v5252 = vsel %vm5249, %v5251, %v5247
  %v5253 = vmul.f32 1.0, %v5252
  %v5254 = vrcp.pop %v5190
  %v5255 = vmul.f32 %v5190, %v5254
  %v5256 = vsub.f32 1.0, %v5255
  %v5257 = vmul.f32 %v5254, %v5256
  %v5258 = vadd.f32 %v5254, %v5257
  %vm5259 = vweird.f32 %v5190
  %vm5260 = vweird.f32 %v5254
  %vm5261 = vmor %vm5259, %vm5260
  %v5262 = vsel %vm5261, %v5254, %v5258
  %v5263 = vand.u32 2147483647, %v5190
  %vm5264 = vcmp.eq.f32.partialorder %v5263, 8.507059e+37
  %v5265 = vand.u32 %v5190, 2147483648
  %v5266 = vor.u32 1.1754944e-38, %v5265
  %v5267 = vsel %vm5264, %v5266, %v5262
  %v5268 = vmul.f32 1.0, %v5267
  %v5269 = vrcp.pop %v5191
  %v5270 = vmul.f32 %v5191, %v5269
  %v5271 = vsub.f32 1.0, %v5270
  %v5272 = vmul.f32 %v5269, %v5271
  %v5273 = vadd.f32 %v5269, %v5272
  %vm5274 = vweird.f32 %v5191
  %vm5275 = vweird.f32 %v5269
  %vm5276 = vmor %vm5274, %vm5275
  %v5277 = vsel %vm5276, %v5269, %v5273
  %v5278 = vand.u32 2147483647, %v5191
  %vm5279 = vcmp.eq.f32.partialorder %v5278, 8.507059e+37
  %v5280 = vand.u32 %v5191, 2147483648
  %v5281 = vor.u32 1.1754944e-38, %v5280
  %v5282 = vsel %vm5279, %v5281, %v5277
  %v5283 = vmul.f32 1.0, %v5282
  %v5284 = vrcp.pop %v5192
  %v5285 = vmul.f32 %v5192, %v5284
  %v5286 = vsub.f32 1.0, %v5285
  %v5287 = vmul.f32 %v5284, %v5286
  %v5288 = vadd.f32 %v5284, %v5287
  %vm5289 = vweird.f32 %v5192
  %vm5290 = vweird.f32 %v5284
  %vm5291 = vmor %vm5289, %vm5290
  %v5292 = vsel %vm5291, %v5284, %v5288
  %v5293 = vand.u32 2147483647, %v5192
  %vm5294 = vcmp.eq.f32.partialorder %v5293, 8.507059e+37
  %v5295 = vand.u32 %v5192, 2147483648
  %v5296 = vor.u32 1.1754944e-38, %v5295
  %v5297 = vsel %vm5294, %v5296, %v5292
  %v5298 = vmul.f32 1.0, %v5297
  %v5299 = vrcp.pop %v5193
  %v5300 = vmul.f32 %v5193, %v5299
  %v5301 = vsub.f32 1.0, %v5300
  %v5302 = vmul.f32 %v5299, %v5301
  %v5303 = vadd.f32 %v5299, %v5302
  %vm5304 = vweird.f32 %v5193
  %vm5305 = vweird.f32 %v5299
  %vm5306 = vmor %vm5304, %vm5305
  %v5307 = vsel %vm5306, %v5299, %v5303
  %v5308 = vand.u32 2147483647, %v5193
  %vm5309 = vcmp.eq.f32.partialorder %v5308, 8.507059e+37
  %v5310 = vand.u32 %v5193, 2147483648
  %v5311 = vor.u32 1.1754944e-38, %v5310
  %v5312 = vsel %vm5309, %v5311, %v5307
  %v5313 = vmul.f32 1.0, %v5312
  %v5314 = vrot.slane %v4978, 2
  %v5315 = vrot.slane %v4979, 2
  %v5316 = vrot.slane %v4980, 2
  %v5317 = vrot.slane %v4981, 2
  %v5318 = vrot.slane %v4982, 2
  %v5319 = vrot.slane %v4983, 2
  %v5320 = vrot.slane %v4984, 2
  %v5321 = vrot.slane %v4985, 2
  %v5330 = vtanh.pop %v5314
  %v5331 = vtanh.pop %v5315
  %v5332 = vtanh.pop %v5316
  %v5333 = vtanh.pop %v5317
  %v5334 = vtanh.pop %v5318
  %v5335 = vtanh.pop %v5319
  %v5336 = vtanh.pop %v5320
  %v5337 = vtanh.pop %v5321
  %v5338 = vrot.slane %v4978, 3
  %v5339 = vrot.slane %v4979, 3
  %v5340 = vrot.slane %v4980, 3
  %v5341 = vrot.slane %v4981, 3
  %v5342 = vrot.slane %v4982, 3
  %v5343 = vrot.slane %v4983, 3
  %v5344 = vrot.slane %v4984, 3
  %v5345 = vrot.slane %v4985, 3
  %v5354 = vxor.u32 %v5338, 2147483648
  %v5355 = vxor.u32 %v5339, 2147483648
  %v5356 = vxor.u32 %v5340, 2147483648
  %v5357 = vxor.u32 %v5341, 2147483648
  %v5358 = vxor.u32 %v5342, 2147483648
  %v5359 = vxor.u32 %v5343, 2147483648
  %v5360 = vxor.u32 %v5344, 2147483648
  %v5361 = vxor.u32 %v5345, 2147483648
  %v5362 = vmul.f32 %v5354, 1.442695
  %v5363 = vpow.pop %v5362
  %v5364 = vmul.f32 %v5355, 1.442695
  %v5365 = vpow.pop %v5364
  %v5366 = vmul.f32 %v5356, 1.442695
  %v5367 = vpow.pop %v5366
  %v5368 = vmul.f32 %v5357, 1.442695
  %v5369 = vpow.pop %v5368
  %v5370 = vmul.f32 %v5358, 1.442695
  %v5371 = vpow.pop %v5370
  %v5372 = vmul.f32 %v5359, 1.442695
  %v5373 = vpow.pop %v5372
  %v5374 = vmul.f32 %v5360, 1.442695
  %v5375 = vpow.pop %v5374
  %v5376 = vmul.f32 %v5361, 1.442695
  %v5377 = vpow.pop %v5376
  %v5378 = vadd.f32 %v5363, 1.0
  %v5379 = vadd.f32 %v5365, 1.0
  %v5380 = vadd.f32 %v5367, 1.0
  %v5381 = vadd.f32 %v5369, 1.0
  %v5382 = vadd.f32 %v5371, 1.0
  %v5383 = vadd.f32 %v5373, 1.0
  %v5384 = vadd.f32 %v5375, 1.0
  %v5385 = vadd.f32 %v5377, 1.0
  %v5386 = vrcp.pop %v5378
  %v5387 = vmul.f32 %v5378, %v5386
  %v5388 = vsub.f32 1.0, %v5387
  %v5389 = vmul.f32 %v5386, %v5388
  %v5390 = vadd.f32 %v5386, %v5389
  %vm5391 = vweird.f32 %v5378
  %vm5392 = vweird.f32 %v5386
  %vm5393 = vmor %vm5391, %vm5392
  %v5394 = vsel %vm5393, %v5386, %v5390
  %v5395 = vand.u32 2147483647, %v5378
  %vm5396 = vcmp.eq.f32.partialorder %v5395, 8.507059e+37
  %v5397 = vand.u32 %v5378, 2147483648
  %v5398 = vor.u32 1.1754944e-38, %v5397
  %v5399 = vsel %vm5396, %v5398, %v5394
  %v5400 = vmul.f32 1.0, %v5399
  %v5401 = vrcp.pop %v5379
  %v5402 = vmul.f32 %v5379, %v5401
  %v5403 = vsub.f32 1.0, %v5402
  %v5404 = vmul.f32 %v5401, %v5403
  %v5405 = vadd.f32 %v5401, %v5404
  %vm5406 = vweird.f32 %v5379
  %vm5407 = vweird.f32 %v5401
  %vm5408 = vmor %vm5406, %vm5407
  %v5409 = vsel %vm5408, %v5401, %v5405
  %v5410 = vand.u32 2147483647, %v5379
  %vm5411 = vcmp.eq.f32.partialorder %v5410, 8.507059e+37
  %v5412 = vand.u32 %v5379, 2147483648
  %v5413 = vor.u32 1.1754944e-38, %v5412
  %v5414 = vsel %vm5411, %v5413, %v5409
  %v5415 = vmul.f32 1.0, %v5414
  %v5416 = vrcp.pop %v5380
  %v5417 = vmul.f32 %v5380, %v5416
  %v5418 = vsub.f32 1.0, %v5417
  %v5419 = vmul.f32 %v5416, %v5418
  %v5420 = vadd.f32 %v5416, %v5419
  %vm5421 = vweird.f32 %v5380
  %vm5422 = vweird.f32 %v5416
  %vm5423 = vmor %vm5421, %vm5422
  %v5424 = vsel %vm5423, %v5416, %v5420
  %v5425 = vand.u32 2147483647, %v5380
  %vm5426 = vcmp.eq.f32.partialorder %v5425, 8.507059e+37
  %v5427 = vand.u32 %v5380, 2147483648
  %v5428 = vor.u32 1.1754944e-38, %v5427
  %v5429 = vsel %vm5426, %v5428, %v5424
  %v5430 = vmul.f32 1.0, %v5429
  %v5431 = vrcp.pop %v5381
  %v5432 = vmul.f32 %v5381, %v5431
  %v5433 = vsub.f32 1.0, %v5432
  %v5434 = vmul.f32 %v5431, %v5433
  %v5435 = vadd.f32 %v5431, %v5434
  %vm5436 = vweird.f32 %v5381
  %vm5437 = vweird.f32 %v5431
  %vm5438 = vmor %vm5436, %vm5437
  %v5439 = vsel %vm5438, %v5431, %v5435
  %v5440 = vand.u32 2147483647, %v5381
  %vm5441 = vcmp.eq.f32.partialorder %v5440, 8.507059e+37
  %v5442 = vand.u32 %v5381, 2147483648
  %v5443 = vor.u32 1.1754944e-38, %v5442
  %v5444 = vsel %vm5441, %v5443, %v5439
  %v5445 = vmul.f32 1.0, %v5444
  %v5446 = vrcp.pop %v5382
  %v5447 = vmul.f32 %v5382, %v5446
  %v5448 = vsub.f32 1.0, %v5447
  %v5449 = vmul.f32 %v5446, %v5448
  %v5450 = vadd.f32 %v5446, %v5449
  %vm5451 = vweird.f32 %v5382
  %vm5452 = vweird.f32 %v5446
  %vm5453 = vmor %vm5451, %vm5452
  %v5454 = vsel %vm5453, %v5446, %v5450
  %v5455 = vand.u32 2147483647, %v5382
  %vm5456 = vcmp.eq.f32.partialorder %v5455, 8.507059e+37
  %v5457 = vand.u32 %v5382, 2147483648
  %v5458 = vor.u32 1.1754944e-38, %v5457
  %v5459 = vsel %vm5456, %v5458, %v5454
  %v5460 = vmul.f32 1.0, %v5459
  %v5461 = vrcp.pop %v5383
  %v5462 = vmul.f32 %v5383, %v5461
  %v5463 = vsub.f32 1.0, %v5462
  %v5464 = vmul.f32 %v5461, %v5463
  %v5465 = vadd.f32 %v5461, %v5464
  %vm5466 = vweird.f32 %v5383
  %vm5467 = vweird.f32 %v5461
  %vm5468 = vmor %vm5466, %vm5467
  %v5469 = vsel %vm5468, %v5461, %v5465
  %v5470 = vand.u32 2147483647, %v5383
  %vm5471 = vcmp.eq.f32.partialorder %v5470, 8.507059e+37
  %v5472 = vand.u32 %v5383, 2147483648
  %v5473 = vor.u32 1.1754944e-38, %v5472
  %v5474 = vsel %vm5471, %v5473, %v5469
  %v5475 = vmul.f32 1.0, %v5474
  %v5476 = vrcp.pop %v5384
  %v5477 = vmul.f32 %v5384, %v5476
  %v5478 = vsub.f32 1.0, %v5477
  %v5479 = vmul.f32 %v5476, %v5478
  %v5480 = vadd.f32 %v5476, %v5479
  %vm5481 = vweird.f32 %v5384
  %vm5482 = vweird.f32 %v5476
  %vm5483 = vmor %vm5481, %vm5482
  %v5484 = vsel %vm5483, %v5476, %v5480
  %v5485 = vand.u32 2147483647, %v5384
  %vm5486 = vcmp.eq.f32.partialorder %v5485, 8.507059e+37
  %v5487 = vand.u32 %v5384, 2147483648
  %v5488 = vor.u32 1.1754944e-38, %v5487
  %v5489 = vsel %vm5486, %v5488, %v5484
  %v5490 = vmul.f32 1.0, %v5489
  %v5491 = vrcp.pop %v5385
  %v5492 = vmul.f32 %v5385, %v5491
  %v5493 = vsub.f32 1.0, %v5492
  %v5494 = vmul.f32 %v5491, %v5493
  %v5495 = vadd.f32 %v5491, %v5494
  %vm5496 = vweird.f32 %v5385
  %vm5497 = vweird.f32 %v5491
  %vm5498 = vmor %vm5496, %vm5497
  %v5499 = vsel %vm5498, %v5491, %v5495
  %v5500 = vand.u32 2147483647, %v5385
  %vm5501 = vcmp.eq.f32.partialorder %v5500, 8.507059e+37
  %v5502 = vand.u32 %v5385, 2147483648
  %v5503 = vor.u32 1.1754944e-38, %v5502
  %v5504 = vsel %vm5501, %v5503, %v5499
  %v5505 = vmul.f32 1.0, %v5504
  %v5506 = vmul.f32 %v5208, %v4600
  %v5507 = vmul.f32 %v5223, %v4601
  %v5508 = vmul.f32 %v5238, %v4602
  %v5509 = vmul.f32 %v5253, %v4603
  %v5510 = vmul.f32 %v5268, %v4604
  %v5511 = vmul.f32 %v5283, %v4605
  %v5512 = vmul.f32 %v5298, %v4606
  %v5513 = vmul.f32 %v5313, %v4607
  %v5514 = vmul.f32 %v5032, %v5330
  %v5515 = vmul.f32 %v5047, %v5331
  %v5516 = vmul.f32 %v5062, %v5332
  %v5517 = vmul.f32 %v5077, %v5333
  %v5518 = vmul.f32 %v5092, %v5334
  %v5519 = vmul.f32 %v5107, %v5335
  %v5520 = vmul.f32 %v5122, %v5336
  %v5521 = vmul.f32 %v5137, %v5337
  %v5522 = vadd.f32 %v5506, %v5514
  %v5523 = vadd.f32 %v5507, %v5515
  %v5524 = vadd.f32 %v5508, %v5516
  %v5525 = vadd.f32 %v5509, %v5517
  %v5526 = vadd.f32 %v5510, %v5518
  %v5527 = vadd.f32 %v5511, %v5519
  %v5528 = vadd.f32 %v5512, %v5520
  %v5529 = vadd.f32 %v5513, %v5521
  %v5530 = vtanh.pop %v5522
  %v5531 = vtanh.pop %v5523
  %v5532 = vtanh.pop %v5524
  %v5533 = vtanh.pop %v5525
  %v5534 = vtanh.pop %v5526
  %v5535 = vtanh.pop %v5527
  %v5536 = vtanh.pop %v5528
  %v5537 = vtanh.pop %v5529
  %v5538 = vmul.f32 %v5400, %v5530
  %v5539 = vmul.f32 %v5415, %v5531
  %v5540 = vmul.f32 %v5430, %v5532
  %v5541 = vmul.f32 %v5445, %v5533
  %v5542 = vmul.f32 %v5460, %v5534
  %v5543 = vmul.f32 %v5475, %v5535
  %v5544 = vmul.f32 %v5490, %v5536
  %v5545 = vmul.f32 %v5505, %v5537
  %5546 = vst [vmem:[%s4 + $0x5] sm:$0x1] %v5538
  %5547 = vst [vmem:[%s4 + $0xd] sm:$0x1] %v5539
  %5548 = vst [vmem:[%s4 + $0x15] sm:$0x1] %v5540
  %5549 = vst [vmem:[%s4 + $0x1d] sm:$0x1] %v5541
  %5550 = vst [vmem:[%s4 + $0x25] sm:$0x1] %v5542
  %5551 = vst [vmem:[%s4 + $0x2d] sm:$0x1] %v5543
  %5552 = vst [vmem:[%s4 + $0x35] sm:$0x1] %v5544
  %5553 = vst [vmem:[%s4 + $0x3d] sm:$0x1] %v5545
  %s5554 = scalar_lea.vmem %s0, 6
  %v5555 = vld [vmem:[%s5554] ss:$8 sm:$0xf]
  %s5556 = scalar_lea.vmem %s0, 38
  %v5557 = vld [vmem:[%s5556] ss:$8 sm:$0xf]
  %s5558 = scalar_lea.vmem %s0, 70
  %v5559 = vld [vmem:[%s5558] ss:$8 sm:$0xf]
  %s5560 = scalar_lea.vmem %s0, 102
  %v5561 = vld [vmem:[%s5560] ss:$8 sm:$0xf]
  %s5562 = scalar_lea.vmem %s0, 134
  %v5563 = vld [vmem:[%s5562] ss:$8 sm:$0xf]
  %s5564 = scalar_lea.vmem %s0, 166
  %v5565 = vld [vmem:[%s5564] ss:$8 sm:$0xf]
  %s5566 = scalar_lea.vmem %s0, 198
  %v5567 = vld [vmem:[%s5566] ss:$8 sm:$0xf]
  %s5568 = scalar_lea.vmem %s0, 230
  %v5569 = vld [vmem:[%s5568] ss:$8 sm:$0xf]
  %v5570 = vpack.c.bf16 %v5538, %v5538
  %v5571 = vpack.c.bf16 %v5539, %v5539
  %v5572 = vpack.c.bf16 %v5540, %v5540
  %v5573 = vpack.c.bf16 %v5541, %v5541
  %v5574 = vpack.c.bf16 %v5542, %v5542
  %v5575 = vpack.c.bf16 %v5543, %v5543
  %v5576 = vpack.c.bf16 %v5544, %v5544
  %v5577 = vpack.c.bf16 %v5545, %v5545
  %v5578 = vld [vmem:[%s1] sm:$0xff]
  %v5579 = vld [vmem:[%s1 + $0x8] sm:$0xff]
  %v5580 = vld [vmem:[%s1 + $0x10] sm:$0xff]
  %v5581 = vld [vmem:[%s1 + $0x18] sm:$0xff]
  %v5582 = vld [vmem:[%s1 + $0x20] sm:$0xff]
  %v5583 = vld [vmem:[%s1 + $0x28] sm:$0xff]
  %v5584 = vld [vmem:[%s1 + $0x30] sm:$0xff]
  %v5585 = vld [vmem:[%s1 + $0x38] sm:$0xff]
  %v5586 = vld [vmem:[%s1 + $0x40] sm:$0xff]
  %v5587 = vld [vmem:[%s1 + $0x48] sm:$0xff]
  %v5588 = vld [vmem:[%s1 + $0x50] sm:$0xff]
  %v5589 = vld [vmem:[%s1 + $0x58] sm:$0xff]
  %v5590 = vld [vmem:[%s1 + $0x60] sm:$0xff]
  %v5591 = vld [vmem:[%s1 + $0x68] sm:$0xff]
  %v5592 = vld [vmem:[%s1 + $0x70] sm:$0xff]
  %v5593 = vld [vmem:[%s1 + $0x78] sm:$0xff]
  %v5594 = vld [vmem:[%s1 + $0x80] sm:$0xff]
  %v5595 = vld [vmem:[%s1 + $0x88] sm:$0xff]
  %v5596 = vld [vmem:[%s1 + $0x90] sm:$0xff]
  %v5597 = vld [vmem:[%s1 + $0x98] sm:$0xff]
  %v5598 = vld [vmem:[%s1 + $0xa0] sm:$0xff]
  %v5599 = vld [vmem:[%s1 + $0xa8] sm:$0xff]
  %v5600 = vld [vmem:[%s1 + $0xb0] sm:$0xff]
  %v5601 = vld [vmem:[%s1 + $0xb8] sm:$0xff]
  %v5602 = vld [vmem:[%s1 + $0xc0] sm:$0xff]
  %v5603 = vld [vmem:[%s1 + $0xc8] sm:$0xff]
  %v5604 = vld [vmem:[%s1 + $0xd0] sm:$0xff]
  %v5605 = vld [vmem:[%s1 + $0xd8] sm:$0xff]
  %v5606 = vld [vmem:[%s1 + $0xe0] sm:$0xff]
  %v5607 = vld [vmem:[%s1 + $0xe8] sm:$0xff]
  %v5608 = vld [vmem:[%s1 + $0xf0] sm:$0xff]
  %v5609 = vld [vmem:[%s1 + $0xf8] sm:$0xff]
  %v5618 = vunpack.c.l.b16 %v5570
  %v5619 = vunpack.c.l.b16 %v5571
  %v5620 = vunpack.c.l.b16 %v5572
  %v5621 = vunpack.c.l.b16 %v5573
  %v5622 = vunpack.c.l.b16 %v5574
  %v5623 = vunpack.c.l.b16 %v5575
  %v5624 = vunpack.c.l.b16 %v5576
  %v5625 = vunpack.c.l.b16 %v5577
  %v5626 = vrot.slane %v5619, 7
  %v5627 = vsel %vm303, %v5626, %v5618
  %v5628 = vrot.slane %v5620, 6
  %v5629 = vsel %vm299, %v5628, %v5627
  %v5630 = vrot.slane %v5621, 5
  %v5631 = vsel %vm305, %v5630, %v5629
  %v5632 = vrot.slane %v5622, 4
  %v5633 = vsel %vm311, %v5632, %v5631
  %v5634 = vrot.slane %v5623, 3
  %v5635 = vsel %vm317, %v5634, %v5633
  %v5636 = vrot.slane %v5624, 2
  %v5637 = vsel %vm323, %v5636, %v5635
  %v5638 = vrot.slane %v5625, 1
  %v5639 = vsel %vm1028, %v5638, %v5637
  %v5640 = vpack.c.b16 %v5639, %v5639
  %v5674 = vunpack.c.l.b16 %v5578
  %v5675 = vunpack.c.h.b16 %v5578
  %v5676 = vunpack.c.l.b16 %v5579
  %v5677 = vunpack.c.h.b16 %v5579
  %v5678 = vunpack.c.l.b16 %v5580
  %v5679 = vunpack.c.h.b16 %v5580
  %v5680 = vunpack.c.l.b16 %v5581
  %v5681 = vunpack.c.h.b16 %v5581
  %v5682 = vunpack.c.l.b16 %v5582
  %v5683 = vunpack.c.h.b16 %v5582
  %v5684 = vunpack.c.l.b16 %v5583
  %v5685 = vunpack.c.h.b16 %v5583
  %v5686 = vunpack.c.l.b16 %v5584
  %v5687 = vunpack.c.h.b16 %v5584
  %v5688 = vunpack.c.l.b16 %v5585
  %v5689 = vunpack.c.h.b16 %v5585
  %v5690 = vunpack.c.l.b16 %v5586
  %v5691 = vunpack.c.h.b16 %v5586
  %v5692 = vunpack.c.l.b16 %v5587
  %v5693 = vunpack.c.h.b16 %v5587
  %v5694 = vunpack.c.l.b16 %v5588
  %v5695 = vunpack.c.h.b16 %v5588
  %v5696 = vunpack.c.l.b16 %v5589
  %v5697 = vunpack.c.h.b16 %v5589
  %v5698 = vunpack.c.l.b16 %v5590
  %v5699 = vunpack.c.h.b16 %v5590
  %v5700 = vunpack.c.l.b16 %v5591
  %v5701 = vunpack.c.h.b16 %v5591
  %v5702 = vunpack.c.l.b16 %v5592
  %v5703 = vunpack.c.h.b16 %v5592
  %v5704 = vunpack.c.l.b16 %v5593
  %v5705 = vunpack.c.h.b16 %v5593
  %v5706 = vunpack.c.l.b16 %v5594
  %v5707 = vunpack.c.h.b16 %v5594
  %v5708 = vunpack.c.l.b16 %v5595
  %v5709 = vunpack.c.h.b16 %v5595
  %v5710 = vunpack.c.l.b16 %v5596
  %v5711 = vunpack.c.h.b16 %v5596
  %v5712 = vunpack.c.l.b16 %v5597
  %v5713 = vunpack.c.h.b16 %v5597
  %v5714 = vunpack.c.l.b16 %v5598
  %v5715 = vunpack.c.h.b16 %v5598
  %v5716 = vunpack.c.l.b16 %v5599
  %v5717 = vunpack.c.h.b16 %v5599
  %v5718 = vunpack.c.l.b16 %v5600
  %v5719 = vunpack.c.h.b16 %v5600
  %v5720 = vunpack.c.l.b16 %v5601
  %v5721 = vunpack.c.h.b16 %v5601
  %v5722 = vunpack.c.l.b16 %v5602
  %v5723 = vunpack.c.h.b16 %v5602
  %v5724 = vunpack.c.l.b16 %v5603
  %v5725 = vunpack.c.h.b16 %v5603
  %v5726 = vunpack.c.l.b16 %v5604
  %v5727 = vunpack.c.h.b16 %v5604
  %v5728 = vunpack.c.l.b16 %v5605
  %v5729 = vunpack.c.h.b16 %v5605
  %v5730 = vunpack.c.l.b16 %v5606
  %v5731 = vunpack.c.h.b16 %v5606
  %v5732 = vunpack.c.l.b16 %v5607
  %v5733 = vunpack.c.h.b16 %v5607
  %v5734 = vunpack.c.l.b16 %v5608
  %v5735 = vunpack.c.h.b16 %v5608
  %v5736 = vunpack.c.l.b16 %v5609
  %v5737 = vunpack.c.h.b16 %v5609
  %v5738 = vpack.c.b16 %v5678, %v5674
  %v5739 = vpack.c.b16 %v5679, %v5675
  %v5740 = vpack.c.b16 %v5680, %v5676
  %v5741 = vpack.c.b16 %v5681, %v5677
  %v5742 = vpack.c.b16 %v5686, %v5682
  %v5743 = vpack.c.b16 %v5687, %v5683
  %v5744 = vpack.c.b16 %v5688, %v5684
  %v5745 = vpack.c.b16 %v5689, %v5685
  %v5746 = vpack.c.b16 %v5694, %v5690
  %v5747 = vpack.c.b16 %v5695, %v5691
  %v5748 = vpack.c.b16 %v5696, %v5692
  %v5749 = vpack.c.b16 %v5697, %v5693
  %v5750 = vpack.c.b16 %v5702, %v5698
  %v5751 = vpack.c.b16 %v5703, %v5699
  %v5752 = vpack.c.b16 %v5704, %v5700
  %v5753 = vpack.c.b16 %v5705, %v5701
  %v5754 = vpack.c.b16 %v5710, %v5706
  %v5755 = vpack.c.b16 %v5711, %v5707
  %v5756 = vpack.c.b16 %v5712, %v5708
  %v5757 = vpack.c.b16 %v5713, %v5709
  %v5758 = vpack.c.b16 %v5718, %v5714
  %v5759 = vpack.c.b16 %v5719, %v5715
  %v5760 = vpack.c.b16 %v5720, %v5716
  %v5761 = vpack.c.b16 %v5721, %v5717
  %v5762 = vpack.c.b16 %v5726, %v5722
  %v5763 = vpack.c.b16 %v5727, %v5723
  %v5764 = vpack.c.b16 %v5728, %v5724
  %v5765 = vpack.c.b16 %v5729, %v5725
  %v5766 = vpack.c.b16 %v5734, %v5730
  %v5767 = vpack.c.b16 %v5735, %v5731
  %v5768 = vpack.c.b16 %v5736, %v5732
  %v5769 = vpack.c.b16 %v5737, %v5733
  %5802 = vmatpush.bf16.msra.mxu0 %v5766
  %5803 = vmatpush.bf16.msra.mxu0 %v5762
  %5804 = vmatpush.bf16.msra.mxu0 %v5758
  %5805 = vmatpush.bf16.msra.mxu0 %v5754
  %5806 = vmatpush.bf16.msra.mxu0 %v5750
  %5807 = vmatpush.bf16.msra.mxu0 %v5746
  %5808 = vmatpush.bf16.msra.mxu0 %v5742
  %5809 = vmatpush.bf16.msra.mxu0 %v5738
  %5810 = vmatmul.bf16.gmra.mxu0 %v5640
  %v5811 = vpop.f32.mrf.mxu0
  %v5812 = vadd.f32 0.0, %v5811
  %v5813 = vpop.f32.mrf.mxu0
  %5814 = vdwg.mxu0
  %5815 = vmatpush.bf16.msra.mxu0 %v5767
  %5816 = vmatpush.bf16.msra.mxu0 %v5763
  %5817 = vmatpush.bf16.msra.mxu0 %v5759
  %5818 = vmatpush.bf16.msra.mxu0 %v5755
  %5819 = vmatpush.bf16.msra.mxu0 %v5751
  %5820 = vmatpush.bf16.msra.mxu0 %v5747
  %5821 = vmatpush.bf16.msra.mxu0 %v5743
  %5822 = vmatpush.bf16.msra.mxu0 %v5739
  %5823 = vmatmul.bf16.gmra.mxu0 %v5640
  %v5824 = vpop.f32.mrf.mxu0
  %v5825 = vadd.f32 0.0, %v5824
  %v5826 = vpop.f32.mrf.mxu0
  %5827 = vdwg.mxu0
  %5828 = vmatpush.bf16.msra.mxu0 %v5768
  %5829 = vmatpush.bf16.msra.mxu0 %v5764
  %5830 = vmatpush.bf16.msra.mxu0 %v5760
  %5831 = vmatpush.bf16.msra.mxu0 %v5756
  %5832 = vmatpush.bf16.msra.mxu0 %v5752
  %5833 = vmatpush.bf16.msra.mxu0 %v5748
  %5834 = vmatpush.bf16.msra.mxu0 %v5744
  %5835 = vmatpush.bf16.msra.mxu0 %v5740
  %5836 = vmatmul.bf16.gmra.mxu0 %v5640
  %v5837 = vpop.f32.mrf.mxu0
  %v5838 = vadd.f32 0.0, %v5837
  %v5839 = vpop.f32.mrf.mxu0
  %5840 = vdwg.mxu0
  %5841 = vmatpush.bf16.msra.mxu0 %v5769
  %5842 = vmatpush.bf16.msra.mxu0 %v5765
  %5843 = vmatpush.bf16.msra.mxu0 %v5761
  %5844 = vmatpush.bf16.msra.mxu0 %v5757
  %5845 = vmatpush.bf16.msra.mxu0 %v5753
  %5846 = vmatpush.bf16.msra.mxu0 %v5749
  %5847 = vmatpush.bf16.msra.mxu0 %v5745
  %5848 = vmatpush.bf16.msra.mxu0 %v5741
  %5849 = vmatmul.bf16.gmra.mxu0 %v5640
  %v5850 = vpop.f32.mrf.mxu0
  %v5851 = vadd.f32 0.0, %v5850
  %v5852 = vpop.f32.mrf.mxu0
  %5853 = vdwg.mxu0
  %v5858 = vrot.slane %v5825, 7
  %v5859 = vrot.slane %v5838, 6
  %v5860 = vrot.slane %v5851, 5
  %v5861 = vsel %vm297, %v5812, %v5858
  %v5862 = vsel %vm299, %v5859, %v5860
  %v5863 = vsel %vm301, %v5861, %v5862
  %v5864 = vsel %vm303, %v5812, %v5858
  %v5865 = vsel %vm305, %v5859, %v5860
  %v5866 = vsel %vm307, %v5864, %v5865
  %v5867 = vrot.slane %v5866, 1
  %v5868 = vsel %vm299, %v5812, %v5858
  %v5869 = vsel %vm311, %v5859, %v5860
  %v5870 = vsel %vm313, %v5868, %v5869
  %v5871 = vrot.slane %v5870, 2
  %v5872 = vsel %vm305, %v5812, %v5858
  %v5873 = vsel %vm317, %v5859, %v5860
  %v5874 = vsel %vm319, %v5872, %v5873
  %v5875 = vrot.slane %v5874, 3
  %v5876 = vsel %vm311, %v5812, %v5858
  %v5877 = vsel %vm323, %v5859, %v5860
  %v5878 = vsel %vm325, %v5876, %v5877
  %v5879 = vrot.slane %v5878, 4
  %v5880 = vsel %vm317, %v5812, %v5858
  %v5881 = vsel %vm329, %v5860, %v5859
  %v5882 = vsel %vm331, %v5880, %v5881
  %v5883 = vrot.slane %v5882, 5
  %v5884 = vsel %vm323, %v5812, %v5858
  %v5885 = vsel %vm297, %v5859, %v5860
  %v5886 = vsel %vm336, %v5885, %v5884
  %v5887 = vrot.slane %v5886, 6
  %v5888 = vsel %vm329, %v5858, %v5812
  %v5889 = vsel %vm303, %v5859, %v5860
  %v5890 = vsel %vm341, %v5889, %v5888
  %v5891 = vrot.slane %v5890, 7
  %v5900 = vadd.f32 %v5555, %v5863
  %v5901 = vadd.f32 %v5557, %v5867
  %v5902 = vadd.f32 %v5559, %v5871
  %v5903 = vadd.f32 %v5561, %v5875
  %v5904 = vadd.f32 %v5563, %v5879
  %v5905 = vadd.f32 %v5565, %v5883
  %v5906 = vadd.f32 %v5567, %v5887
  %v5907 = vadd.f32 %v5569, %v5891
  %v5908 = vxor.u32 %v5900, 2147483648
  %v5909 = vxor.u32 %v5901, 2147483648
  %v5910 = vxor.u32 %v5902, 2147483648
  %v5911 = vxor.u32 %v5903, 2147483648
  %v5912 = vxor.u32 %v5904, 2147483648
  %v5913 = vxor.u32 %v5905, 2147483648
  %v5914 = vxor.u32 %v5906, 2147483648
  %v5915 = vxor.u32 %v5907, 2147483648
  %v5916 = vmul.f32 %v5908, 1.442695
  %v5917 = vpow.pop %v5916
  %v5918 = vmul.f32 %v5909, 1.442695
  %v5919 = vpow.pop %v5918
  %v5920 = vmul.f32 %v5910, 1.442695
  %v5921 = vpow.pop %v5920
  %v5922 = vmul.f32 %v5911, 1.442695
  %v5923 = vpow.pop %v5922
  %v5924 = vmul.f32 %v5912, 1.442695
  %v5925 = vpow.pop %v5924
  %v5926 = vmul.f32 %v5913, 1.442695
  %v5927 = vpow.pop %v5926
  %v5928 = vmul.f32 %v5914, 1.442695
  %v5929 = vpow.pop %v5928
  %v5930 = vmul.f32 %v5915, 1.442695
  %v5931 = vpow.pop %v5930
  %v5932 = vadd.f32 %v5917, 1.0
  %v5933 = vadd.f32 %v5919, 1.0
  %v5934 = vadd.f32 %v5921, 1.0
  %v5935 = vadd.f32 %v5923, 1.0
  %v5936 = vadd.f32 %v5925, 1.0
  %v5937 = vadd.f32 %v5927, 1.0
  %v5938 = vadd.f32 %v5929, 1.0
  %v5939 = vadd.f32 %v5931, 1.0
  %v5940 = vrcp.pop %v5932
  %v5941 = vmul.f32 %v5932, %v5940
  %v5942 = vsub.f32 1.0, %v5941
  %v5943 = vmul.f32 %v5940, %v5942
  %v5944 = vadd.f32 %v5940, %v5943
  %vm5945 = vweird.f32 %v5932
  %vm5946 = vweird.f32 %v5940
  %vm5947 = vmor %vm5945, %vm5946
  %v5948 = vsel %vm5947, %v5940, %v5944
  %v5949 = vand.u32 2147483647, %v5932
  %vm5950 = vcmp.eq.f32.partialorder %v5949, 8.507059e+37
  %v5951 = vand.u32 %v5932, 2147483648
  %v5952 = vor.u32 1.1754944e-38, %v5951
  %v5953 = vsel %vm5950, %v5952, %v5948
  %v5954 = vmul.f32 1.0, %v5953
  %v5955 = vrcp.pop %v5933
  %v5956 = vmul.f32 %v5933, %v5955
  %v5957 = vsub.f32 1.0, %v5956
  %v5958 = vmul.f32 %v5955, %v5957
  %v5959 = vadd.f32 %v5955, %v5958
  %vm5960 = vweird.f32 %v5933
  %vm5961 = vweird.f32 %v5955
  %vm5962 = vmor %vm5960, %vm5961
  %v5963 = vsel %vm5962, %v5955, %v5959
  %v5964 = vand.u32 2147483647, %v5933
  %vm5965 = vcmp.eq.f32.partialorder %v5964, 8.507059e+37
  %v5966 = vand.u32 %v5933, 2147483648
  %v5967 = vor.u32 1.1754944e-38, %v5966
  %v5968 = vsel %vm5965, %v5967, %v5963
  %v5969 = vmul.f32 1.0, %v5968
  %v5970 = vrcp.pop %v5934
  %v5971 = vmul.f32 %v5934, %v5970
  %v5972 = vsub.f32 1.0, %v5971
  %v5973 = vmul.f32 %v5970, %v5972
  %v5974 = vadd.f32 %v5970, %v5973
  %vm5975 = vweird.f32 %v5934
  %vm5976 = vweird.f32 %v5970
  %vm5977 = vmor %vm5975, %vm5976
  %v5978 = vsel %vm5977, %v5970, %v5974
  %v5979 = vand.u32 2147483647, %v5934
  %vm5980 = vcmp.eq.f32.partialorder %v5979, 8.507059e+37
  %v5981 = vand.u32 %v5934, 2147483648
  %v5982 = vor.u32 1.1754944e-38, %v5981
  %v5983 = vsel %vm5980, %v5982, %v5978
  %v5984 = vmul.f32 1.0, %v5983
  %v5985 = vrcp.pop %v5935
  %v5986 = vmul.f32 %v5935, %v5985
  %v5987 = vsub.f32 1.0, %v5986
  %v5988 = vmul.f32 %v5985, %v5987
  %v5989 = vadd.f32 %v5985, %v5988
  %vm5990 = vweird.f32 %v5935
  %vm5991 = vweird.f32 %v5985
  %vm5992 = vmor %vm5990, %vm5991
  %v5993 = vsel %vm5992, %v5985, %v5989
  %v5994 = vand.u32 2147483647, %v5935
  %vm5995 = vcmp.eq.f32.partialorder %v5994, 8.507059e+37
  %v5996 = vand.u32 %v5935, 2147483648
  %v5997 = vor.u32 1.1754944e-38, %v5996
  %v5998 = vsel %vm5995, %v5997, %v5993
  %v5999 = vmul.f32 1.0, %v5998
  %v6000 = vrcp.pop %v5936
  %v6001 = vmul.f32 %v5936, %v6000
  %v6002 = vsub.f32 1.0, %v6001
  %v6003 = vmul.f32 %v6000, %v6002
  %v6004 = vadd.f32 %v6000, %v6003
  %vm6005 = vweird.f32 %v5936
  %vm6006 = vweird.f32 %v6000
  %vm6007 = vmor %vm6005, %vm6006
  %v6008 = vsel %vm6007, %v6000, %v6004
  %v6009 = vand.u32 2147483647, %v5936
  %vm6010 = vcmp.eq.f32.partialorder %v6009, 8.507059e+37
  %v6011 = vand.u32 %v5936, 2147483648
  %v6012 = vor.u32 1.1754944e-38, %v6011
  %v6013 = vsel %vm6010, %v6012, %v6008
  %v6014 = vmul.f32 1.0, %v6013
  %v6015 = vrcp.pop %v5937
  %v6016 = vmul.f32 %v5937, %v6015
  %v6017 = vsub.f32 1.0, %v6016
  %v6018 = vmul.f32 %v6015, %v6017
  %v6019 = vadd.f32 %v6015, %v6018
  %vm6020 = vweird.f32 %v5937
  %vm6021 = vweird.f32 %v6015
  %vm6022 = vmor %vm6020, %vm6021
  %v6023 = vsel %vm6022, %v6015, %v6019
  %v6024 = vand.u32 2147483647, %v5937
  %vm6025 = vcmp.eq.f32.partialorder %v6024, 8.507059e+37
  %v6026 = vand.u32 %v5937, 2147483648
  %v6027 = vor.u32 1.1754944e-38, %v6026
  %v6028 = vsel %vm6025, %v6027, %v6023
  %v6029 = vmul.f32 1.0, %v6028
  %v6030 = vrcp.pop %v5938
  %v6031 = vmul.f32 %v5938, %v6030
  %v6032 = vsub.f32 1.0, %v6031
  %v6033 = vmul.f32 %v6030, %v6032
  %v6034 = vadd.f32 %v6030, %v6033
  %vm6035 = vweird.f32 %v5938
  %vm6036 = vweird.f32 %v6030
  %vm6037 = vmor %vm6035, %vm6036
  %v6038 = vsel %vm6037, %v6030, %v6034
  %v6039 = vand.u32 2147483647, %v5938
  %vm6040 = vcmp.eq.f32.partialorder %v6039, 8.507059e+37
  %v6041 = vand.u32 %v5938, 2147483648
  %v6042 = vor.u32 1.1754944e-38, %v6041
  %v6043 = vsel %vm6040, %v6042, %v6038
  %v6044 = vmul.f32 1.0, %v6043
  %v6045 = vrcp.pop %v5939
  %v6046 = vmul.f32 %v5939, %v6045
  %v6047 = vsub.f32 1.0, %v6046
  %v6048 = vmul.f32 %v6045, %v6047
  %v6049 = vadd.f32 %v6045, %v6048
  %vm6050 = vweird.f32 %v5939
  %vm6051 = vweird.f32 %v6045
  %vm6052 = vmor %vm6050, %vm6051
  %v6053 = vsel %vm6052, %v6045, %v6049
  %v6054 = vand.u32 2147483647, %v5939
  %vm6055 = vcmp.eq.f32.partialorder %v6054, 8.507059e+37
  %v6056 = vand.u32 %v5939, 2147483648
  %v6057 = vor.u32 1.1754944e-38, %v6056
  %v6058 = vsel %vm6055, %v6057, %v6053
  %v6059 = vmul.f32 1.0, %v6058
  %v6068 = vrot.slane %v5900, 1
  %v6069 = vrot.slane %v5901, 1
  %v6070 = vrot.slane %v5902, 1
  %v6071 = vrot.slane %v5903, 1
  %v6072 = vrot.slane %v5904, 1
  %v6073 = vrot.slane %v5905, 1
  %v6074 = vrot.slane %v5906, 1
  %v6075 = vrot.slane %v5907, 1
  %v6084 = vxor.u32 %v6068, 2147483648
  %v6085 = vxor.u32 %v6069, 2147483648
  %v6086 = vxor.u32 %v6070, 2147483648
  %v6087 = vxor.u32 %v6071, 2147483648
  %v6088 = vxor.u32 %v6072, 2147483648
  %v6089 = vxor.u32 %v6073, 2147483648
  %v6090 = vxor.u32 %v6074, 2147483648
  %v6091 = vxor.u32 %v6075, 2147483648
  %v6092 = vmul.f32 %v6084, 1.442695
  %v6093 = vpow.pop %v6092
  %v6094 = vmul.f32 %v6085, 1.442695
  %v6095 = vpow.pop %v6094
  %v6096 = vmul.f32 %v6086, 1.442695
  %v6097 = vpow.pop %v6096
  %v6098 = vmul.f32 %v6087, 1.442695
  %v6099 = vpow.pop %v6098
  %v6100 = vmul.f32 %v6088, 1.442695
  %v6101 = vpow.pop %v6100
  %v6102 = vmul.f32 %v6089, 1.442695
  %v6103 = vpow.pop %v6102
  %v6104 = vmul.f32 %v6090, 1.442695
  %v6105 = vpow.pop %v6104
  %v6106 = vmul.f32 %v6091, 1.442695
  %v6107 = vpow.pop %v6106
  %v6108 = vadd.f32 %v6093, 1.0
  %v6109 = vadd.f32 %v6095, 1.0
  %v6110 = vadd.f32 %v6097, 1.0
  %v6111 = vadd.f32 %v6099, 1.0
  %v6112 = vadd.f32 %v6101, 1.0
  %v6113 = vadd.f32 %v6103, 1.0
  %v6114 = vadd.f32 %v6105, 1.0
  %v6115 = vadd.f32 %v6107, 1.0
  %v6116 = vrcp.pop %v6108
  %v6117 = vmul.f32 %v6108, %v6116
  %v6118 = vsub.f32 1.0, %v6117
  %v6119 = vmul.f32 %v6116, %v6118
  %v6120 = vadd.f32 %v6116, %v6119
  %vm6121 = vweird.f32 %v6108
  %vm6122 = vweird.f32 %v6116
  %vm6123 = vmor %vm6121, %vm6122
  %v6124 = vsel %vm6123, %v6116, %v6120
  %v6125 = vand.u32 2147483647, %v6108
  %vm6126 = vcmp.eq.f32.partialorder %v6125, 8.507059e+37
  %v6127 = vand.u32 %v6108, 2147483648
  %v6128 = vor.u32 1.1754944e-38, %v6127
  %v6129 = vsel %vm6126, %v6128, %v6124
  %v6130 = vmul.f32 1.0, %v6129
  %v6131 = vrcp.pop %v6109
  %v6132 = vmul.f32 %v6109, %v6131
  %v6133 = vsub.f32 1.0, %v6132
  %v6134 = vmul.f32 %v6131, %v6133
  %v6135 = vadd.f32 %v6131, %v6134
  %vm6136 = vweird.f32 %v6109
  %vm6137 = vweird.f32 %v6131
  %vm6138 = vmor %vm6136, %vm6137
  %v6139 = vsel %vm6138, %v6131, %v6135
  %v6140 = vand.u32 2147483647, %v6109
  %vm6141 = vcmp.eq.f32.partialorder %v6140, 8.507059e+37
  %v6142 = vand.u32 %v6109, 2147483648
  %v6143 = vor.u32 1.1754944e-38, %v6142
  %v6144 = vsel %vm6141, %v6143, %v6139
  %v6145 = vmul.f32 1.0, %v6144
  %v6146 = vrcp.pop %v6110
  %v6147 = vmul.f32 %v6110, %v6146
  %v6148 = vsub.f32 1.0, %v6147
  %v6149 = vmul.f32 %v6146, %v6148
  %v6150 = vadd.f32 %v6146, %v6149
  %vm6151 = vweird.f32 %v6110
  %vm6152 = vweird.f32 %v6146
  %vm6153 = vmor %vm6151, %vm6152
  %v6154 = vsel %vm6153, %v6146, %v6150
  %v6155 = vand.u32 2147483647, %v6110
  %vm6156 = vcmp.eq.f32.partialorder %v6155, 8.507059e+37
  %v6157 = vand.u32 %v6110, 2147483648
  %v6158 = vor.u32 1.1754944e-38, %v6157
  %v6159 = vsel %vm6156, %v6158, %v6154
  %v6160 = vmul.f32 1.0, %v6159
  %v6161 = vrcp.pop %v6111
  %v6162 = vmul.f32 %v6111, %v6161
  %v6163 = vsub.f32 1.0, %v6162
  %v6164 = vmul.f32 %v6161, %v6163
  %v6165 = vadd.f32 %v6161, %v6164
  %vm6166 = vweird.f32 %v6111
  %vm6167 = vweird.f32 %v6161
  %vm6168 = vmor %vm6166, %vm6167
  %v6169 = vsel %vm6168, %v6161, %v6165
  %v6170 = vand.u32 2147483647, %v6111
  %vm6171 = vcmp.eq.f32.partialorder %v6170, 8.507059e+37
  %v6172 = vand.u32 %v6111, 2147483648
  %v6173 = vor.u32 1.1754944e-38, %v6172
  %v6174 = vsel %vm6171, %v6173, %v6169
  %v6175 = vmul.f32 1.0, %v6174
  %v6176 = vrcp.pop %v6112
  %v6177 = vmul.f32 %v6112, %v6176
  %v6178 = vsub.f32 1.0, %v6177
  %v6179 = vmul.f32 %v6176, %v6178
  %v6180 = vadd.f32 %v6176, %v6179
  %vm6181 = vweird.f32 %v6112
  %vm6182 = vweird.f32 %v6176
  %vm6183 = vmor %vm6181, %vm6182
  %v6184 = vsel %vm6183, %v6176, %v6180
  %v6185 = vand.u32 2147483647, %v6112
  %vm6186 = vcmp.eq.f32.partialorder %v6185, 8.507059e+37
  %v6187 = vand.u32 %v6112, 2147483648
  %v6188 = vor.u32 1.1754944e-38, %v6187
  %v6189 = vsel %vm6186, %v6188, %v6184
  %v6190 = vmul.f32 1.0, %v6189
  %v6191 = vrcp.pop %v6113
  %v6192 = vmul.f32 %v6113, %v6191
  %v6193 = vsub.f32 1.0, %v6192
  %v6194 = vmul.f32 %v6191, %v6193
  %v6195 = vadd.f32 %v6191, %v6194
  %vm6196 = vweird.f32 %v6113
  %vm6197 = vweird.f32 %v6191
  %vm6198 = vmor %vm6196, %vm6197
  %v6199 = vsel %vm6198, %v6191, %v6195
  %v6200 = vand.u32 2147483647, %v6113
  %vm6201 = vcmp.eq.f32.partialorder %v6200, 8.507059e+37
  %v6202 = vand.u32 %v6113, 2147483648
  %v6203 = vor.u32 1.1754944e-38, %v6202
  %v6204 = vsel %vm6201, %v6203, %v6199
  %v6205 = vmul.f32 1.0, %v6204
  %v6206 = vrcp.pop %v6114
  %v6207 = vmul.f32 %v6114, %v6206
  %v6208 = vsub.f32 1.0, %v6207
  %v6209 = vmul.f32 %v6206, %v6208
  %v6210 = vadd.f32 %v6206, %v6209
  %vm6211 = vweird.f32 %v6114
  %vm6212 = vweird.f32 %v6206
  %vm6213 = vmor %vm6211, %vm6212
  %v6214 = vsel %vm6213, %v6206, %v6210
  %v6215 = vand.u32 2147483647, %v6114
  %vm6216 = vcmp.eq.f32.partialorder %v6215, 8.507059e+37
  %v6217 = vand.u32 %v6114, 2147483648
  %v6218 = vor.u32 1.1754944e-38, %v6217
  %v6219 = vsel %vm6216, %v6218, %v6214
  %v6220 = vmul.f32 1.0, %v6219
  %v6221 = vrcp.pop %v6115
  %v6222 = vmul.f32 %v6115, %v6221
  %v6223 = vsub.f32 1.0, %v6222
  %v6224 = vmul.f32 %v6221, %v6223
  %v6225 = vadd.f32 %v6221, %v6224
  %vm6226 = vweird.f32 %v6115
  %vm6227 = vweird.f32 %v6221
  %vm6228 = vmor %vm6226, %vm6227
  %v6229 = vsel %vm6228, %v6221, %v6225
  %v6230 = vand.u32 2147483647, %v6115
  %vm6231 = vcmp.eq.f32.partialorder %v6230, 8.507059e+37
  %v6232 = vand.u32 %v6115, 2147483648
  %v6233 = vor.u32 1.1754944e-38, %v6232
  %v6234 = vsel %vm6231, %v6233, %v6229
  %v6235 = vmul.f32 1.0, %v6234
  %v6236 = vrot.slane %v5900, 2
  %v6237 = vrot.slane %v5901, 2
  %v6238 = vrot.slane %v5902, 2
  %v6239 = vrot.slane %v5903, 2
  %v6240 = vrot.slane %v5904, 2
  %v6241 = vrot.slane %v5905, 2
  %v6242 = vrot.slane %v5906, 2
  %v6243 = vrot.slane %v5907, 2
  %v6252 = vtanh.pop %v6236
  %v6253 = vtanh.pop %v6237
  %v6254 = vtanh.pop %v6238
  %v6255 = vtanh.pop %v6239
  %v6256 = vtanh.pop %v6240
  %v6257 = vtanh.pop %v6241
  %v6258 = vtanh.pop %v6242
  %v6259 = vtanh.pop %v6243
  %v6260 = vrot.slane %v5900, 3
  %v6261 = vrot.slane %v5901, 3
  %v6262 = vrot.slane %v5902, 3
  %v6263 = vrot.slane %v5903, 3
  %v6264 = vrot.slane %v5904, 3
  %v6265 = vrot.slane %v5905, 3
  %v6266 = vrot.slane %v5906, 3
  %v6267 = vrot.slane %v5907, 3
  %v6276 = vxor.u32 %v6260, 2147483648
  %v6277 = vxor.u32 %v6261, 2147483648
  %v6278 = vxor.u32 %v6262, 2147483648
  %v6279 = vxor.u32 %v6263, 2147483648
  %v6280 = vxor.u32 %v6264, 2147483648
  %v6281 = vxor.u32 %v6265, 2147483648
  %v6282 = vxor.u32 %v6266, 2147483648
  %v6283 = vxor.u32 %v6267, 2147483648
  %v6284 = vmul.f32 %v6276, 1.442695
  %v6285 = vpow.pop %v6284
  %v6286 = vmul.f32 %v6277, 1.442695
  %v6287 = vpow.pop %v6286
  %v6288 = vmul.f32 %v6278, 1.442695
  %v6289 = vpow.pop %v6288
  %v6290 = vmul.f32 %v6279, 1.442695
  %v6291 = vpow.pop %v6290
  %v6292 = vmul.f32 %v6280, 1.442695
  %v6293 = vpow.pop %v6292
  %v6294 = vmul.f32 %v6281, 1.442695
  %v6295 = vpow.pop %v6294
  %v6296 = vmul.f32 %v6282, 1.442695
  %v6297 = vpow.pop %v6296
  %v6298 = vmul.f32 %v6283, 1.442695
  %v6299 = vpow.pop %v6298
  %v6300 = vadd.f32 %v6285, 1.0
  %v6301 = vadd.f32 %v6287, 1.0
  %v6302 = vadd.f32 %v6289, 1.0
  %v6303 = vadd.f32 %v6291, 1.0
  %v6304 = vadd.f32 %v6293, 1.0
  %v6305 = vadd.f32 %v6295, 1.0
  %v6306 = vadd.f32 %v6297, 1.0
  %v6307 = vadd.f32 %v6299, 1.0
  %v6308 = vrcp.pop %v6300
  %v6309 = vmul.f32 %v6300, %v6308
  %v6310 = vsub.f32 1.0, %v6309
  %v6311 = vmul.f32 %v6308, %v6310
  %v6312 = vadd.f32 %v6308, %v6311
  %vm6313 = vweird.f32 %v6300
  %vm6314 = vweird.f32 %v6308
  %vm6315 = vmor %vm6313, %vm6314
  %v6316 = vsel %vm6315, %v6308, %v6312
  %v6317 = vand.u32 2147483647, %v6300
  %vm6318 = vcmp.eq.f32.partialorder %v6317, 8.507059e+37
  %v6319 = vand.u32 %v6300, 2147483648
  %v6320 = vor.u32 1.1754944e-38, %v6319
  %v6321 = vsel %vm6318, %v6320, %v6316
  %v6322 = vmul.f32 1.0, %v6321
  %v6323 = vrcp.pop %v6301
  %v6324 = vmul.f32 %v6301, %v6323
  %v6325 = vsub.f32 1.0, %v6324
  %v6326 = vmul.f32 %v6323, %v6325
  %v6327 = vadd.f32 %v6323, %v6326
  %vm6328 = vweird.f32 %v6301
  %vm6329 = vweird.f32 %v6323
  %vm6330 = vmor %vm6328, %vm6329
  %v6331 = vsel %vm6330, %v6323, %v6327
  %v6332 = vand.u32 2147483647, %v6301
  %vm6333 = vcmp.eq.f32.partialorder %v6332, 8.507059e+37
  %v6334 = vand.u32 %v6301, 2147483648
  %v6335 = vor.u32 1.1754944e-38, %v6334
  %v6336 = vsel %vm6333, %v6335, %v6331
  %v6337 = vmul.f32 1.0, %v6336
  %v6338 = vrcp.pop %v6302
  %v6339 = vmul.f32 %v6302, %v6338
  %v6340 = vsub.f32 1.0, %v6339
  %v6341 = vmul.f32 %v6338, %v6340
  %v6342 = vadd.f32 %v6338, %v6341
  %vm6343 = vweird.f32 %v6302
  %vm6344 = vweird.f32 %v6338
  %vm6345 = vmor %vm6343, %vm6344
  %v6346 = vsel %vm6345, %v6338, %v6342
  %v6347 = vand.u32 2147483647, %v6302
  %vm6348 = vcmp.eq.f32.partialorder %v6347, 8.507059e+37
  %v6349 = vand.u32 %v6302, 2147483648
  %v6350 = vor.u32 1.1754944e-38, %v6349
  %v6351 = vsel %vm6348, %v6350, %v6346
  %v6352 = vmul.f32 1.0, %v6351
  %v6353 = vrcp.pop %v6303
  %v6354 = vmul.f32 %v6303, %v6353
  %v6355 = vsub.f32 1.0, %v6354
  %v6356 = vmul.f32 %v6353, %v6355
  %v6357 = vadd.f32 %v6353, %v6356
  %vm6358 = vweird.f32 %v6303
  %vm6359 = vweird.f32 %v6353
  %vm6360 = vmor %vm6358, %vm6359
  %v6361 = vsel %vm6360, %v6353, %v6357
  %v6362 = vand.u32 2147483647, %v6303
  %vm6363 = vcmp.eq.f32.partialorder %v6362, 8.507059e+37
  %v6364 = vand.u32 %v6303, 2147483648
  %v6365 = vor.u32 1.1754944e-38, %v6364
  %v6366 = vsel %vm6363, %v6365, %v6361
  %v6367 = vmul.f32 1.0, %v6366
  %v6368 = vrcp.pop %v6304
  %v6369 = vmul.f32 %v6304, %v6368
  %v6370 = vsub.f32 1.0, %v6369
  %v6371 = vmul.f32 %v6368, %v6370
  %v6372 = vadd.f32 %v6368, %v6371
  %vm6373 = vweird.f32 %v6304
  %vm6374 = vweird.f32 %v6368
  %vm6375 = vmor %vm6373, %vm6374
  %v6376 = vsel %vm6375, %v6368, %v6372
  %v6377 = vand.u32 2147483647, %v6304
  %vm6378 = vcmp.eq.f32.partialorder %v6377, 8.507059e+37
  %v6379 = vand.u32 %v6304, 2147483648
  %v6380 = vor.u32 1.1754944e-38, %v6379
  %v6381 = vsel %vm6378, %v6380, %v6376
  %v6382 = vmul.f32 1.0, %v6381
  %v6383 = vrcp.pop %v6305
  %v6384 = vmul.f32 %v6305, %v6383
  %v6385 = vsub.f32 1.0, %v6384
  %v6386 = vmul.f32 %v6383, %v6385
  %v6387 = vadd.f32 %v6383, %v6386
  %vm6388 = vweird.f32 %v6305
  %vm6389 = vweird.f32 %v6383
  %vm6390 = vmor %vm6388, %vm6389
  %v6391 = vsel %vm6390, %v6383, %v6387
  %v6392 = vand.u32 2147483647, %v6305
  %vm6393 = vcmp.eq.f32.partialorder %v6392, 8.507059e+37
  %v6394 = vand.u32 %v6305, 2147483648
  %v6395 = vor.u32 1.1754944e-38, %v6394
  %v6396 = vsel %vm6393, %v6395, %v6391
  %v6397 = vmul.f32 1.0, %v6396
  %v6398 = vrcp.pop %v6306
  %v6399 = vmul.f32 %v6306, %v6398
  %v6400 = vsub.f32 1.0, %v6399
  %v6401 = vmul.f32 %v6398, %v6400
  %v6402 = vadd.f32 %v6398, %v6401
  %vm6403 = vweird.f32 %v6306
  %vm6404 = vweird.f32 %v6398
  %vm6405 = vmor %vm6403, %vm6404
  %v6406 = vsel %vm6405, %v6398, %v6402
  %v6407 = vand.u32 2147483647, %v6306
  %vm6408 = vcmp.eq.f32.partialorder %v6407, 8.507059e+37
  %v6409 = vand.u32 %v6306, 2147483648
  %v6410 = vor.u32 1.1754944e-38, %v6409
  %v6411 = vsel %vm6408, %v6410, %v6406
  %v6412 = vmul.f32 1.0, %v6411
  %v6413 = vrcp.pop %v6307
  %v6414 = vmul.f32 %v6307, %v6413
  %v6415 = vsub.f32 1.0, %v6414
  %v6416 = vmul.f32 %v6413, %v6415
  %v6417 = vadd.f32 %v6413, %v6416
  %vm6418 = vweird.f32 %v6307
  %vm6419 = vweird.f32 %v6413
  %vm6420 = vmor %vm6418, %vm6419
  %v6421 = vsel %vm6420, %v6413, %v6417
  %v6422 = vand.u32 2147483647, %v6307
  %vm6423 = vcmp.eq.f32.partialorder %v6422, 8.507059e+37
  %v6424 = vand.u32 %v6307, 2147483648
  %v6425 = vor.u32 1.1754944e-38, %v6424
  %v6426 = vsel %vm6423, %v6425, %v6421
  %v6427 = vmul.f32 1.0, %v6426
  %v6428 = vmul.f32 %v6130, %v5522
  %v6429 = vmul.f32 %v6145, %v5523
  %v6430 = vmul.f32 %v6160, %v5524
  %v6431 = vmul.f32 %v6175, %v5525
  %v6432 = vmul.f32 %v6190, %v5526
  %v6433 = vmul.f32 %v6205, %v5527
  %v6434 = vmul.f32 %v6220, %v5528
  %v6435 = vmul.f32 %v6235, %v5529
  %v6436 = vmul.f32 %v5954, %v6252
  %v6437 = vmul.f32 %v5969, %v6253
  %v6438 = vmul.f32 %v5984, %v6254
  %v6439 = vmul.f32 %v5999, %v6255
  %v6440 = vmul.f32 %v6014, %v6256
  %v6441 = vmul.f32 %v6029, %v6257
  %v6442 = vmul.f32 %v6044, %v6258
  %v6443 = vmul.f32 %v6059, %v6259
  %v6444 = vadd.f32 %v6428, %v6436
  %v6445 = vadd.f32 %v6429, %v6437
  %v6446 = vadd.f32 %v6430, %v6438
  %v6447 = vadd.f32 %v6431, %v6439
  %v6448 = vadd.f32 %v6432, %v6440
  %v6449 = vadd.f32 %v6433, %v6441
  %v6450 = vadd.f32 %v6434, %v6442
  %v6451 = vadd.f32 %v6435, %v6443
  %v6452 = vtanh.pop %v6444
  %v6453 = vtanh.pop %v6445
  %v6454 = vtanh.pop %v6446
  %v6455 = vtanh.pop %v6447
  %v6456 = vtanh.pop %v6448
  %v6457 = vtanh.pop %v6449
  %v6458 = vtanh.pop %v6450
  %v6459 = vtanh.pop %v6451
  %v6460 = vmul.f32 %v6322, %v6452
  %v6461 = vmul.f32 %v6337, %v6453
  %v6462 = vmul.f32 %v6352, %v6454
  %v6463 = vmul.f32 %v6367, %v6455
  %v6464 = vmul.f32 %v6382, %v6456
  %v6465 = vmul.f32 %v6397, %v6457
  %v6466 = vmul.f32 %v6412, %v6458
  %v6467 = vmul.f32 %v6427, %v6459
  %6468 = vst [vmem:[%s4 + $0x6] sm:$0x1] %v6460
  %6469 = vst [vmem:[%s4 + $0xe] sm:$0x1] %v6461
  %6470 = vst [vmem:[%s4 + $0x16] sm:$0x1] %v6462
  %6471 = vst [vmem:[%s4 + $0x1e] sm:$0x1] %v6463
  %6472 = vst [vmem:[%s4 + $0x26] sm:$0x1] %v6464
  %6473 = vst [vmem:[%s4 + $0x2e] sm:$0x1] %v6465
  %6474 = vst [vmem:[%s4 + $0x36] sm:$0x1] %v6466
  %6475 = vst [vmem:[%s4 + $0x3e] sm:$0x1] %v6467
  %s6476 = scalar_lea.vmem %s0, 7
  %v6477 = vld [vmem:[%s6476] ss:$8 sm:$0xf]
  %s6478 = scalar_lea.vmem %s0, 39
  %v6479 = vld [vmem:[%s6478] ss:$8 sm:$0xf]
  %s6480 = scalar_lea.vmem %s0, 71
  %v6481 = vld [vmem:[%s6480] ss:$8 sm:$0xf]
  %s6482 = scalar_lea.vmem %s0, 103
  %v6483 = vld [vmem:[%s6482] ss:$8 sm:$0xf]
  %s6484 = scalar_lea.vmem %s0, 135
  %v6485 = vld [vmem:[%s6484] ss:$8 sm:$0xf]
  %s6486 = scalar_lea.vmem %s0, 167
  %v6487 = vld [vmem:[%s6486] ss:$8 sm:$0xf]
  %s6488 = scalar_lea.vmem %s0, 199
  %v6489 = vld [vmem:[%s6488] ss:$8 sm:$0xf]
  %s6490 = scalar_lea.vmem %s0, 231
  %v6491 = vld [vmem:[%s6490] ss:$8 sm:$0xf]
  %v6492 = vpack.c.bf16 %v6460, %v6460
  %v6493 = vpack.c.bf16 %v6461, %v6461
  %v6494 = vpack.c.bf16 %v6462, %v6462
  %v6495 = vpack.c.bf16 %v6463, %v6463
  %v6496 = vpack.c.bf16 %v6464, %v6464
  %v6497 = vpack.c.bf16 %v6465, %v6465
  %v6498 = vpack.c.bf16 %v6466, %v6466
  %v6499 = vpack.c.bf16 %v6467, %v6467
  %v6500 = vld [vmem:[%s1] sm:$0xff]
  %v6501 = vld [vmem:[%s1 + $0x8] sm:$0xff]
  %v6502 = vld [vmem:[%s1 + $0x10] sm:$0xff]
  %v6503 = vld [vmem:[%s1 + $0x18] sm:$0xff]
  %v6504 = vld [vmem:[%s1 + $0x20] sm:$0xff]
  %v6505 = vld [vmem:[%s1 + $0x28] sm:$0xff]
  %v6506 = vld [vmem:[%s1 + $0x30] sm:$0xff]
  %v6507 = vld [vmem:[%s1 + $0x38] sm:$0xff]
  %v6508 = vld [vmem:[%s1 + $0x40] sm:$0xff]
  %v6509 = vld [vmem:[%s1 + $0x48] sm:$0xff]
  %v6510 = vld [vmem:[%s1 + $0x50] sm:$0xff]
  %v6511 = vld [vmem:[%s1 + $0x58] sm:$0xff]
  %v6512 = vld [vmem:[%s1 + $0x60] sm:$0xff]
  %v6513 = vld [vmem:[%s1 + $0x68] sm:$0xff]
  %v6514 = vld [vmem:[%s1 + $0x70] sm:$0xff]
  %v6515 = vld [vmem:[%s1 + $0x78] sm:$0xff]
  %v6516 = vld [vmem:[%s1 + $0x80] sm:$0xff]
  %v6517 = vld [vmem:[%s1 + $0x88] sm:$0xff]
  %v6518 = vld [vmem:[%s1 + $0x90] sm:$0xff]
  %v6519 = vld [vmem:[%s1 + $0x98] sm:$0xff]
  %v6520 = vld [vmem:[%s1 + $0xa0] sm:$0xff]
  %v6521 = vld [vmem:[%s1 + $0xa8] sm:$0xff]
  %v6522 = vld [vmem:[%s1 + $0xb0] sm:$0xff]
  %v6523 = vld [vmem:[%s1 + $0xb8] sm:$0xff]
  %v6524 = vld [vmem:[%s1 + $0xc0] sm:$0xff]
  %v6525 = vld [vmem:[%s1 + $0xc8] sm:$0xff]
  %v6526 = vld [vmem:[%s1 + $0xd0] sm:$0xff]
  %v6527 = vld [vmem:[%s1 + $0xd8] sm:$0xff]
  %v6528 = vld [vmem:[%s1 + $0xe0] sm:$0xff]
  %v6529 = vld [vmem:[%s1 + $0xe8] sm:$0xff]
  %v6530 = vld [vmem:[%s1 + $0xf0] sm:$0xff]
  %v6531 = vld [vmem:[%s1 + $0xf8] sm:$0xff]
  %v6540 = vunpack.c.l.b16 %v6492
  %v6541 = vunpack.c.l.b16 %v6493
  %v6542 = vunpack.c.l.b16 %v6494
  %v6543 = vunpack.c.l.b16 %v6495
  %v6544 = vunpack.c.l.b16 %v6496
  %v6545 = vunpack.c.l.b16 %v6497
  %v6546 = vunpack.c.l.b16 %v6498
  %v6547 = vunpack.c.l.b16 %v6499
  %v6548 = vrot.slane %v6541, 7
  %v6549 = vsel %vm303, %v6548, %v6540
  %v6550 = vrot.slane %v6542, 6
  %v6551 = vsel %vm299, %v6550, %v6549
  %v6552 = vrot.slane %v6543, 5
  %v6553 = vsel %vm305, %v6552, %v6551
  %v6554 = vrot.slane %v6544, 4
  %v6555 = vsel %vm311, %v6554, %v6553
  %v6556 = vrot.slane %v6545, 3
  %v6557 = vsel %vm317, %v6556, %v6555
  %v6558 = vrot.slane %v6546, 2
  %v6559 = vsel %vm323, %v6558, %v6557
  %v6560 = vrot.slane %v6547, 1
  %v6561 = vsel %vm1028, %v6560, %v6559
  %v6562 = vpack.c.b16 %v6561, %v6561
  %v6596 = vunpack.c.l.b16 %v6500
  %v6597 = vunpack.c.h.b16 %v6500
  %v6598 = vunpack.c.l.b16 %v6501
  %v6599 = vunpack.c.h.b16 %v6501
  %v6600 = vunpack.c.l.b16 %v6502
  %v6601 = vunpack.c.h.b16 %v6502
  %v6602 = vunpack.c.l.b16 %v6503
  %v6603 = vunpack.c.h.b16 %v6503
  %v6604 = vunpack.c.l.b16 %v6504
  %v6605 = vunpack.c.h.b16 %v6504
  %v6606 = vunpack.c.l.b16 %v6505
  %v6607 = vunpack.c.h.b16 %v6505
  %v6608 = vunpack.c.l.b16 %v6506
  %v6609 = vunpack.c.h.b16 %v6506
  %v6610 = vunpack.c.l.b16 %v6507
  %v6611 = vunpack.c.h.b16 %v6507
  %v6612 = vunpack.c.l.b16 %v6508
  %v6613 = vunpack.c.h.b16 %v6508
  %v6614 = vunpack.c.l.b16 %v6509
  %v6615 = vunpack.c.h.b16 %v6509
  %v6616 = vunpack.c.l.b16 %v6510
  %v6617 = vunpack.c.h.b16 %v6510
  %v6618 = vunpack.c.l.b16 %v6511
  %v6619 = vunpack.c.h.b16 %v6511
  %v6620 = vunpack.c.l.b16 %v6512
  %v6621 = vunpack.c.h.b16 %v6512
  %v6622 = vunpack.c.l.b16 %v6513
  %v6623 = vunpack.c.h.b16 %v6513
  %v6624 = vunpack.c.l.b16 %v6514
  %v6625 = vunpack.c.h.b16 %v6514
  %v6626 = vunpack.c.l.b16 %v6515
  %v6627 = vunpack.c.h.b16 %v6515
  %v6628 = vunpack.c.l.b16 %v6516
  %v6629 = vunpack.c.h.b16 %v6516
  %v6630 = vunpack.c.l.b16 %v6517
  %v6631 = vunpack.c.h.b16 %v6517
  %v6632 = vunpack.c.l.b16 %v6518
  %v6633 = vunpack.c.h.b16 %v6518
  %v6634 = vunpack.c.l.b16 %v6519
  %v6635 = vunpack.c.h.b16 %v6519
  %v6636 = vunpack.c.l.b16 %v6520
  %v6637 = vunpack.c.h.b16 %v6520
  %v6638 = vunpack.c.l.b16 %v6521
  %v6639 = vunpack.c.h.b16 %v6521
  %v6640 = vunpack.c.l.b16 %v6522
  %v6641 = vunpack.c.h.b16 %v6522
  %v6642 = vunpack.c.l.b16 %v6523
  %v6643 = vunpack.c.h.b16 %v6523
  %v6644 = vunpack.c.l.b16 %v6524
  %v6645 = vunpack.c.h.b16 %v6524
  %v6646 = vunpack.c.l.b16 %v6525
  %v6647 = vunpack.c.h.b16 %v6525
  %v6648 = vunpack.c.l.b16 %v6526
  %v6649 = vunpack.c.h.b16 %v6526
  %v6650 = vunpack.c.l.b16 %v6527
  %v6651 = vunpack.c.h.b16 %v6527
  %v6652 = vunpack.c.l.b16 %v6528
  %v6653 = vunpack.c.h.b16 %v6528
  %v6654 = vunpack.c.l.b16 %v6529
  %v6655 = vunpack.c.h.b16 %v6529
  %v6656 = vunpack.c.l.b16 %v6530
  %v6657 = vunpack.c.h.b16 %v6530
  %v6658 = vunpack.c.l.b16 %v6531
  %v6659 = vunpack.c.h.b16 %v6531
  %v6660 = vpack.c.b16 %v6600, %v6596
  %v6661 = vpack.c.b16 %v6601, %v6597
  %v6662 = vpack.c.b16 %v6602, %v6598
  %v6663 = vpack.c.b16 %v6603, %v6599
  %v6664 = vpack.c.b16 %v6608, %v6604
  %v6665 = vpack.c.b16 %v6609, %v6605
  %v6666 = vpack.c.b16 %v6610, %v6606
  %v6667 = vpack.c.b16 %v6611, %v6607
  %v6668 = vpack.c.b16 %v6616, %v6612
  %v6669 = vpack.c.b16 %v6617, %v6613
  %v6670 = vpack.c.b16 %v6618, %v6614
  %v6671 = vpack.c.b16 %v6619, %v6615
  %v6672 = vpack.c.b16 %v6624, %v6620
  %v6673 = vpack.c.b16 %v6625, %v6621
  %v6674 = vpack.c.b16 %v6626, %v6622
  %v6675 = vpack.c.b16 %v6627, %v6623
  %v6676 = vpack.c.b16 %v6632, %v6628
  %v6677 = vpack.c.b16 %v6633, %v6629
  %v6678 = vpack.c.b16 %v6634, %v6630
  %v6679 = vpack.c.b16 %v6635, %v6631
  %v6680 = vpack.c.b16 %v6640, %v6636
  %v6681 = vpack.c.b16 %v6641, %v6637
  %v6682 = vpack.c.b16 %v6642, %v6638
  %v6683 = vpack.c.b16 %v6643, %v6639
  %v6684 = vpack.c.b16 %v6648, %v6644
  %v6685 = vpack.c.b16 %v6649, %v6645
  %v6686 = vpack.c.b16 %v6650, %v6646
  %v6687 = vpack.c.b16 %v6651, %v6647
  %v6688 = vpack.c.b16 %v6656, %v6652
  %v6689 = vpack.c.b16 %v6657, %v6653
  %v6690 = vpack.c.b16 %v6658, %v6654
  %v6691 = vpack.c.b16 %v6659, %v6655
  %6724 = vmatpush.bf16.msra.mxu0 %v6688
  %6725 = vmatpush.bf16.msra.mxu0 %v6684
  %6726 = vmatpush.bf16.msra.mxu0 %v6680
  %6727 = vmatpush.bf16.msra.mxu0 %v6676
  %6728 = vmatpush.bf16.msra.mxu0 %v6672
  %6729 = vmatpush.bf16.msra.mxu0 %v6668
  %6730 = vmatpush.bf16.msra.mxu0 %v6664
  %6731 = vmatpush.bf16.msra.mxu0 %v6660
  %6732 = vmatmul.bf16.gmra.mxu0 %v6562
  %v6733 = vpop.f32.mrf.mxu0
  %v6734 = vadd.f32 0.0, %v6733
  %v6735 = vpop.f32.mrf.mxu0
  %6736 = vdwg.mxu0
  %6737 = vmatpush.bf16.msra.mxu0 %v6689
  %6738 = vmatpush.bf16.msra.mxu0 %v6685
  %6739 = vmatpush.bf16.msra.mxu0 %v6681
  %6740 = vmatpush.bf16.msra.mxu0 %v6677
  %6741 = vmatpush.bf16.msra.mxu0 %v6673
  %6742 = vmatpush.bf16.msra.mxu0 %v6669
  %6743 = vmatpush.bf16.msra.mxu0 %v6665
  %6744 = vmatpush.bf16.msra.mxu0 %v6661
  %6745 = vmatmul.bf16.gmra.mxu0 %v6562
  %v6746 = vpop.f32.mrf.mxu0
  %v6747 = vadd.f32 0.0, %v6746
  %v6748 = vpop.f32.mrf.mxu0
  %6749 = vdwg.mxu0
  %6750 = vmatpush.bf16.msra.mxu0 %v6690
  %6751 = vmatpush.bf16.msra.mxu0 %v6686
  %6752 = vmatpush.bf16.msra.mxu0 %v6682
  %6753 = vmatpush.bf16.msra.mxu0 %v6678
  %6754 = vmatpush.bf16.msra.mxu0 %v6674
  %6755 = vmatpush.bf16.msra.mxu0 %v6670
  %6756 = vmatpush.bf16.msra.mxu0 %v6666
  %6757 = vmatpush.bf16.msra.mxu0 %v6662
  %6758 = vmatmul.bf16.gmra.mxu0 %v6562
  %v6759 = vpop.f32.mrf.mxu0
  %v6760 = vadd.f32 0.0, %v6759
  %v6761 = vpop.f32.mrf.mxu0
  %6762 = vdwg.mxu0
  %6763 = vmatpush.bf16.msra.mxu0 %v6691
  %6764 = vmatpush.bf16.msra.mxu0 %v6687
  %6765 = vmatpush.bf16.msra.mxu0 %v6683
  %6766 = vmatpush.bf16.msra.mxu0 %v6679
  %6767 = vmatpush.bf16.msra.mxu0 %v6675
  %6768 = vmatpush.bf16.msra.mxu0 %v6671
  %6769 = vmatpush.bf16.msra.mxu0 %v6667
  %6770 = vmatpush.bf16.msra.mxu0 %v6663
  %6771 = vmatmul.bf16.gmra.mxu0 %v6562
  %v6772 = vpop.f32.mrf.mxu0
  %v6773 = vadd.f32 0.0, %v6772
  %v6774 = vpop.f32.mrf.mxu0
  %6775 = vdwg.mxu0
  %v6780 = vrot.slane %v6747, 7
  %v6781 = vrot.slane %v6760, 6
  %v6782 = vrot.slane %v6773, 5
  %v6783 = vsel %vm297, %v6734, %v6780
  %v6784 = vsel %vm299, %v6781, %v6782
  %v6785 = vsel %vm301, %v6783, %v6784
  %v6786 = vsel %vm303, %v6734, %v6780
  %v6787 = vsel %vm305, %v6781, %v6782
  %v6788 = vsel %vm307, %v6786, %v6787
  %v6789 = vrot.slane %v6788, 1
  %v6790 = vsel %vm299, %v6734, %v6780
  %v6791 = vsel %vm311, %v6781, %v6782
  %v6792 = vsel %vm313, %v6790, %v6791
  %v6793 = vrot.slane %v6792, 2
  %v6794 = vsel %vm305, %v6734, %v6780
  %v6795 = vsel %vm317, %v6781, %v6782
  %v6796 = vsel %vm319, %v6794, %v6795
  %v6797 = vrot.slane %v6796, 3
  %v6798 = vsel %vm311, %v6734, %v6780
  %v6799 = vsel %vm323, %v6781, %v6782
  %v6800 = vsel %vm325, %v6798, %v6799
  %v6801 = vrot.slane %v6800, 4
  %v6802 = vsel %vm317, %v6734, %v6780
  %v6803 = vsel %vm329, %v6782, %v6781
  %v6804 = vsel %vm331, %v6802, %v6803
  %v6805 = vrot.slane %v6804, 5
  %v6806 = vsel %vm323, %v6734, %v6780
  %v6807 = vsel %vm297, %v6781, %v6782
  %v6808 = vsel %vm336, %v6807, %v6806
  %v6809 = vrot.slane %v6808, 6
  %v6810 = vsel %vm329, %v6780, %v6734
  %v6811 = vsel %vm303, %v6781, %v6782
  %v6812 = vsel %vm341, %v6811, %v6810
  %v6813 = vrot.slane %v6812, 7
  %v6822 = vadd.f32 %v6477, %v6785
  %v6823 = vadd.f32 %v6479, %v6789
  %v6824 = vadd.f32 %v6481, %v6793
  %v6825 = vadd.f32 %v6483, %v6797
  %v6826 = vadd.f32 %v6485, %v6801
  %v6827 = vadd.f32 %v6487, %v6805
  %v6828 = vadd.f32 %v6489, %v6809
  %v6829 = vadd.f32 %v6491, %v6813
  %v6830 = vxor.u32 %v6822, 2147483648
  %v6831 = vxor.u32 %v6823, 2147483648
  %v6832 = vxor.u32 %v6824, 2147483648
  %v6833 = vxor.u32 %v6825, 2147483648
  %v6834 = vxor.u32 %v6826, 2147483648
  %v6835 = vxor.u32 %v6827, 2147483648
  %v6836 = vxor.u32 %v6828, 2147483648
  %v6837 = vxor.u32 %v6829, 2147483648
  %v6838 = vmul.f32 %v6830, 1.442695
  %v6839 = vpow.pop %v6838
  %v6840 = vmul.f32 %v6831, 1.442695
  %v6841 = vpow.pop %v6840
  %v6842 = vmul.f32 %v6832, 1.442695
  %v6843 = vpow.pop %v6842
  %v6844 = vmul.f32 %v6833, 1.442695
  %v6845 = vpow.pop %v6844
  %v6846 = vmul.f32 %v6834, 1.442695
  %v6847 = vpow.pop %v6846
  %v6848 = vmul.f32 %v6835, 1.442695
  %v6849 = vpow.pop %v6848
  %v6850 = vmul.f32 %v6836, 1.442695
  %v6851 = vpow.pop %v6850
  %v6852 = vmul.f32 %v6837, 1.442695
  %v6853 = vpow.pop %v6852
  %v6854 = vadd.f32 %v6839, 1.0
  %v6855 = vadd.f32 %v6841, 1.0
  %v6856 = vadd.f32 %v6843, 1.0
  %v6857 = vadd.f32 %v6845, 1.0
  %v6858 = vadd.f32 %v6847, 1.0
  %v6859 = vadd.f32 %v6849, 1.0
  %v6860 = vadd.f32 %v6851, 1.0
  %v6861 = vadd.f32 %v6853, 1.0
  %v6862 = vrcp.pop %v6854
  %v6863 = vmul.f32 %v6854, %v6862
  %v6864 = vsub.f32 1.0, %v6863
  %v6865 = vmul.f32 %v6862, %v6864
  %v6866 = vadd.f32 %v6862, %v6865
  %vm6867 = vweird.f32 %v6854
  %vm6868 = vweird.f32 %v6862
  %vm6869 = vmor %vm6867, %vm6868
  %v6870 = vsel %vm6869, %v6862, %v6866
  %v6871 = vand.u32 2147483647, %v6854
  %vm6872 = vcmp.eq.f32.partialorder %v6871, 8.507059e+37
  %v6873 = vand.u32 %v6854, 2147483648
  %v6874 = vor.u32 1.1754944e-38, %v6873
  %v6875 = vsel %vm6872, %v6874, %v6870
  %v6876 = vmul.f32 1.0, %v6875
  %v6877 = vrcp.pop %v6855
  %v6878 = vmul.f32 %v6855, %v6877
  %v6879 = vsub.f32 1.0, %v6878
  %v6880 = vmul.f32 %v6877, %v6879
  %v6881 = vadd.f32 %v6877, %v6880
  %vm6882 = vweird.f32 %v6855
  %vm6883 = vweird.f32 %v6877
  %vm6884 = vmor %vm6882, %vm6883
  %v6885 = vsel %vm6884, %v6877, %v6881
  %v6886 = vand.u32 2147483647, %v6855
  %vm6887 = vcmp.eq.f32.partialorder %v6886, 8.507059e+37
  %v6888 = vand.u32 %v6855, 2147483648
  %v6889 = vor.u32 1.1754944e-38, %v6888
  %v6890 = vsel %vm6887, %v6889, %v6885
  %v6891 = vmul.f32 1.0, %v6890
  %v6892 = vrcp.pop %v6856
  %v6893 = vmul.f32 %v6856, %v6892
  %v6894 = vsub.f32 1.0, %v6893
  %v6895 = vmul.f32 %v6892, %v6894
  %v6896 = vadd.f32 %v6892, %v6895
  %vm6897 = vweird.f32 %v6856
  %vm6898 = vweird.f32 %v6892
  %vm6899 = vmor %vm6897, %vm6898
  %v6900 = vsel %vm6899, %v6892, %v6896
  %v6901 = vand.u32 2147483647, %v6856
  %vm6902 = vcmp.eq.f32.partialorder %v6901, 8.507059e+37
  %v6903 = vand.u32 %v6856, 2147483648
  %v6904 = vor.u32 1.1754944e-38, %v6903
  %v6905 = vsel %vm6902, %v6904, %v6900
  %v6906 = vmul.f32 1.0, %v6905
  %v6907 = vrcp.pop %v6857
  %v6908 = vmul.f32 %v6857, %v6907
  %v6909 = vsub.f32 1.0, %v6908
  %v6910 = vmul.f32 %v6907, %v6909
  %v6911 = vadd.f32 %v6907, %v6910
  %vm6912 = vweird.f32 %v6857
  %vm6913 = vweird.f32 %v6907
  %vm6914 = vmor %vm6912, %vm6913
  %v6915 = vsel %vm6914, %v6907, %v6911
  %v6916 = vand.u32 2147483647, %v6857
  %vm6917 = vcmp.eq.f32.partialorder %v6916, 8.507059e+37
  %v6918 = vand.u32 %v6857, 2147483648
  %v6919 = vor.u32 1.1754944e-38, %v6918
  %v6920 = vsel %vm6917, %v6919, %v6915
  %v6921 = vmul.f32 1.0, %v6920
  %v6922 = vrcp.pop %v6858
  %v6923 = vmul.f32 %v6858, %v6922
  %v6924 = vsub.f32 1.0, %v6923
  %v6925 = vmul.f32 %v6922, %v6924
  %v6926 = vadd.f32 %v6922, %v6925
  %vm6927 = vweird.f32 %v6858
  %vm6928 = vweird.f32 %v6922
  %vm6929 = vmor %vm6927, %vm6928
  %v6930 = vsel %vm6929, %v6922, %v6926
  %v6931 = vand.u32 2147483647, %v6858
  %vm6932 = vcmp.eq.f32.partialorder %v6931, 8.507059e+37
  %v6933 = vand.u32 %v6858, 2147483648
  %v6934 = vor.u32 1.1754944e-38, %v6933
  %v6935 = vsel %vm6932, %v6934, %v6930
  %v6936 = vmul.f32 1.0, %v6935
  %v6937 = vrcp.pop %v6859
  %v6938 = vmul.f32 %v6859, %v6937
  %v6939 = vsub.f32 1.0, %v6938
  %v6940 = vmul.f32 %v6937, %v6939
  %v6941 = vadd.f32 %v6937, %v6940
  %vm6942 = vweird.f32 %v6859
  %vm6943 = vweird.f32 %v6937
  %vm6944 = vmor %vm6942, %vm6943
  %v6945 = vsel %vm6944, %v6937, %v6941
  %v6946 = vand.u32 2147483647, %v6859
  %vm6947 = vcmp.eq.f32.partialorder %v6946, 8.507059e+37
  %v6948 = vand.u32 %v6859, 2147483648
  %v6949 = vor.u32 1.1754944e-38, %v6948
  %v6950 = vsel %vm6947, %v6949, %v6945
  %v6951 = vmul.f32 1.0, %v6950
  %v6952 = vrcp.pop %v6860
  %v6953 = vmul.f32 %v6860, %v6952
  %v6954 = vsub.f32 1.0, %v6953
  %v6955 = vmul.f32 %v6952, %v6954
  %v6956 = vadd.f32 %v6952, %v6955
  %vm6957 = vweird.f32 %v6860
  %vm6958 = vweird.f32 %v6952
  %vm6959 = vmor %vm6957, %vm6958
  %v6960 = vsel %vm6959, %v6952, %v6956
  %v6961 = vand.u32 2147483647, %v6860
  %vm6962 = vcmp.eq.f32.partialorder %v6961, 8.507059e+37
  %v6963 = vand.u32 %v6860, 2147483648
  %v6964 = vor.u32 1.1754944e-38, %v6963
  %v6965 = vsel %vm6962, %v6964, %v6960
  %v6966 = vmul.f32 1.0, %v6965
  %v6967 = vrcp.pop %v6861
  %v6968 = vmul.f32 %v6861, %v6967
  %v6969 = vsub.f32 1.0, %v6968
  %v6970 = vmul.f32 %v6967, %v6969
  %v6971 = vadd.f32 %v6967, %v6970
  %vm6972 = vweird.f32 %v6861
  %vm6973 = vweird.f32 %v6967
  %vm6974 = vmor %vm6972, %vm6973
  %v6975 = vsel %vm6974, %v6967, %v6971
  %v6976 = vand.u32 2147483647, %v6861
  %vm6977 = vcmp.eq.f32.partialorder %v6976, 8.507059e+37
  %v6978 = vand.u32 %v6861, 2147483648
  %v6979 = vor.u32 1.1754944e-38, %v6978
  %v6980 = vsel %vm6977, %v6979, %v6975
  %v6981 = vmul.f32 1.0, %v6980
  %v6990 = vrot.slane %v6822, 1
  %v6991 = vrot.slane %v6823, 1
  %v6992 = vrot.slane %v6824, 1
  %v6993 = vrot.slane %v6825, 1
  %v6994 = vrot.slane %v6826, 1
  %v6995 = vrot.slane %v6827, 1
  %v6996 = vrot.slane %v6828, 1
  %v6997 = vrot.slane %v6829, 1
  %v7006 = vxor.u32 %v6990, 2147483648
  %v7007 = vxor.u32 %v6991, 2147483648
  %v7008 = vxor.u32 %v6992, 2147483648
  %v7009 = vxor.u32 %v6993, 2147483648
  %v7010 = vxor.u32 %v6994, 2147483648
  %v7011 = vxor.u32 %v6995, 2147483648
  %v7012 = vxor.u32 %v6996, 2147483648
  %v7013 = vxor.u32 %v6997, 2147483648
  %v7014 = vmul.f32 %v7006, 1.442695
  %v7015 = vpow.pop %v7014
  %v7016 = vmul.f32 %v7007, 1.442695
  %v7017 = vpow.pop %v7016
  %v7018 = vmul.f32 %v7008, 1.442695
  %v7019 = vpow.pop %v7018
  %v7020 = vmul.f32 %v7009, 1.442695
  %v7021 = vpow.pop %v7020
  %v7022 = vmul.f32 %v7010, 1.442695
  %v7023 = vpow.pop %v7022
  %v7024 = vmul.f32 %v7011, 1.442695
  %v7025 = vpow.pop %v7024
  %v7026 = vmul.f32 %v7012, 1.442695
  %v7027 = vpow.pop %v7026
  %v7028 = vmul.f32 %v7013, 1.442695
  %v7029 = vpow.pop %v7028
  %v7030 = vadd.f32 %v7015, 1.0
  %v7031 = vadd.f32 %v7017, 1.0
  %v7032 = vadd.f32 %v7019, 1.0
  %v7033 = vadd.f32 %v7021, 1.0
  %v7034 = vadd.f32 %v7023, 1.0
  %v7035 = vadd.f32 %v7025, 1.0
  %v7036 = vadd.f32 %v7027, 1.0
  %v7037 = vadd.f32 %v7029, 1.0
  %v7038 = vrcp.pop %v7030
  %v7039 = vmul.f32 %v7030, %v7038
  %v7040 = vsub.f32 1.0, %v7039
  %v7041 = vmul.f32 %v7038, %v7040
  %v7042 = vadd.f32 %v7038, %v7041
  %vm7043 = vweird.f32 %v7030
  %vm7044 = vweird.f32 %v7038
  %vm7045 = vmor %vm7043, %vm7044
  %v7046 = vsel %vm7045, %v7038, %v7042
  %v7047 = vand.u32 2147483647, %v7030
  %vm7048 = vcmp.eq.f32.partialorder %v7047, 8.507059e+37
  %v7049 = vand.u32 %v7030, 2147483648
  %v7050 = vor.u32 1.1754944e-38, %v7049
  %v7051 = vsel %vm7048, %v7050, %v7046
  %v7052 = vmul.f32 1.0, %v7051
  %v7053 = vrcp.pop %v7031
  %v7054 = vmul.f32 %v7031, %v7053
  %v7055 = vsub.f32 1.0, %v7054
  %v7056 = vmul.f32 %v7053, %v7055
  %v7057 = vadd.f32 %v7053, %v7056
  %vm7058 = vweird.f32 %v7031
  %vm7059 = vweird.f32 %v7053
  %vm7060 = vmor %vm7058, %vm7059
  %v7061 = vsel %vm7060, %v7053, %v7057
  %v7062 = vand.u32 2147483647, %v7031
  %vm7063 = vcmp.eq.f32.partialorder %v7062, 8.507059e+37
  %v7064 = vand.u32 %v7031, 2147483648
  %v7065 = vor.u32 1.1754944e-38, %v7064
  %v7066 = vsel %vm7063, %v7065, %v7061
  %v7067 = vmul.f32 1.0, %v7066
  %v7068 = vrcp.pop %v7032
  %v7069 = vmul.f32 %v7032, %v7068
  %v7070 = vsub.f32 1.0, %v7069
  %v7071 = vmul.f32 %v7068, %v7070
  %v7072 = vadd.f32 %v7068, %v7071
  %vm7073 = vweird.f32 %v7032
  %vm7074 = vweird.f32 %v7068
  %vm7075 = vmor %vm7073, %vm7074
  %v7076 = vsel %vm7075, %v7068, %v7072
  %v7077 = vand.u32 2147483647, %v7032
  %vm7078 = vcmp.eq.f32.partialorder %v7077, 8.507059e+37
  %v7079 = vand.u32 %v7032, 2147483648
  %v7080 = vor.u32 1.1754944e-38, %v7079
  %v7081 = vsel %vm7078, %v7080, %v7076
  %v7082 = vmul.f32 1.0, %v7081
  %v7083 = vrcp.pop %v7033
  %v7084 = vmul.f32 %v7033, %v7083
  %v7085 = vsub.f32 1.0, %v7084
  %v7086 = vmul.f32 %v7083, %v7085
  %v7087 = vadd.f32 %v7083, %v7086
  %vm7088 = vweird.f32 %v7033
  %vm7089 = vweird.f32 %v7083
  %vm7090 = vmor %vm7088, %vm7089
  %v7091 = vsel %vm7090, %v7083, %v7087
  %v7092 = vand.u32 2147483647, %v7033
  %vm7093 = vcmp.eq.f32.partialorder %v7092, 8.507059e+37
  %v7094 = vand.u32 %v7033, 2147483648
  %v7095 = vor.u32 1.1754944e-38, %v7094
  %v7096 = vsel %vm7093, %v7095, %v7091
  %v7097 = vmul.f32 1.0, %v7096
  %v7098 = vrcp.pop %v7034
  %v7099 = vmul.f32 %v7034, %v7098
  %v7100 = vsub.f32 1.0, %v7099
  %v7101 = vmul.f32 %v7098, %v7100
  %v7102 = vadd.f32 %v7098, %v7101
  %vm7103 = vweird.f32 %v7034
  %vm7104 = vweird.f32 %v7098
  %vm7105 = vmor %vm7103, %vm7104
  %v7106 = vsel %vm7105, %v7098, %v7102
  %v7107 = vand.u32 2147483647, %v7034
  %vm7108 = vcmp.eq.f32.partialorder %v7107, 8.507059e+37
  %v7109 = vand.u32 %v7034, 2147483648
  %v7110 = vor.u32 1.1754944e-38, %v7109
  %v7111 = vsel %vm7108, %v7110, %v7106
  %v7112 = vmul.f32 1.0, %v7111
  %v7113 = vrcp.pop %v7035
  %v7114 = vmul.f32 %v7035, %v7113
  %v7115 = vsub.f32 1.0, %v7114
  %v7116 = vmul.f32 %v7113, %v7115
  %v7117 = vadd.f32 %v7113, %v7116
  %vm7118 = vweird.f32 %v7035
  %vm7119 = vweird.f32 %v7113
  %vm7120 = vmor %vm7118, %vm7119
  %v7121 = vsel %vm7120, %v7113, %v7117
  %v7122 = vand.u32 2147483647, %v7035
  %vm7123 = vcmp.eq.f32.partialorder %v7122, 8.507059e+37
  %v7124 = vand.u32 %v7035, 2147483648
  %v7125 = vor.u32 1.1754944e-38, %v7124
  %v7126 = vsel %vm7123, %v7125, %v7121
  %v7127 = vmul.f32 1.0, %v7126
  %v7128 = vrcp.pop %v7036
  %v7129 = vmul.f32 %v7036, %v7128
  %v7130 = vsub.f32 1.0, %v7129
  %v7131 = vmul.f32 %v7128, %v7130
  %v7132 = vadd.f32 %v7128, %v7131
  %vm7133 = vweird.f32 %v7036
  %vm7134 = vweird.f32 %v7128
  %vm7135 = vmor %vm7133, %vm7134
  %v7136 = vsel %vm7135, %v7128, %v7132
  %v7137 = vand.u32 2147483647, %v7036
  %vm7138 = vcmp.eq.f32.partialorder %v7137, 8.507059e+37
  %v7139 = vand.u32 %v7036, 2147483648
  %v7140 = vor.u32 1.1754944e-38, %v7139
  %v7141 = vsel %vm7138, %v7140, %v7136
  %v7142 = vmul.f32 1.0, %v7141
  %v7143 = vrcp.pop %v7037
  %v7144 = vmul.f32 %v7037, %v7143
  %v7145 = vsub.f32 1.0, %v7144
  %v7146 = vmul.f32 %v7143, %v7145
  %v7147 = vadd.f32 %v7143, %v7146
  %vm7148 = vweird.f32 %v7037
  %vm7149 = vweird.f32 %v7143
  %vm7150 = vmor %vm7148, %vm7149
  %v7151 = vsel %vm7150, %v7143, %v7147
  %v7152 = vand.u32 2147483647, %v7037
  %vm7153 = vcmp.eq.f32.partialorder %v7152, 8.507059e+37
  %v7154 = vand.u32 %v7037, 2147483648
  %v7155 = vor.u32 1.1754944e-38, %v7154
  %v7156 = vsel %vm7153, %v7155, %v7151
  %v7157 = vmul.f32 1.0, %v7156
  %v7158 = vrot.slane %v6822, 2
  %v7159 = vrot.slane %v6823, 2
  %v7160 = vrot.slane %v6824, 2
  %v7161 = vrot.slane %v6825, 2
  %v7162 = vrot.slane %v6826, 2
  %v7163 = vrot.slane %v6827, 2
  %v7164 = vrot.slane %v6828, 2
  %v7165 = vrot.slane %v6829, 2
  %v7174 = vtanh.pop %v7158
  %v7175 = vtanh.pop %v7159
  %v7176 = vtanh.pop %v7160
  %v7177 = vtanh.pop %v7161
  %v7178 = vtanh.pop %v7162
  %v7179 = vtanh.pop %v7163
  %v7180 = vtanh.pop %v7164
  %v7181 = vtanh.pop %v7165
  %v7182 = vrot.slane %v6822, 3
  %v7183 = vrot.slane %v6823, 3
  %v7184 = vrot.slane %v6824, 3
  %v7185 = vrot.slane %v6825, 3
  %v7186 = vrot.slane %v6826, 3
  %v7187 = vrot.slane %v6827, 3
  %v7188 = vrot.slane %v6828, 3
  %v7189 = vrot.slane %v6829, 3
  %v7198 = vxor.u32 %v7182, 2147483648
  %v7199 = vxor.u32 %v7183, 2147483648
  %v7200 = vxor.u32 %v7184, 2147483648
  %v7201 = vxor.u32 %v7185, 2147483648
  %v7202 = vxor.u32 %v7186, 2147483648
  %v7203 = vxor.u32 %v7187, 2147483648
  %v7204 = vxor.u32 %v7188, 2147483648
  %v7205 = vxor.u32 %v7189, 2147483648
  %v7206 = vmul.f32 %v7198, 1.442695
  %v7207 = vpow.pop %v7206
  %v7208 = vmul.f32 %v7199, 1.442695
  %v7209 = vpow.pop %v7208
  %v7210 = vmul.f32 %v7200, 1.442695
  %v7211 = vpow.pop %v7210
  %v7212 = vmul.f32 %v7201, 1.442695
  %v7213 = vpow.pop %v7212
  %v7214 = vmul.f32 %v7202, 1.442695
  %v7215 = vpow.pop %v7214
  %v7216 = vmul.f32 %v7203, 1.442695
  %v7217 = vpow.pop %v7216
  %v7218 = vmul.f32 %v7204, 1.442695
  %v7219 = vpow.pop %v7218
  %v7220 = vmul.f32 %v7205, 1.442695
  %v7221 = vpow.pop %v7220
  %v7222 = vadd.f32 %v7207, 1.0
  %v7223 = vadd.f32 %v7209, 1.0
  %v7224 = vadd.f32 %v7211, 1.0
  %v7225 = vadd.f32 %v7213, 1.0
  %v7226 = vadd.f32 %v7215, 1.0
  %v7227 = vadd.f32 %v7217, 1.0
  %v7228 = vadd.f32 %v7219, 1.0
  %v7229 = vadd.f32 %v7221, 1.0
  %v7230 = vrcp.pop %v7222
  %v7231 = vmul.f32 %v7222, %v7230
  %v7232 = vsub.f32 1.0, %v7231
  %v7233 = vmul.f32 %v7230, %v7232
  %v7234 = vadd.f32 %v7230, %v7233
  %vm7235 = vweird.f32 %v7222
  %vm7236 = vweird.f32 %v7230
  %vm7237 = vmor %vm7235, %vm7236
  %v7238 = vsel %vm7237, %v7230, %v7234
  %v7239 = vand.u32 2147483647, %v7222
  %vm7240 = vcmp.eq.f32.partialorder %v7239, 8.507059e+37
  %v7241 = vand.u32 %v7222, 2147483648
  %v7242 = vor.u32 1.1754944e-38, %v7241
  %v7243 = vsel %vm7240, %v7242, %v7238
  %v7244 = vmul.f32 1.0, %v7243
  %v7245 = vrcp.pop %v7223
  %v7246 = vmul.f32 %v7223, %v7245
  %v7247 = vsub.f32 1.0, %v7246
  %v7248 = vmul.f32 %v7245, %v7247
  %v7249 = vadd.f32 %v7245, %v7248
  %vm7250 = vweird.f32 %v7223
  %vm7251 = vweird.f32 %v7245
  %vm7252 = vmor %vm7250, %vm7251
  %v7253 = vsel %vm7252, %v7245, %v7249
  %v7254 = vand.u32 2147483647, %v7223
  %vm7255 = vcmp.eq.f32.partialorder %v7254, 8.507059e+37
  %v7256 = vand.u32 %v7223, 2147483648
  %v7257 = vor.u32 1.1754944e-38, %v7256
  %v7258 = vsel %vm7255, %v7257, %v7253
  %v7259 = vmul.f32 1.0, %v7258
  %v7260 = vrcp.pop %v7224
  %v7261 = vmul.f32 %v7224, %v7260
  %v7262 = vsub.f32 1.0, %v7261
  %v7263 = vmul.f32 %v7260, %v7262
  %v7264 = vadd.f32 %v7260, %v7263
  %vm7265 = vweird.f32 %v7224
  %vm7266 = vweird.f32 %v7260
  %vm7267 = vmor %vm7265, %vm7266
  %v7268 = vsel %vm7267, %v7260, %v7264
  %v7269 = vand.u32 2147483647, %v7224
  %vm7270 = vcmp.eq.f32.partialorder %v7269, 8.507059e+37
  %v7271 = vand.u32 %v7224, 2147483648
  %v7272 = vor.u32 1.1754944e-38, %v7271
  %v7273 = vsel %vm7270, %v7272, %v7268
  %v7274 = vmul.f32 1.0, %v7273
  %v7275 = vrcp.pop %v7225
  %v7276 = vmul.f32 %v7225, %v7275
  %v7277 = vsub.f32 1.0, %v7276
  %v7278 = vmul.f32 %v7275, %v7277
  %v7279 = vadd.f32 %v7275, %v7278
  %vm7280 = vweird.f32 %v7225
  %vm7281 = vweird.f32 %v7275
  %vm7282 = vmor %vm7280, %vm7281
  %v7283 = vsel %vm7282, %v7275, %v7279
  %v7284 = vand.u32 2147483647, %v7225
  %vm7285 = vcmp.eq.f32.partialorder %v7284, 8.507059e+37
  %v7286 = vand.u32 %v7225, 2147483648
  %v7287 = vor.u32 1.1754944e-38, %v7286
  %v7288 = vsel %vm7285, %v7287, %v7283
  %v7289 = vmul.f32 1.0, %v7288
  %v7290 = vrcp.pop %v7226
  %v7291 = vmul.f32 %v7226, %v7290
  %v7292 = vsub.f32 1.0, %v7291
  %v7293 = vmul.f32 %v7290, %v7292
  %v7294 = vadd.f32 %v7290, %v7293
  %vm7295 = vweird.f32 %v7226
  %vm7296 = vweird.f32 %v7290
  %vm7297 = vmor %vm7295, %vm7296
  %v7298 = vsel %vm7297, %v7290, %v7294
  %v7299 = vand.u32 2147483647, %v7226
  %vm7300 = vcmp.eq.f32.partialorder %v7299, 8.507059e+37
  %v7301 = vand.u32 %v7226, 2147483648
  %v7302 = vor.u32 1.1754944e-38, %v7301
  %v7303 = vsel %vm7300, %v7302, %v7298
  %v7304 = vmul.f32 1.0, %v7303
  %v7305 = vrcp.pop %v7227
  %v7306 = vmul.f32 %v7227, %v7305
  %v7307 = vsub.f32 1.0, %v7306
  %v7308 = vmul.f32 %v7305, %v7307
  %v7309 = vadd.f32 %v7305, %v7308
  %vm7310 = vweird.f32 %v7227
  %vm7311 = vweird.f32 %v7305
  %vm7312 = vmor %vm7310, %vm7311
  %v7313 = vsel %vm7312, %v7305, %v7309
  %v7314 = vand.u32 2147483647, %v7227
  %vm7315 = vcmp.eq.f32.partialorder %v7314, 8.507059e+37
  %v7316 = vand.u32 %v7227, 2147483648
  %v7317 = vor.u32 1.1754944e-38, %v7316
  %v7318 = vsel %vm7315, %v7317, %v7313
  %v7319 = vmul.f32 1.0, %v7318
  %v7320 = vrcp.pop %v7228
  %v7321 = vmul.f32 %v7228, %v7320
  %v7322 = vsub.f32 1.0, %v7321
  %v7323 = vmul.f32 %v7320, %v7322
  %v7324 = vadd.f32 %v7320, %v7323
  %vm7325 = vweird.f32 %v7228
  %vm7326 = vweird.f32 %v7320
  %vm7327 = vmor %vm7325, %vm7326
  %v7328 = vsel %vm7327, %v7320, %v7324
  %v7329 = vand.u32 2147483647, %v7228
  %vm7330 = vcmp.eq.f32.partialorder %v7329, 8.507059e+37
  %v7331 = vand.u32 %v7228, 2147483648
  %v7332 = vor.u32 1.1754944e-38, %v7331
  %v7333 = vsel %vm7330, %v7332, %v7328
  %v7334 = vmul.f32 1.0, %v7333
  %v7335 = vrcp.pop %v7229
  %v7336 = vmul.f32 %v7229, %v7335
  %v7337 = vsub.f32 1.0, %v7336
  %v7338 = vmul.f32 %v7335, %v7337
  %v7339 = vadd.f32 %v7335, %v7338
  %vm7340 = vweird.f32 %v7229
  %vm7341 = vweird.f32 %v7335
  %vm7342 = vmor %vm7340, %vm7341
  %v7343 = vsel %vm7342, %v7335, %v7339
  %v7344 = vand.u32 2147483647, %v7229
  %vm7345 = vcmp.eq.f32.partialorder %v7344, 8.507059e+37
  %v7346 = vand.u32 %v7229, 2147483648
  %v7347 = vor.u32 1.1754944e-38, %v7346
  %v7348 = vsel %vm7345, %v7347, %v7343
  %v7349 = vmul.f32 1.0, %v7348
  %v7350 = vmul.f32 %v7052, %v6444
  %v7351 = vmul.f32 %v7067, %v6445
  %v7352 = vmul.f32 %v7082, %v6446
  %v7353 = vmul.f32 %v7097, %v6447
  %v7354 = vmul.f32 %v7112, %v6448
  %v7355 = vmul.f32 %v7127, %v6449
  %v7356 = vmul.f32 %v7142, %v6450
  %v7357 = vmul.f32 %v7157, %v6451
  %v7358 = vmul.f32 %v6876, %v7174
  %v7359 = vmul.f32 %v6891, %v7175
  %v7360 = vmul.f32 %v6906, %v7176
  %v7361 = vmul.f32 %v6921, %v7177
  %v7362 = vmul.f32 %v6936, %v7178
  %v7363 = vmul.f32 %v6951, %v7179
  %v7364 = vmul.f32 %v6966, %v7180
  %v7365 = vmul.f32 %v6981, %v7181
  %v7366 = vadd.f32 %v7350, %v7358
  %v7367 = vadd.f32 %v7351, %v7359
  %v7368 = vadd.f32 %v7352, %v7360
  %v7369 = vadd.f32 %v7353, %v7361
  %v7370 = vadd.f32 %v7354, %v7362
  %v7371 = vadd.f32 %v7355, %v7363
  %v7372 = vadd.f32 %v7356, %v7364
  %v7373 = vadd.f32 %v7357, %v7365
  %v7374 = vtanh.pop %v7366
  %v7375 = vtanh.pop %v7367
  %v7376 = vtanh.pop %v7368
  %v7377 = vtanh.pop %v7369
  %v7378 = vtanh.pop %v7370
  %v7379 = vtanh.pop %v7371
  %v7380 = vtanh.pop %v7372
  %v7381 = vtanh.pop %v7373
  %v7382 = vmul.f32 %v7244, %v7374
  %v7383 = vmul.f32 %v7259, %v7375
  %v7384 = vmul.f32 %v7274, %v7376
  %v7385 = vmul.f32 %v7289, %v7377
  %v7386 = vmul.f32 %v7304, %v7378
  %v7387 = vmul.f32 %v7319, %v7379
  %v7388 = vmul.f32 %v7334, %v7380
  %v7389 = vmul.f32 %v7349, %v7381
  %7390 = vst [vmem:[%s4 + $0x7] sm:$0x1] %v7382
  %7391 = vst [vmem:[%s4 + $0xf] sm:$0x1] %v7383
  %7392 = vst [vmem:[%s4 + $0x17] sm:$0x1] %v7384
  %7393 = vst [vmem:[%s4 + $0x1f] sm:$0x1] %v7385
  %7394 = vst [vmem:[%s4 + $0x27] sm:$0x1] %v7386
  %7395 = vst [vmem:[%s4 + $0x2f] sm:$0x1] %v7387
  %7396 = vst [vmem:[%s4 + $0x37] sm:$0x1] %v7388
  %7397 = vst [vmem:[%s4 + $0x3f] sm:$0x1] %v7389
  %7406 = vst [vmem:[#allocation1] ss:$9 sm:$0xff] %v7382
  %s7407 = scalar_lea.vmem [#allocation1], 1
  %7408 = vst [vmem:[%s7407] ss:$9 sm:$0xff] %v7383
  %s7409 = scalar_lea.vmem [#allocation1], 2
  %7410 = vst [vmem:[%s7409] ss:$9 sm:$0xff] %v7384
  %s7411 = scalar_lea.vmem [#allocation1], 3
  %7412 = vst [vmem:[%s7411] ss:$9 sm:$0xff] %v7385
  %s7413 = scalar_lea.vmem [#allocation1], 4
  %7414 = vst [vmem:[%s7413] ss:$9 sm:$0xff] %v7386
  %s7415 = scalar_lea.vmem [#allocation1], 5
  %7416 = vst [vmem:[%s7415] ss:$9 sm:$0xff] %v7387
  %s7417 = scalar_lea.vmem [#allocation1], 6
  %7418 = vst [vmem:[%s7417] ss:$9 sm:$0xff] %v7388
  %s7419 = scalar_lea.vmem [#allocation1], 7
  %7420 = vst [vmem:[%s7419] ss:$9 sm:$0xff] %v7389
  %v7421 = vld [vmem:[#allocation1] sm:$0xff]
  %7423 = vst [vmem:[%s5] sm:$0xff] %v7421
  %7432 = vst [vmem:[#allocation1] ss:$9 sm:$0xff] %v7366
  %s7433 = scalar_lea.vmem [#allocation1], 1
  %7434 = vst [vmem:[%s7433] ss:$9 sm:$0xff] %v7367
  %s7435 = scalar_lea.vmem [#allocation1], 2
  %7436 = vst [vmem:[%s7435] ss:$9 sm:$0xff] %v7368
  %s7437 = scalar_lea.vmem [#allocation1], 3
  %7438 = vst [vmem:[%s7437] ss:$9 sm:$0xff] %v7369
  %s7439 = scalar_lea.vmem [#allocation1], 4
  %7440 = vst [vmem:[%s7439] ss:$9 sm:$0xff] %v7370
  %s7441 = scalar_lea.vmem [#allocation1], 5
  %7442 = vst [vmem:[%s7441] ss:$9 sm:$0xff] %v7371
  %s7443 = scalar_lea.vmem [#allocation1], 6
  %7444 = vst [vmem:[%s7443] ss:$9 sm:$0xff] %v7372
  %s7445 = scalar_lea.vmem [#allocation1], 7
  %7446 = vst [vmem:[%s7445] ss:$9 sm:$0xff] %v7373
  %v7447 = vld [vmem:[#allocation1] sm:$0xff]
  %7449 = vst [vmem:[%s6] sm:$0xff] %v7447
  // Predicated region
  $region22: #{decoder_forward.1} parent=0 // pred_check
    _
  $region23: #{decoder_forward.1} parent=0 // pred_check_branch
    %7451 = sbr.rel (0) target = $region25
  $region24: #{decoder_forward.1} parent=0 // pred_region
    _
  $region25: #{decoder_forward.1} parent=0 // pred_fallthru
    _
  // Predicated region
  $region26: #{decoder_forward.1} parent=0 // pred_check
    _
  $region27: #{decoder_forward.1} parent=0 // pred_check_branch
    %7453 = sbr.rel (0) target = $region29
  $region28: #{decoder_forward.1} parent=0 // pred_region
    _
  $region29: #{decoder_forward.1} parent=0 // pred_fallthru
    _
  // Predicated region
  $region30: #{decoder_forward.1} parent=0 // pred_check
    _
  $region31: #{decoder_forward.1} parent=0 // pred_check_branch
    %7455 = sbr.rel (0) target = $region33
  $region32: #{decoder_forward.1} parent=0 // pred_region
    _
  $region33: #{decoder_forward.1} parent=0 // pred_fallthru
    _
  // Predicated region
  $region34: #{decoder_forward.1} parent=0 // pred_check
    _
  $region35: #{decoder_forward.1} parent=0 // pred_check_branch
    %7457 = sbr.rel (0) target = $region37
  $region36: #{decoder_forward.1} parent=0 // pred_region
    _
  $region37: #{decoder_forward.1} parent=0 // pred_fallthru
    _
  // Predicated region
  $region38: #{decoder_forward.1} parent=0 // pred_check
    _
  $region39: #{decoder_forward.1} parent=0 // pred_check_branch
    %7459 = sbr.rel (0) target = $region41
  $region40: #{decoder_forward.1} parent=0 // pred_region
    _
  $region41: #{decoder_forward.1} parent=0 // pred_fallthru
    _
  // Predicated region
  $region42: #{decoder_forward.1} parent=0 // pred_check
    _
  $region43: #{decoder_forward.1} parent=0 // pred_check_branch
    %7461 = sbr.rel (0) target = $region45
  $region44: #{decoder_forward.1} parent=0 // pred_region
    _
  $region45: #{decoder_forward.1} parent=0 // pred_fallthru
    _

</llo_original>
